<compile_context>
chip_gen: v5e
topology: v5e:2x2
jax: 0.10.0
libtpu: 0.0.40
codegen_flags: <defaults>
</compile_context>

<pallas_src>
import numpy as np

import jax
import jax.numpy as jnp
from jax.experimental import pallas as pl
from jax.experimental.pallas import tpu as pltpu


_ON_TPU = jax.default_backend() == "tpu"

CELL_DIM = 80            # real prediction width
HEAD_PAD = 128           # prediction heads' fc2 padded to a full 128-lane store
EMBED_DIM = 256          # 32 * 8
NUM_HEADS = 8
HEAD_DIM = EMBED_DIM // NUM_HEADS
VIT_DEPTH = 3
HG_HIDDEN = 128          # HypergraphConv(512 -> 128)
HG_OUT = 256             # HypergraphConv(128 -> 256)
DROP_RATE = 0.3
LN_EPS = 1e-5


# ---------------------------------------------------------------------------
# pallas_call plumbing
# ---------------------------------------------------------------------------
# Whole-array VMEM residency, single-buffered (no grid -> no pipelining buffers).
_VMEM_SPEC = pl.BlockSpec(memory_space=pltpu.MemorySpace.VMEM)


def _nbytes(arrays):
    return sum(int(a.size) * int(np.dtype(a.dtype).itemsize) for a in arrays)


def _compiler_params(footprint_bytes):
    # Mosaic-only knob; skip when the backend is not a TPU (e.g. interpret/CPU runs).
    if not _ON_TPU:
        return None
    # Operand footprint + headroom for in-kernel intermediates; floor above v5e's
    # 16 MiB scoped default, cap at 64 MiB so the request stays valid on v7x.
    limit = min(64 << 20, max(int(footprint_bytes) + (16 << 20), 32 << 20))
    return pltpu.CompilerParams(vmem_limit_bytes=limit)


# ---------------------------------------------------------------------------
# in-kernel helpers (operate on VMEM-resident values)
# ---------------------------------------------------------------------------
def _layernorm(x, g, b, eps=LN_EPS):
    mu = jnp.mean(x, axis=-1, keepdims=True)
    xc = x - mu
    var = jnp.mean(xc * xc, axis=-1, keepdims=True)
    return xc * jax.lax.rsqrt(var + eps) * g + b


def _mm(x, w_bf16):
    # bf16 MXU inputs, f32 accumulation.
    return jnp.dot(x.astype(jnp.bfloat16), w_bf16, preferred_element_type=jnp.float32)


def _dot_t(a, b):
    # a @ b.T via contraction over the last dim of both operands (no transpose copy).
    return jax.lax.dot_general(
        a, b, dimension_numbers=(((1,), (1,)), ((), ())),
        preferred_element_type=jnp.float32)


def _gelu(x):
    # TODO(synk): torch nn.GELU is exact erf; tanh approximation used here.
    return jax.nn.gelu(x, approximate=True)


def _softmax_rows(s):
    s = s - jnp.max(s, axis=-1, keepdims=True)
    p = jnp.exp(s)
    denom = jnp.sum(p, axis=-1, keepdims=True)
    if _ON_TPU:
        # EUP reciprocal: separate VLIW slot, effectively free next to the VALU work.
        return p * pl.reciprocal(denom, approx=True)
    return p / denom


# ---------------------------------------------------------------------------
# Kernel 1: encoder stand-in + spot_fc_initial/final + fused hypergraph branch
# ---------------------------------------------------------------------------
def _stage1_kernel(x_ref, enc_w, enc_b, fi_w, fi_b, ff_w, ff_b,
                   hg1_w, hg1_b, hg2_w, hg2_b, hln_g, hln_b,
                   h_d_ref, htb_ref, drop_ref,
                   refined_ref, local_ref):
    x = x_ref[...]
    spot_features = _mm(x, enc_w[...]) + enc_b[...]               # [N, 1536]
    spot_tr = _mm(spot_features, fi_w[...]) + fi_b[...]           # [N, 512]
    refined_ref[...] = _mm(spot_tr, ff_w[...]) + ff_b[...]        # [N, 256]

    # HypergraphNeuralNetwork: conv1 -> ReLU -> dropout(0.3) -> conv2 -> LayerNorm.
    # PyG HypergraphConv (unit hyperedge weights): D^-1 H B^-1 H^T X Theta + bias,
    # with D^-1 / B^-1 pre-folded into h_d / htb on the host (both bf16).
    h_d = h_d_ref[...]                                            # [N, N] bf16
    htb = htb_ref[...]                                            # [N, N] bf16

    xw1 = _mm(spot_tr, hg1_w[...]).astype(jnp.bfloat16)           # [N, 128]
    e1 = jnp.dot(htb, xw1, preferred_element_type=jnp.float32).astype(jnp.bfloat16)
    h1 = jnp.dot(h_d, e1, preferred_element_type=jnp.float32) + hg1_b[...]
    h1 = jnp.maximum(h1, 0.0) * drop_ref[...]                     # ReLU + dropout mask

    xw2 = _mm(h1, hg2_w[...]).astype(jnp.bfloat16)                # [N, 256]
    e2 = jnp.dot(htb, xw2, preferred_element_type=jnp.float32).astype(jnp.bfloat16)
    h2 = jnp.dot(h_d, e2, preferred_element_type=jnp.float32) + hg2_b[...]
    local_ref[...] = _layernorm(h2, hln_g[...], hln_b[...])


def stage1_forward(params, x_flat, h_d, htb, drop_mult):
    n = x_flat.shape[0]
    inputs = (x_flat,
              params["enc_w"], params["enc_b"],
              params["fc_init_w"], params["fc_init_b"],
              params["fc_final_w"], params["fc_final_b"],
              params["hg1_w"], params["hg1_b"],
              params["hg2_w"], params["hg2_b"],
              params["hg_ln_g"], params["hg_ln_b"],
              h_d, htb, drop_mult)
    out_shape = (jax.ShapeDtypeStruct((n, 256), jnp.float32),
                 jax.ShapeDtypeStruct((n, HG_OUT), jnp.float32))
    footprint = _nbytes(inputs) + 2 * n * 256 * 4
    refined, local_features = pl.pallas_call(
        _stage1_kernel,
        in_specs=[_VMEM_SPEC] * len(inputs),
        out_specs=(_VMEM_SPEC, _VMEM_SPEC),
        out_shape=out_shape,
        compiler_params=_compiler_params(footprint),
    )(*inputs)
    return refined, local_features


# ---------------------------------------------------------------------------
# Kernel 2: 3 transformer blocks (fused QKV / fused output projection) +
#           final transformer LN + all four Mlp prediction heads + 4-way mean
# ---------------------------------------------------------------------------
def _vit_heads_kernel(refined_ref, local_ref,
                      ln1_g, ln1_b, wqkv, bqkv, wproj, bproj,
                      ln2_g, ln2_b, w1, b1, w2, b2,
                      vln_g, vln_b, hw1, hb1, hw2, hb2,
                      pred_ref):
    x = local_ref[...]                                  # [N, 256] f32
    for blk in range(VIT_DEPTH):
        # --- attention: one lane-dense [256,768] QKV matmul per block; the
        # attention scale 1/sqrt(HEAD_DIM) is folded into the Q columns at init ---
        xn = _layernorm(x, ln1_g[blk], ln1_b[blk])
        qkv = _mm(xn, wqkv[blk]) + bqkv[blk]            # [N, 768] f32
        q = qkv[:, 0:EMBED_DIM]
        k = qkv[:, EMBED_DIM:2 * EMBED_DIM]
        v = qkv[:, 2 * EMBED_DIM:3 * EMBED_DIM]
        heads_out = []
        for h in range(NUM_HEADS):
            sl = slice(h * HEAD_DIM, (h + 1) * HEAD_DIM)   # static 32-lane slice
            s = _dot_t(q[:, sl].astype(jnp.bfloat16),
                       k[:, sl].astype(jnp.bfloat16))      # [N, N]
            p = _softmax_rows(s)
            heads_out.append(jnp.dot(p.astype(jnp.bfloat16),
                                     v[:, sl].astype(jnp.bfloat16),
                                     preferred_element_type=jnp.float32))
        o = jnp.concatenate(heads_out, axis=-1)         # [N, 256] lane concat
        # single K=256 output projection (was 8 K=32 matmuls)
        x = x + _mm(o, wproj[blk]) + bproj[blk]
        # --- MLP ---
        xn2 = _layernorm(x, ln2_g[blk], ln2_b[blk])
        hidden = _gelu(_mm(xn2, w1[blk]) + b1[blk])     # [N, 1024] stays in VMEM
        x = x + _mm(hidden, w2[blk]) + b2[blk]

    # --- shared prologue of the prediction heads, computed exactly once ---
    refined = refined_ref[...]
    local = local_ref[...]
    # TODO(synk): Hist2Cell's custom VisionTransformer source is unavailable; the
    # "global features" are the final-LN features of the pre-norm encoder stand-in.
    global_feats = _layernorm(x, vln_g[...], vln_b[...])
    combined = (refined + local + global_feats) * (1.0 / 3.0)

    # heads order: 0 = spot(refined), 1 = local, 2 = vit/global, 3 = fusion(mean)
    feats = (refined, local, global_feats, combined)
    acc = jnp.zeros((refined.shape[0], HEAD_PAD), jnp.float32)
    for i in range(4):
        hidden = _gelu(_mm(feats[i], hw1[i]) + hb1[i])  # [N, 1024], never leaves VMEM
        acc = acc + _mm(hidden, hw2[i]) + hb2[i]        # [N, 128] lane-dense
    pred_ref[...] = acc * 0.25                          # final 4-way prediction mean


def vit_heads_forward(refined, local_features, params):
    n = refined.shape[0]
    vp = params["vit"]
    hp = params["heads"]
    inputs = (refined, local_features,
              vp["ln1_g"], vp["ln1_b"], vp["wqkv"], vp["bqkv"],
              vp["wproj"], vp["bproj"], vp["ln2_g"], vp["ln2_b"],
              vp["w1"], vp["b1"], vp["w2"], vp["b2"],
              params["vit_ln_g"], params["vit_ln_b"],
              hp["w1"], hp["b1"], hp["w2"], hp["b2"])
    footprint = _nbytes(inputs) + n * HEAD_PAD * 4
    return pl.pallas_call(
        _vit_heads_kernel,
        in_specs=[_VMEM_SPEC] * len(inputs),
        out_specs=_VMEM_SPEC,
        out_shape=jax.ShapeDtypeStruct((n, HEAD_PAD), jnp.float32),
        compiler_params=_compiler_params(footprint),
    )(*inputs)


# ---------------------------------------------------------------------------
# Host-side graph prep: build_adj_hypergraph / compute_adjacency_matrix equivalent
# ---------------------------------------------------------------------------
def build_hypergraph_operators(edges, pos, num_nodes):
    edges = np.asarray(edges)
    pos = np.asarray(pos, dtype=np.float64)
    A = np.zeros((num_nodes, num_nodes), dtype=np.float64)
    for e in range(edges.shape[1]):
        a, b = int(edges[0, e]), int(edges[1, e])
        d = float(np.linalg.norm(pos[a] - pos[b]))
        A[a, b] = d
        A[b, a] = d
    max_d = A.max()
    if max_d > 0:                      # guard against edge-less graphs
        A = A / max_d
    keep = np.nonzero(A.sum(axis=1) > 0)[0]
    # TODO(synk): isolated-node graphs are not filtered here (the downstream fusion
    # in the reference would shape-mismatch anyway); the example ring graph keeps all.
    assert keep.size == num_nodes, "example graph keeps every node (as the reference assumes)"
    A = A[keep][:, keep]
    H = (A > 0).astype(np.float64)     # incidence: hyperedge j = neighbourhood of node j
    # TODO(synk): the reference passes per-incidence distances as PyG hyperedge_weight,
    # which PyG would mis-index; unit hyperedge weights (PyG default) are used here.
    edge_deg = H.sum(axis=0)           # B
    node_deg = H.sum(axis=1)           # D
    b_inv = np.where(edge_deg > 0, 1.0 / np.maximum(edge_deg, 1e-12), 0.0)
    d_inv = np.where(node_deg > 0, 1.0 / np.maximum(node_deg, 1e-12), 0.0)
    # Fold the degree normalizations into the incidence operators; store the only
    # O(N^2) operands as bf16 (MXU would demote f32 anyway; halves HBM/VMEM traffic).
    H_d = (d_inv[:, None] * H).astype(np.float32)      # D^-1 H
    HtB = (b_inv[:, None] * H.T).astype(np.float32)    # B^-1 H^T
    return (jnp.asarray(H_d, dtype=jnp.bfloat16),
            jnp.asarray(HtB, dtype=jnp.bfloat16))


# ---------------------------------------------------------------------------
# Parameters (deterministic synthetic init; weights bf16, biases/LN params f32)
# ---------------------------------------------------------------------------
def init_params(seed=0, img_feat=3 * 16 * 16):
    keys = iter(jax.random.split(jax.random.PRNGKey(seed), 128))

    def w_f32(shape):
        return jax.random.normal(next(keys), shape, jnp.float32) * 0.02

    def lin(fan_in, fan_out, pad_to=None):
        w = w_f32((fan_in, fan_out))
        b = jnp.zeros((fan_out,), jnp.float32)
        if pad_to is not None and pad_to > fan_out:
            w = jnp.pad(w, ((0, 0), (0, pad_to - fan_out)))
            b = jnp.pad(b, (0, pad_to - fan_out))
        return w.astype(jnp.bfloat16), b.reshape(1, -1)

    p = {}
    p["enc_w"], p["enc_b"] = lin(img_feat, 1536)           # tile-encoder stand-in
    p["fc_init_w"], p["fc_init_b"] = lin(1536, 512)        # spot_fc_initial
    p["hg1_w"], p["hg1_b"] = lin(512, HG_HIDDEN)           # HypergraphConv(512,128)
    p["hg2_w"], p["hg2_b"] = lin(HG_HIDDEN, HG_OUT)        # HypergraphConv(128,256)
    p["hg_ln_g"] = jnp.ones((1, HG_OUT), jnp.float32)
    p["hg_ln_b"] = jnp.zeros((1, HG_OUT), jnp.float32)
    p["fc_final_w"], p["fc_final_b"] = lin(512, 256)       # spot_fc_final

    # Transformer blocks stacked along a leading depth axis (single fused kernel).
    # QKV is stored as one [256, 768] bf16 weight per block (Q | K | V, head-major
    # 32-lane groups) so each block does ONE lane-dense QKV matmul; the attention
    # scale 1/sqrt(HEAD_DIM) is folded into the Q columns (and would-be Q bias).
    scale = 1.0 / float(HEAD_DIM) ** 0.5
    vit = {k: [] for k in ("ln1_g", "ln1_b", "wqkv", "bqkv", "wproj", "bproj",
                           "ln2_g", "ln2_b", "w1", "b1", "w2", "b2")}
    for _ in range(VIT_DEPTH):
        vit["ln1_g"].append(jnp.ones((1, EMBED_DIM), jnp.float32))
        vit["ln1_b"].append(jnp.zeros((1, EMBED_DIM), jnp.float32))
        wq = w_f32((EMBED_DIM, EMBED_DIM)) * scale          # scale folded into Wq
        wk = w_f32((EMBED_DIM, EMBED_DIM))
        wv = w_f32((EMBED_DIM, EMBED_DIM))
        vit["wqkv"].append(jnp.concatenate([wq, wk, wv], axis=1).astype(jnp.bfloat16))
        vit["bqkv"].append(jnp.zeros((1, 3 * EMBED_DIM), jnp.float32))
        vit["wproj"].append(w_f32((EMBED_DIM, EMBED_DIM)).astype(jnp.bfloat16))
        vit["bproj"].append(jnp.zeros((1, EMBED_DIM), jnp.float32))
        vit["ln2_g"].append(jnp.ones((1, EMBED_DIM), jnp.float32))
        vit["ln2_b"].append(jnp.zeros((1, EMBED_DIM), jnp.float32))
        w, b = lin(EMBED_DIM, 4 * EMBED_DIM)
        vit["w1"].append(w); vit["b1"].append(b)
        w, b = lin(4 * EMBED_DIM, EMBED_DIM)
        vit["w2"].append(w); vit["b2"].append(b)
    p["vit"] = {k: jnp.stack(v) for k, v in vit.items()}

    p["vit_ln_g"] = jnp.ones((1, EMBED_DIM), jnp.float32)
    p["vit_ln_b"] = jnp.zeros((1, EMBED_DIM), jnp.float32)

    # prediction heads stacked along a leading head axis (single kernel step):
    # order = [spot, local, vit-global, fusion]; fc2 zero-padded 80 -> 128 lanes.
    hw1, hb1, hw2, hb2 = [], [], [], []
    for _ in range(4):
        w, b = lin(EMBED_DIM, 1024)
        hw1.append(w); hb1.append(b)
        w, b = lin(1024, CELL_DIM, pad_to=HEAD_PAD)
        hw2.append(w); hb2.append(b)
    p["heads"] = {"w1": jnp.stack(hw1), "b1": jnp.stack(hb1),
                  "w2": jnp.stack(hw2), "b2": jnp.stack(hb2)}
    return p


# ---------------------------------------------------------------------------
# Model forward (2 pallas_call launches total)
# ---------------------------------------------------------------------------
def hpcell_forward(params, input_data, edges, positions, dropout_seed=0):
    n = input_data.shape[0]

    # TODO(synk): prov-gigapath pretrained ViT tile encoder is not reproducible here;
    # replaced by a deterministic linear projection of the flattened NCHW image -> 1536.
    x_flat = input_data.reshape(n, -1).astype(jnp.float32)

    # build_adj_hypergraph / compute_adjacency_matrix equivalent (host-side data prep).
    h_d, htb = build_hypergraph_operators(edges, positions, n)

    # F.dropout(0.3, training=True): mask drawn with jax.random and handed to the kernel.
    # TODO(synk): in-kernel pltpu.prng_* has no CPU/interpret lowering, so the mask is
    # generated host-side; dropout semantics preserved, RNG stream differs from torch.
    keep = jax.random.bernoulli(jax.random.PRNGKey(dropout_seed),
                                p=1.0 - DROP_RATE, shape=(n, HG_HIDDEN))
    drop_mult = keep.astype(jnp.float32) / (1.0 - DROP_RATE)

    # kernel 1: encoder stand-in + spot_fc_initial/final + fused hypergraph branch.
    refined, local_features = stage1_forward(params, x_flat, h_d, htb, drop_mult)

    # kernel 2: transformer blocks + final LN + all four Mlp heads + 4-way mean.
    # TODO(synk): Hist2Cell's custom VisionTransformer source is unavailable; implemented
    # as a standard pre-norm encoder (depth=3, 8 heads, MLP ratio 4); drop/attn-drop off.
    preds = vit_heads_forward(refined, local_features, params)

    # tiny epilogue: un-pad 128 -> 80 prediction lanes.
    return preds[:, :CELL_DIM]


# ---------------------------------------------------------------------------
if __name__ == "__main__":
    N, C, S = 8, 3, 16
    key = jax.random.PRNGKey(0)
    k_img, k_pos = jax.random.split(key)

    input_data = jax.random.normal(k_img, (N, C, S, S), jnp.float32)      # NCHW
    positions = np.asarray(jax.random.uniform(k_pos, (N, 2), jnp.float32)) * 10.0
    edges = np.stack([np.arange(N), (np.arange(N) + 1) % N]).astype(np.int64)  # ring graph

    params = init_params(seed=0, img_feat=C * S * S)
    out = hpcell_forward(params, input_data, edges, positions)
    out = jax.block_until_ready(out)
    assert out.shape == (N, CELL_DIM) and out.dtype == jnp.float32
    assert bool(jnp.all(jnp.isfinite(out)))
    print("KERNEL_OK")
</pallas_src>

<mosaic_0001>
module attributes {stable_mosaic.version = 11 : i64} {
  func.func @_stage1_kernel(%arg0: memref<8x768xf32, #tpu.memory_space<vmem>>, %arg1: memref<768x1536xbf16, #tpu.memory_space<vmem>>, %arg2: memref<1x1536xf32, #tpu.memory_space<vmem>>, %arg3: memref<1536x512xbf16, #tpu.memory_space<vmem>>, %arg4: memref<1x512xf32, #tpu.memory_space<vmem>>, %arg5: memref<512x256xbf16, #tpu.memory_space<vmem>>, %arg6: memref<1x256xf32, #tpu.memory_space<vmem>>, %arg7: memref<512x128xbf16, #tpu.memory_space<vmem>>, %arg8: memref<1x128xf32, #tpu.memory_space<vmem>>, %arg9: memref<128x256xbf16, #tpu.memory_space<vmem>>, %arg10: memref<1x256xf32, #tpu.memory_space<vmem>>, %arg11: memref<1x256xf32, #tpu.memory_space<vmem>>, %arg12: memref<1x256xf32, #tpu.memory_space<vmem>>, %arg13: memref<8x8xbf16, #tpu.memory_space<vmem>>, %arg14: memref<8x8xbf16, #tpu.memory_space<vmem>>, %arg15: memref<8x128xf32, #tpu.memory_space<vmem>>, %arg16: memref<8x256xf32, #tpu.memory_space<vmem>>, %arg17: memref<8x256xf32, #tpu.memory_space<vmem>>) attributes {dimension_semantics = [], scalar_prefetch = 0 : i64, scratch_operands = 0 : i64, tpu.core_type = #tpu.core_type<tc>} {
    %c0 = arith.constant 0 : index
    %c0_0 = arith.constant 0 : index
    %0 = vector.load %arg0[%c0, %c0_0] : memref<8x768xf32, #tpu.memory_space<vmem>>, vector<8x768xf32>
    %c0_1 = arith.constant 0 : index
    %c0_2 = arith.constant 0 : index
    %1 = vector.load %arg1[%c0_1, %c0_2] : memref<768x1536xbf16, #tpu.memory_space<vmem>>, vector<768x1536xbf16>
    %2 = arith.truncf %0 : vector<8x768xf32> to vector<8x768xbf16>
    %cst = arith.constant dense<0.000000e+00> : vector<8x1536xf32>
    %3 = tpu.matmul %2, %1, %cst {dimension_numbers = #tpu.dot_dimension_numbers<[1], [0], [0], [1], [0, 0, 1, 1], [], []>} : vector<8x768xbf16>, vector<768x1536xbf16>, vector<8x1536xf32> -> vector<8x1536xf32>
    %c0_3 = arith.constant 0 : index
    %c0_4 = arith.constant 0 : index
    %4 = vector.load %arg2[%c0_3, %c0_4] : memref<1x1536xf32, #tpu.memory_space<vmem>>, vector<1x1536xf32>
    %5 = vector.broadcast %4 : vector<1x1536xf32> to vector<8x1536xf32>
    %6 = arith.addf %3, %5 : vector<8x1536xf32>
    %c0_5 = arith.constant 0 : index
    %c0_6 = arith.constant 0 : index
    %7 = vector.load %arg3[%c0_5, %c0_6] : memref<1536x512xbf16, #tpu.memory_space<vmem>>, vector<1536x512xbf16>
    %8 = arith.truncf %6 : vector<8x1536xf32> to vector<8x1536xbf16>
    %cst_7 = arith.constant dense<0.000000e+00> : vector<8x512xf32>
    %9 = tpu.matmul %8, %7, %cst_7 {dimension_numbers = #tpu.dot_dimension_numbers<[1], [0], [0], [1], [0, 0, 1, 1], [], []>} : vector<8x1536xbf16>, vector<1536x512xbf16>, vector<8x512xf32> -> vector<8x512xf32>
    %c0_8 = arith.constant 0 : index
    %c0_9 = arith.constant 0 : index
    %10 = vector.load %arg4[%c0_8, %c0_9] : memref<1x512xf32, #tpu.memory_space<vmem>>, vector<1x512xf32>
    %11 = vector.broadcast %10 : vector<1x512xf32> to vector<8x512xf32>
    %12 = arith.addf %9, %11 : vector<8x512xf32>
    %c0_10 = arith.constant 0 : index
    %c0_11 = arith.constant 0 : index
    %13 = vector.load %arg5[%c0_10, %c0_11] : memref<512x256xbf16, #tpu.memory_space<vmem>>, vector<512x256xbf16>
    %14 = arith.truncf %12 : vector<8x512xf32> to vector<8x512xbf16>
    %cst_12 = arith.constant dense<0.000000e+00> : vector<8x256xf32>
    %15 = tpu.matmul %14, %13, %cst_12 {dimension_numbers = #tpu.dot_dimension_numbers<[1], [0], [0], [1], [0, 0, 1, 1], [], []>} : vector<8x512xbf16>, vector<512x256xbf16>, vector<8x256xf32> -> vector<8x256xf32>
    %c0_13 = arith.constant 0 : index
    %c0_14 = arith.constant 0 : index
    %16 = vector.load %arg6[%c0_13, %c0_14] : memref<1x256xf32, #tpu.memory_space<vmem>>, vector<1x256xf32>
    %17 = vector.broadcast %16 : vector<1x256xf32> to vector<8x256xf32>
    %18 = arith.addf %15, %17 : vector<8x256xf32>
    %c0_15 = arith.constant 0 : index
    %c0_16 = arith.constant 0 : index
    %19 = vector.load %arg16[%c0_15, %c0_16] : memref<8x256xf32, #tpu.memory_space<vmem>>, vector<8x256xf32>
    tpu.vector_store %arg16[%c0_15, %c0_16], %18 {strides = array<i32>} : memref<8x256xf32, #tpu.memory_space<vmem>>, vector<8x256xf32>,
    %c0_17 = arith.constant 0 : index
    %c0_18 = arith.constant 0 : index
    %20 = vector.load %arg13[%c0_17, %c0_18] : memref<8x8xbf16, #tpu.memory_space<vmem>>, vector<8x8xbf16>
    %c0_19 = arith.constant 0 : index
    %c0_20 = arith.constant 0 : index
    %21 = vector.load %arg14[%c0_19, %c0_20] : memref<8x8xbf16, #tpu.memory_space<vmem>>, vector<8x8xbf16>
    %c0_21 = arith.constant 0 : index
    %c0_22 = arith.constant 0 : index
    %22 = vector.load %arg7[%c0_21, %c0_22] : memref<512x128xbf16, #tpu.memory_space<vmem>>, vector<512x128xbf16>
    %23 = arith.truncf %12 : vector<8x512xf32> to vector<8x512xbf16>
    %cst_23 = arith.constant dense<0.000000e+00> : vector<8x128xf32>
    %24 = tpu.matmul %23, %22, %cst_23 {dimension_numbers = #tpu.dot_dimension_numbers<[1], [0], [0], [1], [0, 0, 1, 1], [], []>} : vector<8x512xbf16>, vector<512x128xbf16>, vector<8x128xf32> -> vector<8x128xf32>
    %25 = arith.truncf %24 : vector<8x128xf32> to vector<8x128xbf16>
    %cst_24 = arith.constant dense<0.000000e+00> : vector<8x128xf32>
    %26 = tpu.matmul %21, %25, %cst_24 {dimension_numbers = #tpu.dot_dimension_numbers<[1], [0], [0], [1], [0, 0, 1, 1], [], []>} : vector<8x8xbf16>, vector<8x128xbf16>, vector<8x128xf32> -> vector<8x128xf32>
    %27 = arith.truncf %26 : vector<8x128xf32> to vector<8x128xbf16>
    %cst_25 = arith.constant dense<0.000000e+00> : vector<8x128xf32>
    %28 = tpu.matmul %20, %27, %cst_25 {dimension_numbers = #tpu.dot_dimension_numbers<[1], [0], [0], [1], [0, 0, 1, 1], [], []>} : vector<8x8xbf16>, vector<8x128xbf16>, vector<8x128xf32> -> vector<8x128xf32>
    %c0_26 = arith.constant 0 : index
    %c0_27 = arith.constant 0 : index
    %29 = vector.load %arg8[%c0_26, %c0_27] : memref<1x128xf32, #tpu.memory_space<vmem>>, vector<1x128xf32>
    %30 = vector.broadcast %29 : vector<1x128xf32> to vector<8x128xf32>
    %31 = arith.addf %28, %30 : vector<8x128xf32>
    %cst_28 = arith.constant 0.000000e+00 : f32
    %32 = vector.broadcast %cst_28 : f32 to vector<8x128xf32>
    %33 = arith.maximumf %31, %32 : vector<8x128xf32>
    %c0_29 = arith.constant 0 : index
    %c0_30 = arith.constant 0 : index
    %34 = vector.load %arg15[%c0_29, %c0_30] : memref<8x128xf32, #tpu.memory_space<vmem>>, vector<8x128xf32>
    %35 = arith.mulf %33, %34 : vector<8x128xf32>
    %c0_31 = arith.constant 0 : index
    %c0_32 = arith.constant 0 : index
    %36 = vector.load %arg9[%c0_31, %c0_32] : memref<128x256xbf16, #tpu.memory_space<vmem>>, vector<128x256xbf16>
    %37 = arith.truncf %35 : vector<8x128xf32> to vector<8x128xbf16>
    %cst_33 = arith.constant dense<0.000000e+00> : vector<8x256xf32>
    %38 = tpu.matmul %37, %36, %cst_33 {dimension_numbers = #tpu.dot_dimension_numbers<[1], [0], [0], [1], [0, 0, 1, 1], [], []>} : vector<8x128xbf16>, vector<128x256xbf16>, vector<8x256xf32> -> vector<8x256xf32>
    %39 = arith.truncf %38 : vector<8x256xf32> to vector<8x256xbf16>
    %cst_34 = arith.constant dense<0.000000e+00> : vector<8x256xf32>
    %40 = tpu.matmul %21, %39, %cst_34 {dimension_numbers = #tpu.dot_dimension_numbers<[1], [0], [0], [1], [0, 0, 1, 1], [], []>} : vector<8x8xbf16>, vector<8x256xbf16>, vector<8x256xf32> -> vector<8x256xf32>
    %41 = arith.truncf %40 : vector<8x256xf32> to vector<8x256xbf16>
    %cst_35 = arith.constant dense<0.000000e+00> : vector<8x256xf32>
    %42 = tpu.matmul %20, %41, %cst_35 {dimension_numbers = #tpu.dot_dimension_numbers<[1], [0], [0], [1], [0, 0, 1, 1], [], []>} : vector<8x8xbf16>, vector<8x256xbf16>, vector<8x256xf32> -> vector<8x256xf32>
    %c0_36 = arith.constant 0 : index
    %c0_37 = arith.constant 0 : index
    %43 = vector.load %arg10[%c0_36, %c0_37] : memref<1x256xf32, #tpu.memory_space<vmem>>, vector<1x256xf32>
    %44 = vector.broadcast %43 : vector<1x256xf32> to vector<8x256xf32>
    %45 = arith.addf %42, %44 : vector<8x256xf32>
    %c0_38 = arith.constant 0 : index
    %c0_39 = arith.constant 0 : index
    %46 = vector.load %arg11[%c0_38, %c0_39] : memref<1x256xf32, #tpu.memory_space<vmem>>, vector<1x256xf32>
    %c0_40 = arith.constant 0 : index
    %c0_41 = arith.constant 0 : index
    %47 = vector.load %arg12[%c0_40, %c0_41] : memref<1x256xf32, #tpu.memory_space<vmem>>, vector<1x256xf32>
    %cst_42 = arith.constant dense<0.000000e+00> : vector<8xf32>
    %48 = vector.multi_reduction <add>, %45, %cst_42 [1] : vector<8x256xf32> to vector<8xf32>
    %49 = vector.shape_cast %48 : vector<8xf32> to vector<8x1xf32>
    %cst_43 = arith.constant 2.560000e+02 : f32
    %50 = vector.broadcast %cst_43 : f32 to vector<8x1xf32>
    %51 = arith.divf %49, %50 : vector<8x1xf32>
    %52 = vector.broadcast %51 : vector<8x1xf32> to vector<8x256xf32>
    %53 = arith.subf %45, %52 : vector<8x256xf32>
    %54 = arith.mulf %53, %53 : vector<8x256xf32>
    %cst_44 = arith.constant dense<0.000000e+00> : vector<8xf32>
    %55 = vector.multi_reduction <add>, %54, %cst_44 [1] : vector<8x256xf32> to vector<8xf32>
    %56 = vector.shape_cast %55 : vector<8xf32> to vector<8x1xf32>
    %cst_45 = arith.constant 2.560000e+02 : f32
    %57 = vector.broadcast %cst_45 : f32 to vector<8x1xf32>
    %58 = arith.divf %56, %57 : vector<8x1xf32>
    %cst_46 = arith.constant 9.99999974E-6 : f32
    %59 = vector.broadcast %cst_46 : f32 to vector<8x1xf32>
    %60 = arith.addf %58, %59 : vector<8x1xf32>
    %61 = math.rsqrt %60 : vector<8x1xf32>
    %62 = vector.broadcast %61 : vector<8x1xf32> to vector<8x256xf32>
    %63 = arith.mulf %53, %62 : vector<8x256xf32>
    %64 = vector.broadcast %46 : vector<1x256xf32> to vector<8x256xf32>
    %65 = arith.mulf %63, %64 : vector<8x256xf32>
    %66 = vector.broadcast %47 : vector<1x256xf32> to vector<8x256xf32>
    %67 = arith.addf %65, %66 : vector<8x256xf32>
    %c0_47 = arith.constant 0 : index
    %c0_48 = arith.constant 0 : index
    %68 = vector.load %arg17[%c0_47, %c0_48] : memref<8x256xf32, #tpu.memory_space<vmem>>, vector<8x256xf32>
    tpu.vector_store %arg17[%c0_47, %c0_48], %67 {strides = array<i32>} : memref<8x256xf32, #tpu.memory_space<vmem>>, vector<8x256xf32>,
    return
  }
}

</mosaic_0001>

<llo_original>
// kernel: tpu_custom_call.1
$region0: #{tpu_custom_call.1}
  #allocation0 [shape = 'u32[]', space=smem, size = 0x4, offset = 0x4, fixed_abs, tag = 'smem constant byte address 0x4 - core index']
  #allocation1 [shape = 'u32[72,128]{1,0:T(1,128)}', space=vmem, size = 0x9000, scoped, tag = 'internal scratch']
  %s0 = inlined_call_operand.hbm [shape: f32[8,768], index: 0, kind: input, shape index: {}]
  %s1 = inlined_call_operand.hbm [shape: bf16[768,1536], index: 1, kind: input, shape index: {}]
  %s2 = inlined_call_operand.hbm [shape: f32[1,1536], index: 2, kind: input, shape index: {}]
  %s3 = inlined_call_operand.hbm [shape: bf16[1536,512], index: 3, kind: input, shape index: {}]
  %s4 = inlined_call_operand.hbm [shape: f32[1,512], index: 4, kind: input, shape index: {}]
  %s5 = inlined_call_operand.hbm [shape: bf16[512,256], index: 5, kind: input, shape index: {}]
  %s6 = inlined_call_operand.hbm [shape: f32[1,256], index: 6, kind: input, shape index: {}]
  %s7 = inlined_call_operand.hbm [shape: bf16[512,128], index: 7, kind: input, shape index: {}]
  %s8 = inlined_call_operand.hbm [shape: f32[1,128], index: 8, kind: input, shape index: {}]
  %s9 = inlined_call_operand.hbm [shape: bf16[128,256], index: 9, kind: input, shape index: {}]
  %s10 = inlined_call_operand.hbm [shape: f32[1,256], index: 10, kind: input, shape index: {}]
  %s11 = inlined_call_operand.hbm [shape: f32[1,256], index: 11, kind: input, shape index: {}]
  %s12 = inlined_call_operand.hbm [shape: f32[1,256], index: 12, kind: input, shape index: {}]
  %s13 = inlined_call_operand.hbm [shape: bf16[8,8], index: 13, kind: input, shape index: {}]
  %s14 = inlined_call_operand.hbm [shape: bf16[8,8], index: 14, kind: input, shape index: {}]
  %s15 = inlined_call_operand.hbm [shape: f32[8,128], index: 15, kind: input, shape index: {}]
  %s16 = inlined_call_operand.hbm [shape: f32[8,256], index: 16, kind: output, shape index: {0}]
  %s17 = inlined_call_operand.hbm [shape: f32[8,256], index: 17, kind: output, shape index: {1}]
  %18 = xla_tuple %s16, %s17
  %s19 = sld [smem:[#allocation0]]
  $region146: #{tpu_custom_call.1} parent=0
    _
  %s21 = ssub.s32 1, %s19
  %s22 = scalar_select 0, %s21, %s19
  $region1: #{tpu_custom_call.1} parent=0
    #allocation2 [shape = 'u8[24576]{0}', space=vmem, size = 0x6000, scoped, tag = 'input window, operand 0, single buffered']
    #allocation3 [shape = 's32[1]{0}', space=sflag, size = 0x4, scoped, tag = 'scoped memory for tpu_custom_call.1']
    #allocation4 [shape = 's32[1]{0}', space=sflag, size = 0x4, scoped, tag = 'scoped memory for tpu_custom_call.1']
    #allocation5 [shape = 'u8[2359296]{0}', space=vmem, size = 0x240000, scoped, tag = 'input window, operand 1, single buffered']
    #allocation6 [shape = 's32[1]{0}', space=sflag, size = 0x4, scoped, tag = 'scoped memory for tpu_custom_call.1']
    #allocation7 [shape = 'u8[6144]{0}', space=vmem, size = 0x1800, scoped, tag = 'input window, operand 2, single buffered']
    #allocation8 [shape = 'u8[1572864]{0}', space=vmem, size = 0x180000, scoped, tag = 'input window, operand 3, single buffered']
    #allocation9 [shape = 's32[1]{0}', space=sflag, size = 0x4, scoped, tag = 'scoped memory for tpu_custom_call.1']
    #allocation10 [shape = 'u8[2048]{0}', space=vmem, size = 0x800, scoped, tag = 'input window, operand 4, single buffered']
    #allocation11 [shape = 'u8[262144]{0}', space=vmem, size = 0x40000, scoped, tag = 'input window, operand 5, single buffered']
    #allocation12 [shape = 's32[1]{0}', space=sflag, size = 0x4, scoped, tag = 'scoped memory for tpu_custom_call.1']
    #allocation13 [shape = 'u8[1024]{0}', space=vmem, size = 0x400, scoped, tag = 'input window, operand 6, single buffered']
    #allocation14 [shape = 'u8[131072]{0}', space=vmem, size = 0x20000, scoped, tag = 'input window, operand 7, single buffered']
    #allocation15 [shape = 's32[1]{0}', space=sflag, size = 0x4, scoped, tag = 'scoped memory for tpu_custom_call.1']
    #allocation16 [shape = 'u8[512]{0}', space=vmem, size = 0x400, scoped, tag = 'input window, operand 8, single buffered']
    #allocation17 [shape = 'u8[65536]{0}', space=vmem, size = 0x10000, scoped, tag = 'input window, operand 9, single buffered']
    #allocation18 [shape = 's32[1]{0}', space=sflag, size = 0x4, scoped, tag = 'scoped memory for tpu_custom_call.1']
    #allocation19 [shape = 'u8[1024]{0}', space=vmem, size = 0x400, scoped, tag = 'input window, operand 10, single buffered']
    #allocation20 [shape = 'u8[1024]{0}', space=vmem, size = 0x400, scoped, tag = 'input window, operand 11, single buffered']
    #allocation21 [shape = 's32[1]{0}', space=sflag, size = 0x4, scoped, tag = 'scoped memory for tpu_custom_call.1']
    #allocation22 [shape = 'u8[1024]{0}', space=vmem, size = 0x400, scoped, tag = 'input window, operand 12, single buffered']
    #allocation23 [shape = 'u8[2048]{0}', space=vmem, size = 0x800, scoped, tag = 'input window, operand 13, single buffered']
    #allocation24 [shape = 's32[1]{0}', space=sflag, size = 0x4, scoped, tag = 'scoped memory for tpu_custom_call.1']
    #allocation25 [shape = 'u8[2048]{0}', space=vmem, size = 0x800, scoped, tag = 'input window, operand 14, single buffered']
    #allocation26 [shape = 'u8[4096]{0}', space=vmem, size = 0x1000, scoped, tag = 'input window, operand 15, single buffered']
    #allocation27 [shape = 's32[1]{0}', space=sflag, size = 0x4, scoped, tag = 'scoped memory for tpu_custom_call.1']
    #allocation28 [shape = 'u8[8192]{0}', space=vmem, size = 0x2000, scoped, tag = 'output window, operand 0, single buffered']
    #allocation29 [shape = 'u8[8192]{0}', space=vmem, size = 0x2000, scoped, tag = 'output window, operand 1, single buffered']
    #allocation30 [shape = 's32[1]{0}', space=sflag, size = 0x4, scoped, tag = 'scoped memory for tpu_custom_call.1']
    %23 = vsyncpa [#allocation3], 0
    %24 = vsyncpa [#allocation6], 0
    %25 = vsyncpa [#allocation9], 0
    %26 = vsyncpa [#allocation12], 0
    %27 = vsyncpa [#allocation15], 0
    %28 = vsyncpa [#allocation18], 0
    %29 = vsyncpa [#allocation21], 0
    %30 = vsyncpa [#allocation24], 0
    %31 = vsyncpa [#allocation27], 0
    %32 = vsyncpa [#allocation4], 0
    %33 = vsyncpa [#allocation30], 0
    // Predicated region
    $region2: #{tpu_custom_call.1} parent=1 // pred_check
      _
    $region3: #{tpu_custom_call.1} parent=1 // pred_check_branch
      %35 = sbr.rel (0) target = $region5
    $region4: #{tpu_custom_call.1} parent=1 // pred_region
      %37 = vsyncadd [#allocation3], 0
      %s39 = sshll.u32 %s0, 4
      %s40 = int_to_ptr.hbm [resolvable:$true] %s39
      %s41 = sshll.u32 [#allocation2], 4
      %s42 = int_to_ptr.vmem [resolvable:$true] %s41
      %44 = dma.hbm_to_vmem [thread:$0]  %s40, 768, %s42, [#allocation3]
    $region5: #{tpu_custom_call.1} parent=1 // pred_fallthru
      _
    // Predicated region
    $region6: #{tpu_custom_call.1} parent=1 // pred_check
      _
    $region7: #{tpu_custom_call.1} parent=1 // pred_check_branch
      %46 = sbr.rel (0) target = $region9
    $region8: #{tpu_custom_call.1} parent=1 // pred_region
      %48 = vsyncadd [#allocation6], 0
      %s49 = sshll.u32 %s1, 4
      %s50 = int_to_ptr.hbm [resolvable:$true] %s49
      %s51 = sshll.u32 [#allocation5], 4
      %s52 = int_to_ptr.vmem [resolvable:$true] %s51
      %57 = dma.hbm_to_vmem [thread:$0]  %s50, 73728, %s52, [#allocation6], 768, 768, 48
    $region9: #{tpu_custom_call.1} parent=1 // pred_fallthru
      _
    // Predicated region
    $region10: #{tpu_custom_call.1} parent=1 // pred_check
      _
    $region11: #{tpu_custom_call.1} parent=1 // pred_check_branch
      %59 = sbr.rel (0) target = $region13
    $region12: #{tpu_custom_call.1} parent=1 // pred_region
      %61 = vsyncadd [#allocation6], 0
      %s63 = sshll.u32 %s2, 4
      %s64 = int_to_ptr.hbm [resolvable:$true] %s63
      %s65 = sshll.u32 [#allocation7], 4
      %s66 = int_to_ptr.vmem [resolvable:$true] %s65
      %68 = dma.hbm_to_vmem [thread:$0]  %s64, 192, %s66, [#allocation6]
    $region13: #{tpu_custom_call.1} parent=1 // pred_fallthru
      _
    // Predicated region
    $region14: #{tpu_custom_call.1} parent=1 // pred_check
      _
    $region15: #{tpu_custom_call.1} parent=1 // pred_check_branch
      %70 = sbr.rel (0) target = $region17
    $region16: #{tpu_custom_call.1} parent=1 // pred_region
      %72 = vsyncadd [#allocation9], 0
      %s73 = sshll.u32 %s3, 4
      %s74 = int_to_ptr.hbm [resolvable:$true] %s73
      %s75 = sshll.u32 [#allocation8], 4
      %s76 = int_to_ptr.vmem [resolvable:$true] %s75
      %81 = dma.hbm_to_vmem [thread:$0]  %s74, 49152, %s76, [#allocation9], 256, 256, 16
    $region17: #{tpu_custom_call.1} parent=1 // pred_fallthru
      _
    // Predicated region
    $region18: #{tpu_custom_call.1} parent=1 // pred_check
      _
    $region19: #{tpu_custom_call.1} parent=1 // pred_check_branch
      %83 = sbr.rel (0) target = $region21
    $region20: #{tpu_custom_call.1} parent=1 // pred_region
      %85 = vsyncadd [#allocation9], 0
      %s87 = sshll.u32 %s4, 4
      %s88 = int_to_ptr.hbm [resolvable:$true] %s87
      %s89 = sshll.u32 [#allocation10], 4
      %s90 = int_to_ptr.vmem [resolvable:$true] %s89
      %92 = dma.hbm_to_vmem [thread:$0]  %s88, 64, %s90, [#allocation9]
    $region21: #{tpu_custom_call.1} parent=1 // pred_fallthru
      _
    // Predicated region
    $region22: #{tpu_custom_call.1} parent=1 // pred_check
      _
    $region23: #{tpu_custom_call.1} parent=1 // pred_check_branch
      %94 = sbr.rel (0) target = $region25
    $region24: #{tpu_custom_call.1} parent=1 // pred_region
      %96 = vsyncadd [#allocation12], 0
      %s97 = sshll.u32 %s5, 4
      %s98 = int_to_ptr.hbm [resolvable:$true] %s97
      %s99 = sshll.u32 [#allocation11], 4
      %s100 = int_to_ptr.vmem [resolvable:$true] %s99
      %105 = dma.hbm_to_vmem [thread:$0]  %s98, 8192, %s100, [#allocation12], 128, 128, 8
    $region25: #{tpu_custom_call.1} parent=1 // pred_fallthru
      _
    // Predicated region
    $region26: #{tpu_custom_call.1} parent=1 // pred_check
      _
    $region27: #{tpu_custom_call.1} parent=1 // pred_check_branch
      %107 = sbr.rel (0) target = $region29
    $region28: #{tpu_custom_call.1} parent=1 // pred_region
      %109 = vsyncadd [#allocation12], 0
      %s111 = sshll.u32 %s6, 4
      %s112 = int_to_ptr.hbm [resolvable:$true] %s111
      %s113 = sshll.u32 [#allocation13], 4
      %s114 = int_to_ptr.vmem [resolvable:$true] %s113
      %116 = dma.hbm_to_vmem [thread:$0]  %s112, 32, %s114, [#allocation12]
    $region29: #{tpu_custom_call.1} parent=1 // pred_fallthru
      _
    // Predicated region
    $region30: #{tpu_custom_call.1} parent=1 // pred_check
      _
    $region31: #{tpu_custom_call.1} parent=1 // pred_check_branch
      %118 = sbr.rel (0) target = $region33
    $region32: #{tpu_custom_call.1} parent=1 // pred_region
      %120 = vsyncadd [#allocation15], 0
      %s121 = sshll.u32 %s7, 4
      %s122 = int_to_ptr.hbm [resolvable:$true] %s121
      %s123 = sshll.u32 [#allocation14], 4
      %s124 = int_to_ptr.vmem [resolvable:$true] %s123
      %129 = dma.hbm_to_vmem [thread:$0]  %s122, 4096, %s124, [#allocation15], 64, 64, 4
    $region33: #{tpu_custom_call.1} parent=1 // pred_fallthru
      _
    // Predicated region
    $region34: #{tpu_custom_call.1} parent=1 // pred_check
      _
    $region35: #{tpu_custom_call.1} parent=1 // pred_check_branch
      %131 = sbr.rel (0) target = $region37
    $region36: #{tpu_custom_call.1} parent=1 // pred_region
      %133 = vsyncadd [#allocation15], 0
      %s135 = sshll.u32 %s8, 4
      %s136 = int_to_ptr.hbm [resolvable:$true] %s135
      %s137 = sshll.u32 [#allocation16], 4
      %s138 = int_to_ptr.vmem [resolvable:$true] %s137
      %140 = dma.hbm_to_vmem [thread:$0]  %s136, 16, %s138, [#allocation15]
    $region37: #{tpu_custom_call.1} parent=1 // pred_fallthru
      _
    // Predicated region
    $region38: #{tpu_custom_call.1} parent=1 // pred_check
      _
    $region39: #{tpu_custom_call.1} parent=1 // pred_check_branch
      %142 = sbr.rel (0) target = $region41
    $region40: #{tpu_custom_call.1} parent=1 // pred_region
      %144 = vsyncadd [#allocation18], 0
      %s145 = sshll.u32 %s9, 4
      %s146 = int_to_ptr.hbm [resolvable:$true] %s145
      %s147 = sshll.u32 [#allocation17], 4
      %s148 = int_to_ptr.vmem [resolvable:$true] %s147
      %153 = dma.hbm_to_vmem [thread:$0]  %s146, 2048, %s148, [#allocation18], 128, 128, 8
    $region41: #{tpu_custom_call.1} parent=1 // pred_fallthru
      _
    // Predicated region
    $region42: #{tpu_custom_call.1} parent=1 // pred_check
      _
    $region43: #{tpu_custom_call.1} parent=1 // pred_check_branch
      %155 = sbr.rel (0) target = $region45
    $region44: #{tpu_custom_call.1} parent=1 // pred_region
      %157 = vsyncadd [#allocation18], 0
      %s159 = sshll.u32 %s10, 4
      %s160 = int_to_ptr.hbm [resolvable:$true] %s159
      %s161 = sshll.u32 [#allocation19], 4
      %s162 = int_to_ptr.vmem [resolvable:$true] %s161
      %164 = dma.hbm_to_vmem [thread:$0]  %s160, 32, %s162, [#allocation18]
    $region45: #{tpu_custom_call.1} parent=1 // pred_fallthru
      _
    // Predicated region
    $region46: #{tpu_custom_call.1} parent=1 // pred_check
      _
    $region47: #{tpu_custom_call.1} parent=1 // pred_check_branch
      %166 = sbr.rel (0) target = $region49
    $region48: #{tpu_custom_call.1} parent=1 // pred_region
      %168 = vsyncadd [#allocation21], 0
      %s170 = sshll.u32 %s11, 4
      %s171 = int_to_ptr.hbm [resolvable:$true] %s170
      %s172 = sshll.u32 [#allocation20], 4
      %s173 = int_to_ptr.vmem [resolvable:$true] %s172
      %175 = dma.hbm_to_vmem [thread:$0]  %s171, 32, %s173, [#allocation21]
    $region49: #{tpu_custom_call.1} parent=1 // pred_fallthru
      _
    // Predicated region
    $region50: #{tpu_custom_call.1} parent=1 // pred_check
      _
    $region51: #{tpu_custom_call.1} parent=1 // pred_check_branch
      %177 = sbr.rel (0) target = $region53
    $region52: #{tpu_custom_call.1} parent=1 // pred_region
      %179 = vsyncadd [#allocation21], 0
      %s181 = sshll.u32 %s12, 4
      %s182 = int_to_ptr.hbm [resolvable:$true] %s181
      %s183 = sshll.u32 [#allocation22], 4
      %s184 = int_to_ptr.vmem [resolvable:$true] %s183
      %186 = dma.hbm_to_vmem [thread:$0]  %s182, 32, %s184, [#allocation21]
    $region53: #{tpu_custom_call.1} parent=1 // pred_fallthru
      _
    // Predicated region
    $region54: #{tpu_custom_call.1} parent=1 // pred_check
      _
    $region55: #{tpu_custom_call.1} parent=1 // pred_check_branch
      %188 = sbr.rel (0) target = $region57
    $region56: #{tpu_custom_call.1} parent=1 // pred_region
      %190 = vsyncadd [#allocation24], 0
      %s192 = sshll.u32 %s13, 4
      %s193 = int_to_ptr.hbm [resolvable:$true] %s192
      %s194 = sshll.u32 [#allocation23], 4
      %s195 = int_to_ptr.vmem [resolvable:$true] %s194
      %197 = dma.hbm_to_vmem [thread:$0]  %s193, 64, %s195, [#allocation24]
    $region57: #{tpu_custom_call.1} parent=1 // pred_fallthru
      _
    // Predicated region
    $region58: #{tpu_custom_call.1} parent=1 // pred_check
      _
    $region59: #{tpu_custom_call.1} parent=1 // pred_check_branch
      %199 = sbr.rel (0) target = $region61
    $region60: #{tpu_custom_call.1} parent=1 // pred_region
      %201 = vsyncadd [#allocation24], 0
      %s203 = sshll.u32 %s14, 4
      %s204 = int_to_ptr.hbm [resolvable:$true] %s203
      %s205 = sshll.u32 [#allocation25], 4
      %s206 = int_to_ptr.vmem [resolvable:$true] %s205
      %208 = dma.hbm_to_vmem [thread:$0]  %s204, 64, %s206, [#allocation24]
    $region61: #{tpu_custom_call.1} parent=1 // pred_fallthru
      _
    // Predicated region
    $region62: #{tpu_custom_call.1} parent=1 // pred_check
      _
    $region63: #{tpu_custom_call.1} parent=1 // pred_check_branch
      %210 = sbr.rel (0) target = $region65
    $region64: #{tpu_custom_call.1} parent=1 // pred_region
      %212 = vsyncadd [#allocation27], 0
      %s214 = sshll.u32 %s15, 4
      %s215 = int_to_ptr.hbm [resolvable:$true] %s214
      %s216 = sshll.u32 [#allocation26], 4
      %s217 = int_to_ptr.vmem [resolvable:$true] %s216
      %219 = dma.hbm_to_vmem [thread:$0]  %s215, 128, %s217, [#allocation27]
    $region65: #{tpu_custom_call.1} parent=1 // pred_fallthru
      _
    // Predicated region
    $region66: #{tpu_custom_call.1} parent=1 // pred_check
      _
    $region67: #{tpu_custom_call.1} parent=1 // pred_check_branch
      %221 = sbr.rel (0) target = $region69
    $region68: #{tpu_custom_call.1} parent=1 // pred_region
      %223 = dma.done [#allocation3], 768
    $region69: #{tpu_custom_call.1} parent=1 // pred_fallthru
      _
    // Predicated region
    $region70: #{tpu_custom_call.1} parent=1 // pred_check
      _
    $region71: #{tpu_custom_call.1} parent=1 // pred_check_branch
      %225 = sbr.rel (0) target = $region73
    $region72: #{tpu_custom_call.1} parent=1 // pred_region
      %227 = dma.done [#allocation6], 73728
    $region73: #{tpu_custom_call.1} parent=1 // pred_fallthru
      _
    // Predicated region
    $region74: #{tpu_custom_call.1} parent=1 // pred_check
      _
    $region75: #{tpu_custom_call.1} parent=1 // pred_check_branch
      %229 = sbr.rel (0) target = $region77
    $region76: #{tpu_custom_call.1} parent=1 // pred_region
      %231 = dma.done [#allocation6], 192
    $region77: #{tpu_custom_call.1} parent=1 // pred_fallthru
      _
    // Predicated region
    $region78: #{tpu_custom_call.1} parent=1 // pred_check
      _
    $region79: #{tpu_custom_call.1} parent=1 // pred_check_branch
      %233 = sbr.rel (0) target = $region81
    $region80: #{tpu_custom_call.1} parent=1 // pred_region
      %235 = dma.done [#allocation9], 49152
    $region81: #{tpu_custom_call.1} parent=1 // pred_fallthru
      _
    // Predicated region
    $region82: #{tpu_custom_call.1} parent=1 // pred_check
      _
    $region83: #{tpu_custom_call.1} parent=1 // pred_check_branch
      %237 = sbr.rel (0) target = $region85
    $region84: #{tpu_custom_call.1} parent=1 // pred_region
      %239 = dma.done [#allocation9], 64
    $region85: #{tpu_custom_call.1} parent=1 // pred_fallthru
      _
    // Predicated region
    $region86: #{tpu_custom_call.1} parent=1 // pred_check
      _
    $region87: #{tpu_custom_call.1} parent=1 // pred_check_branch
      %241 = sbr.rel (0) target = $region89
    $region88: #{tpu_custom_call.1} parent=1 // pred_region
      %243 = dma.done [#allocation12], 8192
    $region89: #{tpu_custom_call.1} parent=1 // pred_fallthru
      _
    // Predicated region
    $region90: #{tpu_custom_call.1} parent=1 // pred_check
      _
    $region91: #{tpu_custom_call.1} parent=1 // pred_check_branch
      %245 = sbr.rel (0) target = $region93
    $region92: #{tpu_custom_call.1} parent=1 // pred_region
      %247 = dma.done [#allocation12], 32
    $region93: #{tpu_custom_call.1} parent=1 // pred_fallthru
      _
    // Predicated region
    $region94: #{tpu_custom_call.1} parent=1 // pred_check
      _
    $region95: #{tpu_custom_call.1} parent=1 // pred_check_branch
      %249 = sbr.rel (0) target = $region97
    $region96: #{tpu_custom_call.1} parent=1 // pred_region
      %251 = dma.done [#allocation15], 4096
    $region97: #{tpu_custom_call.1} parent=1 // pred_fallthru
      _
    // Predicated region
    $region98: #{tpu_custom_call.1} parent=1 // pred_check
      _
    $region99: #{tpu_custom_call.1} parent=1 // pred_check_branch
      %253 = sbr.rel (0) target = $region101
    $region100: #{tpu_custom_call.1} parent=1 // pred_region
      %255 = dma.done [#allocation15], 16
    $region101: #{tpu_custom_call.1} parent=1 // pred_fallthru
      _
    // Predicated region
    $region102: #{tpu_custom_call.1} parent=1 // pred_check
      _
    $region103: #{tpu_custom_call.1} parent=1 // pred_check_branch
      %257 = sbr.rel (0) target = $region105
    $region104: #{tpu_custom_call.1} parent=1 // pred_region
      %259 = dma.done [#allocation18], 2048
    $region105: #{tpu_custom_call.1} parent=1 // pred_fallthru
      _
    // Predicated region
    $region106: #{tpu_custom_call.1} parent=1 // pred_check
      _
    $region107: #{tpu_custom_call.1} parent=1 // pred_check_branch
      %261 = sbr.rel (0) target = $region109
    $region108: #{tpu_custom_call.1} parent=1 // pred_region
      %263 = dma.done [#allocation18], 32
    $region109: #{tpu_custom_call.1} parent=1 // pred_fallthru
      _
    // Predicated region
    $region110: #{tpu_custom_call.1} parent=1 // pred_check
      _
    $region111: #{tpu_custom_call.1} parent=1 // pred_check_branch
      %265 = sbr.rel (0) target = $region113
    $region112: #{tpu_custom_call.1} parent=1 // pred_region
      %267 = dma.done [#allocation21], 32
    $region113: #{tpu_custom_call.1} parent=1 // pred_fallthru
      _
    // Predicated region
    $region114: #{tpu_custom_call.1} parent=1 // pred_check
      _
    $region115: #{tpu_custom_call.1} parent=1 // pred_check_branch
      %269 = sbr.rel (0) target = $region117
    $region116: #{tpu_custom_call.1} parent=1 // pred_region
      %271 = dma.done [#allocation21], 32
    $region117: #{tpu_custom_call.1} parent=1 // pred_fallthru
      _
    // Predicated region
    $region118: #{tpu_custom_call.1} parent=1 // pred_check
      _
    $region119: #{tpu_custom_call.1} parent=1 // pred_check_branch
      %273 = sbr.rel (0) target = $region121
    $region120: #{tpu_custom_call.1} parent=1 // pred_region
      %275 = dma.done [#allocation24], 64
    $region121: #{tpu_custom_call.1} parent=1 // pred_fallthru
      _
    // Predicated region
    $region122: #{tpu_custom_call.1} parent=1 // pred_check
      _
    $region123: #{tpu_custom_call.1} parent=1 // pred_check_branch
      %277 = sbr.rel (0) target = $region125
    $region124: #{tpu_custom_call.1} parent=1 // pred_region
      %279 = dma.done [#allocation24], 64
    $region125: #{tpu_custom_call.1} parent=1 // pred_fallthru
      _
    // Predicated region
    $region126: #{tpu_custom_call.1} parent=1 // pred_check
      _
    $region127: #{tpu_custom_call.1} parent=1 // pred_check_branch
      %281 = sbr.rel (0) target = $region129
    $region128: #{tpu_custom_call.1} parent=1 // pred_region
      %283 = dma.done [#allocation27], 128
    $region129: #{tpu_custom_call.1} parent=1 // pred_fallthru
      _
    %v285 = vld [vmem:[#allocation2] sm:$0xff]
    %v286 = vld [vmem:[#allocation2 + $0x8] sm:$0xff]
    %v287 = vld [vmem:[#allocation2 + $0x10] sm:$0xff]
    %v288 = vld [vmem:[#allocation2 + $0x18] sm:$0xff]
    %v289 = vld [vmem:[#allocation2 + $0x20] sm:$0xff]
    %v290 = vld [vmem:[#allocation2 + $0x28] sm:$0xff]
    %v291 = vld [vmem:[#allocation5] sm:$0xff]
    %v292 = vld [vmem:[#allocation5 + $0x8] sm:$0xff]
    %v293 = vld [vmem:[#allocation5 + $0x10] sm:$0xff]
    %v294 = vld [vmem:[#allocation5 + $0x18] sm:$0xff]
    %v295 = vld [vmem:[#allocation5 + $0x20] sm:$0xff]
    %v296 = vld [vmem:[#allocation5 + $0x28] sm:$0xff]
    %v297 = vld [vmem:[#allocation5 + $0x30] sm:$0xff]
    %v298 = vld [vmem:[#allocation5 + $0x38] sm:$0xff]
    %v299 = vld [vmem:[#allocation5 + $0x40] sm:$0xff]
    %v300 = vld [vmem:[#allocation5 + $0x48] sm:$0xff]
    %v301 = vld [vmem:[#allocation5 + $0x50] sm:$0xff]
    %v302 = vld [vmem:[#allocation5 + $0x58] sm:$0xff]
    %v303 = vld [vmem:[#allocation5 + $0x60] sm:$0xff]
    %v304 = vld [vmem:[#allocation5 + $0x68] sm:$0xff]
    %v305 = vld [vmem:[#allocation5 + $0x70] sm:$0xff]
    %v306 = vld [vmem:[#allocation5 + $0x78] sm:$0xff]
    %v307 = vld [vmem:[#allocation5 + $0x80] sm:$0xff]
    %v308 = vld [vmem:[#allocation5 + $0x88] sm:$0xff]
    %v309 = vld [vmem:[#allocation5 + $0x90] sm:$0xff]
    %v310 = vld [vmem:[#allocation5 + $0x98] sm:$0xff]
    %v311 = vld [vmem:[#allocation5 + $0xa0] sm:$0xff]
    %v312 = vld [vmem:[#allocation5 + $0xa8] sm:$0xff]
    %v313 = vld [vmem:[#allocation5 + $0xb0] sm:$0xff]
    %v314 = vld [vmem:[#allocation5 + $0xb8] sm:$0xff]
    %v315 = vld [vmem:[#allocation5 + $0xc0] sm:$0xff]
    %v316 = vld [vmem:[#allocation5 + $0xc8] sm:$0xff]
    %v317 = vld [vmem:[#allocation5 + $0xd0] sm:$0xff]
    %v318 = vld [vmem:[#allocation5 + $0xd8] sm:$0xff]
    %v319 = vld [vmem:[#allocation5 + $0xe0] sm:$0xff]
    %v320 = vld [vmem:[#allocation5 + $0xe8] sm:$0xff]
    %v321 = vld [vmem:[#allocation5 + $0xf0] sm:$0xff]
    %v322 = vld [vmem:[#allocation5 + $0xf8] sm:$0xff]
    %v323 = vld [vmem:[#allocation5 + $0x100] sm:$0xff]
    %v324 = vld [vmem:[#allocation5 + $0x108] sm:$0xff]
    %v325 = vld [vmem:[#allocation5 + $0x110] sm:$0xff]
    %v326 = vld [vmem:[#allocation5 + $0x118] sm:$0xff]
    %v327 = vld [vmem:[#allocation5 + $0x120] sm:$0xff]
    %v328 = vld [vmem:[#allocation5 + $0x128] sm:$0xff]
    %v329 = vld [vmem:[#allocation5 + $0x130] sm:$0xff]
    %v330 = vld [vmem:[#allocation5 + $0x138] sm:$0xff]
    %v331 = vld [vmem:[#allocation5 + $0x140] sm:$0xff]
    %v332 = vld [vmem:[#allocation5 + $0x148] sm:$0xff]
    %v333 = vld [vmem:[#allocation5 + $0x150] sm:$0xff]
    %v334 = vld [vmem:[#allocation5 + $0x158] sm:$0xff]
    %v335 = vld [vmem:[#allocation5 + $0x160] sm:$0xff]
    %v336 = vld [vmem:[#allocation5 + $0x168] sm:$0xff]
    %v337 = vld [vmem:[#allocation5 + $0x170] sm:$0xff]
    %v338 = vld [vmem:[#allocation5 + $0x178] sm:$0xff]
    %v339 = vld [vmem:[#allocation5 + $0x180] sm:$0xff]
    %v340 = vld [vmem:[#allocation5 + $0x188] sm:$0xff]
    %v341 = vld [vmem:[#allocation5 + $0x190] sm:$0xff]
    %v342 = vld [vmem:[#allocation5 + $0x198] sm:$0xff]
    %v343 = vld [vmem:[#allocation5 + $0x1a0] sm:$0xff]
    %v344 = vld [vmem:[#allocation5 + $0x1a8] sm:$0xff]
    %v345 = vld [vmem:[#allocation5 + $0x1b0] sm:$0xff]
    %v346 = vld [vmem:[#allocation5 + $0x1b8] sm:$0xff]
    %v347 = vld [vmem:[#allocation5 + $0x1c0] sm:$0xff]
    %v348 = vld [vmem:[#allocation5 + $0x1c8] sm:$0xff]
    %v349 = vld [vmem:[#allocation5 + $0x1d0] sm:$0xff]
    %v350 = vld [vmem:[#allocation5 + $0x1d8] sm:$0xff]
    %v351 = vld [vmem:[#allocation5 + $0x1e0] sm:$0xff]
    %v352 = vld [vmem:[#allocation5 + $0x1e8] sm:$0xff]
    %v353 = vld [vmem:[#allocation5 + $0x1f0] sm:$0xff]
    %v354 = vld [vmem:[#allocation5 + $0x1f8] sm:$0xff]
    %v355 = vld [vmem:[#allocation5 + $0x200] sm:$0xff]
    %v356 = vld [vmem:[#allocation5 + $0x208] sm:$0xff]
    %v357 = vld [vmem:[#allocation5 + $0x210] sm:$0xff]
    %v358 = vld [vmem:[#allocation5 + $0x218] sm:$0xff]
    %v359 = vld [vmem:[#allocation5 + $0x220] sm:$0xff]
    %v360 = vld [vmem:[#allocation5 + $0x228] sm:$0xff]
    %v361 = vld [vmem:[#allocation5 + $0x230] sm:$0xff]
    %v362 = vld [vmem:[#allocation5 + $0x238] sm:$0xff]
    %v363 = vld [vmem:[#allocation5 + $0x240] sm:$0xff]
    %v364 = vld [vmem:[#allocation5 + $0x248] sm:$0xff]
    %v365 = vld [vmem:[#allocation5 + $0x250] sm:$0xff]
    %v366 = vld [vmem:[#allocation5 + $0x258] sm:$0xff]
    %v367 = vld [vmem:[#allocation5 + $0x260] sm:$0xff]
    %v368 = vld [vmem:[#allocation5 + $0x268] sm:$0xff]
    %v369 = vld [vmem:[#allocation5 + $0x270] sm:$0xff]
    %v370 = vld [vmem:[#allocation5 + $0x278] sm:$0xff]
    %v371 = vld [vmem:[#allocation5 + $0x280] sm:$0xff]
    %v372 = vld [vmem:[#allocation5 + $0x288] sm:$0xff]
    %v373 = vld [vmem:[#allocation5 + $0x290] sm:$0xff]
    %v374 = vld [vmem:[#allocation5 + $0x298] sm:$0xff]
    %v375 = vld [vmem:[#allocation5 + $0x2a0] sm:$0xff]
    %v376 = vld [vmem:[#allocation5 + $0x2a8] sm:$0xff]
    %v377 = vld [vmem:[#allocation5 + $0x2b0] sm:$0xff]
    %v378 = vld [vmem:[#allocation5 + $0x2b8] sm:$0xff]
    %v379 = vld [vmem:[#allocation5 + $0x2c0] sm:$0xff]
    %v380 = vld [vmem:[#allocation5 + $0x2c8] sm:$0xff]
    %v381 = vld [vmem:[#allocation5 + $0x2d0] sm:$0xff]
    %v382 = vld [vmem:[#allocation5 + $0x2d8] sm:$0xff]
    %v383 = vld [vmem:[#allocation5 + $0x2e0] sm:$0xff]
    %v384 = vld [vmem:[#allocation5 + $0x2e8] sm:$0xff]
    %v385 = vld [vmem:[#allocation5 + $0x2f0] sm:$0xff]
    %v386 = vld [vmem:[#allocation5 + $0x2f8] sm:$0xff]
    %v387 = vld [vmem:[#allocation5 + $0x300] sm:$0xff]
    %v388 = vld [vmem:[#allocation5 + $0x308] sm:$0xff]
    %v389 = vld [vmem:[#allocation5 + $0x310] sm:$0xff]
    %v390 = vld [vmem:[#allocation5 + $0x318] sm:$0xff]
    %v391 = vld [vmem:[#allocation5 + $0x320] sm:$0xff]
    %v392 = vld [vmem:[#allocation5 + $0x328] sm:$0xff]
    %v393 = vld [vmem:[#allocation5 + $0x330] sm:$0xff]
    %v394 = vld [vmem:[#allocation5 + $0x338] sm:$0xff]
    %v395 = vld [vmem:[#allocation5 + $0x340] sm:$0xff]
    %v396 = vld [vmem:[#allocation5 + $0x348] sm:$0xff]
    %v397 = vld [vmem:[#allocation5 + $0x350] sm:$0xff]
    %v398 = vld [vmem:[#allocation5 + $0x358] sm:$0xff]
    %v399 = vld [vmem:[#allocation5 + $0x360] sm:$0xff]
    %v400 = vld [vmem:[#allocation5 + $0x368] sm:$0xff]
    %v401 = vld [vmem:[#allocation5 + $0x370] sm:$0xff]
    %v402 = vld [vmem:[#allocation5 + $0x378] sm:$0xff]
    %v403 = vld [vmem:[#allocation5 + $0x380] sm:$0xff]
    %v404 = vld [vmem:[#allocation5 + $0x388] sm:$0xff]
    %v405 = vld [vmem:[#allocation5 + $0x390] sm:$0xff]
    %v406 = vld [vmem:[#allocation5 + $0x398] sm:$0xff]
    %v407 = vld [vmem:[#allocation5 + $0x3a0] sm:$0xff]
    %v408 = vld [vmem:[#allocation5 + $0x3a8] sm:$0xff]
    %v409 = vld [vmem:[#allocation5 + $0x3b0] sm:$0xff]
    %v410 = vld [vmem:[#allocation5 + $0x3b8] sm:$0xff]
    %v411 = vld [vmem:[#allocation5 + $0x3c0] sm:$0xff]
    %v412 = vld [vmem:[#allocation5 + $0x3c8] sm:$0xff]
    %v413 = vld [vmem:[#allocation5 + $0x3d0] sm:$0xff]
    %v414 = vld [vmem:[#allocation5 + $0x3d8] sm:$0xff]
    %v415 = vld [vmem:[#allocation5 + $0x3e0] sm:$0xff]
    %v416 = vld [vmem:[#allocation5 + $0x3e8] sm:$0xff]
    %v417 = vld [vmem:[#allocation5 + $0x3f0] sm:$0xff]
    %v418 = vld [vmem:[#allocation5 + $0x3f8] sm:$0xff]
    %v419 = vld [vmem:[#allocation5 + $0x400] sm:$0xff]
    %v420 = vld [vmem:[#allocation5 + $0x408] sm:$0xff]
    %v421 = vld [vmem:[#allocation5 + $0x410] sm:$0xff]
    %v422 = vld [vmem:[#allocation5 + $0x418] sm:$0xff]
    %v423 = vld [vmem:[#allocation5 + $0x420] sm:$0xff]
    %v424 = vld [vmem:[#allocation5 + $0x428] sm:$0xff]
    %v425 = vld [vmem:[#allocation5 + $0x430] sm:$0xff]
    %v426 = vld [vmem:[#allocation5 + $0x438] sm:$0xff]
    %v427 = vld [vmem:[#allocation5 + $0x440] sm:$0xff]
    %v428 = vld [vmem:[#allocation5 + $0x448] sm:$0xff]
    %v429 = vld [vmem:[#allocation5 + $0x450] sm:$0xff]
    %v430 = vld [vmem:[#allocation5 + $0x458] sm:$0xff]
    %v431 = vld [vmem:[#allocation5 + $0x460] sm:$0xff]
    %v432 = vld [vmem:[#allocation5 + $0x468] sm:$0xff]
    %v433 = vld [vmem:[#allocation5 + $0x470] sm:$0xff]
    %v434 = vld [vmem:[#allocation5 + $0x478] sm:$0xff]
    %v435 = vld [vmem:[#allocation5 + $0x480] sm:$0xff]
    %v436 = vld [vmem:[#allocation5 + $0x488] sm:$0xff]
    %v437 = vld [vmem:[#allocation5 + $0x490] sm:$0xff]
    %v438 = vld [vmem:[#allocation5 + $0x498] sm:$0xff]
    %v439 = vld [vmem:[#allocation5 + $0x4a0] sm:$0xff]
    %v440 = vld [vmem:[#allocation5 + $0x4a8] sm:$0xff]
    %v441 = vld [vmem:[#allocation5 + $0x4b0] sm:$0xff]
    %v442 = vld [vmem:[#allocation5 + $0x4b8] sm:$0xff]
    %v443 = vld [vmem:[#allocation5 + $0x4c0] sm:$0xff]
    %v444 = vld [vmem:[#allocation5 + $0x4c8] sm:$0xff]
    %v445 = vld [vmem:[#allocation5 + $0x4d0] sm:$0xff]
    %v446 = vld [vmem:[#allocation5 + $0x4d8] sm:$0xff]
    %v447 = vld [vmem:[#allocation5 + $0x4e0] sm:$0xff]
    %v448 = vld [vmem:[#allocation5 + $0x4e8] sm:$0xff]
    %v449 = vld [vmem:[#allocation5 + $0x4f0] sm:$0xff]
    %v450 = vld [vmem:[#allocation5 + $0x4f8] sm:$0xff]
    %v451 = vld [vmem:[#allocation5 + $0x500] sm:$0xff]
    %v452 = vld [vmem:[#allocation5 + $0x508] sm:$0xff]
    %v453 = vld [vmem:[#allocation5 + $0x510] sm:$0xff]
    %v454 = vld [vmem:[#allocation5 + $0x518] sm:$0xff]
    %v455 = vld [vmem:[#allocation5 + $0x520] sm:$0xff]
    %v456 = vld [vmem:[#allocation5 + $0x528] sm:$0xff]
    %v457 = vld [vmem:[#allocation5 + $0x530] sm:$0xff]
    %v458 = vld [vmem:[#allocation5 + $0x538] sm:$0xff]
    %v459 = vld [vmem:[#allocation5 + $0x540] sm:$0xff]
    %v460 = vld [vmem:[#allocation5 + $0x548] sm:$0xff]
    %v461 = vld [vmem:[#allocation5 + $0x550] sm:$0xff]
    %v462 = vld [vmem:[#allocation5 + $0x558] sm:$0xff]
    %v463 = vld [vmem:[#allocation5 + $0x560] sm:$0xff]
    %v464 = vld [vmem:[#allocation5 + $0x568] sm:$0xff]
    %v465 = vld [vmem:[#allocation5 + $0x570] sm:$0xff]
    %v466 = vld [vmem:[#allocation5 + $0x578] sm:$0xff]
    %v467 = vld [vmem:[#allocation5 + $0x580] sm:$0xff]
    %v468 = vld [vmem:[#allocation5 + $0x588] sm:$0xff]
    %v469 = vld [vmem:[#allocation5 + $0x590] sm:$0xff]
    %v470 = vld [vmem:[#allocation5 + $0x598] sm:$0xff]
    %v471 = vld [vmem:[#allocation5 + $0x5a0] sm:$0xff]
    %v472 = vld [vmem:[#allocation5 + $0x5a8] sm:$0xff]
    %v473 = vld [vmem:[#allocation5 + $0x5b0] sm:$0xff]
    %v474 = vld [vmem:[#allocation5 + $0x5b8] sm:$0xff]
    %v475 = vld [vmem:[#allocation5 + $0x5c0] sm:$0xff]
    %v476 = vld [vmem:[#allocation5 + $0x5c8] sm:$0xff]
    %v477 = vld [vmem:[#allocation5 + $0x5d0] sm:$0xff]
    %v478 = vld [vmem:[#allocation5 + $0x5d8] sm:$0xff]
    %v479 = vld [vmem:[#allocation5 + $0x5e0] sm:$0xff]
    %v480 = vld [vmem:[#allocation5 + $0x5e8] sm:$0xff]
    %v481 = vld [vmem:[#allocation5 + $0x5f0] sm:$0xff]
    %v482 = vld [vmem:[#allocation5 + $0x5f8] sm:$0xff]
    %v483 = vld [vmem:[#allocation5 + $0x600] sm:$0xff]
    %v484 = vld [vmem:[#allocation5 + $0x608] sm:$0xff]
    %v485 = vld [vmem:[#allocation5 + $0x610] sm:$0xff]
    %v486 = vld [vmem:[#allocation5 + $0x618] sm:$0xff]
    %v487 = vld [vmem:[#allocation5 + $0x620] sm:$0xff]
    %v488 = vld [vmem:[#allocation5 + $0x628] sm:$0xff]
    %v489 = vld [vmem:[#allocation5 + $0x630] sm:$0xff]
    %v490 = vld [vmem:[#allocation5 + $0x638] sm:$0xff]
    %v491 = vld [vmem:[#allocation5 + $0x640] sm:$0xff]
    %v492 = vld [vmem:[#allocation5 + $0x648] sm:$0xff]
    %v493 = vld [vmem:[#allocation5 + $0x650] sm:$0xff]
    %v494 = vld [vmem:[#allocation5 + $0x658] sm:$0xff]
    %v495 = vld [vmem:[#allocation5 + $0x660] sm:$0xff]
    %v496 = vld [vmem:[#allocation5 + $0x668] sm:$0xff]
    %v497 = vld [vmem:[#allocation5 + $0x670] sm:$0xff]
    %v498 = vld [vmem:[#allocation5 + $0x678] sm:$0xff]
    %v499 = vld [vmem:[#allocation5 + $0x680] sm:$0xff]
    %v500 = vld [vmem:[#allocation5 + $0x688] sm:$0xff]
    %v501 = vld [vmem:[#allocation5 + $0x690] sm:$0xff]
    %v502 = vld [vmem:[#allocation5 + $0x698] sm:$0xff]
    %v503 = vld [vmem:[#allocation5 + $0x6a0] sm:$0xff]
    %v504 = vld [vmem:[#allocation5 + $0x6a8] sm:$0xff]
    %v505 = vld [vmem:[#allocation5 + $0x6b0] sm:$0xff]
    %v506 = vld [vmem:[#allocation5 + $0x6b8] sm:$0xff]
    %v507 = vld [vmem:[#allocation5 + $0x6c0] sm:$0xff]
    %v508 = vld [vmem:[#allocation5 + $0x6c8] sm:$0xff]
    %v509 = vld [vmem:[#allocation5 + $0x6d0] sm:$0xff]
    %v510 = vld [vmem:[#allocation5 + $0x6d8] sm:$0xff]
    %v511 = vld [vmem:[#allocation5 + $0x6e0] sm:$0xff]
    %v512 = vld [vmem:[#allocation5 + $0x6e8] sm:$0xff]
    %v513 = vld [vmem:[#allocation5 + $0x6f0] sm:$0xff]
    %v514 = vld [vmem:[#allocation5 + $0x6f8] sm:$0xff]
    %v515 = vld [vmem:[#allocation5 + $0x700] sm:$0xff]
    %v516 = vld [vmem:[#allocation5 + $0x708] sm:$0xff]
    %v517 = vld [vmem:[#allocation5 + $0x710] sm:$0xff]
    %v518 = vld [vmem:[#allocation5 + $0x718] sm:$0xff]
    %v519 = vld [vmem:[#allocation5 + $0x720] sm:$0xff]
    %v520 = vld [vmem:[#allocation5 + $0x728] sm:$0xff]
    %v521 = vld [vmem:[#allocation5 + $0x730] sm:$0xff]
    %v522 = vld [vmem:[#allocation5 + $0x738] sm:$0xff]
    %v523 = vld [vmem:[#allocation5 + $0x740] sm:$0xff]
    %v524 = vld [vmem:[#allocation5 + $0x748] sm:$0xff]
    %v525 = vld [vmem:[#allocation5 + $0x750] sm:$0xff]
    %v526 = vld [vmem:[#allocation5 + $0x758] sm:$0xff]
    %v527 = vld [vmem:[#allocation5 + $0x760] sm:$0xff]
    %v528 = vld [vmem:[#allocation5 + $0x768] sm:$0xff]
    %v529 = vld [vmem:[#allocation5 + $0x770] sm:$0xff]
    %v530 = vld [vmem:[#allocation5 + $0x778] sm:$0xff]
    %v531 = vld [vmem:[#allocation5 + $0x780] sm:$0xff]
    %v532 = vld [vmem:[#allocation5 + $0x788] sm:$0xff]
    %v533 = vld [vmem:[#allocation5 + $0x790] sm:$0xff]
    %v534 = vld [vmem:[#allocation5 + $0x798] sm:$0xff]
    %v535 = vld [vmem:[#allocation5 + $0x7a0] sm:$0xff]
    %v536 = vld [vmem:[#allocation5 + $0x7a8] sm:$0xff]
    %v537 = vld [vmem:[#allocation5 + $0x7b0] sm:$0xff]
    %v538 = vld [vmem:[#allocation5 + $0x7b8] sm:$0xff]
    %v539 = vld [vmem:[#allocation5 + $0x7c0] sm:$0xff]
    %v540 = vld [vmem:[#allocation5 + $0x7c8] sm:$0xff]
    %v541 = vld [vmem:[#allocation5 + $0x7d0] sm:$0xff]
    %v542 = vld [vmem:[#allocation5 + $0x7d8] sm:$0xff]
    %v543 = vld [vmem:[#allocation5 + $0x7e0] sm:$0xff]
    %v544 = vld [vmem:[#allocation5 + $0x7e8] sm:$0xff]
    %v545 = vld [vmem:[#allocation5 + $0x7f0] sm:$0xff]
    %v546 = vld [vmem:[#allocation5 + $0x7f8] sm:$0xff]
    %v547 = vld [vmem:[#allocation5 + $0x800] sm:$0xff]
    %v548 = vld [vmem:[#allocation5 + $0x808] sm:$0xff]
    %v549 = vld [vmem:[#allocation5 + $0x810] sm:$0xff]
    %v550 = vld [vmem:[#allocation5 + $0x818] sm:$0xff]
    %v551 = vld [vmem:[#allocation5 + $0x820] sm:$0xff]
    %v552 = vld [vmem:[#allocation5 + $0x828] sm:$0xff]
    %v553 = vld [vmem:[#allocation5 + $0x830] sm:$0xff]
    %v554 = vld [vmem:[#allocation5 + $0x838] sm:$0xff]
    %v555 = vld [vmem:[#allocation5 + $0x840] sm:$0xff]
    %v556 = vld [vmem:[#allocation5 + $0x848] sm:$0xff]
    %v557 = vld [vmem:[#allocation5 + $0x850] sm:$0xff]
    %v558 = vld [vmem:[#allocation5 + $0x858] sm:$0xff]
    %v559 = vld [vmem:[#allocation5 + $0x860] sm:$0xff]
    %v560 = vld [vmem:[#allocation5 + $0x868] sm:$0xff]
    %v561 = vld [vmem:[#allocation5 + $0x870] sm:$0xff]
    %v562 = vld [vmem:[#allocation5 + $0x878] sm:$0xff]
    %v563 = vld [vmem:[#allocation5 + $0x880] sm:$0xff]
    %v564 = vld [vmem:[#allocation5 + $0x888] sm:$0xff]
    %v565 = vld [vmem:[#allocation5 + $0x890] sm:$0xff]
    %v566 = vld [vmem:[#allocation5 + $0x898] sm:$0xff]
    %v567 = vld [vmem:[#allocation5 + $0x8a0] sm:$0xff]
    %v568 = vld [vmem:[#allocation5 + $0x8a8] sm:$0xff]
    %v569 = vld [vmem:[#allocation5 + $0x8b0] sm:$0xff]
    %v570 = vld [vmem:[#allocation5 + $0x8b8] sm:$0xff]
    %v571 = vld [vmem:[#allocation5 + $0x8c0] sm:$0xff]
    %v572 = vld [vmem:[#allocation5 + $0x8c8] sm:$0xff]
    %v573 = vld [vmem:[#allocation5 + $0x8d0] sm:$0xff]
    %v574 = vld [vmem:[#allocation5 + $0x8d8] sm:$0xff]
    %v575 = vld [vmem:[#allocation5 + $0x8e0] sm:$0xff]
    %v576 = vld [vmem:[#allocation5 + $0x8e8] sm:$0xff]
    %v577 = vld [vmem:[#allocation5 + $0x8f0] sm:$0xff]
    %v578 = vld [vmem:[#allocation5 + $0x8f8] sm:$0xff]
    %v579 = vld [vmem:[#allocation5 + $0x900] sm:$0xff]
    %v580 = vld [vmem:[#allocation5 + $0x908] sm:$0xff]
    %v581 = vld [vmem:[#allocation5 + $0x910] sm:$0xff]
    %v582 = vld [vmem:[#allocation5 + $0x918] sm:$0xff]
    %v583 = vld [vmem:[#allocation5 + $0x920] sm:$0xff]
    %v584 = vld [vmem:[#allocation5 + $0x928] sm:$0xff]
    %v585 = vld [vmem:[#allocation5 + $0x930] sm:$0xff]
    %v586 = vld [vmem:[#allocation5 + $0x938] sm:$0xff]
    %v587 = vld [vmem:[#allocation5 + $0x940] sm:$0xff]
    %v588 = vld [vmem:[#allocation5 + $0x948] sm:$0xff]
    %v589 = vld [vmem:[#allocation5 + $0x950] sm:$0xff]
    %v590 = vld [vmem:[#allocation5 + $0x958] sm:$0xff]
    %v591 = vld [vmem:[#allocation5 + $0x960] sm:$0xff]
    %v592 = vld [vmem:[#allocation5 + $0x968] sm:$0xff]
    %v593 = vld [vmem:[#allocation5 + $0x970] sm:$0xff]
    %v594 = vld [vmem:[#allocation5 + $0x978] sm:$0xff]
    %v595 = vld [vmem:[#allocation5 + $0x980] sm:$0xff]
    %v596 = vld [vmem:[#allocation5 + $0x988] sm:$0xff]
    %v597 = vld [vmem:[#allocation5 + $0x990] sm:$0xff]
    %v598 = vld [vmem:[#allocation5 + $0x998] sm:$0xff]
    %v599 = vld [vmem:[#allocation5 + $0x9a0] sm:$0xff]
    %v600 = vld [vmem:[#allocation5 + $0x9a8] sm:$0xff]
    %v601 = vld [vmem:[#allocation5 + $0x9b0] sm:$0xff]
    %v602 = vld [vmem:[#allocation5 + $0x9b8] sm:$0xff]
    %v603 = vld [vmem:[#allocation5 + $0x9c0] sm:$0xff]
    %v604 = vld [vmem:[#allocation5 + $0x9c8] sm:$0xff]
    %v605 = vld [vmem:[#allocation5 + $0x9d0] sm:$0xff]
    %v606 = vld [vmem:[#allocation5 + $0x9d8] sm:$0xff]
    %v607 = vld [vmem:[#allocation5 + $0x9e0] sm:$0xff]
    %v608 = vld [vmem:[#allocation5 + $0x9e8] sm:$0xff]
    %v609 = vld [vmem:[#allocation5 + $0x9f0] sm:$0xff]
    %v610 = vld [vmem:[#allocation5 + $0x9f8] sm:$0xff]
    %v611 = vld [vmem:[#allocation5 + $0xa00] sm:$0xff]
    %v612 = vld [vmem:[#allocation5 + $0xa08] sm:$0xff]
    %v613 = vld [vmem:[#allocation5 + $0xa10] sm:$0xff]
    %v614 = vld [vmem:[#allocation5 + $0xa18] sm:$0xff]
    %v615 = vld [vmem:[#allocation5 + $0xa20] sm:$0xff]
    %v616 = vld [vmem:[#allocation5 + $0xa28] sm:$0xff]
    %v617 = vld [vmem:[#allocation5 + $0xa30] sm:$0xff]
    %v618 = vld [vmem:[#allocation5 + $0xa38] sm:$0xff]
    %v619 = vld [vmem:[#allocation5 + $0xa40] sm:$0xff]
    %v620 = vld [vmem:[#allocation5 + $0xa48] sm:$0xff]
    %v621 = vld [vmem:[#allocation5 + $0xa50] sm:$0xff]
    %v622 = vld [vmem:[#allocation5 + $0xa58] sm:$0xff]
    %v623 = vld [vmem:[#allocation5 + $0xa60] sm:$0xff]
    %v624 = vld [vmem:[#allocation5 + $0xa68] sm:$0xff]
    %v625 = vld [vmem:[#allocation5 + $0xa70] sm:$0xff]
    %v626 = vld [vmem:[#allocation5 + $0xa78] sm:$0xff]
    %v627 = vld [vmem:[#allocation5 + $0xa80] sm:$0xff]
    %v628 = vld [vmem:[#allocation5 + $0xa88] sm:$0xff]
    %v629 = vld [vmem:[#allocation5 + $0xa90] sm:$0xff]
    %v630 = vld [vmem:[#allocation5 + $0xa98] sm:$0xff]
    %v631 = vld [vmem:[#allocation5 + $0xaa0] sm:$0xff]
    %v632 = vld [vmem:[#allocation5 + $0xaa8] sm:$0xff]
    %v633 = vld [vmem:[#allocation5 + $0xab0] sm:$0xff]
    %v634 = vld [vmem:[#allocation5 + $0xab8] sm:$0xff]
    %v635 = vld [vmem:[#allocation5 + $0xac0] sm:$0xff]
    %v636 = vld [vmem:[#allocation5 + $0xac8] sm:$0xff]
    %v637 = vld [vmem:[#allocation5 + $0xad0] sm:$0xff]
    %v638 = vld [vmem:[#allocation5 + $0xad8] sm:$0xff]
    %v639 = vld [vmem:[#allocation5 + $0xae0] sm:$0xff]
    %v640 = vld [vmem:[#allocation5 + $0xae8] sm:$0xff]
    %v641 = vld [vmem:[#allocation5 + $0xaf0] sm:$0xff]
    %v642 = vld [vmem:[#allocation5 + $0xaf8] sm:$0xff]
    %v643 = vld [vmem:[#allocation5 + $0xb00] sm:$0xff]
    %v644 = vld [vmem:[#allocation5 + $0xb08] sm:$0xff]
    %v645 = vld [vmem:[#allocation5 + $0xb10] sm:$0xff]
    %v646 = vld [vmem:[#allocation5 + $0xb18] sm:$0xff]
    %v647 = vld [vmem:[#allocation5 + $0xb20] sm:$0xff]
    %v648 = vld [vmem:[#allocation5 + $0xb28] sm:$0xff]
    %v649 = vld [vmem:[#allocation5 + $0xb30] sm:$0xff]
    %v650 = vld [vmem:[#allocation5 + $0xb38] sm:$0xff]
    %v651 = vld [vmem:[#allocation5 + $0xb40] sm:$0xff]
    %v652 = vld [vmem:[#allocation5 + $0xb48] sm:$0xff]
    %v653 = vld [vmem:[#allocation5 + $0xb50] sm:$0xff]
    %v654 = vld [vmem:[#allocation5 + $0xb58] sm:$0xff]
    %v655 = vld [vmem:[#allocation5 + $0xb60] sm:$0xff]
    %v656 = vld [vmem:[#allocation5 + $0xb68] sm:$0xff]
    %v657 = vld [vmem:[#allocation5 + $0xb70] sm:$0xff]
    %v658 = vld [vmem:[#allocation5 + $0xb78] sm:$0xff]
    %v659 = vld [vmem:[#allocation5 + $0xb80] sm:$0xff]
    %v660 = vld [vmem:[#allocation5 + $0xb88] sm:$0xff]
    %v661 = vld [vmem:[#allocation5 + $0xb90] sm:$0xff]
    %v662 = vld [vmem:[#allocation5 + $0xb98] sm:$0xff]
    %v663 = vld [vmem:[#allocation5 + $0xba0] sm:$0xff]
    %v664 = vld [vmem:[#allocation5 + $0xba8] sm:$0xff]
    %v665 = vld [vmem:[#allocation5 + $0xbb0] sm:$0xff]
    %v666 = vld [vmem:[#allocation5 + $0xbb8] sm:$0xff]
    %v667 = vld [vmem:[#allocation5 + $0xbc0] sm:$0xff]
    %v668 = vld [vmem:[#allocation5 + $0xbc8] sm:$0xff]
    %v669 = vld [vmem:[#allocation5 + $0xbd0] sm:$0xff]
    %v670 = vld [vmem:[#allocation5 + $0xbd8] sm:$0xff]
    %v671 = vld [vmem:[#allocation5 + $0xbe0] sm:$0xff]
    %v672 = vld [vmem:[#allocation5 + $0xbe8] sm:$0xff]
    %v673 = vld [vmem:[#allocation5 + $0xbf0] sm:$0xff]
    %v674 = vld [vmem:[#allocation5 + $0xbf8] sm:$0xff]
    %v675 = vld [vmem:[#allocation5 + $0xc00] sm:$0xff]
    %v676 = vld [vmem:[#allocation5 + $0xc08] sm:$0xff]
    %v677 = vld [vmem:[#allocation5 + $0xc10] sm:$0xff]
    %v678 = vld [vmem:[#allocation5 + $0xc18] sm:$0xff]
    %v679 = vld [vmem:[#allocation5 + $0xc20] sm:$0xff]
    %v680 = vld [vmem:[#allocation5 + $0xc28] sm:$0xff]
    %v681 = vld [vmem:[#allocation5 + $0xc30] sm:$0xff]
    %v682 = vld [vmem:[#allocation5 + $0xc38] sm:$0xff]
    %v683 = vld [vmem:[#allocation5 + $0xc40] sm:$0xff]
    %v684 = vld [vmem:[#allocation5 + $0xc48] sm:$0xff]
    %v685 = vld [vmem:[#allocation5 + $0xc50] sm:$0xff]
    %v686 = vld [vmem:[#allocation5 + $0xc58] sm:$0xff]
    %v687 = vld [vmem:[#allocation5 + $0xc60] sm:$0xff]
    %v688 = vld [vmem:[#allocation5 + $0xc68] sm:$0xff]
    %v689 = vld [vmem:[#allocation5 + $0xc70] sm:$0xff]
    %v690 = vld [vmem:[#allocation5 + $0xc78] sm:$0xff]
    %v691 = vld [vmem:[#allocation5 + $0xc80] sm:$0xff]
    %v692 = vld [vmem:[#allocation5 + $0xc88] sm:$0xff]
    %v693 = vld [vmem:[#allocation5 + $0xc90] sm:$0xff]
    %v694 = vld [vmem:[#allocation5 + $0xc98] sm:$0xff]
    %v695 = vld [vmem:[#allocation5 + $0xca0] sm:$0xff]
    %v696 = vld [vmem:[#allocation5 + $0xca8] sm:$0xff]
    %v697 = vld [vmem:[#allocation5 + $0xcb0] sm:$0xff]
    %v698 = vld [vmem:[#allocation5 + $0xcb8] sm:$0xff]
    %v699 = vld [vmem:[#allocation5 + $0xcc0] sm:$0xff]
    %v700 = vld [vmem:[#allocation5 + $0xcc8] sm:$0xff]
    %v701 = vld [vmem:[#allocation5 + $0xcd0] sm:$0xff]
    %v702 = vld [vmem:[#allocation5 + $0xcd8] sm:$0xff]
    %v703 = vld [vmem:[#allocation5 + $0xce0] sm:$0xff]
    %v704 = vld [vmem:[#allocation5 + $0xce8] sm:$0xff]
    %v705 = vld [vmem:[#allocation5 + $0xcf0] sm:$0xff]
    %v706 = vld [vmem:[#allocation5 + $0xcf8] sm:$0xff]
    %v707 = vld [vmem:[#allocation5 + $0xd00] sm:$0xff]
    %v708 = vld [vmem:[#allocation5 + $0xd08] sm:$0xff]
    %v709 = vld [vmem:[#allocation5 + $0xd10] sm:$0xff]
    %v710 = vld [vmem:[#allocation5 + $0xd18] sm:$0xff]
    %v711 = vld [vmem:[#allocation5 + $0xd20] sm:$0xff]
    %v712 = vld [vmem:[#allocation5 + $0xd28] sm:$0xff]
    %v713 = vld [vmem:[#allocation5 + $0xd30] sm:$0xff]
    %v714 = vld [vmem:[#allocation5 + $0xd38] sm:$0xff]
    %v715 = vld [vmem:[#allocation5 + $0xd40] sm:$0xff]
    %v716 = vld [vmem:[#allocation5 + $0xd48] sm:$0xff]
    %v717 = vld [vmem:[#allocation5 + $0xd50] sm:$0xff]
    %v718 = vld [vmem:[#allocation5 + $0xd58] sm:$0xff]
    %v719 = vld [vmem:[#allocation5 + $0xd60] sm:$0xff]
    %v720 = vld [vmem:[#allocation5 + $0xd68] sm:$0xff]
    %v721 = vld [vmem:[#allocation5 + $0xd70] sm:$0xff]
    %v722 = vld [vmem:[#allocation5 + $0xd78] sm:$0xff]
    %v723 = vld [vmem:[#allocation5 + $0xd80] sm:$0xff]
    %v724 = vld [vmem:[#allocation5 + $0xd88] sm:$0xff]
    %v725 = vld [vmem:[#allocation5 + $0xd90] sm:$0xff]
    %v726 = vld [vmem:[#allocation5 + $0xd98] sm:$0xff]
    %v727 = vld [vmem:[#allocation5 + $0xda0] sm:$0xff]
    %v728 = vld [vmem:[#allocation5 + $0xda8] sm:$0xff]
    %v729 = vld [vmem:[#allocation5 + $0xdb0] sm:$0xff]
    %v730 = vld [vmem:[#allocation5 + $0xdb8] sm:$0xff]
    %v731 = vld [vmem:[#allocation5 + $0xdc0] sm:$0xff]
    %v732 = vld [vmem:[#allocation5 + $0xdc8] sm:$0xff]
    %v733 = vld [vmem:[#allocation5 + $0xdd0] sm:$0xff]
    %v734 = vld [vmem:[#allocation5 + $0xdd8] sm:$0xff]
    %v735 = vld [vmem:[#allocation5 + $0xde0] sm:$0xff]
    %v736 = vld [vmem:[#allocation5 + $0xde8] sm:$0xff]
    %v737 = vld [vmem:[#allocation5 + $0xdf0] sm:$0xff]
    %v738 = vld [vmem:[#allocation5 + $0xdf8] sm:$0xff]
    %v739 = vld [vmem:[#allocation5 + $0xe00] sm:$0xff]
    %v740 = vld [vmem:[#allocation5 + $0xe08] sm:$0xff]
    %v741 = vld [vmem:[#allocation5 + $0xe10] sm:$0xff]
    %v742 = vld [vmem:[#allocation5 + $0xe18] sm:$0xff]
    %v743 = vld [vmem:[#allocation5 + $0xe20] sm:$0xff]
    %v744 = vld [vmem:[#allocation5 + $0xe28] sm:$0xff]
    %v745 = vld [vmem:[#allocation5 + $0xe30] sm:$0xff]
    %v746 = vld [vmem:[#allocation5 + $0xe38] sm:$0xff]
    %v747 = vld [vmem:[#allocation5 + $0xe40] sm:$0xff]
    %v748 = vld [vmem:[#allocation5 + $0xe48] sm:$0xff]
    %v749 = vld [vmem:[#allocation5 + $0xe50] sm:$0xff]
    %v750 = vld [vmem:[#allocation5 + $0xe58] sm:$0xff]
    %v751 = vld [vmem:[#allocation5 + $0xe60] sm:$0xff]
    %v752 = vld [vmem:[#allocation5 + $0xe68] sm:$0xff]
    %v753 = vld [vmem:[#allocation5 + $0xe70] sm:$0xff]
    %v754 = vld [vmem:[#allocation5 + $0xe78] sm:$0xff]
    %v755 = vld [vmem:[#allocation5 + $0xe80] sm:$0xff]
    %v756 = vld [vmem:[#allocation5 + $0xe88] sm:$0xff]
    %v757 = vld [vmem:[#allocation5 + $0xe90] sm:$0xff]
    %v758 = vld [vmem:[#allocation5 + $0xe98] sm:$0xff]
    %v759 = vld [vmem:[#allocation5 + $0xea0] sm:$0xff]
    %v760 = vld [vmem:[#allocation5 + $0xea8] sm:$0xff]
    %v761 = vld [vmem:[#allocation5 + $0xeb0] sm:$0xff]
    %v762 = vld [vmem:[#allocation5 + $0xeb8] sm:$0xff]
    %v763 = vld [vmem:[#allocation5 + $0xec0] sm:$0xff]
    %v764 = vld [vmem:[#allocation5 + $0xec8] sm:$0xff]
    %v765 = vld [vmem:[#allocation5 + $0xed0] sm:$0xff]
    %v766 = vld [vmem:[#allocation5 + $0xed8] sm:$0xff]
    %v767 = vld [vmem:[#allocation5 + $0xee0] sm:$0xff]
    %v768 = vld [vmem:[#allocation5 + $0xee8] sm:$0xff]
    %v769 = vld [vmem:[#allocation5 + $0xef0] sm:$0xff]
    %v770 = vld [vmem:[#allocation5 + $0xef8] sm:$0xff]
    %v771 = vld [vmem:[#allocation5 + $0xf00] sm:$0xff]
    %v772 = vld [vmem:[#allocation5 + $0xf08] sm:$0xff]
    %v773 = vld [vmem:[#allocation5 + $0xf10] sm:$0xff]
    %v774 = vld [vmem:[#allocation5 + $0xf18] sm:$0xff]
    %v775 = vld [vmem:[#allocation5 + $0xf20] sm:$0xff]
    %v776 = vld [vmem:[#allocation5 + $0xf28] sm:$0xff]
    %v777 = vld [vmem:[#allocation5 + $0xf30] sm:$0xff]
    %v778 = vld [vmem:[#allocation5 + $0xf38] sm:$0xff]
    %v779 = vld [vmem:[#allocation5 + $0xf40] sm:$0xff]
    %v780 = vld [vmem:[#allocation5 + $0xf48] sm:$0xff]
    %v781 = vld [vmem:[#allocation5 + $0xf50] sm:$0xff]
    %v782 = vld [vmem:[#allocation5 + $0xf58] sm:$0xff]
    %v783 = vld [vmem:[#allocation5 + $0xf60] sm:$0xff]
    %v784 = vld [vmem:[#allocation5 + $0xf68] sm:$0xff]
    %v785 = vld [vmem:[#allocation5 + $0xf70] sm:$0xff]
    %v786 = vld [vmem:[#allocation5 + $0xf78] sm:$0xff]
    %v787 = vld [vmem:[#allocation5 + $0xf80] sm:$0xff]
    %v788 = vld [vmem:[#allocation5 + $0xf88] sm:$0xff]
    %v789 = vld [vmem:[#allocation5 + $0xf90] sm:$0xff]
    %v790 = vld [vmem:[#allocation5 + $0xf98] sm:$0xff]
    %v791 = vld [vmem:[#allocation5 + $0xfa0] sm:$0xff]
    %v792 = vld [vmem:[#allocation5 + $0xfa8] sm:$0xff]
    %v793 = vld [vmem:[#allocation5 + $0xfb0] sm:$0xff]
    %v794 = vld [vmem:[#allocation5 + $0xfb8] sm:$0xff]
    %v795 = vld [vmem:[#allocation5 + $0xfc0] sm:$0xff]
    %v796 = vld [vmem:[#allocation5 + $0xfc8] sm:$0xff]
    %v797 = vld [vmem:[#allocation5 + $0xfd0] sm:$0xff]
    %v798 = vld [vmem:[#allocation5 + $0xfd8] sm:$0xff]
    %v799 = vld [vmem:[#allocation5 + $0xfe0] sm:$0xff]
    %v800 = vld [vmem:[#allocation5 + $0xfe8] sm:$0xff]
    %v801 = vld [vmem:[#allocation5 + $0xff0] sm:$0xff]
    %v802 = vld [vmem:[#allocation5 + $0xff8] sm:$0xff]
    %v803 = vld [vmem:[#allocation5 + $0x1000] sm:$0xff]
    %v804 = vld [vmem:[#allocation5 + $0x1008] sm:$0xff]
    %v805 = vld [vmem:[#allocation5 + $0x1010] sm:$0xff]
    %v806 = vld [vmem:[#allocation5 + $0x1018] sm:$0xff]
    %v807 = vld [vmem:[#allocation5 + $0x1020] sm:$0xff]
    %v808 = vld [vmem:[#allocation5 + $0x1028] sm:$0xff]
    %v809 = vld [vmem:[#allocation5 + $0x1030] sm:$0xff]
    %v810 = vld [vmem:[#allocation5 + $0x1038] sm:$0xff]
    %v811 = vld [vmem:[#allocation5 + $0x1040] sm:$0xff]
    %v812 = vld [vmem:[#allocation5 + $0x1048] sm:$0xff]
    %v813 = vld [vmem:[#allocation5 + $0x1050] sm:$0xff]
    %v814 = vld [vmem:[#allocation5 + $0x1058] sm:$0xff]
    %v815 = vld [vmem:[#allocation5 + $0x1060] sm:$0xff]
    %v816 = vld [vmem:[#allocation5 + $0x1068] sm:$0xff]
    %v817 = vld [vmem:[#allocation5 + $0x1070] sm:$0xff]
    %v818 = vld [vmem:[#allocation5 + $0x1078] sm:$0xff]
    %v819 = vld [vmem:[#allocation5 + $0x1080] sm:$0xff]
    %v820 = vld [vmem:[#allocation5 + $0x1088] sm:$0xff]
    %v821 = vld [vmem:[#allocation5 + $0x1090] sm:$0xff]
    %v822 = vld [vmem:[#allocation5 + $0x1098] sm:$0xff]
    %v823 = vld [vmem:[#allocation5 + $0x10a0] sm:$0xff]
    %v824 = vld [vmem:[#allocation5 + $0x10a8] sm:$0xff]
    %v825 = vld [vmem:[#allocation5 + $0x10b0] sm:$0xff]
    %v826 = vld [vmem:[#allocation5 + $0x10b8] sm:$0xff]
    %v827 = vld [vmem:[#allocation5 + $0x10c0] sm:$0xff]
    %v828 = vld [vmem:[#allocation5 + $0x10c8] sm:$0xff]
    %v829 = vld [vmem:[#allocation5 + $0x10d0] sm:$0xff]
    %v830 = vld [vmem:[#allocation5 + $0x10d8] sm:$0xff]
    %v831 = vld [vmem:[#allocation5 + $0x10e0] sm:$0xff]
    %v832 = vld [vmem:[#allocation5 + $0x10e8] sm:$0xff]
    %v833 = vld [vmem:[#allocation5 + $0x10f0] sm:$0xff]
    %v834 = vld [vmem:[#allocation5 + $0x10f8] sm:$0xff]
    %v835 = vld [vmem:[#allocation5 + $0x1100] sm:$0xff]
    %v836 = vld [vmem:[#allocation5 + $0x1108] sm:$0xff]
    %v837 = vld [vmem:[#allocation5 + $0x1110] sm:$0xff]
    %v838 = vld [vmem:[#allocation5 + $0x1118] sm:$0xff]
    %v839 = vld [vmem:[#allocation5 + $0x1120] sm:$0xff]
    %v840 = vld [vmem:[#allocation5 + $0x1128] sm:$0xff]
    %v841 = vld [vmem:[#allocation5 + $0x1130] sm:$0xff]
    %v842 = vld [vmem:[#allocation5 + $0x1138] sm:$0xff]
    %v843 = vld [vmem:[#allocation5 + $0x1140] sm:$0xff]
    %v844 = vld [vmem:[#allocation5 + $0x1148] sm:$0xff]
    %v845 = vld [vmem:[#allocation5 + $0x1150] sm:$0xff]
    %v846 = vld [vmem:[#allocation5 + $0x1158] sm:$0xff]
    %v847 = vld [vmem:[#allocation5 + $0x1160] sm:$0xff]
    %v848 = vld [vmem:[#allocation5 + $0x1168] sm:$0xff]
    %v849 = vld [vmem:[#allocation5 + $0x1170] sm:$0xff]
    %v850 = vld [vmem:[#allocation5 + $0x1178] sm:$0xff]
    %v851 = vld [vmem:[#allocation5 + $0x1180] sm:$0xff]
    %v852 = vld [vmem:[#allocation5 + $0x1188] sm:$0xff]
    %v853 = vld [vmem:[#allocation5 + $0x1190] sm:$0xff]
    %v854 = vld [vmem:[#allocation5 + $0x1198] sm:$0xff]
    %v855 = vld [vmem:[#allocation5 + $0x11a0] sm:$0xff]
    %v856 = vld [vmem:[#allocation5 + $0x11a8] sm:$0xff]
    %v857 = vld [vmem:[#allocation5 + $0x11b0] sm:$0xff]
    %v858 = vld [vmem:[#allocation5 + $0x11b8] sm:$0xff]
    %v859 = vld [vmem:[#allocation5 + $0x11c0] sm:$0xff]
    %v860 = vld [vmem:[#allocation5 + $0x11c8] sm:$0xff]
    %v861 = vld [vmem:[#allocation5 + $0x11d0] sm:$0xff]
    %v862 = vld [vmem:[#allocation5 + $0x11d8] sm:$0xff]
    %v863 = vld [vmem:[#allocation5 + $0x11e0] sm:$0xff]
    %v864 = vld [vmem:[#allocation5 + $0x11e8] sm:$0xff]
    %v865 = vld [vmem:[#allocation5 + $0x11f0] sm:$0xff]
    %v866 = vld [vmem:[#allocation5 + $0x11f8] sm:$0xff]
    %v867 = vpack.c.bf16 %v285, %v285
    %v868 = vpack.c.bf16 %v286, %v286
    %v869 = vpack.c.bf16 %v287, %v287
    %v870 = vpack.c.bf16 %v288, %v288
    %v871 = vpack.c.bf16 %v289, %v289
    %v872 = vpack.c.bf16 %v290, %v290
    %v873 = vld [vmem:[#allocation7] sm:$0xff]
    %v874 = vld [vmem:[#allocation7 + $0x8] sm:$0xf]
    %v877 = vperm.slane %v873, 0
    %v878 = vperm.slane %v873, 1
    %v879 = vperm.slane %v873, 2
    %v880 = vperm.slane %v873, 3
    %v881 = vperm.slane %v873, 4
    %v882 = vperm.slane %v873, 5
    %v883 = vperm.slane %v873, 6
    %v884 = vperm.slane %v873, 7
    %v885 = vperm.slane %v874, 0
    %v886 = vperm.slane %v874, 1
    %v887 = vperm.slane %v874, 2
    %v888 = vperm.slane %v874, 3
    %v1477 = vunpack.c.l.b16 %v291
    %v1478 = vunpack.c.h.b16 %v291
    %v1479 = vunpack.c.l.b16 %v292
    %v1480 = vunpack.c.h.b16 %v292
    %v1481 = vunpack.c.l.b16 %v293
    %v1482 = vunpack.c.h.b16 %v293
    %v1483 = vunpack.c.l.b16 %v294
    %v1484 = vunpack.c.h.b16 %v294
    %v1485 = vunpack.c.l.b16 %v295
    %v1486 = vunpack.c.h.b16 %v295
    %v1487 = vunpack.c.l.b16 %v296
    %v1488 = vunpack.c.h.b16 %v296
    %v1489 = vunpack.c.l.b16 %v297
    %v1490 = vunpack.c.h.b16 %v297
    %v1491 = vunpack.c.l.b16 %v298
    %v1492 = vunpack.c.h.b16 %v298
    %v1493 = vunpack.c.l.b16 %v299
    %v1494 = vunpack.c.h.b16 %v299
    %v1495 = vunpack.c.l.b16 %v300
    %v1496 = vunpack.c.h.b16 %v300
    %v1497 = vunpack.c.l.b16 %v301
    %v1498 = vunpack.c.h.b16 %v301
    %v1499 = vunpack.c.l.b16 %v302
    %v1500 = vunpack.c.h.b16 %v302
    %v1501 = vunpack.c.l.b16 %v303
    %v1502 = vunpack.c.h.b16 %v303
    %v1503 = vunpack.c.l.b16 %v304
    %v1504 = vunpack.c.h.b16 %v304
    %v1505 = vunpack.c.l.b16 %v305
    %v1506 = vunpack.c.h.b16 %v305
    %v1507 = vunpack.c.l.b16 %v306
    %v1508 = vunpack.c.h.b16 %v306
    %v1509 = vunpack.c.l.b16 %v307
    %v1510 = vunpack.c.h.b16 %v307
    %v1511 = vunpack.c.l.b16 %v308
    %v1512 = vunpack.c.h.b16 %v308
    %v1513 = vunpack.c.l.b16 %v309
    %v1514 = vunpack.c.h.b16 %v309
    %v1515 = vunpack.c.l.b16 %v310
    %v1516 = vunpack.c.h.b16 %v310
    %v1517 = vunpack.c.l.b16 %v311
    %v1518 = vunpack.c.h.b16 %v311
    %v1519 = vunpack.c.l.b16 %v312
    %v1520 = vunpack.c.h.b16 %v312
    %v1521 = vunpack.c.l.b16 %v313
    %v1522 = vunpack.c.h.b16 %v313
    %v1523 = vunpack.c.l.b16 %v314
    %v1524 = vunpack.c.h.b16 %v314
    %v1525 = vunpack.c.l.b16 %v315
    %v1526 = vunpack.c.h.b16 %v315
    %v1527 = vunpack.c.l.b16 %v316
    %v1528 = vunpack.c.h.b16 %v316
    %v1529 = vunpack.c.l.b16 %v317
    %v1530 = vunpack.c.h.b16 %v317
    %v1531 = vunpack.c.l.b16 %v318
    %v1532 = vunpack.c.h.b16 %v318
    %v1533 = vunpack.c.l.b16 %v319
    %v1534 = vunpack.c.h.b16 %v319
    %v1535 = vunpack.c.l.b16 %v320
    %v1536 = vunpack.c.h.b16 %v320
    %v1537 = vunpack.c.l.b16 %v321
    %v1538 = vunpack.c.h.b16 %v321
    %v1539 = vunpack.c.l.b16 %v322
    %v1540 = vunpack.c.h.b16 %v322
    %v1541 = vunpack.c.l.b16 %v323
    %v1542 = vunpack.c.h.b16 %v323
    %v1543 = vunpack.c.l.b16 %v324
    %v1544 = vunpack.c.h.b16 %v324
    %v1545 = vunpack.c.l.b16 %v325
    %v1546 = vunpack.c.h.b16 %v325
    %v1547 = vunpack.c.l.b16 %v326
    %v1548 = vunpack.c.h.b16 %v326
    %v1549 = vunpack.c.l.b16 %v327
    %v1550 = vunpack.c.h.b16 %v327
    %v1551 = vunpack.c.l.b16 %v328
    %v1552 = vunpack.c.h.b16 %v328
    %v1553 = vunpack.c.l.b16 %v329
    %v1554 = vunpack.c.h.b16 %v329
    %v1555 = vunpack.c.l.b16 %v330
    %v1556 = vunpack.c.h.b16 %v330
    %v1557 = vunpack.c.l.b16 %v331
    %v1558 = vunpack.c.h.b16 %v331
    %v1559 = vunpack.c.l.b16 %v332
    %v1560 = vunpack.c.h.b16 %v332
    %v1561 = vunpack.c.l.b16 %v333
    %v1562 = vunpack.c.h.b16 %v333
    %v1563 = vunpack.c.l.b16 %v334
    %v1564 = vunpack.c.h.b16 %v334
    %v1565 = vunpack.c.l.b16 %v335
    %v1566 = vunpack.c.h.b16 %v335
    %v1567 = vunpack.c.l.b16 %v336
    %v1568 = vunpack.c.h.b16 %v336
    %v1569 = vunpack.c.l.b16 %v337
    %v1570 = vunpack.c.h.b16 %v337
    %v1571 = vunpack.c.l.b16 %v338
    %v1572 = vunpack.c.h.b16 %v338
    %v1573 = vunpack.c.l.b16 %v339
    %v1574 = vunpack.c.h.b16 %v339
    %v1575 = vunpack.c.l.b16 %v340
    %v1576 = vunpack.c.h.b16 %v340
    %v1577 = vunpack.c.l.b16 %v341
    %v1578 = vunpack.c.h.b16 %v341
    %v1579 = vunpack.c.l.b16 %v342
    %v1580 = vunpack.c.h.b16 %v342
    %v1581 = vunpack.c.l.b16 %v343
    %v1582 = vunpack.c.h.b16 %v343
    %v1583 = vunpack.c.l.b16 %v344
    %v1584 = vunpack.c.h.b16 %v344
    %v1585 = vunpack.c.l.b16 %v345
    %v1586 = vunpack.c.h.b16 %v345
    %v1587 = vunpack.c.l.b16 %v346
    %v1588 = vunpack.c.h.b16 %v346
    %v1589 = vunpack.c.l.b16 %v347
    %v1590 = vunpack.c.h.b16 %v347
    %v1591 = vunpack.c.l.b16 %v348
    %v1592 = vunpack.c.h.b16 %v348
    %v1593 = vunpack.c.l.b16 %v349
    %v1594 = vunpack.c.h.b16 %v349
    %v1595 = vunpack.c.l.b16 %v350
    %v1596 = vunpack.c.h.b16 %v350
    %v1597 = vunpack.c.l.b16 %v351
    %v1598 = vunpack.c.h.b16 %v351
    %v1599 = vunpack.c.l.b16 %v352
    %v1600 = vunpack.c.h.b16 %v352
    %v1601 = vunpack.c.l.b16 %v353
    %v1602 = vunpack.c.h.b16 %v353
    %v1603 = vunpack.c.l.b16 %v354
    %v1604 = vunpack.c.h.b16 %v354
    %v1605 = vunpack.c.l.b16 %v355
    %v1606 = vunpack.c.h.b16 %v355
    %v1607 = vunpack.c.l.b16 %v356
    %v1608 = vunpack.c.h.b16 %v356
    %v1609 = vunpack.c.l.b16 %v357
    %v1610 = vunpack.c.h.b16 %v357
    %v1611 = vunpack.c.l.b16 %v358
    %v1612 = vunpack.c.h.b16 %v358
    %v1613 = vunpack.c.l.b16 %v359
    %v1614 = vunpack.c.h.b16 %v359
    %v1615 = vunpack.c.l.b16 %v360
    %v1616 = vunpack.c.h.b16 %v360
    %v1617 = vunpack.c.l.b16 %v361
    %v1618 = vunpack.c.h.b16 %v361
    %v1619 = vunpack.c.l.b16 %v362
    %v1620 = vunpack.c.h.b16 %v362
    %v1621 = vunpack.c.l.b16 %v363
    %v1622 = vunpack.c.h.b16 %v363
    %v1623 = vunpack.c.l.b16 %v364
    %v1624 = vunpack.c.h.b16 %v364
    %v1625 = vunpack.c.l.b16 %v365
    %v1626 = vunpack.c.h.b16 %v365
    %v1627 = vunpack.c.l.b16 %v366
    %v1628 = vunpack.c.h.b16 %v366
    %v1629 = vunpack.c.l.b16 %v367
    %v1630 = vunpack.c.h.b16 %v367
    %v1631 = vunpack.c.l.b16 %v368
    %v1632 = vunpack.c.h.b16 %v368
    %v1633 = vunpack.c.l.b16 %v369
    %v1634 = vunpack.c.h.b16 %v369
    %v1635 = vunpack.c.l.b16 %v370
    %v1636 = vunpack.c.h.b16 %v370
    %v1637 = vunpack.c.l.b16 %v371
    %v1638 = vunpack.c.h.b16 %v371
    %v1639 = vunpack.c.l.b16 %v372
    %v1640 = vunpack.c.h.b16 %v372
    %v1641 = vunpack.c.l.b16 %v373
    %v1642 = vunpack.c.h.b16 %v373
    %v1643 = vunpack.c.l.b16 %v374
    %v1644 = vunpack.c.h.b16 %v374
    %v1645 = vunpack.c.l.b16 %v375
    %v1646 = vunpack.c.h.b16 %v375
    %v1647 = vunpack.c.l.b16 %v376
    %v1648 = vunpack.c.h.b16 %v376
    %v1649 = vunpack.c.l.b16 %v377
    %v1650 = vunpack.c.h.b16 %v377
    %v1651 = vunpack.c.l.b16 %v378
    %v1652 = vunpack.c.h.b16 %v378
    %v1653 = vunpack.c.l.b16 %v379
    %v1654 = vunpack.c.h.b16 %v379
    %v1655 = vunpack.c.l.b16 %v380
    %v1656 = vunpack.c.h.b16 %v380
    %v1657 = vunpack.c.l.b16 %v381
    %v1658 = vunpack.c.h.b16 %v381
    %v1659 = vunpack.c.l.b16 %v382
    %v1660 = vunpack.c.h.b16 %v382
    %v1661 = vunpack.c.l.b16 %v383
    %v1662 = vunpack.c.h.b16 %v383
    %v1663 = vunpack.c.l.b16 %v384
    %v1664 = vunpack.c.h.b16 %v384
    %v1665 = vunpack.c.l.b16 %v385
    %v1666 = vunpack.c.h.b16 %v385
    %v1667 = vunpack.c.l.b16 %v386
    %v1668 = vunpack.c.h.b16 %v386
    %v1669 = vunpack.c.l.b16 %v387
    %v1670 = vunpack.c.h.b16 %v387
    %v1671 = vunpack.c.l.b16 %v388
    %v1672 = vunpack.c.h.b16 %v388
    %v1673 = vunpack.c.l.b16 %v389
    %v1674 = vunpack.c.h.b16 %v389
    %v1675 = vunpack.c.l.b16 %v390
    %v1676 = vunpack.c.h.b16 %v390
    %v1677 = vunpack.c.l.b16 %v391
    %v1678 = vunpack.c.h.b16 %v391
    %v1679 = vunpack.c.l.b16 %v392
    %v1680 = vunpack.c.h.b16 %v392
    %v1681 = vunpack.c.l.b16 %v393
    %v1682 = vunpack.c.h.b16 %v393
    %v1683 = vunpack.c.l.b16 %v394
    %v1684 = vunpack.c.h.b16 %v394
    %v1685 = vunpack.c.l.b16 %v395
    %v1686 = vunpack.c.h.b16 %v395
    %v1687 = vunpack.c.l.b16 %v396
    %v1688 = vunpack.c.h.b16 %v396
    %v1689 = vunpack.c.l.b16 %v397
    %v1690 = vunpack.c.h.b16 %v397
    %v1691 = vunpack.c.l.b16 %v398
    %v1692 = vunpack.c.h.b16 %v398
    %v1693 = vunpack.c.l.b16 %v399
    %v1694 = vunpack.c.h.b16 %v399
    %v1695 = vunpack.c.l.b16 %v400
    %v1696 = vunpack.c.h.b16 %v400
    %v1697 = vunpack.c.l.b16 %v401
    %v1698 = vunpack.c.h.b16 %v401
    %v1699 = vunpack.c.l.b16 %v402
    %v1700 = vunpack.c.h.b16 %v402
    %v1701 = vunpack.c.l.b16 %v403
    %v1702 = vunpack.c.h.b16 %v403
    %v1703 = vunpack.c.l.b16 %v404
    %v1704 = vunpack.c.h.b16 %v404
    %v1705 = vunpack.c.l.b16 %v405
    %v1706 = vunpack.c.h.b16 %v405
    %v1707 = vunpack.c.l.b16 %v406
    %v1708 = vunpack.c.h.b16 %v406
    %v1709 = vunpack.c.l.b16 %v407
    %v1710 = vunpack.c.h.b16 %v407
    %v1711 = vunpack.c.l.b16 %v408
    %v1712 = vunpack.c.h.b16 %v408
    %v1713 = vunpack.c.l.b16 %v409
    %v1714 = vunpack.c.h.b16 %v409
    %v1715 = vunpack.c.l.b16 %v410
    %v1716 = vunpack.c.h.b16 %v410
    %v1717 = vunpack.c.l.b16 %v411
    %v1718 = vunpack.c.h.b16 %v411
    %v1719 = vunpack.c.l.b16 %v412
    %v1720 = vunpack.c.h.b16 %v412
    %v1721 = vunpack.c.l.b16 %v413
    %v1722 = vunpack.c.h.b16 %v413
    %v1723 = vunpack.c.l.b16 %v414
    %v1724 = vunpack.c.h.b16 %v414
    %v1725 = vunpack.c.l.b16 %v415
    %v1726 = vunpack.c.h.b16 %v415
    %v1727 = vunpack.c.l.b16 %v416
    %v1728 = vunpack.c.h.b16 %v416
    %v1729 = vunpack.c.l.b16 %v417
    %v1730 = vunpack.c.h.b16 %v417
    %v1731 = vunpack.c.l.b16 %v418
    %v1732 = vunpack.c.h.b16 %v418
    %v1733 = vunpack.c.l.b16 %v419
    %v1734 = vunpack.c.h.b16 %v419
    %v1735 = vunpack.c.l.b16 %v420
    %v1736 = vunpack.c.h.b16 %v420
    %v1737 = vunpack.c.l.b16 %v421
    %v1738 = vunpack.c.h.b16 %v421
    %v1739 = vunpack.c.l.b16 %v422
    %v1740 = vunpack.c.h.b16 %v422
    %v1741 = vunpack.c.l.b16 %v423
    %v1742 = vunpack.c.h.b16 %v423
    %v1743 = vunpack.c.l.b16 %v424
    %v1744 = vunpack.c.h.b16 %v424
    %v1745 = vunpack.c.l.b16 %v425
    %v1746 = vunpack.c.h.b16 %v425
    %v1747 = vunpack.c.l.b16 %v426
    %v1748 = vunpack.c.h.b16 %v426
    %v1749 = vunpack.c.l.b16 %v427
    %v1750 = vunpack.c.h.b16 %v427
    %v1751 = vunpack.c.l.b16 %v428
    %v1752 = vunpack.c.h.b16 %v428
    %v1753 = vunpack.c.l.b16 %v429
    %v1754 = vunpack.c.h.b16 %v429
    %v1755 = vunpack.c.l.b16 %v430
    %v1756 = vunpack.c.h.b16 %v430
    %v1757 = vunpack.c.l.b16 %v431
    %v1758 = vunpack.c.h.b16 %v431
    %v1759 = vunpack.c.l.b16 %v432
    %v1760 = vunpack.c.h.b16 %v432
    %v1761 = vunpack.c.l.b16 %v433
    %v1762 = vunpack.c.h.b16 %v433
    %v1763 = vunpack.c.l.b16 %v434
    %v1764 = vunpack.c.h.b16 %v434
    %v1765 = vunpack.c.l.b16 %v435
    %v1766 = vunpack.c.h.b16 %v435
    %v1767 = vunpack.c.l.b16 %v436
    %v1768 = vunpack.c.h.b16 %v436
    %v1769 = vunpack.c.l.b16 %v437
    %v1770 = vunpack.c.h.b16 %v437
    %v1771 = vunpack.c.l.b16 %v438
    %v1772 = vunpack.c.h.b16 %v438
    %v1773 = vunpack.c.l.b16 %v439
    %v1774 = vunpack.c.h.b16 %v439
    %v1775 = vunpack.c.l.b16 %v440
    %v1776 = vunpack.c.h.b16 %v440
    %v1777 = vunpack.c.l.b16 %v441
    %v1778 = vunpack.c.h.b16 %v441
    %v1779 = vunpack.c.l.b16 %v442
    %v1780 = vunpack.c.h.b16 %v442
    %v1781 = vunpack.c.l.b16 %v443
    %v1782 = vunpack.c.h.b16 %v443
    %v1783 = vunpack.c.l.b16 %v444
    %v1784 = vunpack.c.h.b16 %v444
    %v1785 = vunpack.c.l.b16 %v445
    %v1786 = vunpack.c.h.b16 %v445
    %v1787 = vunpack.c.l.b16 %v446
    %v1788 = vunpack.c.h.b16 %v446
    %v1789 = vunpack.c.l.b16 %v447
    %v1790 = vunpack.c.h.b16 %v447
    %v1791 = vunpack.c.l.b16 %v448
    %v1792 = vunpack.c.h.b16 %v448
    %v1793 = vunpack.c.l.b16 %v449
    %v1794 = vunpack.c.h.b16 %v449
    %v1795 = vunpack.c.l.b16 %v450
    %v1796 = vunpack.c.h.b16 %v450
    %v1797 = vunpack.c.l.b16 %v451
    %v1798 = vunpack.c.h.b16 %v451
    %v1799 = vunpack.c.l.b16 %v452
    %v1800 = vunpack.c.h.b16 %v452
    %v1801 = vunpack.c.l.b16 %v453
    %v1802 = vunpack.c.h.b16 %v453
    %v1803 = vunpack.c.l.b16 %v454
    %v1804 = vunpack.c.h.b16 %v454
    %v1805 = vunpack.c.l.b16 %v455
    %v1806 = vunpack.c.h.b16 %v455
    %v1807 = vunpack.c.l.b16 %v456
    %v1808 = vunpack.c.h.b16 %v456
    %v1809 = vunpack.c.l.b16 %v457
    %v1810 = vunpack.c.h.b16 %v457
    %v1811 = vunpack.c.l.b16 %v458
    %v1812 = vunpack.c.h.b16 %v458
    %v1813 = vunpack.c.l.b16 %v459
    %v1814 = vunpack.c.h.b16 %v459
    %v1815 = vunpack.c.l.b16 %v460
    %v1816 = vunpack.c.h.b16 %v460
    %v1817 = vunpack.c.l.b16 %v461
    %v1818 = vunpack.c.h.b16 %v461
    %v1819 = vunpack.c.l.b16 %v462
    %v1820 = vunpack.c.h.b16 %v462
    %v1821 = vunpack.c.l.b16 %v463
    %v1822 = vunpack.c.h.b16 %v463
    %v1823 = vunpack.c.l.b16 %v464
    %v1824 = vunpack.c.h.b16 %v464
    %v1825 = vunpack.c.l.b16 %v465
    %v1826 = vunpack.c.h.b16 %v465
    %v1827 = vunpack.c.l.b16 %v466
    %v1828 = vunpack.c.h.b16 %v466
    %v1829 = vunpack.c.l.b16 %v467
    %v1830 = vunpack.c.h.b16 %v467
    %v1831 = vunpack.c.l.b16 %v468
    %v1832 = vunpack.c.h.b16 %v468
    %v1833 = vunpack.c.l.b16 %v469
    %v1834 = vunpack.c.h.b16 %v469
    %v1835 = vunpack.c.l.b16 %v470
    %v1836 = vunpack.c.h.b16 %v470
    %v1837 = vunpack.c.l.b16 %v471
    %v1838 = vunpack.c.h.b16 %v471
    %v1839 = vunpack.c.l.b16 %v472
    %v1840 = vunpack.c.h.b16 %v472
    %v1841 = vunpack.c.l.b16 %v473
    %v1842 = vunpack.c.h.b16 %v473
    %v1843 = vunpack.c.l.b16 %v474
    %v1844 = vunpack.c.h.b16 %v474
    %v1845 = vunpack.c.l.b16 %v475
    %v1846 = vunpack.c.h.b16 %v475
    %v1847 = vunpack.c.l.b16 %v476
    %v1848 = vunpack.c.h.b16 %v476
    %v1849 = vunpack.c.l.b16 %v477
    %v1850 = vunpack.c.h.b16 %v477
    %v1851 = vunpack.c.l.b16 %v478
    %v1852 = vunpack.c.h.b16 %v478
    %v1853 = vunpack.c.l.b16 %v479
    %v1854 = vunpack.c.h.b16 %v479
    %v1855 = vunpack.c.l.b16 %v480
    %v1856 = vunpack.c.h.b16 %v480
    %v1857 = vunpack.c.l.b16 %v481
    %v1858 = vunpack.c.h.b16 %v481
    %v1859 = vunpack.c.l.b16 %v482
    %v1860 = vunpack.c.h.b16 %v482
    %v1861 = vunpack.c.l.b16 %v483
    %v1862 = vunpack.c.h.b16 %v483
    %v1863 = vunpack.c.l.b16 %v484
    %v1864 = vunpack.c.h.b16 %v484
    %v1865 = vunpack.c.l.b16 %v485
    %v1866 = vunpack.c.h.b16 %v485
    %v1867 = vunpack.c.l.b16 %v486
    %v1868 = vunpack.c.h.b16 %v486
    %v1869 = vunpack.c.l.b16 %v487
    %v1870 = vunpack.c.h.b16 %v487
    %v1871 = vunpack.c.l.b16 %v488
    %v1872 = vunpack.c.h.b16 %v488
    %v1873 = vunpack.c.l.b16 %v489
    %v1874 = vunpack.c.h.b16 %v489
    %v1875 = vunpack.c.l.b16 %v490
    %v1876 = vunpack.c.h.b16 %v490
    %v1877 = vunpack.c.l.b16 %v491
    %v1878 = vunpack.c.h.b16 %v491
    %v1879 = vunpack.c.l.b16 %v492
    %v1880 = vunpack.c.h.b16 %v492
    %v1881 = vunpack.c.l.b16 %v493
    %v1882 = vunpack.c.h.b16 %v493
    %v1883 = vunpack.c.l.b16 %v494
    %v1884 = vunpack.c.h.b16 %v494
    %v1885 = vunpack.c.l.b16 %v495
    %v1886 = vunpack.c.h.b16 %v495
    %v1887 = vunpack.c.l.b16 %v496
    %v1888 = vunpack.c.h.b16 %v496
    %v1889 = vunpack.c.l.b16 %v497
    %v1890 = vunpack.c.h.b16 %v497
    %v1891 = vunpack.c.l.b16 %v498
    %v1892 = vunpack.c.h.b16 %v498
    %v1893 = vunpack.c.l.b16 %v499
    %v1894 = vunpack.c.h.b16 %v499
    %v1895 = vunpack.c.l.b16 %v500
    %v1896 = vunpack.c.h.b16 %v500
    %v1897 = vunpack.c.l.b16 %v501
    %v1898 = vunpack.c.h.b16 %v501
    %v1899 = vunpack.c.l.b16 %v502
    %v1900 = vunpack.c.h.b16 %v502
    %v1901 = vunpack.c.l.b16 %v503
    %v1902 = vunpack.c.h.b16 %v503
    %v1903 = vunpack.c.l.b16 %v504
    %v1904 = vunpack.c.h.b16 %v504
    %v1905 = vunpack.c.l.b16 %v505
    %v1906 = vunpack.c.h.b16 %v505
    %v1907 = vunpack.c.l.b16 %v506
    %v1908 = vunpack.c.h.b16 %v506
    %v1909 = vunpack.c.l.b16 %v507
    %v1910 = vunpack.c.h.b16 %v507
    %v1911 = vunpack.c.l.b16 %v508
    %v1912 = vunpack.c.h.b16 %v508
    %v1913 = vunpack.c.l.b16 %v509
    %v1914 = vunpack.c.h.b16 %v509
    %v1915 = vunpack.c.l.b16 %v510
    %v1916 = vunpack.c.h.b16 %v510
    %v1917 = vunpack.c.l.b16 %v511
    %v1918 = vunpack.c.h.b16 %v511
    %v1919 = vunpack.c.l.b16 %v512
    %v1920 = vunpack.c.h.b16 %v512
    %v1921 = vunpack.c.l.b16 %v513
    %v1922 = vunpack.c.h.b16 %v513
    %v1923 = vunpack.c.l.b16 %v514
    %v1924 = vunpack.c.h.b16 %v514
    %v1925 = vunpack.c.l.b16 %v515
    %v1926 = vunpack.c.h.b16 %v515
    %v1927 = vunpack.c.l.b16 %v516
    %v1928 = vunpack.c.h.b16 %v516
    %v1929 = vunpack.c.l.b16 %v517
    %v1930 = vunpack.c.h.b16 %v517
    %v1931 = vunpack.c.l.b16 %v518
    %v1932 = vunpack.c.h.b16 %v518
    %v1933 = vunpack.c.l.b16 %v519
    %v1934 = vunpack.c.h.b16 %v519
    %v1935 = vunpack.c.l.b16 %v520
    %v1936 = vunpack.c.h.b16 %v520
    %v1937 = vunpack.c.l.b16 %v521
    %v1938 = vunpack.c.h.b16 %v521
    %v1939 = vunpack.c.l.b16 %v522
    %v1940 = vunpack.c.h.b16 %v522
    %v1941 = vunpack.c.l.b16 %v523
    %v1942 = vunpack.c.h.b16 %v523
    %v1943 = vunpack.c.l.b16 %v524
    %v1944 = vunpack.c.h.b16 %v524
    %v1945 = vunpack.c.l.b16 %v525
    %v1946 = vunpack.c.h.b16 %v525
    %v1947 = vunpack.c.l.b16 %v526
    %v1948 = vunpack.c.h.b16 %v526
    %v1949 = vunpack.c.l.b16 %v527
    %v1950 = vunpack.c.h.b16 %v527
    %v1951 = vunpack.c.l.b16 %v528
    %v1952 = vunpack.c.h.b16 %v528
    %v1953 = vunpack.c.l.b16 %v529
    %v1954 = vunpack.c.h.b16 %v529
    %v1955 = vunpack.c.l.b16 %v530
    %v1956 = vunpack.c.h.b16 %v530
    %v1957 = vunpack.c.l.b16 %v531
    %v1958 = vunpack.c.h.b16 %v531
    %v1959 = vunpack.c.l.b16 %v532
    %v1960 = vunpack.c.h.b16 %v532
    %v1961 = vunpack.c.l.b16 %v533
    %v1962 = vunpack.c.h.b16 %v533
    %v1963 = vunpack.c.l.b16 %v534
    %v1964 = vunpack.c.h.b16 %v534
    %v1965 = vunpack.c.l.b16 %v535
    %v1966 = vunpack.c.h.b16 %v535
    %v1967 = vunpack.c.l.b16 %v536
    %v1968 = vunpack.c.h.b16 %v536
    %v1969 = vunpack.c.l.b16 %v537
    %v1970 = vunpack.c.h.b16 %v537
    %v1971 = vunpack.c.l.b16 %v538
    %v1972 = vunpack.c.h.b16 %v538
    %v1973 = vunpack.c.l.b16 %v539
    %v1974 = vunpack.c.h.b16 %v539
    %v1975 = vunpack.c.l.b16 %v540
    %v1976 = vunpack.c.h.b16 %v540
    %v1977 = vunpack.c.l.b16 %v541
    %v1978 = vunpack.c.h.b16 %v541
    %v1979 = vunpack.c.l.b16 %v542
    %v1980 = vunpack.c.h.b16 %v542
    %v1981 = vunpack.c.l.b16 %v543
    %v1982 = vunpack.c.h.b16 %v543
    %v1983 = vunpack.c.l.b16 %v544
    %v1984 = vunpack.c.h.b16 %v544
    %v1985 = vunpack.c.l.b16 %v545
    %v1986 = vunpack.c.h.b16 %v545
    %v1987 = vunpack.c.l.b16 %v546
    %v1988 = vunpack.c.h.b16 %v546
    %v1989 = vunpack.c.l.b16 %v547
    %v1990 = vunpack.c.h.b16 %v547
    %v1991 = vunpack.c.l.b16 %v548
    %v1992 = vunpack.c.h.b16 %v548
    %v1993 = vunpack.c.l.b16 %v549
    %v1994 = vunpack.c.h.b16 %v549
    %v1995 = vunpack.c.l.b16 %v550
    %v1996 = vunpack.c.h.b16 %v550
    %v1997 = vunpack.c.l.b16 %v551
    %v1998 = vunpack.c.h.b16 %v551
    %v1999 = vunpack.c.l.b16 %v552
    %v2000 = vunpack.c.h.b16 %v552
    %v2001 = vunpack.c.l.b16 %v553
    %v2002 = vunpack.c.h.b16 %v553
    %v2003 = vunpack.c.l.b16 %v554
    %v2004 = vunpack.c.h.b16 %v554
    %v2005 = vunpack.c.l.b16 %v555
    %v2006 = vunpack.c.h.b16 %v555
    %v2007 = vunpack.c.l.b16 %v556
    %v2008 = vunpack.c.h.b16 %v556
    %v2009 = vunpack.c.l.b16 %v557
    %v2010 = vunpack.c.h.b16 %v557
    %v2011 = vunpack.c.l.b16 %v558
    %v2012 = vunpack.c.h.b16 %v558
    %v2013 = vunpack.c.l.b16 %v559
    %v2014 = vunpack.c.h.b16 %v559
    %v2015 = vunpack.c.l.b16 %v560
    %v2016 = vunpack.c.h.b16 %v560
    %v2017 = vunpack.c.l.b16 %v561
    %v2018 = vunpack.c.h.b16 %v561
    %v2019 = vunpack.c.l.b16 %v562
    %v2020 = vunpack.c.h.b16 %v562
    %v2021 = vunpack.c.l.b16 %v563
    %v2022 = vunpack.c.h.b16 %v563
    %v2023 = vunpack.c.l.b16 %v564
    %v2024 = vunpack.c.h.b16 %v564
    %v2025 = vunpack.c.l.b16 %v565
    %v2026 = vunpack.c.h.b16 %v565
    %v2027 = vunpack.c.l.b16 %v566
    %v2028 = vunpack.c.h.b16 %v566
    %v2029 = vunpack.c.l.b16 %v567
    %v2030 = vunpack.c.h.b16 %v567
    %v2031 = vunpack.c.l.b16 %v568
    %v2032 = vunpack.c.h.b16 %v568
    %v2033 = vunpack.c.l.b16 %v569
    %v2034 = vunpack.c.h.b16 %v569
    %v2035 = vunpack.c.l.b16 %v570
    %v2036 = vunpack.c.h.b16 %v570
    %v2037 = vunpack.c.l.b16 %v571
    %v2038 = vunpack.c.h.b16 %v571
    %v2039 = vunpack.c.l.b16 %v572
    %v2040 = vunpack.c.h.b16 %v572
    %v2041 = vunpack.c.l.b16 %v573
    %v2042 = vunpack.c.h.b16 %v573
    %v2043 = vunpack.c.l.b16 %v574
    %v2044 = vunpack.c.h.b16 %v574
    %v2045 = vunpack.c.l.b16 %v575
    %v2046 = vunpack.c.h.b16 %v575
    %v2047 = vunpack.c.l.b16 %v576
    %v2048 = vunpack.c.h.b16 %v576
    %v2049 = vunpack.c.l.b16 %v577
    %v2050 = vunpack.c.h.b16 %v577
    %v2051 = vunpack.c.l.b16 %v578
    %v2052 = vunpack.c.h.b16 %v578
    %v2053 = vunpack.c.l.b16 %v579
    %v2054 = vunpack.c.h.b16 %v579
    %v2055 = vunpack.c.l.b16 %v580
    %v2056 = vunpack.c.h.b16 %v580
    %v2057 = vunpack.c.l.b16 %v581
    %v2058 = vunpack.c.h.b16 %v581
    %v2059 = vunpack.c.l.b16 %v582
    %v2060 = vunpack.c.h.b16 %v582
    %v2061 = vunpack.c.l.b16 %v583
    %v2062 = vunpack.c.h.b16 %v583
    %v2063 = vunpack.c.l.b16 %v584
    %v2064 = vunpack.c.h.b16 %v584
    %v2065 = vunpack.c.l.b16 %v585
    %v2066 = vunpack.c.h.b16 %v585
    %v2067 = vunpack.c.l.b16 %v586
    %v2068 = vunpack.c.h.b16 %v586
    %v2069 = vunpack.c.l.b16 %v587
    %v2070 = vunpack.c.h.b16 %v587
    %v2071 = vunpack.c.l.b16 %v588
    %v2072 = vunpack.c.h.b16 %v588
    %v2073 = vunpack.c.l.b16 %v589
    %v2074 = vunpack.c.h.b16 %v589
    %v2075 = vunpack.c.l.b16 %v590
    %v2076 = vunpack.c.h.b16 %v590
    %v2077 = vunpack.c.l.b16 %v591
    %v2078 = vunpack.c.h.b16 %v591
    %v2079 = vunpack.c.l.b16 %v592
    %v2080 = vunpack.c.h.b16 %v592
    %v2081 = vunpack.c.l.b16 %v593
    %v2082 = vunpack.c.h.b16 %v593
    %v2083 = vunpack.c.l.b16 %v594
    %v2084 = vunpack.c.h.b16 %v594
    %v2085 = vunpack.c.l.b16 %v595
    %v2086 = vunpack.c.h.b16 %v595
    %v2087 = vunpack.c.l.b16 %v596
    %v2088 = vunpack.c.h.b16 %v596
    %v2089 = vunpack.c.l.b16 %v597
    %v2090 = vunpack.c.h.b16 %v597
    %v2091 = vunpack.c.l.b16 %v598
    %v2092 = vunpack.c.h.b16 %v598
    %v2093 = vunpack.c.l.b16 %v599
    %v2094 = vunpack.c.h.b16 %v599
    %v2095 = vunpack.c.l.b16 %v600
    %v2096 = vunpack.c.h.b16 %v600
    %v2097 = vunpack.c.l.b16 %v601
    %v2098 = vunpack.c.h.b16 %v601
    %v2099 = vunpack.c.l.b16 %v602
    %v2100 = vunpack.c.h.b16 %v602
    %v2101 = vunpack.c.l.b16 %v603
    %v2102 = vunpack.c.h.b16 %v603
    %v2103 = vunpack.c.l.b16 %v604
    %v2104 = vunpack.c.h.b16 %v604
    %v2105 = vunpack.c.l.b16 %v605
    %v2106 = vunpack.c.h.b16 %v605
    %v2107 = vunpack.c.l.b16 %v606
    %v2108 = vunpack.c.h.b16 %v606
    %v2109 = vunpack.c.l.b16 %v607
    %v2110 = vunpack.c.h.b16 %v607
    %v2111 = vunpack.c.l.b16 %v608
    %v2112 = vunpack.c.h.b16 %v608
    %v2113 = vunpack.c.l.b16 %v609
    %v2114 = vunpack.c.h.b16 %v609
    %v2115 = vunpack.c.l.b16 %v610
    %v2116 = vunpack.c.h.b16 %v610
    %v2117 = vunpack.c.l.b16 %v611
    %v2118 = vunpack.c.h.b16 %v611
    %v2119 = vunpack.c.l.b16 %v612
    %v2120 = vunpack.c.h.b16 %v612
    %v2121 = vunpack.c.l.b16 %v613
    %v2122 = vunpack.c.h.b16 %v613
    %v2123 = vunpack.c.l.b16 %v614
    %v2124 = vunpack.c.h.b16 %v614
    %v2125 = vunpack.c.l.b16 %v615
    %v2126 = vunpack.c.h.b16 %v615
    %v2127 = vunpack.c.l.b16 %v616
    %v2128 = vunpack.c.h.b16 %v616
    %v2129 = vunpack.c.l.b16 %v617
    %v2130 = vunpack.c.h.b16 %v617
    %v2131 = vunpack.c.l.b16 %v618
    %v2132 = vunpack.c.h.b16 %v618
    %v2133 = vunpack.c.l.b16 %v619
    %v2134 = vunpack.c.h.b16 %v619
    %v2135 = vunpack.c.l.b16 %v620
    %v2136 = vunpack.c.h.b16 %v620
    %v2137 = vunpack.c.l.b16 %v621
    %v2138 = vunpack.c.h.b16 %v621
    %v2139 = vunpack.c.l.b16 %v622
    %v2140 = vunpack.c.h.b16 %v622
    %v2141 = vunpack.c.l.b16 %v623
    %v2142 = vunpack.c.h.b16 %v623
    %v2143 = vunpack.c.l.b16 %v624
    %v2144 = vunpack.c.h.b16 %v624
    %v2145 = vunpack.c.l.b16 %v625
    %v2146 = vunpack.c.h.b16 %v625
    %v2147 = vunpack.c.l.b16 %v626
    %v2148 = vunpack.c.h.b16 %v626
    %v2149 = vunpack.c.l.b16 %v627
    %v2150 = vunpack.c.h.b16 %v627
    %v2151 = vunpack.c.l.b16 %v628
    %v2152 = vunpack.c.h.b16 %v628
    %v2153 = vunpack.c.l.b16 %v629
    %v2154 = vunpack.c.h.b16 %v629
    %v2155 = vunpack.c.l.b16 %v630
    %v2156 = vunpack.c.h.b16 %v630
    %v2157 = vunpack.c.l.b16 %v631
    %v2158 = vunpack.c.h.b16 %v631
    %v2159 = vunpack.c.l.b16 %v632
    %v2160 = vunpack.c.h.b16 %v632
    %v2161 = vunpack.c.l.b16 %v633
    %v2162 = vunpack.c.h.b16 %v633
    %v2163 = vunpack.c.l.b16 %v634
    %v2164 = vunpack.c.h.b16 %v634
    %v2165 = vunpack.c.l.b16 %v635
    %v2166 = vunpack.c.h.b16 %v635
    %v2167 = vunpack.c.l.b16 %v636
    %v2168 = vunpack.c.h.b16 %v636
    %v2169 = vunpack.c.l.b16 %v637
    %v2170 = vunpack.c.h.b16 %v637
    %v2171 = vunpack.c.l.b16 %v638
    %v2172 = vunpack.c.h.b16 %v638
    %v2173 = vunpack.c.l.b16 %v639
    %v2174 = vunpack.c.h.b16 %v639
    %v2175 = vunpack.c.l.b16 %v640
    %v2176 = vunpack.c.h.b16 %v640
    %v2177 = vunpack.c.l.b16 %v641
    %v2178 = vunpack.c.h.b16 %v641
    %v2179 = vunpack.c.l.b16 %v642
    %v2180 = vunpack.c.h.b16 %v642
    %v2181 = vunpack.c.l.b16 %v643
    %v2182 = vunpack.c.h.b16 %v643
    %v2183 = vunpack.c.l.b16 %v644
    %v2184 = vunpack.c.h.b16 %v644
    %v2185 = vunpack.c.l.b16 %v645
    %v2186 = vunpack.c.h.b16 %v645
    %v2187 = vunpack.c.l.b16 %v646
    %v2188 = vunpack.c.h.b16 %v646
    %v2189 = vunpack.c.l.b16 %v647
    %v2190 = vunpack.c.h.b16 %v647
    %v2191 = vunpack.c.l.b16 %v648
    %v2192 = vunpack.c.h.b16 %v648
    %v2193 = vunpack.c.l.b16 %v649
    %v2194 = vunpack.c.h.b16 %v649
    %v2195 = vunpack.c.l.b16 %v650
    %v2196 = vunpack.c.h.b16 %v650
    %v2197 = vunpack.c.l.b16 %v651
    %v2198 = vunpack.c.h.b16 %v651
    %v2199 = vunpack.c.l.b16 %v652
    %v2200 = vunpack.c.h.b16 %v652
    %v2201 = vunpack.c.l.b16 %v653
    %v2202 = vunpack.c.h.b16 %v653
    %v2203 = vunpack.c.l.b16 %v654
    %v2204 = vunpack.c.h.b16 %v654
    %v2205 = vunpack.c.l.b16 %v655
    %v2206 = vunpack.c.h.b16 %v655
    %v2207 = vunpack.c.l.b16 %v656
    %v2208 = vunpack.c.h.b16 %v656
    %v2209 = vunpack.c.l.b16 %v657
    %v2210 = vunpack.c.h.b16 %v657
    %v2211 = vunpack.c.l.b16 %v658
    %v2212 = vunpack.c.h.b16 %v658
    %v2213 = vunpack.c.l.b16 %v659
    %v2214 = vunpack.c.h.b16 %v659
    %v2215 = vunpack.c.l.b16 %v660
    %v2216 = vunpack.c.h.b16 %v660
    %v2217 = vunpack.c.l.b16 %v661
    %v2218 = vunpack.c.h.b16 %v661
    %v2219 = vunpack.c.l.b16 %v662
    %v2220 = vunpack.c.h.b16 %v662
    %v2221 = vunpack.c.l.b16 %v663
    %v2222 = vunpack.c.h.b16 %v663
    %v2223 = vunpack.c.l.b16 %v664
    %v2224 = vunpack.c.h.b16 %v664
    %v2225 = vunpack.c.l.b16 %v665
    %v2226 = vunpack.c.h.b16 %v665
    %v2227 = vunpack.c.l.b16 %v666
    %v2228 = vunpack.c.h.b16 %v666
    %v2229 = vunpack.c.l.b16 %v667
    %v2230 = vunpack.c.h.b16 %v667
    %v2231 = vunpack.c.l.b16 %v668
    %v2232 = vunpack.c.h.b16 %v668
    %v2233 = vunpack.c.l.b16 %v669
    %v2234 = vunpack.c.h.b16 %v669
    %v2235 = vunpack.c.l.b16 %v670
    %v2236 = vunpack.c.h.b16 %v670
    %v2237 = vunpack.c.l.b16 %v671
    %v2238 = vunpack.c.h.b16 %v671
    %v2239 = vunpack.c.l.b16 %v672
    %v2240 = vunpack.c.h.b16 %v672
    %v2241 = vunpack.c.l.b16 %v673
    %v2242 = vunpack.c.h.b16 %v673
    %v2243 = vunpack.c.l.b16 %v674
    %v2244 = vunpack.c.h.b16 %v674
    %v2245 = vunpack.c.l.b16 %v675
    %v2246 = vunpack.c.h.b16 %v675
    %v2247 = vunpack.c.l.b16 %v676
    %v2248 = vunpack.c.h.b16 %v676
    %v2249 = vunpack.c.l.b16 %v677
    %v2250 = vunpack.c.h.b16 %v677
    %v2251 = vunpack.c.l.b16 %v678
    %v2252 = vunpack.c.h.b16 %v678
    %v2253 = vunpack.c.l.b16 %v679
    %v2254 = vunpack.c.h.b16 %v679
    %v2255 = vunpack.c.l.b16 %v680
    %v2256 = vunpack.c.h.b16 %v680
    %v2257 = vunpack.c.l.b16 %v681
    %v2258 = vunpack.c.h.b16 %v681
    %v2259 = vunpack.c.l.b16 %v682
    %v2260 = vunpack.c.h.b16 %v682
    %v2261 = vunpack.c.l.b16 %v683
    %v2262 = vunpack.c.h.b16 %v683
    %v2263 = vunpack.c.l.b16 %v684
    %v2264 = vunpack.c.h.b16 %v684
    %v2265 = vunpack.c.l.b16 %v685
    %v2266 = vunpack.c.h.b16 %v685
    %v2267 = vunpack.c.l.b16 %v686
    %v2268 = vunpack.c.h.b16 %v686
    %v2269 = vunpack.c.l.b16 %v687
    %v2270 = vunpack.c.h.b16 %v687
    %v2271 = vunpack.c.l.b16 %v688
    %v2272 = vunpack.c.h.b16 %v688
    %v2273 = vunpack.c.l.b16 %v689
    %v2274 = vunpack.c.h.b16 %v689
    %v2275 = vunpack.c.l.b16 %v690
    %v2276 = vunpack.c.h.b16 %v690
    %v2277 = vunpack.c.l.b16 %v691
    %v2278 = vunpack.c.h.b16 %v691
    %v2279 = vunpack.c.l.b16 %v692
    %v2280 = vunpack.c.h.b16 %v692
    %v2281 = vunpack.c.l.b16 %v693
    %v2282 = vunpack.c.h.b16 %v693
    %v2283 = vunpack.c.l.b16 %v694
    %v2284 = vunpack.c.h.b16 %v694
    %v2285 = vunpack.c.l.b16 %v695
    %v2286 = vunpack.c.h.b16 %v695
    %v2287 = vunpack.c.l.b16 %v696
    %v2288 = vunpack.c.h.b16 %v696
    %v2289 = vunpack.c.l.b16 %v697
    %v2290 = vunpack.c.h.b16 %v697
    %v2291 = vunpack.c.l.b16 %v698
    %v2292 = vunpack.c.h.b16 %v698
    %v2293 = vunpack.c.l.b16 %v699
    %v2294 = vunpack.c.h.b16 %v699
    %v2295 = vunpack.c.l.b16 %v700
    %v2296 = vunpack.c.h.b16 %v700
    %v2297 = vunpack.c.l.b16 %v701
    %v2298 = vunpack.c.h.b16 %v701
    %v2299 = vunpack.c.l.b16 %v702
    %v2300 = vunpack.c.h.b16 %v702
    %v2301 = vunpack.c.l.b16 %v703
    %v2302 = vunpack.c.h.b16 %v703
    %v2303 = vunpack.c.l.b16 %v704
    %v2304 = vunpack.c.h.b16 %v704
    %v2305 = vunpack.c.l.b16 %v705
    %v2306 = vunpack.c.h.b16 %v705
    %v2307 = vunpack.c.l.b16 %v706
    %v2308 = vunpack.c.h.b16 %v706
    %v2309 = vunpack.c.l.b16 %v707
    %v2310 = vunpack.c.h.b16 %v707
    %v2311 = vunpack.c.l.b16 %v708
    %v2312 = vunpack.c.h.b16 %v708
    %v2313 = vunpack.c.l.b16 %v709
    %v2314 = vunpack.c.h.b16 %v709
    %v2315 = vunpack.c.l.b16 %v710
    %v2316 = vunpack.c.h.b16 %v710
    %v2317 = vunpack.c.l.b16 %v711
    %v2318 = vunpack.c.h.b16 %v711
    %v2319 = vunpack.c.l.b16 %v712
    %v2320 = vunpack.c.h.b16 %v712
    %v2321 = vunpack.c.l.b16 %v713
    %v2322 = vunpack.c.h.b16 %v713
    %v2323 = vunpack.c.l.b16 %v714
    %v2324 = vunpack.c.h.b16 %v714
    %v2325 = vunpack.c.l.b16 %v715
    %v2326 = vunpack.c.h.b16 %v715
    %v2327 = vunpack.c.l.b16 %v716
    %v2328 = vunpack.c.h.b16 %v716
    %v2329 = vunpack.c.l.b16 %v717
    %v2330 = vunpack.c.h.b16 %v717
    %v2331 = vunpack.c.l.b16 %v718
    %v2332 = vunpack.c.h.b16 %v718
    %v2333 = vunpack.c.l.b16 %v719
    %v2334 = vunpack.c.h.b16 %v719
    %v2335 = vunpack.c.l.b16 %v720
    %v2336 = vunpack.c.h.b16 %v720
    %v2337 = vunpack.c.l.b16 %v721
    %v2338 = vunpack.c.h.b16 %v721
    %v2339 = vunpack.c.l.b16 %v722
    %v2340 = vunpack.c.h.b16 %v722
    %v2341 = vunpack.c.l.b16 %v723
    %v2342 = vunpack.c.h.b16 %v723
    %v2343 = vunpack.c.l.b16 %v724
    %v2344 = vunpack.c.h.b16 %v724
    %v2345 = vunpack.c.l.b16 %v725
    %v2346 = vunpack.c.h.b16 %v725
    %v2347 = vunpack.c.l.b16 %v726
    %v2348 = vunpack.c.h.b16 %v726
    %v2349 = vunpack.c.l.b16 %v727
    %v2350 = vunpack.c.h.b16 %v727
    %v2351 = vunpack.c.l.b16 %v728
    %v2352 = vunpack.c.h.b16 %v728
    %v2353 = vunpack.c.l.b16 %v729
    %v2354 = vunpack.c.h.b16 %v729
    %v2355 = vunpack.c.l.b16 %v730
    %v2356 = vunpack.c.h.b16 %v730
    %v2357 = vunpack.c.l.b16 %v731
    %v2358 = vunpack.c.h.b16 %v731
    %v2359 = vunpack.c.l.b16 %v732
    %v2360 = vunpack.c.h.b16 %v732
    %v2361 = vunpack.c.l.b16 %v733
    %v2362 = vunpack.c.h.b16 %v733
    %v2363 = vunpack.c.l.b16 %v734
    %v2364 = vunpack.c.h.b16 %v734
    %v2365 = vunpack.c.l.b16 %v735
    %v2366 = vunpack.c.h.b16 %v735
    %v2367 = vunpack.c.l.b16 %v736
    %v2368 = vunpack.c.h.b16 %v736
    %v2369 = vunpack.c.l.b16 %v737
    %v2370 = vunpack.c.h.b16 %v737
    %v2371 = vunpack.c.l.b16 %v738
    %v2372 = vunpack.c.h.b16 %v738
    %v2373 = vunpack.c.l.b16 %v739
    %v2374 = vunpack.c.h.b16 %v739
    %v2375 = vunpack.c.l.b16 %v740
    %v2376 = vunpack.c.h.b16 %v740
    %v2377 = vunpack.c.l.b16 %v741
    %v2378 = vunpack.c.h.b16 %v741
    %v2379 = vunpack.c.l.b16 %v742
    %v2380 = vunpack.c.h.b16 %v742
    %v2381 = vunpack.c.l.b16 %v743
    %v2382 = vunpack.c.h.b16 %v743
    %v2383 = vunpack.c.l.b16 %v744
    %v2384 = vunpack.c.h.b16 %v744
    %v2385 = vunpack.c.l.b16 %v745
    %v2386 = vunpack.c.h.b16 %v745
    %v2387 = vunpack.c.l.b16 %v746
    %v2388 = vunpack.c.h.b16 %v746
    %v2389 = vunpack.c.l.b16 %v747
    %v2390 = vunpack.c.h.b16 %v747
    %v2391 = vunpack.c.l.b16 %v748
    %v2392 = vunpack.c.h.b16 %v748
    %v2393 = vunpack.c.l.b16 %v749
    %v2394 = vunpack.c.h.b16 %v749
    %v2395 = vunpack.c.l.b16 %v750
    %v2396 = vunpack.c.h.b16 %v750
    %v2397 = vunpack.c.l.b16 %v751
    %v2398 = vunpack.c.h.b16 %v751
    %v2399 = vunpack.c.l.b16 %v752
    %v2400 = vunpack.c.h.b16 %v752
    %v2401 = vunpack.c.l.b16 %v753
    %v2402 = vunpack.c.h.b16 %v753
    %v2403 = vunpack.c.l.b16 %v754
    %v2404 = vunpack.c.h.b16 %v754
    %v2405 = vunpack.c.l.b16 %v755
    %v2406 = vunpack.c.h.b16 %v755
    %v2407 = vunpack.c.l.b16 %v756
    %v2408 = vunpack.c.h.b16 %v756
    %v2409 = vunpack.c.l.b16 %v757
    %v2410 = vunpack.c.h.b16 %v757
    %v2411 = vunpack.c.l.b16 %v758
    %v2412 = vunpack.c.h.b16 %v758
    %v2413 = vunpack.c.l.b16 %v759
    %v2414 = vunpack.c.h.b16 %v759
    %v2415 = vunpack.c.l.b16 %v760
    %v2416 = vunpack.c.h.b16 %v760
    %v2417 = vunpack.c.l.b16 %v761
    %v2418 = vunpack.c.h.b16 %v761
    %v2419 = vunpack.c.l.b16 %v762
    %v2420 = vunpack.c.h.b16 %v762
    %v2421 = vunpack.c.l.b16 %v763
    %v2422 = vunpack.c.h.b16 %v763
    %v2423 = vunpack.c.l.b16 %v764
    %v2424 = vunpack.c.h.b16 %v764
    %v2425 = vunpack.c.l.b16 %v765
    %v2426 = vunpack.c.h.b16 %v765
    %v2427 = vunpack.c.l.b16 %v766
    %v2428 = vunpack.c.h.b16 %v766
    %v2429 = vunpack.c.l.b16 %v767
    %v2430 = vunpack.c.h.b16 %v767
    %v2431 = vunpack.c.l.b16 %v768
    %v2432 = vunpack.c.h.b16 %v768
    %v2433 = vunpack.c.l.b16 %v769
    %v2434 = vunpack.c.h.b16 %v769
    %v2435 = vunpack.c.l.b16 %v770
    %v2436 = vunpack.c.h.b16 %v770
    %v2437 = vunpack.c.l.b16 %v771
    %v2438 = vunpack.c.h.b16 %v771
    %v2439 = vunpack.c.l.b16 %v772
    %v2440 = vunpack.c.h.b16 %v772
    %v2441 = vunpack.c.l.b16 %v773
    %v2442 = vunpack.c.h.b16 %v773
    %v2443 = vunpack.c.l.b16 %v774
    %v2444 = vunpack.c.h.b16 %v774
    %v2445 = vunpack.c.l.b16 %v775
    %v2446 = vunpack.c.h.b16 %v775
    %v2447 = vunpack.c.l.b16 %v776
    %v2448 = vunpack.c.h.b16 %v776
    %v2449 = vunpack.c.l.b16 %v777
    %v2450 = vunpack.c.h.b16 %v777
    %v2451 = vunpack.c.l.b16 %v778
    %v2452 = vunpack.c.h.b16 %v778
    %v2453 = vunpack.c.l.b16 %v779
    %v2454 = vunpack.c.h.b16 %v779
    %v2455 = vunpack.c.l.b16 %v780
    %v2456 = vunpack.c.h.b16 %v780
    %v2457 = vunpack.c.l.b16 %v781
    %v2458 = vunpack.c.h.b16 %v781
    %v2459 = vunpack.c.l.b16 %v782
    %v2460 = vunpack.c.h.b16 %v782
    %v2461 = vunpack.c.l.b16 %v783
    %v2462 = vunpack.c.h.b16 %v783
    %v2463 = vunpack.c.l.b16 %v784
    %v2464 = vunpack.c.h.b16 %v784
    %v2465 = vunpack.c.l.b16 %v785
    %v2466 = vunpack.c.h.b16 %v785
    %v2467 = vunpack.c.l.b16 %v786
    %v2468 = vunpack.c.h.b16 %v786
    %v2469 = vunpack.c.l.b16 %v787
    %v2470 = vunpack.c.h.b16 %v787
    %v2471 = vunpack.c.l.b16 %v788
    %v2472 = vunpack.c.h.b16 %v788
    %v2473 = vunpack.c.l.b16 %v789
    %v2474 = vunpack.c.h.b16 %v789
    %v2475 = vunpack.c.l.b16 %v790
    %v2476 = vunpack.c.h.b16 %v790
    %v2477 = vunpack.c.l.b16 %v791
    %v2478 = vunpack.c.h.b16 %v791
    %v2479 = vunpack.c.l.b16 %v792
    %v2480 = vunpack.c.h.b16 %v792
    %v2481 = vunpack.c.l.b16 %v793
    %v2482 = vunpack.c.h.b16 %v793
    %v2483 = vunpack.c.l.b16 %v794
    %v2484 = vunpack.c.h.b16 %v794
    %v2485 = vunpack.c.l.b16 %v795
    %v2486 = vunpack.c.h.b16 %v795
    %v2487 = vunpack.c.l.b16 %v796
    %v2488 = vunpack.c.h.b16 %v796
    %v2489 = vunpack.c.l.b16 %v797
    %v2490 = vunpack.c.h.b16 %v797
    %v2491 = vunpack.c.l.b16 %v798
    %v2492 = vunpack.c.h.b16 %v798
    %v2493 = vunpack.c.l.b16 %v799
    %v2494 = vunpack.c.h.b16 %v799
    %v2495 = vunpack.c.l.b16 %v800
    %v2496 = vunpack.c.h.b16 %v800
    %v2497 = vunpack.c.l.b16 %v801
    %v2498 = vunpack.c.h.b16 %v801
    %v2499 = vunpack.c.l.b16 %v802
    %v2500 = vunpack.c.h.b16 %v802
    %v2501 = vunpack.c.l.b16 %v803
    %v2502 = vunpack.c.h.b16 %v803
    %v2503 = vunpack.c.l.b16 %v804
    %v2504 = vunpack.c.h.b16 %v804
    %v2505 = vunpack.c.l.b16 %v805
    %v2506 = vunpack.c.h.b16 %v805
    %v2507 = vunpack.c.l.b16 %v806
    %v2508 = vunpack.c.h.b16 %v806
    %v2509 = vunpack.c.l.b16 %v807
    %v2510 = vunpack.c.h.b16 %v807
    %v2511 = vunpack.c.l.b16 %v808
    %v2512 = vunpack.c.h.b16 %v808
    %v2513 = vunpack.c.l.b16 %v809
    %v2514 = vunpack.c.h.b16 %v809
    %v2515 = vunpack.c.l.b16 %v810
    %v2516 = vunpack.c.h.b16 %v810
    %v2517 = vunpack.c.l.b16 %v811
    %v2518 = vunpack.c.h.b16 %v811
    %v2519 = vunpack.c.l.b16 %v812
    %v2520 = vunpack.c.h.b16 %v812
    %v2521 = vunpack.c.l.b16 %v813
    %v2522 = vunpack.c.h.b16 %v813
    %v2523 = vunpack.c.l.b16 %v814
    %v2524 = vunpack.c.h.b16 %v814
    %v2525 = vunpack.c.l.b16 %v815
    %v2526 = vunpack.c.h.b16 %v815
    %v2527 = vunpack.c.l.b16 %v816
    %v2528 = vunpack.c.h.b16 %v816
    %v2529 = vunpack.c.l.b16 %v817
    %v2530 = vunpack.c.h.b16 %v817
    %v2531 = vunpack.c.l.b16 %v818
    %v2532 = vunpack.c.h.b16 %v818
    %v2533 = vunpack.c.l.b16 %v819
    %v2534 = vunpack.c.h.b16 %v819
    %v2535 = vunpack.c.l.b16 %v820
    %v2536 = vunpack.c.h.b16 %v820
    %v2537 = vunpack.c.l.b16 %v821
    %v2538 = vunpack.c.h.b16 %v821
    %v2539 = vunpack.c.l.b16 %v822
    %v2540 = vunpack.c.h.b16 %v822
    %v2541 = vunpack.c.l.b16 %v823
    %v2542 = vunpack.c.h.b16 %v823
    %v2543 = vunpack.c.l.b16 %v824
    %v2544 = vunpack.c.h.b16 %v824
    %v2545 = vunpack.c.l.b16 %v825
    %v2546 = vunpack.c.h.b16 %v825
    %v2547 = vunpack.c.l.b16 %v826
    %v2548 = vunpack.c.h.b16 %v826
    %v2549 = vunpack.c.l.b16 %v827
    %v2550 = vunpack.c.h.b16 %v827
    %v2551 = vunpack.c.l.b16 %v828
    %v2552 = vunpack.c.h.b16 %v828
    %v2553 = vunpack.c.l.b16 %v829
    %v2554 = vunpack.c.h.b16 %v829
    %v2555 = vunpack.c.l.b16 %v830
    %v2556 = vunpack.c.h.b16 %v830
    %v2557 = vunpack.c.l.b16 %v831
    %v2558 = vunpack.c.h.b16 %v831
    %v2559 = vunpack.c.l.b16 %v832
    %v2560 = vunpack.c.h.b16 %v832
    %v2561 = vunpack.c.l.b16 %v833
    %v2562 = vunpack.c.h.b16 %v833
    %v2563 = vunpack.c.l.b16 %v834
    %v2564 = vunpack.c.h.b16 %v834
    %v2565 = vunpack.c.l.b16 %v835
    %v2566 = vunpack.c.h.b16 %v835
    %v2567 = vunpack.c.l.b16 %v836
    %v2568 = vunpack.c.h.b16 %v836
    %v2569 = vunpack.c.l.b16 %v837
    %v2570 = vunpack.c.h.b16 %v837
    %v2571 = vunpack.c.l.b16 %v838
    %v2572 = vunpack.c.h.b16 %v838
    %v2573 = vunpack.c.l.b16 %v839
    %v2574 = vunpack.c.h.b16 %v839
    %v2575 = vunpack.c.l.b16 %v840
    %v2576 = vunpack.c.h.b16 %v840
    %v2577 = vunpack.c.l.b16 %v841
    %v2578 = vunpack.c.h.b16 %v841
    %v2579 = vunpack.c.l.b16 %v842
    %v2580 = vunpack.c.h.b16 %v842
    %v2581 = vunpack.c.l.b16 %v843
    %v2582 = vunpack.c.h.b16 %v843
    %v2583 = vunpack.c.l.b16 %v844
    %v2584 = vunpack.c.h.b16 %v844
    %v2585 = vunpack.c.l.b16 %v845
    %v2586 = vunpack.c.h.b16 %v845
    %v2587 = vunpack.c.l.b16 %v846
    %v2588 = vunpack.c.h.b16 %v846
    %v2589 = vunpack.c.l.b16 %v847
    %v2590 = vunpack.c.h.b16 %v847
    %v2591 = vunpack.c.l.b16 %v848
    %v2592 = vunpack.c.h.b16 %v848
    %v2593 = vunpack.c.l.b16 %v849
    %v2594 = vunpack.c.h.b16 %v849
    %v2595 = vunpack.c.l.b16 %v850
    %v2596 = vunpack.c.h.b16 %v850
    %v2597 = vunpack.c.l.b16 %v851
    %v2598 = vunpack.c.h.b16 %v851
    %v2599 = vunpack.c.l.b16 %v852
    %v2600 = vunpack.c.h.b16 %v852
    %v2601 = vunpack.c.l.b16 %v853
    %v2602 = vunpack.c.h.b16 %v853
    %v2603 = vunpack.c.l.b16 %v854
    %v2604 = vunpack.c.h.b16 %v854
    %v2605 = vunpack.c.l.b16 %v855
    %v2606 = vunpack.c.h.b16 %v855
    %v2607 = vunpack.c.l.b16 %v856
    %v2608 = vunpack.c.h.b16 %v856
    %v2609 = vunpack.c.l.b16 %v857
    %v2610 = vunpack.c.h.b16 %v857
    %v2611 = vunpack.c.l.b16 %v858
    %v2612 = vunpack.c.h.b16 %v858
    %v2613 = vunpack.c.l.b16 %v859
    %v2614 = vunpack.c.h.b16 %v859
    %v2615 = vunpack.c.l.b16 %v860
    %v2616 = vunpack.c.h.b16 %v860
    %v2617 = vunpack.c.l.b16 %v861
    %v2618 = vunpack.c.h.b16 %v861
    %v2619 = vunpack.c.l.b16 %v862
    %v2620 = vunpack.c.h.b16 %v862
    %v2621 = vunpack.c.l.b16 %v863
    %v2622 = vunpack.c.h.b16 %v863
    %v2623 = vunpack.c.l.b16 %v864
    %v2624 = vunpack.c.h.b16 %v864
    %v2625 = vunpack.c.l.b16 %v865
    %v2626 = vunpack.c.h.b16 %v865
    %v2627 = vunpack.c.l.b16 %v866
    %v2628 = vunpack.c.h.b16 %v866
    %v2629 = vpack.c.b16 %v1489, %v1477
    %v2630 = vpack.c.b16 %v1490, %v1478
    %v2631 = vpack.c.b16 %v1491, %v1479
    %v2632 = vpack.c.b16 %v1492, %v1480
    %v2633 = vpack.c.b16 %v1493, %v1481
    %v2634 = vpack.c.b16 %v1494, %v1482
    %v2635 = vpack.c.b16 %v1495, %v1483
    %v2636 = vpack.c.b16 %v1496, %v1484
    %v2637 = vpack.c.b16 %v1497, %v1485
    %v2638 = vpack.c.b16 %v1498, %v1486
    %v2639 = vpack.c.b16 %v1499, %v1487
    %v2640 = vpack.c.b16 %v1500, %v1488
    %v2641 = vpack.c.b16 %v1513, %v1501
    %v2642 = vpack.c.b16 %v1514, %v1502
    %v2643 = vpack.c.b16 %v1515, %v1503
    %v2644 = vpack.c.b16 %v1516, %v1504
    %v2645 = vpack.c.b16 %v1517, %v1505
    %v2646 = vpack.c.b16 %v1518, %v1506
    %v2647 = vpack.c.b16 %v1519, %v1507
    %v2648 = vpack.c.b16 %v1520, %v1508
    %v2649 = vpack.c.b16 %v1521, %v1509
    %v2650 = vpack.c.b16 %v1522, %v1510
    %v2651 = vpack.c.b16 %v1523, %v1511
    %v2652 = vpack.c.b16 %v1524, %v1512
    %v2653 = vpack.c.b16 %v1537, %v1525
    %v2654 = vpack.c.b16 %v1538, %v1526
    %v2655 = vpack.c.b16 %v1539, %v1527
    %v2656 = vpack.c.b16 %v1540, %v1528
    %v2657 = vpack.c.b16 %v1541, %v1529
    %v2658 = vpack.c.b16 %v1542, %v1530
    %v2659 = vpack.c.b16 %v1543, %v1531
    %v2660 = vpack.c.b16 %v1544, %v1532
    %v2661 = vpack.c.b16 %v1545, %v1533
    %v2662 = vpack.c.b16 %v1546, %v1534
    %v2663 = vpack.c.b16 %v1547, %v1535
    %v2664 = vpack.c.b16 %v1548, %v1536
    %v2665 = vpack.c.b16 %v1561, %v1549
    %v2666 = vpack.c.b16 %v1562, %v1550
    %v2667 = vpack.c.b16 %v1563, %v1551
    %v2668 = vpack.c.b16 %v1564, %v1552
    %v2669 = vpack.c.b16 %v1565, %v1553
    %v2670 = vpack.c.b16 %v1566, %v1554
    %v2671 = vpack.c.b16 %v1567, %v1555
    %v2672 = vpack.c.b16 %v1568, %v1556
    %v2673 = vpack.c.b16 %v1569, %v1557
    %v2674 = vpack.c.b16 %v1570, %v1558
    %v2675 = vpack.c.b16 %v1571, %v1559
    %v2676 = vpack.c.b16 %v1572, %v1560
    %v2677 = vpack.c.b16 %v1585, %v1573
    %v2678 = vpack.c.b16 %v1586, %v1574
    %v2679 = vpack.c.b16 %v1587, %v1575
    %v2680 = vpack.c.b16 %v1588, %v1576
    %v2681 = vpack.c.b16 %v1589, %v1577
    %v2682 = vpack.c.b16 %v1590, %v1578
    %v2683 = vpack.c.b16 %v1591, %v1579
    %v2684 = vpack.c.b16 %v1592, %v1580
    %v2685 = vpack.c.b16 %v1593, %v1581
    %v2686 = vpack.c.b16 %v1594, %v1582
    %v2687 = vpack.c.b16 %v1595, %v1583
    %v2688 = vpack.c.b16 %v1596, %v1584
    %v2689 = vpack.c.b16 %v1609, %v1597
    %v2690 = vpack.c.b16 %v1610, %v1598
    %v2691 = vpack.c.b16 %v1611, %v1599
    %v2692 = vpack.c.b16 %v1612, %v1600
    %v2693 = vpack.c.b16 %v1613, %v1601
    %v2694 = vpack.c.b16 %v1614, %v1602
    %v2695 = vpack.c.b16 %v1615, %v1603
    %v2696 = vpack.c.b16 %v1616, %v1604
    %v2697 = vpack.c.b16 %v1617, %v1605
    %v2698 = vpack.c.b16 %v1618, %v1606
    %v2699 = vpack.c.b16 %v1619, %v1607
    %v2700 = vpack.c.b16 %v1620, %v1608
    %v2701 = vpack.c.b16 %v1633, %v1621
    %v2702 = vpack.c.b16 %v1634, %v1622
    %v2703 = vpack.c.b16 %v1635, %v1623
    %v2704 = vpack.c.b16 %v1636, %v1624
    %v2705 = vpack.c.b16 %v1637, %v1625
    %v2706 = vpack.c.b16 %v1638, %v1626
    %v2707 = vpack.c.b16 %v1639, %v1627
    %v2708 = vpack.c.b16 %v1640, %v1628
    %v2709 = vpack.c.b16 %v1641, %v1629
    %v2710 = vpack.c.b16 %v1642, %v1630
    %v2711 = vpack.c.b16 %v1643, %v1631
    %v2712 = vpack.c.b16 %v1644, %v1632
    %v2713 = vpack.c.b16 %v1657, %v1645
    %v2714 = vpack.c.b16 %v1658, %v1646
    %v2715 = vpack.c.b16 %v1659, %v1647
    %v2716 = vpack.c.b16 %v1660, %v1648
    %v2717 = vpack.c.b16 %v1661, %v1649
    %v2718 = vpack.c.b16 %v1662, %v1650
    %v2719 = vpack.c.b16 %v1663, %v1651
    %v2720 = vpack.c.b16 %v1664, %v1652
    %v2721 = vpack.c.b16 %v1665, %v1653
    %v2722 = vpack.c.b16 %v1666, %v1654
    %v2723 = vpack.c.b16 %v1667, %v1655
    %v2724 = vpack.c.b16 %v1668, %v1656
    %v2725 = vpack.c.b16 %v1681, %v1669
    %v2726 = vpack.c.b16 %v1682, %v1670
    %v2727 = vpack.c.b16 %v1683, %v1671
    %v2728 = vpack.c.b16 %v1684, %v1672
    %v2729 = vpack.c.b16 %v1685, %v1673
    %v2730 = vpack.c.b16 %v1686, %v1674
    %v2731 = vpack.c.b16 %v1687, %v1675
    %v2732 = vpack.c.b16 %v1688, %v1676
    %v2733 = vpack.c.b16 %v1689, %v1677
    %v2734 = vpack.c.b16 %v1690, %v1678
    %v2735 = vpack.c.b16 %v1691, %v1679
    %v2736 = vpack.c.b16 %v1692, %v1680
    %v2737 = vpack.c.b16 %v1705, %v1693
    %v2738 = vpack.c.b16 %v1706, %v1694
    %v2739 = vpack.c.b16 %v1707, %v1695
    %v2740 = vpack.c.b16 %v1708, %v1696
    %v2741 = vpack.c.b16 %v1709, %v1697
    %v2742 = vpack.c.b16 %v1710, %v1698
    %v2743 = vpack.c.b16 %v1711, %v1699
    %v2744 = vpack.c.b16 %v1712, %v1700
    %v2745 = vpack.c.b16 %v1713, %v1701
    %v2746 = vpack.c.b16 %v1714, %v1702
    %v2747 = vpack.c.b16 %v1715, %v1703
    %v2748 = vpack.c.b16 %v1716, %v1704
    %v2749 = vpack.c.b16 %v1729, %v1717
    %v2750 = vpack.c.b16 %v1730, %v1718
    %v2751 = vpack.c.b16 %v1731, %v1719
    %v2752 = vpack.c.b16 %v1732, %v1720
    %v2753 = vpack.c.b16 %v1733, %v1721
    %v2754 = vpack.c.b16 %v1734, %v1722
    %v2755 = vpack.c.b16 %v1735, %v1723
    %v2756 = vpack.c.b16 %v1736, %v1724
    %v2757 = vpack.c.b16 %v1737, %v1725
    %v2758 = vpack.c.b16 %v1738, %v1726
    %v2759 = vpack.c.b16 %v1739, %v1727
    %v2760 = vpack.c.b16 %v1740, %v1728
    %v2761 = vpack.c.b16 %v1753, %v1741
    %v2762 = vpack.c.b16 %v1754, %v1742
    %v2763 = vpack.c.b16 %v1755, %v1743
    %v2764 = vpack.c.b16 %v1756, %v1744
    %v2765 = vpack.c.b16 %v1757, %v1745
    %v2766 = vpack.c.b16 %v1758, %v1746
    %v2767 = vpack.c.b16 %v1759, %v1747
    %v2768 = vpack.c.b16 %v1760, %v1748
    %v2769 = vpack.c.b16 %v1761, %v1749
    %v2770 = vpack.c.b16 %v1762, %v1750
    %v2771 = vpack.c.b16 %v1763, %v1751
    %v2772 = vpack.c.b16 %v1764, %v1752
    %v2773 = vpack.c.b16 %v1777, %v1765
    %v2774 = vpack.c.b16 %v1778, %v1766
    %v2775 = vpack.c.b16 %v1779, %v1767
    %v2776 = vpack.c.b16 %v1780, %v1768
    %v2777 = vpack.c.b16 %v1781, %v1769
    %v2778 = vpack.c.b16 %v1782, %v1770
    %v2779 = vpack.c.b16 %v1783, %v1771
    %v2780 = vpack.c.b16 %v1784, %v1772
    %v2781 = vpack.c.b16 %v1785, %v1773
    %v2782 = vpack.c.b16 %v1786, %v1774
    %v2783 = vpack.c.b16 %v1787, %v1775
    %v2784 = vpack.c.b16 %v1788, %v1776
    %v2785 = vpack.c.b16 %v1801, %v1789
    %v2786 = vpack.c.b16 %v1802, %v1790
    %v2787 = vpack.c.b16 %v1803, %v1791
    %v2788 = vpack.c.b16 %v1804, %v1792
    %v2789 = vpack.c.b16 %v1805, %v1793
    %v2790 = vpack.c.b16 %v1806, %v1794
    %v2791 = vpack.c.b16 %v1807, %v1795
    %v2792 = vpack.c.b16 %v1808, %v1796
    %v2793 = vpack.c.b16 %v1809, %v1797
    %v2794 = vpack.c.b16 %v1810, %v1798
    %v2795 = vpack.c.b16 %v1811, %v1799
    %v2796 = vpack.c.b16 %v1812, %v1800
    %v2797 = vpack.c.b16 %v1825, %v1813
    %v2798 = vpack.c.b16 %v1826, %v1814
    %v2799 = vpack.c.b16 %v1827, %v1815
    %v2800 = vpack.c.b16 %v1828, %v1816
    %v2801 = vpack.c.b16 %v1829, %v1817
    %v2802 = vpack.c.b16 %v1830, %v1818
    %v2803 = vpack.c.b16 %v1831, %v1819
    %v2804 = vpack.c.b16 %v1832, %v1820
    %v2805 = vpack.c.b16 %v1833, %v1821
    %v2806 = vpack.c.b16 %v1834, %v1822
    %v2807 = vpack.c.b16 %v1835, %v1823
    %v2808 = vpack.c.b16 %v1836, %v1824
    %v2809 = vpack.c.b16 %v1849, %v1837
    %v2810 = vpack.c.b16 %v1850, %v1838
    %v2811 = vpack.c.b16 %v1851, %v1839
    %v2812 = vpack.c.b16 %v1852, %v1840
    %v2813 = vpack.c.b16 %v1853, %v1841
    %v2814 = vpack.c.b16 %v1854, %v1842
    %v2815 = vpack.c.b16 %v1855, %v1843
    %v2816 = vpack.c.b16 %v1856, %v1844
    %v2817 = vpack.c.b16 %v1857, %v1845
    %v2818 = vpack.c.b16 %v1858, %v1846
    %v2819 = vpack.c.b16 %v1859, %v1847
    %v2820 = vpack.c.b16 %v1860, %v1848
    %v2821 = vpack.c.b16 %v1873, %v1861
    %v2822 = vpack.c.b16 %v1874, %v1862
    %v2823 = vpack.c.b16 %v1875, %v1863
    %v2824 = vpack.c.b16 %v1876, %v1864
    %v2825 = vpack.c.b16 %v1877, %v1865
    %v2826 = vpack.c.b16 %v1878, %v1866
    %v2827 = vpack.c.b16 %v1879, %v1867
    %v2828 = vpack.c.b16 %v1880, %v1868
    %v2829 = vpack.c.b16 %v1881, %v1869
    %v2830 = vpack.c.b16 %v1882, %v1870
    %v2831 = vpack.c.b16 %v1883, %v1871
    %v2832 = vpack.c.b16 %v1884, %v1872
    %v2833 = vpack.c.b16 %v1897, %v1885
    %v2834 = vpack.c.b16 %v1898, %v1886
    %v2835 = vpack.c.b16 %v1899, %v1887
    %v2836 = vpack.c.b16 %v1900, %v1888
    %v2837 = vpack.c.b16 %v1901, %v1889
    %v2838 = vpack.c.b16 %v1902, %v1890
    %v2839 = vpack.c.b16 %v1903, %v1891
    %v2840 = vpack.c.b16 %v1904, %v1892
    %v2841 = vpack.c.b16 %v1905, %v1893
    %v2842 = vpack.c.b16 %v1906, %v1894
    %v2843 = vpack.c.b16 %v1907, %v1895
    %v2844 = vpack.c.b16 %v1908, %v1896
    %v2845 = vpack.c.b16 %v1921, %v1909
    %v2846 = vpack.c.b16 %v1922, %v1910
    %v2847 = vpack.c.b16 %v1923, %v1911
    %v2848 = vpack.c.b16 %v1924, %v1912
    %v2849 = vpack.c.b16 %v1925, %v1913
    %v2850 = vpack.c.b16 %v1926, %v1914
    %v2851 = vpack.c.b16 %v1927, %v1915
    %v2852 = vpack.c.b16 %v1928, %v1916
    %v2853 = vpack.c.b16 %v1929, %v1917
    %v2854 = vpack.c.b16 %v1930, %v1918
    %v2855 = vpack.c.b16 %v1931, %v1919
    %v2856 = vpack.c.b16 %v1932, %v1920
    %v2857 = vpack.c.b16 %v1945, %v1933
    %v2858 = vpack.c.b16 %v1946, %v1934
    %v2859 = vpack.c.b16 %v1947, %v1935
    %v2860 = vpack.c.b16 %v1948, %v1936
    %v2861 = vpack.c.b16 %v1949, %v1937
    %v2862 = vpack.c.b16 %v1950, %v1938
    %v2863 = vpack.c.b16 %v1951, %v1939
    %v2864 = vpack.c.b16 %v1952, %v1940
    %v2865 = vpack.c.b16 %v1953, %v1941
    %v2866 = vpack.c.b16 %v1954, %v1942
    %v2867 = vpack.c.b16 %v1955, %v1943
    %v2868 = vpack.c.b16 %v1956, %v1944
    %v2869 = vpack.c.b16 %v1969, %v1957
    %v2870 = vpack.c.b16 %v1970, %v1958
    %v2871 = vpack.c.b16 %v1971, %v1959
    %v2872 = vpack.c.b16 %v1972, %v1960
    %v2873 = vpack.c.b16 %v1973, %v1961
    %v2874 = vpack.c.b16 %v1974, %v1962
    %v2875 = vpack.c.b16 %v1975, %v1963
    %v2876 = vpack.c.b16 %v1976, %v1964
    %v2877 = vpack.c.b16 %v1977, %v1965
    %v2878 = vpack.c.b16 %v1978, %v1966
    %v2879 = vpack.c.b16 %v1979, %v1967
    %v2880 = vpack.c.b16 %v1980, %v1968
    %v2881 = vpack.c.b16 %v1993, %v1981
    %v2882 = vpack.c.b16 %v1994, %v1982
    %v2883 = vpack.c.b16 %v1995, %v1983
    %v2884 = vpack.c.b16 %v1996, %v1984
    %v2885 = vpack.c.b16 %v1997, %v1985
    %v2886 = vpack.c.b16 %v1998, %v1986
    %v2887 = vpack.c.b16 %v1999, %v1987
    %v2888 = vpack.c.b16 %v2000, %v1988
    %v2889 = vpack.c.b16 %v2001, %v1989
    %v2890 = vpack.c.b16 %v2002, %v1990
    %v2891 = vpack.c.b16 %v2003, %v1991
    %v2892 = vpack.c.b16 %v2004, %v1992
    %v2893 = vpack.c.b16 %v2017, %v2005
    %v2894 = vpack.c.b16 %v2018, %v2006
    %v2895 = vpack.c.b16 %v2019, %v2007
    %v2896 = vpack.c.b16 %v2020, %v2008
    %v2897 = vpack.c.b16 %v2021, %v2009
    %v2898 = vpack.c.b16 %v2022, %v2010
    %v2899 = vpack.c.b16 %v2023, %v2011
    %v2900 = vpack.c.b16 %v2024, %v2012
    %v2901 = vpack.c.b16 %v2025, %v2013
    %v2902 = vpack.c.b16 %v2026, %v2014
    %v2903 = vpack.c.b16 %v2027, %v2015
    %v2904 = vpack.c.b16 %v2028, %v2016
    %v2905 = vpack.c.b16 %v2041, %v2029
    %v2906 = vpack.c.b16 %v2042, %v2030
    %v2907 = vpack.c.b16 %v2043, %v2031
    %v2908 = vpack.c.b16 %v2044, %v2032
    %v2909 = vpack.c.b16 %v2045, %v2033
    %v2910 = vpack.c.b16 %v2046, %v2034
    %v2911 = vpack.c.b16 %v2047, %v2035
    %v2912 = vpack.c.b16 %v2048, %v2036
    %v2913 = vpack.c.b16 %v2049, %v2037
    %v2914 = vpack.c.b16 %v2050, %v2038
    %v2915 = vpack.c.b16 %v2051, %v2039
    %v2916 = vpack.c.b16 %v2052, %v2040
    %v2917 = vpack.c.b16 %v2065, %v2053
    %v2918 = vpack.c.b16 %v2066, %v2054
    %v2919 = vpack.c.b16 %v2067, %v2055
    %v2920 = vpack.c.b16 %v2068, %v2056
    %v2921 = vpack.c.b16 %v2069, %v2057
    %v2922 = vpack.c.b16 %v2070, %v2058
    %v2923 = vpack.c.b16 %v2071, %v2059
    %v2924 = vpack.c.b16 %v2072, %v2060
    %v2925 = vpack.c.b16 %v2073, %v2061
    %v2926 = vpack.c.b16 %v2074, %v2062
    %v2927 = vpack.c.b16 %v2075, %v2063
    %v2928 = vpack.c.b16 %v2076, %v2064
    %v2929 = vpack.c.b16 %v2089, %v2077
    %v2930 = vpack.c.b16 %v2090, %v2078
    %v2931 = vpack.c.b16 %v2091, %v2079
    %v2932 = vpack.c.b16 %v2092, %v2080
    %v2933 = vpack.c.b16 %v2093, %v2081
    %v2934 = vpack.c.b16 %v2094, %v2082
    %v2935 = vpack.c.b16 %v2095, %v2083
    %v2936 = vpack.c.b16 %v2096, %v2084
    %v2937 = vpack.c.b16 %v2097, %v2085
    %v2938 = vpack.c.b16 %v2098, %v2086
    %v2939 = vpack.c.b16 %v2099, %v2087
    %v2940 = vpack.c.b16 %v2100, %v2088
    %v2941 = vpack.c.b16 %v2113, %v2101
    %v2942 = vpack.c.b16 %v2114, %v2102
    %v2943 = vpack.c.b16 %v2115, %v2103
    %v2944 = vpack.c.b16 %v2116, %v2104
    %v2945 = vpack.c.b16 %v2117, %v2105
    %v2946 = vpack.c.b16 %v2118, %v2106
    %v2947 = vpack.c.b16 %v2119, %v2107
    %v2948 = vpack.c.b16 %v2120, %v2108
    %v2949 = vpack.c.b16 %v2121, %v2109
    %v2950 = vpack.c.b16 %v2122, %v2110
    %v2951 = vpack.c.b16 %v2123, %v2111
    %v2952 = vpack.c.b16 %v2124, %v2112
    %v2953 = vpack.c.b16 %v2137, %v2125
    %v2954 = vpack.c.b16 %v2138, %v2126
    %v2955 = vpack.c.b16 %v2139, %v2127
    %v2956 = vpack.c.b16 %v2140, %v2128
    %v2957 = vpack.c.b16 %v2141, %v2129
    %v2958 = vpack.c.b16 %v2142, %v2130
    %v2959 = vpack.c.b16 %v2143, %v2131
    %v2960 = vpack.c.b16 %v2144, %v2132
    %v2961 = vpack.c.b16 %v2145, %v2133
    %v2962 = vpack.c.b16 %v2146, %v2134
    %v2963 = vpack.c.b16 %v2147, %v2135
    %v2964 = vpack.c.b16 %v2148, %v2136
    %v2965 = vpack.c.b16 %v2161, %v2149
    %v2966 = vpack.c.b16 %v2162, %v2150
    %v2967 = vpack.c.b16 %v2163, %v2151
    %v2968 = vpack.c.b16 %v2164, %v2152
    %v2969 = vpack.c.b16 %v2165, %v2153
    %v2970 = vpack.c.b16 %v2166, %v2154
    %v2971 = vpack.c.b16 %v2167, %v2155
    %v2972 = vpack.c.b16 %v2168, %v2156
    %v2973 = vpack.c.b16 %v2169, %v2157
    %v2974 = vpack.c.b16 %v2170, %v2158
    %v2975 = vpack.c.b16 %v2171, %v2159
    %v2976 = vpack.c.b16 %v2172, %v2160
    %v2977 = vpack.c.b16 %v2185, %v2173
    %v2978 = vpack.c.b16 %v2186, %v2174
    %v2979 = vpack.c.b16 %v2187, %v2175
    %v2980 = vpack.c.b16 %v2188, %v2176
    %v2981 = vpack.c.b16 %v2189, %v2177
    %v2982 = vpack.c.b16 %v2190, %v2178
    %v2983 = vpack.c.b16 %v2191, %v2179
    %v2984 = vpack.c.b16 %v2192, %v2180
    %v2985 = vpack.c.b16 %v2193, %v2181
    %v2986 = vpack.c.b16 %v2194, %v2182
    %v2987 = vpack.c.b16 %v2195, %v2183
    %v2988 = vpack.c.b16 %v2196, %v2184
    %v2989 = vpack.c.b16 %v2209, %v2197
    %v2990 = vpack.c.b16 %v2210, %v2198
    %v2991 = vpack.c.b16 %v2211, %v2199
    %v2992 = vpack.c.b16 %v2212, %v2200
    %v2993 = vpack.c.b16 %v2213, %v2201
    %v2994 = vpack.c.b16 %v2214, %v2202
    %v2995 = vpack.c.b16 %v2215, %v2203
    %v2996 = vpack.c.b16 %v2216, %v2204
    %v2997 = vpack.c.b16 %v2217, %v2205
    %v2998 = vpack.c.b16 %v2218, %v2206
    %v2999 = vpack.c.b16 %v2219, %v2207
    %v3000 = vpack.c.b16 %v2220, %v2208
    %v3001 = vpack.c.b16 %v2233, %v2221
    %v3002 = vpack.c.b16 %v2234, %v2222
    %v3003 = vpack.c.b16 %v2235, %v2223
    %v3004 = vpack.c.b16 %v2236, %v2224
    %v3005 = vpack.c.b16 %v2237, %v2225
    %v3006 = vpack.c.b16 %v2238, %v2226
    %v3007 = vpack.c.b16 %v2239, %v2227
    %v3008 = vpack.c.b16 %v2240, %v2228
    %v3009 = vpack.c.b16 %v2241, %v2229
    %v3010 = vpack.c.b16 %v2242, %v2230
    %v3011 = vpack.c.b16 %v2243, %v2231
    %v3012 = vpack.c.b16 %v2244, %v2232
    %v3013 = vpack.c.b16 %v2257, %v2245
    %v3014 = vpack.c.b16 %v2258, %v2246
    %v3015 = vpack.c.b16 %v2259, %v2247
    %v3016 = vpack.c.b16 %v2260, %v2248
    %v3017 = vpack.c.b16 %v2261, %v2249
    %v3018 = vpack.c.b16 %v2262, %v2250
    %v3019 = vpack.c.b16 %v2263, %v2251
    %v3020 = vpack.c.b16 %v2264, %v2252
    %v3021 = vpack.c.b16 %v2265, %v2253
    %v3022 = vpack.c.b16 %v2266, %v2254
    %v3023 = vpack.c.b16 %v2267, %v2255
    %v3024 = vpack.c.b16 %v2268, %v2256
    %v3025 = vpack.c.b16 %v2281, %v2269
    %v3026 = vpack.c.b16 %v2282, %v2270
    %v3027 = vpack.c.b16 %v2283, %v2271
    %v3028 = vpack.c.b16 %v2284, %v2272
    %v3029 = vpack.c.b16 %v2285, %v2273
    %v3030 = vpack.c.b16 %v2286, %v2274
    %v3031 = vpack.c.b16 %v2287, %v2275
    %v3032 = vpack.c.b16 %v2288, %v2276
    %v3033 = vpack.c.b16 %v2289, %v2277
    %v3034 = vpack.c.b16 %v2290, %v2278
    %v3035 = vpack.c.b16 %v2291, %v2279
    %v3036 = vpack.c.b16 %v2292, %v2280
    %v3037 = vpack.c.b16 %v2305, %v2293
    %v3038 = vpack.c.b16 %v2306, %v2294
    %v3039 = vpack.c.b16 %v2307, %v2295
    %v3040 = vpack.c.b16 %v2308, %v2296
    %v3041 = vpack.c.b16 %v2309, %v2297
    %v3042 = vpack.c.b16 %v2310, %v2298
    %v3043 = vpack.c.b16 %v2311, %v2299
    %v3044 = vpack.c.b16 %v2312, %v2300
    %v3045 = vpack.c.b16 %v2313, %v2301
    %v3046 = vpack.c.b16 %v2314, %v2302
    %v3047 = vpack.c.b16 %v2315, %v2303
    %v3048 = vpack.c.b16 %v2316, %v2304
    %v3049 = vpack.c.b16 %v2329, %v2317
    %v3050 = vpack.c.b16 %v2330, %v2318
    %v3051 = vpack.c.b16 %v2331, %v2319
    %v3052 = vpack.c.b16 %v2332, %v2320
    %v3053 = vpack.c.b16 %v2333, %v2321
    %v3054 = vpack.c.b16 %v2334, %v2322
    %v3055 = vpack.c.b16 %v2335, %v2323
    %v3056 = vpack.c.b16 %v2336, %v2324
    %v3057 = vpack.c.b16 %v2337, %v2325
    %v3058 = vpack.c.b16 %v2338, %v2326
    %v3059 = vpack.c.b16 %v2339, %v2327
    %v3060 = vpack.c.b16 %v2340, %v2328
    %v3061 = vpack.c.b16 %v2353, %v2341
    %v3062 = vpack.c.b16 %v2354, %v2342
    %v3063 = vpack.c.b16 %v2355, %v2343
    %v3064 = vpack.c.b16 %v2356, %v2344
    %v3065 = vpack.c.b16 %v2357, %v2345
    %v3066 = vpack.c.b16 %v2358, %v2346
    %v3067 = vpack.c.b16 %v2359, %v2347
    %v3068 = vpack.c.b16 %v2360, %v2348
    %v3069 = vpack.c.b16 %v2361, %v2349
    %v3070 = vpack.c.b16 %v2362, %v2350
    %v3071 = vpack.c.b16 %v2363, %v2351
    %v3072 = vpack.c.b16 %v2364, %v2352
    %v3073 = vpack.c.b16 %v2377, %v2365
    %v3074 = vpack.c.b16 %v2378, %v2366
    %v3075 = vpack.c.b16 %v2379, %v2367
    %v3076 = vpack.c.b16 %v2380, %v2368
    %v3077 = vpack.c.b16 %v2381, %v2369
    %v3078 = vpack.c.b16 %v2382, %v2370
    %v3079 = vpack.c.b16 %v2383, %v2371
    %v3080 = vpack.c.b16 %v2384, %v2372
    %v3081 = vpack.c.b16 %v2385, %v2373
    %v3082 = vpack.c.b16 %v2386, %v2374
    %v3083 = vpack.c.b16 %v2387, %v2375
    %v3084 = vpack.c.b16 %v2388, %v2376
    %v3085 = vpack.c.b16 %v2401, %v2389
    %v3086 = vpack.c.b16 %v2402, %v2390
    %v3087 = vpack.c.b16 %v2403, %v2391
    %v3088 = vpack.c.b16 %v2404, %v2392
    %v3089 = vpack.c.b16 %v2405, %v2393
    %v3090 = vpack.c.b16 %v2406, %v2394
    %v3091 = vpack.c.b16 %v2407, %v2395
    %v3092 = vpack.c.b16 %v2408, %v2396
    %v3093 = vpack.c.b16 %v2409, %v2397
    %v3094 = vpack.c.b16 %v2410, %v2398
    %v3095 = vpack.c.b16 %v2411, %v2399
    %v3096 = vpack.c.b16 %v2412, %v2400
    %v3097 = vpack.c.b16 %v2425, %v2413
    %v3098 = vpack.c.b16 %v2426, %v2414
    %v3099 = vpack.c.b16 %v2427, %v2415
    %v3100 = vpack.c.b16 %v2428, %v2416
    %v3101 = vpack.c.b16 %v2429, %v2417
    %v3102 = vpack.c.b16 %v2430, %v2418
    %v3103 = vpack.c.b16 %v2431, %v2419
    %v3104 = vpack.c.b16 %v2432, %v2420
    %v3105 = vpack.c.b16 %v2433, %v2421
    %v3106 = vpack.c.b16 %v2434, %v2422
    %v3107 = vpack.c.b16 %v2435, %v2423
    %v3108 = vpack.c.b16 %v2436, %v2424
    %v3109 = vpack.c.b16 %v2449, %v2437
    %v3110 = vpack.c.b16 %v2450, %v2438
    %v3111 = vpack.c.b16 %v2451, %v2439
    %v3112 = vpack.c.b16 %v2452, %v2440
    %v3113 = vpack.c.b16 %v2453, %v2441
    %v3114 = vpack.c.b16 %v2454, %v2442
    %v3115 = vpack.c.b16 %v2455, %v2443
    %v3116 = vpack.c.b16 %v2456, %v2444
    %v3117 = vpack.c.b16 %v2457, %v2445
    %v3118 = vpack.c.b16 %v2458, %v2446
    %v3119 = vpack.c.b16 %v2459, %v2447
    %v3120 = vpack.c.b16 %v2460, %v2448
    %v3121 = vpack.c.b16 %v2473, %v2461
    %v3122 = vpack.c.b16 %v2474, %v2462
    %v3123 = vpack.c.b16 %v2475, %v2463
    %v3124 = vpack.c.b16 %v2476, %v2464
    %v3125 = vpack.c.b16 %v2477, %v2465
    %v3126 = vpack.c.b16 %v2478, %v2466
    %v3127 = vpack.c.b16 %v2479, %v2467
    %v3128 = vpack.c.b16 %v2480, %v2468
    %v3129 = vpack.c.b16 %v2481, %v2469
    %v3130 = vpack.c.b16 %v2482, %v2470
    %v3131 = vpack.c.b16 %v2483, %v2471
    %v3132 = vpack.c.b16 %v2484, %v2472
    %v3133 = vpack.c.b16 %v2497, %v2485
    %v3134 = vpack.c.b16 %v2498, %v2486
    %v3135 = vpack.c.b16 %v2499, %v2487
    %v3136 = vpack.c.b16 %v2500, %v2488
    %v3137 = vpack.c.b16 %v2501, %v2489
    %v3138 = vpack.c.b16 %v2502, %v2490
    %v3139 = vpack.c.b16 %v2503, %v2491
    %v3140 = vpack.c.b16 %v2504, %v2492
    %v3141 = vpack.c.b16 %v2505, %v2493
    %v3142 = vpack.c.b16 %v2506, %v2494
    %v3143 = vpack.c.b16 %v2507, %v2495
    %v3144 = vpack.c.b16 %v2508, %v2496
    %v3145 = vpack.c.b16 %v2521, %v2509
    %v3146 = vpack.c.b16 %v2522, %v2510
    %v3147 = vpack.c.b16 %v2523, %v2511
    %v3148 = vpack.c.b16 %v2524, %v2512
    %v3149 = vpack.c.b16 %v2525, %v2513
    %v3150 = vpack.c.b16 %v2526, %v2514
    %v3151 = vpack.c.b16 %v2527, %v2515
    %v3152 = vpack.c.b16 %v2528, %v2516
    %v3153 = vpack.c.b16 %v2529, %v2517
    %v3154 = vpack.c.b16 %v2530, %v2518
    %v3155 = vpack.c.b16 %v2531, %v2519
    %v3156 = vpack.c.b16 %v2532, %v2520
    %v3157 = vpack.c.b16 %v2545, %v2533
    %v3158 = vpack.c.b16 %v2546, %v2534
    %v3159 = vpack.c.b16 %v2547, %v2535
    %v3160 = vpack.c.b16 %v2548, %v2536
    %v3161 = vpack.c.b16 %v2549, %v2537
    %v3162 = vpack.c.b16 %v2550, %v2538
    %v3163 = vpack.c.b16 %v2551, %v2539
    %v3164 = vpack.c.b16 %v2552, %v2540
    %v3165 = vpack.c.b16 %v2553, %v2541
    %v3166 = vpack.c.b16 %v2554, %v2542
    %v3167 = vpack.c.b16 %v2555, %v2543
    %v3168 = vpack.c.b16 %v2556, %v2544
    %v3169 = vpack.c.b16 %v2569, %v2557
    %v3170 = vpack.c.b16 %v2570, %v2558
    %v3171 = vpack.c.b16 %v2571, %v2559
    %v3172 = vpack.c.b16 %v2572, %v2560
    %v3173 = vpack.c.b16 %v2573, %v2561
    %v3174 = vpack.c.b16 %v2574, %v2562
    %v3175 = vpack.c.b16 %v2575, %v2563
    %v3176 = vpack.c.b16 %v2576, %v2564
    %v3177 = vpack.c.b16 %v2577, %v2565
    %v3178 = vpack.c.b16 %v2578, %v2566
    %v3179 = vpack.c.b16 %v2579, %v2567
    %v3180 = vpack.c.b16 %v2580, %v2568
    %v3181 = vpack.c.b16 %v2593, %v2581
    %v3182 = vpack.c.b16 %v2594, %v2582
    %v3183 = vpack.c.b16 %v2595, %v2583
    %v3184 = vpack.c.b16 %v2596, %v2584
    %v3185 = vpack.c.b16 %v2597, %v2585
    %v3186 = vpack.c.b16 %v2598, %v2586
    %v3187 = vpack.c.b16 %v2599, %v2587
    %v3188 = vpack.c.b16 %v2600, %v2588
    %v3189 = vpack.c.b16 %v2601, %v2589
    %v3190 = vpack.c.b16 %v2602, %v2590
    %v3191 = vpack.c.b16 %v2603, %v2591
    %v3192 = vpack.c.b16 %v2604, %v2592
    %v3193 = vpack.c.b16 %v2617, %v2605
    %v3194 = vpack.c.b16 %v2618, %v2606
    %v3195 = vpack.c.b16 %v2619, %v2607
    %v3196 = vpack.c.b16 %v2620, %v2608
    %v3197 = vpack.c.b16 %v2621, %v2609
    %v3198 = vpack.c.b16 %v2622, %v2610
    %v3199 = vpack.c.b16 %v2623, %v2611
    %v3200 = vpack.c.b16 %v2624, %v2612
    %v3201 = vpack.c.b16 %v2625, %v2613
    %v3202 = vpack.c.b16 %v2626, %v2614
    %v3203 = vpack.c.b16 %v2627, %v2615
    %v3204 = vpack.c.b16 %v2628, %v2616
    %3781 = vmatpush.bf16.msra.mxu0 %v2713
    %3782 = vmatpush.bf16.msra.mxu0 %v2701
    %3783 = vmatpush.bf16.msra.mxu0 %v2689
    %3784 = vmatpush.bf16.msra.mxu0 %v2677
    %3785 = vmatpush.bf16.msra.mxu0 %v2665
    %3786 = vmatpush.bf16.msra.mxu0 %v2653
    %3787 = vmatpush.bf16.msra.mxu0 %v2641
    %3788 = vmatpush.bf16.msra.mxu0 %v2629
    %3789 = vmatmul.bf16.gmra.mxu0 %v867
    %v3790 = vpop.f32.mrf.mxu0
    %v3791 = vadd.f32 %v877, %v3790
    %v3792 = vpop.f32.mrf.mxu0
    %3793 = vdwg.mxu0
    %3794 = vmatpush.bf16.msra.mxu0 %v2809
    %3795 = vmatpush.bf16.msra.mxu0 %v2797
    %3796 = vmatpush.bf16.msra.mxu0 %v2785
    %3797 = vmatpush.bf16.msra.mxu0 %v2773
    %3798 = vmatpush.bf16.msra.mxu0 %v2761
    %3799 = vmatpush.bf16.msra.mxu0 %v2749
    %3800 = vmatpush.bf16.msra.mxu0 %v2737
    %3801 = vmatpush.bf16.msra.mxu0 %v2725
    %3802 = vmatmul.bf16.gmra.mxu0 %v868
    %v3803 = vpop.f32.mrf.mxu0
    %v3804 = vadd.f32 %v3791, %v3803
    %v3805 = vpop.f32.mrf.mxu0
    %3806 = vdwg.mxu0
    %3807 = vmatpush.bf16.msra.mxu0 %v2905
    %3808 = vmatpush.bf16.msra.mxu0 %v2893
    %3809 = vmatpush.bf16.msra.mxu0 %v2881
    %3810 = vmatpush.bf16.msra.mxu0 %v2869
    %3811 = vmatpush.bf16.msra.mxu0 %v2857
    %3812 = vmatpush.bf16.msra.mxu0 %v2845
    %3813 = vmatpush.bf16.msra.mxu0 %v2833
    %3814 = vmatpush.bf16.msra.mxu0 %v2821
    %3815 = vmatmul.bf16.gmra.mxu0 %v869
    %v3816 = vpop.f32.mrf.mxu0
    %v3817 = vadd.f32 %v3804, %v3816
    %v3818 = vpop.f32.mrf.mxu0
    %3819 = vdwg.mxu0
    %3820 = vmatpush.bf16.msra.mxu0 %v3001
    %3821 = vmatpush.bf16.msra.mxu0 %v2989
    %3822 = vmatpush.bf16.msra.mxu0 %v2977
    %3823 = vmatpush.bf16.msra.mxu0 %v2965
    %3824 = vmatpush.bf16.msra.mxu0 %v2953
    %3825 = vmatpush.bf16.msra.mxu0 %v2941
    %3826 = vmatpush.bf16.msra.mxu0 %v2929
    %3827 = vmatpush.bf16.msra.mxu0 %v2917
    %3828 = vmatmul.bf16.gmra.mxu0 %v870
    %v3829 = vpop.f32.mrf.mxu0
    %v3830 = vadd.f32 %v3817, %v3829
    %v3831 = vpop.f32.mrf.mxu0
    %3832 = vdwg.mxu0
    %3833 = vmatpush.bf16.msra.mxu0 %v3097
    %3834 = vmatpush.bf16.msra.mxu0 %v3085
    %3835 = vmatpush.bf16.msra.mxu0 %v3073
    %3836 = vmatpush.bf16.msra.mxu0 %v3061
    %3837 = vmatpush.bf16.msra.mxu0 %v3049
    %3838 = vmatpush.bf16.msra.mxu0 %v3037
    %3839 = vmatpush.bf16.msra.mxu0 %v3025
    %3840 = vmatpush.bf16.msra.mxu0 %v3013
    %3841 = vmatmul.bf16.gmra.mxu0 %v871
    %v3842 = vpop.f32.mrf.mxu0
    %v3843 = vadd.f32 %v3830, %v3842
    %v3844 = vpop.f32.mrf.mxu0
    %3845 = vdwg.mxu0
    %3846 = vmatpush.bf16.msra.mxu0 %v3193
    %3847 = vmatpush.bf16.msra.mxu0 %v3181
    %3848 = vmatpush.bf16.msra.mxu0 %v3169
    %3849 = vmatpush.bf16.msra.mxu0 %v3157
    %3850 = vmatpush.bf16.msra.mxu0 %v3145
    %3851 = vmatpush.bf16.msra.mxu0 %v3133
    %3852 = vmatpush.bf16.msra.mxu0 %v3121
    %3853 = vmatpush.bf16.msra.mxu0 %v3109
    %3854 = vmatmul.bf16.gmra.mxu0 %v872
    %v3855 = vpop.f32.mrf.mxu0
    %v3856 = vadd.f32 %v3843, %v3855
    %v3857 = vpop.f32.mrf.mxu0
    %3858 = vdwg.mxu0
    %3859 = vmatpush.bf16.msra.mxu0 %v2714
    %3860 = vmatpush.bf16.msra.mxu0 %v2702
    %3861 = vmatpush.bf16.msra.mxu0 %v2690
    %3862 = vmatpush.bf16.msra.mxu0 %v2678
    %3863 = vmatpush.bf16.msra.mxu0 %v2666
    %3864 = vmatpush.bf16.msra.mxu0 %v2654
    %3865 = vmatpush.bf16.msra.mxu0 %v2642
    %3866 = vmatpush.bf16.msra.mxu0 %v2630
    %3867 = vmatmul.bf16.gmra.mxu0 %v867
    %v3868 = vpop.f32.mrf.mxu0
    %v3869 = vadd.f32 %v878, %v3868
    %v3870 = vpop.f32.mrf.mxu0
    %3871 = vdwg.mxu0
    %3872 = vmatpush.bf16.msra.mxu0 %v2810
    %3873 = vmatpush.bf16.msra.mxu0 %v2798
    %3874 = vmatpush.bf16.msra.mxu0 %v2786
    %3875 = vmatpush.bf16.msra.mxu0 %v2774
    %3876 = vmatpush.bf16.msra.mxu0 %v2762
    %3877 = vmatpush.bf16.msra.mxu0 %v2750
    %3878 = vmatpush.bf16.msra.mxu0 %v2738
    %3879 = vmatpush.bf16.msra.mxu0 %v2726
    %3880 = vmatmul.bf16.gmra.mxu0 %v868
    %v3881 = vpop.f32.mrf.mxu0
    %v3882 = vadd.f32 %v3869, %v3881
    %v3883 = vpop.f32.mrf.mxu0
    %3884 = vdwg.mxu0
    %3885 = vmatpush.bf16.msra.mxu0 %v2906
    %3886 = vmatpush.bf16.msra.mxu0 %v2894
    %3887 = vmatpush.bf16.msra.mxu0 %v2882
    %3888 = vmatpush.bf16.msra.mxu0 %v2870
    %3889 = vmatpush.bf16.msra.mxu0 %v2858
    %3890 = vmatpush.bf16.msra.mxu0 %v2846
    %3891 = vmatpush.bf16.msra.mxu0 %v2834
    %3892 = vmatpush.bf16.msra.mxu0 %v2822
    %3893 = vmatmul.bf16.gmra.mxu0 %v869
    %v3894 = vpop.f32.mrf.mxu0
    %v3895 = vadd.f32 %v3882, %v3894
    %v3896 = vpop.f32.mrf.mxu0
    %3897 = vdwg.mxu0
    %3898 = vmatpush.bf16.msra.mxu0 %v3002
    %3899 = vmatpush.bf16.msra.mxu0 %v2990
    %3900 = vmatpush.bf16.msra.mxu0 %v2978
    %3901 = vmatpush.bf16.msra.mxu0 %v2966
    %3902 = vmatpush.bf16.msra.mxu0 %v2954
    %3903 = vmatpush.bf16.msra.mxu0 %v2942
    %3904 = vmatpush.bf16.msra.mxu0 %v2930
    %3905 = vmatpush.bf16.msra.mxu0 %v2918
    %3906 = vmatmul.bf16.gmra.mxu0 %v870
    %v3907 = vpop.f32.mrf.mxu0
    %v3908 = vadd.f32 %v3895, %v3907
    %v3909 = vpop.f32.mrf.mxu0
    %3910 = vdwg.mxu0
    %3911 = vmatpush.bf16.msra.mxu0 %v3098
    %3912 = vmatpush.bf16.msra.mxu0 %v3086
    %3913 = vmatpush.bf16.msra.mxu0 %v3074
    %3914 = vmatpush.bf16.msra.mxu0 %v3062
    %3915 = vmatpush.bf16.msra.mxu0 %v3050
    %3916 = vmatpush.bf16.msra.mxu0 %v3038
    %3917 = vmatpush.bf16.msra.mxu0 %v3026
    %3918 = vmatpush.bf16.msra.mxu0 %v3014
    %3919 = vmatmul.bf16.gmra.mxu0 %v871
    %v3920 = vpop.f32.mrf.mxu0
    %v3921 = vadd.f32 %v3908, %v3920
    %v3922 = vpop.f32.mrf.mxu0
    %3923 = vdwg.mxu0
    %3924 = vmatpush.bf16.msra.mxu0 %v3194
    %3925 = vmatpush.bf16.msra.mxu0 %v3182
    %3926 = vmatpush.bf16.msra.mxu0 %v3170
    %3927 = vmatpush.bf16.msra.mxu0 %v3158
    %3928 = vmatpush.bf16.msra.mxu0 %v3146
    %3929 = vmatpush.bf16.msra.mxu0 %v3134
    %3930 = vmatpush.bf16.msra.mxu0 %v3122
    %3931 = vmatpush.bf16.msra.mxu0 %v3110
    %3932 = vmatmul.bf16.gmra.mxu0 %v872
    %v3933 = vpop.f32.mrf.mxu0
    %v3934 = vadd.f32 %v3921, %v3933
    %v3935 = vpop.f32.mrf.mxu0
    %3936 = vdwg.mxu0
    %3937 = vmatpush.bf16.msra.mxu0 %v2715
    %3938 = vmatpush.bf16.msra.mxu0 %v2703
    %3939 = vmatpush.bf16.msra.mxu0 %v2691
    %3940 = vmatpush.bf16.msra.mxu0 %v2679
    %3941 = vmatpush.bf16.msra.mxu0 %v2667
    %3942 = vmatpush.bf16.msra.mxu0 %v2655
    %3943 = vmatpush.bf16.msra.mxu0 %v2643
    %3944 = vmatpush.bf16.msra.mxu0 %v2631
    %3945 = vmatmul.bf16.gmra.mxu0 %v867
    %v3946 = vpop.f32.mrf.mxu0
    %v3947 = vadd.f32 %v879, %v3946
    %v3948 = vpop.f32.mrf.mxu0
    %3949 = vdwg.mxu0
    %3950 = vmatpush.bf16.msra.mxu0 %v2811
    %3951 = vmatpush.bf16.msra.mxu0 %v2799
    %3952 = vmatpush.bf16.msra.mxu0 %v2787
    %3953 = vmatpush.bf16.msra.mxu0 %v2775
    %3954 = vmatpush.bf16.msra.mxu0 %v2763
    %3955 = vmatpush.bf16.msra.mxu0 %v2751
    %3956 = vmatpush.bf16.msra.mxu0 %v2739
    %3957 = vmatpush.bf16.msra.mxu0 %v2727
    %3958 = vmatmul.bf16.gmra.mxu0 %v868
    %v3959 = vpop.f32.mrf.mxu0
    %v3960 = vadd.f32 %v3947, %v3959
    %v3961 = vpop.f32.mrf.mxu0
    %3962 = vdwg.mxu0
    %3963 = vmatpush.bf16.msra.mxu0 %v2907
    %3964 = vmatpush.bf16.msra.mxu0 %v2895
    %3965 = vmatpush.bf16.msra.mxu0 %v2883
    %3966 = vmatpush.bf16.msra.mxu0 %v2871
    %3967 = vmatpush.bf16.msra.mxu0 %v2859
    %3968 = vmatpush.bf16.msra.mxu0 %v2847
    %3969 = vmatpush.bf16.msra.mxu0 %v2835
    %3970 = vmatpush.bf16.msra.mxu0 %v2823
    %3971 = vmatmul.bf16.gmra.mxu0 %v869
    %v3972 = vpop.f32.mrf.mxu0
    %v3973 = vadd.f32 %v3960, %v3972
    %v3974 = vpop.f32.mrf.mxu0
    %3975 = vdwg.mxu0
    %3976 = vmatpush.bf16.msra.mxu0 %v3003
    %3977 = vmatpush.bf16.msra.mxu0 %v2991
    %3978 = vmatpush.bf16.msra.mxu0 %v2979
    %3979 = vmatpush.bf16.msra.mxu0 %v2967
    %3980 = vmatpush.bf16.msra.mxu0 %v2955
    %3981 = vmatpush.bf16.msra.mxu0 %v2943
    %3982 = vmatpush.bf16.msra.mxu0 %v2931
    %3983 = vmatpush.bf16.msra.mxu0 %v2919
    %3984 = vmatmul.bf16.gmra.mxu0 %v870
    %v3985 = vpop.f32.mrf.mxu0
    %v3986 = vadd.f32 %v3973, %v3985
    %v3987 = vpop.f32.mrf.mxu0
    %3988 = vdwg.mxu0
    %3989 = vmatpush.bf16.msra.mxu0 %v3099
    %3990 = vmatpush.bf16.msra.mxu0 %v3087
    %3991 = vmatpush.bf16.msra.mxu0 %v3075
    %3992 = vmatpush.bf16.msra.mxu0 %v3063
    %3993 = vmatpush.bf16.msra.mxu0 %v3051
    %3994 = vmatpush.bf16.msra.mxu0 %v3039
    %3995 = vmatpush.bf16.msra.mxu0 %v3027
    %3996 = vmatpush.bf16.msra.mxu0 %v3015
    %3997 = vmatmul.bf16.gmra.mxu0 %v871
    %v3998 = vpop.f32.mrf.mxu0
    %v3999 = vadd.f32 %v3986, %v3998
    %v4000 = vpop.f32.mrf.mxu0
    %4001 = vdwg.mxu0
    %4002 = vmatpush.bf16.msra.mxu0 %v3195
    %4003 = vmatpush.bf16.msra.mxu0 %v3183
    %4004 = vmatpush.bf16.msra.mxu0 %v3171
    %4005 = vmatpush.bf16.msra.mxu0 %v3159
    %4006 = vmatpush.bf16.msra.mxu0 %v3147
    %4007 = vmatpush.bf16.msra.mxu0 %v3135
    %4008 = vmatpush.bf16.msra.mxu0 %v3123
    %4009 = vmatpush.bf16.msra.mxu0 %v3111
    %4010 = vmatmul.bf16.gmra.mxu0 %v872
    %v4011 = vpop.f32.mrf.mxu0
    %v4012 = vadd.f32 %v3999, %v4011
    %v4013 = vpop.f32.mrf.mxu0
    %4014 = vdwg.mxu0
    %4015 = vmatpush.bf16.msra.mxu0 %v2716
    %4016 = vmatpush.bf16.msra.mxu0 %v2704
    %4017 = vmatpush.bf16.msra.mxu0 %v2692
    %4018 = vmatpush.bf16.msra.mxu0 %v2680
    %4019 = vmatpush.bf16.msra.mxu0 %v2668
    %4020 = vmatpush.bf16.msra.mxu0 %v2656
    %4021 = vmatpush.bf16.msra.mxu0 %v2644
    %4022 = vmatpush.bf16.msra.mxu0 %v2632
    %4023 = vmatmul.bf16.gmra.mxu0 %v867
    %v4024 = vpop.f32.mrf.mxu0
    %v4025 = vadd.f32 %v880, %v4024
    %v4026 = vpop.f32.mrf.mxu0
    %4027 = vdwg.mxu0
    %4028 = vmatpush.bf16.msra.mxu0 %v2812
    %4029 = vmatpush.bf16.msra.mxu0 %v2800
    %4030 = vmatpush.bf16.msra.mxu0 %v2788
    %4031 = vmatpush.bf16.msra.mxu0 %v2776
    %4032 = vmatpush.bf16.msra.mxu0 %v2764
    %4033 = vmatpush.bf16.msra.mxu0 %v2752
    %4034 = vmatpush.bf16.msra.mxu0 %v2740
    %4035 = vmatpush.bf16.msra.mxu0 %v2728
    %4036 = vmatmul.bf16.gmra.mxu0 %v868
    %v4037 = vpop.f32.mrf.mxu0
    %v4038 = vadd.f32 %v4025, %v4037
    %v4039 = vpop.f32.mrf.mxu0
    %4040 = vdwg.mxu0
    %4041 = vmatpush.bf16.msra.mxu0 %v2908
    %4042 = vmatpush.bf16.msra.mxu0 %v2896
    %4043 = vmatpush.bf16.msra.mxu0 %v2884
    %4044 = vmatpush.bf16.msra.mxu0 %v2872
    %4045 = vmatpush.bf16.msra.mxu0 %v2860
    %4046 = vmatpush.bf16.msra.mxu0 %v2848
    %4047 = vmatpush.bf16.msra.mxu0 %v2836
    %4048 = vmatpush.bf16.msra.mxu0 %v2824
    %4049 = vmatmul.bf16.gmra.mxu0 %v869
    %v4050 = vpop.f32.mrf.mxu0
    %v4051 = vadd.f32 %v4038, %v4050
    %v4052 = vpop.f32.mrf.mxu0
    %4053 = vdwg.mxu0
    %4054 = vmatpush.bf16.msra.mxu0 %v3004
    %4055 = vmatpush.bf16.msra.mxu0 %v2992
    %4056 = vmatpush.bf16.msra.mxu0 %v2980
    %4057 = vmatpush.bf16.msra.mxu0 %v2968
    %4058 = vmatpush.bf16.msra.mxu0 %v2956
    %4059 = vmatpush.bf16.msra.mxu0 %v2944
    %4060 = vmatpush.bf16.msra.mxu0 %v2932
    %4061 = vmatpush.bf16.msra.mxu0 %v2920
    %4062 = vmatmul.bf16.gmra.mxu0 %v870
    %v4063 = vpop.f32.mrf.mxu0
    %v4064 = vadd.f32 %v4051, %v4063
    %v4065 = vpop.f32.mrf.mxu0
    %4066 = vdwg.mxu0
    %4067 = vmatpush.bf16.msra.mxu0 %v3100
    %4068 = vmatpush.bf16.msra.mxu0 %v3088
    %4069 = vmatpush.bf16.msra.mxu0 %v3076
    %4070 = vmatpush.bf16.msra.mxu0 %v3064
    %4071 = vmatpush.bf16.msra.mxu0 %v3052
    %4072 = vmatpush.bf16.msra.mxu0 %v3040
    %4073 = vmatpush.bf16.msra.mxu0 %v3028
    %4074 = vmatpush.bf16.msra.mxu0 %v3016
    %4075 = vmatmul.bf16.gmra.mxu0 %v871
    %v4076 = vpop.f32.mrf.mxu0
    %v4077 = vadd.f32 %v4064, %v4076
    %v4078 = vpop.f32.mrf.mxu0
    %4079 = vdwg.mxu0
    %4080 = vmatpush.bf16.msra.mxu0 %v3196
    %4081 = vmatpush.bf16.msra.mxu0 %v3184
    %4082 = vmatpush.bf16.msra.mxu0 %v3172
    %4083 = vmatpush.bf16.msra.mxu0 %v3160
    %4084 = vmatpush.bf16.msra.mxu0 %v3148
    %4085 = vmatpush.bf16.msra.mxu0 %v3136
    %4086 = vmatpush.bf16.msra.mxu0 %v3124
    %4087 = vmatpush.bf16.msra.mxu0 %v3112
    %4088 = vmatmul.bf16.gmra.mxu0 %v872
    %v4089 = vpop.f32.mrf.mxu0
    %v4090 = vadd.f32 %v4077, %v4089
    %v4091 = vpop.f32.mrf.mxu0
    %4092 = vdwg.mxu0
    %4093 = vmatpush.bf16.msra.mxu0 %v2717
    %4094 = vmatpush.bf16.msra.mxu0 %v2705
    %4095 = vmatpush.bf16.msra.mxu0 %v2693
    %4096 = vmatpush.bf16.msra.mxu0 %v2681
    %4097 = vmatpush.bf16.msra.mxu0 %v2669
    %4098 = vmatpush.bf16.msra.mxu0 %v2657
    %4099 = vmatpush.bf16.msra.mxu0 %v2645
    %4100 = vmatpush.bf16.msra.mxu0 %v2633
    %4101 = vmatmul.bf16.gmra.mxu0 %v867
    %v4102 = vpop.f32.mrf.mxu0
    %v4103 = vadd.f32 %v881, %v4102
    %v4104 = vpop.f32.mrf.mxu0
    %4105 = vdwg.mxu0
    %4106 = vmatpush.bf16.msra.mxu0 %v2813
    %4107 = vmatpush.bf16.msra.mxu0 %v2801
    %4108 = vmatpush.bf16.msra.mxu0 %v2789
    %4109 = vmatpush.bf16.msra.mxu0 %v2777
    %4110 = vmatpush.bf16.msra.mxu0 %v2765
    %4111 = vmatpush.bf16.msra.mxu0 %v2753
    %4112 = vmatpush.bf16.msra.mxu0 %v2741
    %4113 = vmatpush.bf16.msra.mxu0 %v2729
    %4114 = vmatmul.bf16.gmra.mxu0 %v868
    %v4115 = vpop.f32.mrf.mxu0
    %v4116 = vadd.f32 %v4103, %v4115
    %v4117 = vpop.f32.mrf.mxu0
    %4118 = vdwg.mxu0
    %4119 = vmatpush.bf16.msra.mxu0 %v2909
    %4120 = vmatpush.bf16.msra.mxu0 %v2897
    %4121 = vmatpush.bf16.msra.mxu0 %v2885
    %4122 = vmatpush.bf16.msra.mxu0 %v2873
    %4123 = vmatpush.bf16.msra.mxu0 %v2861
    %4124 = vmatpush.bf16.msra.mxu0 %v2849
    %4125 = vmatpush.bf16.msra.mxu0 %v2837
    %4126 = vmatpush.bf16.msra.mxu0 %v2825
    %4127 = vmatmul.bf16.gmra.mxu0 %v869
    %v4128 = vpop.f32.mrf.mxu0
    %v4129 = vadd.f32 %v4116, %v4128
    %v4130 = vpop.f32.mrf.mxu0
    %4131 = vdwg.mxu0
    %4132 = vmatpush.bf16.msra.mxu0 %v3005
    %4133 = vmatpush.bf16.msra.mxu0 %v2993
    %4134 = vmatpush.bf16.msra.mxu0 %v2981
    %4135 = vmatpush.bf16.msra.mxu0 %v2969
    %4136 = vmatpush.bf16.msra.mxu0 %v2957
    %4137 = vmatpush.bf16.msra.mxu0 %v2945
    %4138 = vmatpush.bf16.msra.mxu0 %v2933
    %4139 = vmatpush.bf16.msra.mxu0 %v2921
    %4140 = vmatmul.bf16.gmra.mxu0 %v870
    %v4141 = vpop.f32.mrf.mxu0
    %v4142 = vadd.f32 %v4129, %v4141
    %v4143 = vpop.f32.mrf.mxu0
    %4144 = vdwg.mxu0
    %4145 = vmatpush.bf16.msra.mxu0 %v3101
    %4146 = vmatpush.bf16.msra.mxu0 %v3089
    %4147 = vmatpush.bf16.msra.mxu0 %v3077
    %4148 = vmatpush.bf16.msra.mxu0 %v3065
    %4149 = vmatpush.bf16.msra.mxu0 %v3053
    %4150 = vmatpush.bf16.msra.mxu0 %v3041
    %4151 = vmatpush.bf16.msra.mxu0 %v3029
    %4152 = vmatpush.bf16.msra.mxu0 %v3017
    %4153 = vmatmul.bf16.gmra.mxu0 %v871
    %v4154 = vpop.f32.mrf.mxu0
    %v4155 = vadd.f32 %v4142, %v4154
    %v4156 = vpop.f32.mrf.mxu0
    %4157 = vdwg.mxu0
    %4158 = vmatpush.bf16.msra.mxu0 %v3197
    %4159 = vmatpush.bf16.msra.mxu0 %v3185
    %4160 = vmatpush.bf16.msra.mxu0 %v3173
    %4161 = vmatpush.bf16.msra.mxu0 %v3161
    %4162 = vmatpush.bf16.msra.mxu0 %v3149
    %4163 = vmatpush.bf16.msra.mxu0 %v3137
    %4164 = vmatpush.bf16.msra.mxu0 %v3125
    %4165 = vmatpush.bf16.msra.mxu0 %v3113
    %4166 = vmatmul.bf16.gmra.mxu0 %v872
    %v4167 = vpop.f32.mrf.mxu0
    %v4168 = vadd.f32 %v4155, %v4167
    %v4169 = vpop.f32.mrf.mxu0
    %4170 = vdwg.mxu0
    %4171 = vmatpush.bf16.msra.mxu0 %v2718
    %4172 = vmatpush.bf16.msra.mxu0 %v2706
    %4173 = vmatpush.bf16.msra.mxu0 %v2694
    %4174 = vmatpush.bf16.msra.mxu0 %v2682
    %4175 = vmatpush.bf16.msra.mxu0 %v2670
    %4176 = vmatpush.bf16.msra.mxu0 %v2658
    %4177 = vmatpush.bf16.msra.mxu0 %v2646
    %4178 = vmatpush.bf16.msra.mxu0 %v2634
    %4179 = vmatmul.bf16.gmra.mxu0 %v867
    %v4180 = vpop.f32.mrf.mxu0
    %v4181 = vadd.f32 %v882, %v4180
    %v4182 = vpop.f32.mrf.mxu0
    %4183 = vdwg.mxu0
    %4184 = vmatpush.bf16.msra.mxu0 %v2814
    %4185 = vmatpush.bf16.msra.mxu0 %v2802
    %4186 = vmatpush.bf16.msra.mxu0 %v2790
    %4187 = vmatpush.bf16.msra.mxu0 %v2778
    %4188 = vmatpush.bf16.msra.mxu0 %v2766
    %4189 = vmatpush.bf16.msra.mxu0 %v2754
    %4190 = vmatpush.bf16.msra.mxu0 %v2742
    %4191 = vmatpush.bf16.msra.mxu0 %v2730
    %4192 = vmatmul.bf16.gmra.mxu0 %v868
    %v4193 = vpop.f32.mrf.mxu0
    %v4194 = vadd.f32 %v4181, %v4193
    %v4195 = vpop.f32.mrf.mxu0
    %4196 = vdwg.mxu0
    %4197 = vmatpush.bf16.msra.mxu0 %v2910
    %4198 = vmatpush.bf16.msra.mxu0 %v2898
    %4199 = vmatpush.bf16.msra.mxu0 %v2886
    %4200 = vmatpush.bf16.msra.mxu0 %v2874
    %4201 = vmatpush.bf16.msra.mxu0 %v2862
    %4202 = vmatpush.bf16.msra.mxu0 %v2850
    %4203 = vmatpush.bf16.msra.mxu0 %v2838
    %4204 = vmatpush.bf16.msra.mxu0 %v2826
    %4205 = vmatmul.bf16.gmra.mxu0 %v869
    %v4206 = vpop.f32.mrf.mxu0
    %v4207 = vadd.f32 %v4194, %v4206
    %v4208 = vpop.f32.mrf.mxu0
    %4209 = vdwg.mxu0
    %4210 = vmatpush.bf16.msra.mxu0 %v3006
    %4211 = vmatpush.bf16.msra.mxu0 %v2994
    %4212 = vmatpush.bf16.msra.mxu0 %v2982
    %4213 = vmatpush.bf16.msra.mxu0 %v2970
    %4214 = vmatpush.bf16.msra.mxu0 %v2958
    %4215 = vmatpush.bf16.msra.mxu0 %v2946
    %4216 = vmatpush.bf16.msra.mxu0 %v2934
    %4217 = vmatpush.bf16.msra.mxu0 %v2922
    %4218 = vmatmul.bf16.gmra.mxu0 %v870
    %v4219 = vpop.f32.mrf.mxu0
    %v4220 = vadd.f32 %v4207, %v4219
    %v4221 = vpop.f32.mrf.mxu0
    %4222 = vdwg.mxu0
    %4223 = vmatpush.bf16.msra.mxu0 %v3102
    %4224 = vmatpush.bf16.msra.mxu0 %v3090
    %4225 = vmatpush.bf16.msra.mxu0 %v3078
    %4226 = vmatpush.bf16.msra.mxu0 %v3066
    %4227 = vmatpush.bf16.msra.mxu0 %v3054
    %4228 = vmatpush.bf16.msra.mxu0 %v3042
    %4229 = vmatpush.bf16.msra.mxu0 %v3030
    %4230 = vmatpush.bf16.msra.mxu0 %v3018
    %4231 = vmatmul.bf16.gmra.mxu0 %v871
    %v4232 = vpop.f32.mrf.mxu0
    %v4233 = vadd.f32 %v4220, %v4232
    %v4234 = vpop.f32.mrf.mxu0
    %4235 = vdwg.mxu0
    %4236 = vmatpush.bf16.msra.mxu0 %v3198
    %4237 = vmatpush.bf16.msra.mxu0 %v3186
    %4238 = vmatpush.bf16.msra.mxu0 %v3174
    %4239 = vmatpush.bf16.msra.mxu0 %v3162
    %4240 = vmatpush.bf16.msra.mxu0 %v3150
    %4241 = vmatpush.bf16.msra.mxu0 %v3138
    %4242 = vmatpush.bf16.msra.mxu0 %v3126
    %4243 = vmatpush.bf16.msra.mxu0 %v3114
    %4244 = vmatmul.bf16.gmra.mxu0 %v872
    %v4245 = vpop.f32.mrf.mxu0
    %v4246 = vadd.f32 %v4233, %v4245
    %v4247 = vpop.f32.mrf.mxu0
    %4248 = vdwg.mxu0
    %4249 = vmatpush.bf16.msra.mxu0 %v2719
    %4250 = vmatpush.bf16.msra.mxu0 %v2707
    %4251 = vmatpush.bf16.msra.mxu0 %v2695
    %4252 = vmatpush.bf16.msra.mxu0 %v2683
    %4253 = vmatpush.bf16.msra.mxu0 %v2671
    %4254 = vmatpush.bf16.msra.mxu0 %v2659
    %4255 = vmatpush.bf16.msra.mxu0 %v2647
    %4256 = vmatpush.bf16.msra.mxu0 %v2635
    %4257 = vmatmul.bf16.gmra.mxu0 %v867
    %v4258 = vpop.f32.mrf.mxu0
    %v4259 = vadd.f32 %v883, %v4258
    %v4260 = vpop.f32.mrf.mxu0
    %4261 = vdwg.mxu0
    %4262 = vmatpush.bf16.msra.mxu0 %v2815
    %4263 = vmatpush.bf16.msra.mxu0 %v2803
    %4264 = vmatpush.bf16.msra.mxu0 %v2791
    %4265 = vmatpush.bf16.msra.mxu0 %v2779
    %4266 = vmatpush.bf16.msra.mxu0 %v2767
    %4267 = vmatpush.bf16.msra.mxu0 %v2755
    %4268 = vmatpush.bf16.msra.mxu0 %v2743
    %4269 = vmatpush.bf16.msra.mxu0 %v2731
    %4270 = vmatmul.bf16.gmra.mxu0 %v868
    %v4271 = vpop.f32.mrf.mxu0
    %v4272 = vadd.f32 %v4259, %v4271
    %v4273 = vpop.f32.mrf.mxu0
    %4274 = vdwg.mxu0
    %4275 = vmatpush.bf16.msra.mxu0 %v2911
    %4276 = vmatpush.bf16.msra.mxu0 %v2899
    %4277 = vmatpush.bf16.msra.mxu0 %v2887
    %4278 = vmatpush.bf16.msra.mxu0 %v2875
    %4279 = vmatpush.bf16.msra.mxu0 %v2863
    %4280 = vmatpush.bf16.msra.mxu0 %v2851
    %4281 = vmatpush.bf16.msra.mxu0 %v2839
    %4282 = vmatpush.bf16.msra.mxu0 %v2827
    %4283 = vmatmul.bf16.gmra.mxu0 %v869
    %v4284 = vpop.f32.mrf.mxu0
    %v4285 = vadd.f32 %v4272, %v4284
    %v4286 = vpop.f32.mrf.mxu0
    %4287 = vdwg.mxu0
    %4288 = vmatpush.bf16.msra.mxu0 %v3007
    %4289 = vmatpush.bf16.msra.mxu0 %v2995
    %4290 = vmatpush.bf16.msra.mxu0 %v2983
    %4291 = vmatpush.bf16.msra.mxu0 %v2971
    %4292 = vmatpush.bf16.msra.mxu0 %v2959
    %4293 = vmatpush.bf16.msra.mxu0 %v2947
    %4294 = vmatpush.bf16.msra.mxu0 %v2935
    %4295 = vmatpush.bf16.msra.mxu0 %v2923
    %4296 = vmatmul.bf16.gmra.mxu0 %v870
    %v4297 = vpop.f32.mrf.mxu0
    %v4298 = vadd.f32 %v4285, %v4297
    %v4299 = vpop.f32.mrf.mxu0
    %4300 = vdwg.mxu0
    %4301 = vmatpush.bf16.msra.mxu0 %v3103
    %4302 = vmatpush.bf16.msra.mxu0 %v3091
    %4303 = vmatpush.bf16.msra.mxu0 %v3079
    %4304 = vmatpush.bf16.msra.mxu0 %v3067
    %4305 = vmatpush.bf16.msra.mxu0 %v3055
    %4306 = vmatpush.bf16.msra.mxu0 %v3043
    %4307 = vmatpush.bf16.msra.mxu0 %v3031
    %4308 = vmatpush.bf16.msra.mxu0 %v3019
    %4309 = vmatmul.bf16.gmra.mxu0 %v871
    %v4310 = vpop.f32.mrf.mxu0
    %v4311 = vadd.f32 %v4298, %v4310
    %v4312 = vpop.f32.mrf.mxu0
    %4313 = vdwg.mxu0
    %4314 = vmatpush.bf16.msra.mxu0 %v3199
    %4315 = vmatpush.bf16.msra.mxu0 %v3187
    %4316 = vmatpush.bf16.msra.mxu0 %v3175
    %4317 = vmatpush.bf16.msra.mxu0 %v3163
    %4318 = vmatpush.bf16.msra.mxu0 %v3151
    %4319 = vmatpush.bf16.msra.mxu0 %v3139
    %4320 = vmatpush.bf16.msra.mxu0 %v3127
    %4321 = vmatpush.bf16.msra.mxu0 %v3115
    %4322 = vmatmul.bf16.gmra.mxu0 %v872
    %v4323 = vpop.f32.mrf.mxu0
    %v4324 = vadd.f32 %v4311, %v4323
    %v4325 = vpop.f32.mrf.mxu0
    %4326 = vdwg.mxu0
    %4327 = vmatpush.bf16.msra.mxu0 %v2720
    %4328 = vmatpush.bf16.msra.mxu0 %v2708
    %4329 = vmatpush.bf16.msra.mxu0 %v2696
    %4330 = vmatpush.bf16.msra.mxu0 %v2684
    %4331 = vmatpush.bf16.msra.mxu0 %v2672
    %4332 = vmatpush.bf16.msra.mxu0 %v2660
    %4333 = vmatpush.bf16.msra.mxu0 %v2648
    %4334 = vmatpush.bf16.msra.mxu0 %v2636
    %4335 = vmatmul.bf16.gmra.mxu0 %v867
    %v4336 = vpop.f32.mrf.mxu0
    %v4337 = vadd.f32 %v884, %v4336
    %v4338 = vpop.f32.mrf.mxu0
    %4339 = vdwg.mxu0
    %4340 = vmatpush.bf16.msra.mxu0 %v2816
    %4341 = vmatpush.bf16.msra.mxu0 %v2804
    %4342 = vmatpush.bf16.msra.mxu0 %v2792
    %4343 = vmatpush.bf16.msra.mxu0 %v2780
    %4344 = vmatpush.bf16.msra.mxu0 %v2768
    %4345 = vmatpush.bf16.msra.mxu0 %v2756
    %4346 = vmatpush.bf16.msra.mxu0 %v2744
    %4347 = vmatpush.bf16.msra.mxu0 %v2732
    %4348 = vmatmul.bf16.gmra.mxu0 %v868
    %v4349 = vpop.f32.mrf.mxu0
    %v4350 = vadd.f32 %v4337, %v4349
    %v4351 = vpop.f32.mrf.mxu0
    %4352 = vdwg.mxu0
    %4353 = vmatpush.bf16.msra.mxu0 %v2912
    %4354 = vmatpush.bf16.msra.mxu0 %v2900
    %4355 = vmatpush.bf16.msra.mxu0 %v2888
    %4356 = vmatpush.bf16.msra.mxu0 %v2876
    %4357 = vmatpush.bf16.msra.mxu0 %v2864
    %4358 = vmatpush.bf16.msra.mxu0 %v2852
    %4359 = vmatpush.bf16.msra.mxu0 %v2840
    %4360 = vmatpush.bf16.msra.mxu0 %v2828
    %4361 = vmatmul.bf16.gmra.mxu0 %v869
    %v4362 = vpop.f32.mrf.mxu0
    %v4363 = vadd.f32 %v4350, %v4362
    %v4364 = vpop.f32.mrf.mxu0
    %4365 = vdwg.mxu0
    %4366 = vmatpush.bf16.msra.mxu0 %v3008
    %4367 = vmatpush.bf16.msra.mxu0 %v2996
    %4368 = vmatpush.bf16.msra.mxu0 %v2984
    %4369 = vmatpush.bf16.msra.mxu0 %v2972
    %4370 = vmatpush.bf16.msra.mxu0 %v2960
    %4371 = vmatpush.bf16.msra.mxu0 %v2948
    %4372 = vmatpush.bf16.msra.mxu0 %v2936
    %4373 = vmatpush.bf16.msra.mxu0 %v2924
    %4374 = vmatmul.bf16.gmra.mxu0 %v870
    %v4375 = vpop.f32.mrf.mxu0
    %v4376 = vadd.f32 %v4363, %v4375
    %v4377 = vpop.f32.mrf.mxu0
    %4378 = vdwg.mxu0
    %4379 = vmatpush.bf16.msra.mxu0 %v3104
    %4380 = vmatpush.bf16.msra.mxu0 %v3092
    %4381 = vmatpush.bf16.msra.mxu0 %v3080
    %4382 = vmatpush.bf16.msra.mxu0 %v3068
    %4383 = vmatpush.bf16.msra.mxu0 %v3056
    %4384 = vmatpush.bf16.msra.mxu0 %v3044
    %4385 = vmatpush.bf16.msra.mxu0 %v3032
    %4386 = vmatpush.bf16.msra.mxu0 %v3020
    %4387 = vmatmul.bf16.gmra.mxu0 %v871
    %v4388 = vpop.f32.mrf.mxu0
    %v4389 = vadd.f32 %v4376, %v4388
    %v4390 = vpop.f32.mrf.mxu0
    %4391 = vdwg.mxu0
    %4392 = vmatpush.bf16.msra.mxu0 %v3200
    %4393 = vmatpush.bf16.msra.mxu0 %v3188
    %4394 = vmatpush.bf16.msra.mxu0 %v3176
    %4395 = vmatpush.bf16.msra.mxu0 %v3164
    %4396 = vmatpush.bf16.msra.mxu0 %v3152
    %4397 = vmatpush.bf16.msra.mxu0 %v3140
    %4398 = vmatpush.bf16.msra.mxu0 %v3128
    %4399 = vmatpush.bf16.msra.mxu0 %v3116
    %4400 = vmatmul.bf16.gmra.mxu0 %v872
    %v4401 = vpop.f32.mrf.mxu0
    %v4402 = vadd.f32 %v4389, %v4401
    %v4403 = vpop.f32.mrf.mxu0
    %4404 = vdwg.mxu0
    %4405 = vmatpush.bf16.msra.mxu0 %v2721
    %4406 = vmatpush.bf16.msra.mxu0 %v2709
    %4407 = vmatpush.bf16.msra.mxu0 %v2697
    %4408 = vmatpush.bf16.msra.mxu0 %v2685
    %4409 = vmatpush.bf16.msra.mxu0 %v2673
    %4410 = vmatpush.bf16.msra.mxu0 %v2661
    %4411 = vmatpush.bf16.msra.mxu0 %v2649
    %4412 = vmatpush.bf16.msra.mxu0 %v2637
    %4413 = vmatmul.bf16.gmra.mxu0 %v867
    %v4414 = vpop.f32.mrf.mxu0
    %v4415 = vadd.f32 %v885, %v4414
    %v4416 = vpop.f32.mrf.mxu0
    %4417 = vdwg.mxu0
    %4418 = vmatpush.bf16.msra.mxu0 %v2817
    %4419 = vmatpush.bf16.msra.mxu0 %v2805
    %4420 = vmatpush.bf16.msra.mxu0 %v2793
    %4421 = vmatpush.bf16.msra.mxu0 %v2781
    %4422 = vmatpush.bf16.msra.mxu0 %v2769
    %4423 = vmatpush.bf16.msra.mxu0 %v2757
    %4424 = vmatpush.bf16.msra.mxu0 %v2745
    %4425 = vmatpush.bf16.msra.mxu0 %v2733
    %4426 = vmatmul.bf16.gmra.mxu0 %v868
    %v4427 = vpop.f32.mrf.mxu0
    %v4428 = vadd.f32 %v4415, %v4427
    %v4429 = vpop.f32.mrf.mxu0
    %4430 = vdwg.mxu0
    %4431 = vmatpush.bf16.msra.mxu0 %v2913
    %4432 = vmatpush.bf16.msra.mxu0 %v2901
    %4433 = vmatpush.bf16.msra.mxu0 %v2889
    %4434 = vmatpush.bf16.msra.mxu0 %v2877
    %4435 = vmatpush.bf16.msra.mxu0 %v2865
    %4436 = vmatpush.bf16.msra.mxu0 %v2853
    %4437 = vmatpush.bf16.msra.mxu0 %v2841
    %4438 = vmatpush.bf16.msra.mxu0 %v2829
    %4439 = vmatmul.bf16.gmra.mxu0 %v869
    %v4440 = vpop.f32.mrf.mxu0
    %v4441 = vadd.f32 %v4428, %v4440
    %v4442 = vpop.f32.mrf.mxu0
    %4443 = vdwg.mxu0
    %4444 = vmatpush.bf16.msra.mxu0 %v3009
    %4445 = vmatpush.bf16.msra.mxu0 %v2997
    %4446 = vmatpush.bf16.msra.mxu0 %v2985
    %4447 = vmatpush.bf16.msra.mxu0 %v2973
    %4448 = vmatpush.bf16.msra.mxu0 %v2961
    %4449 = vmatpush.bf16.msra.mxu0 %v2949
    %4450 = vmatpush.bf16.msra.mxu0 %v2937
    %4451 = vmatpush.bf16.msra.mxu0 %v2925
    %4452 = vmatmul.bf16.gmra.mxu0 %v870
    %v4453 = vpop.f32.mrf.mxu0
    %v4454 = vadd.f32 %v4441, %v4453
    %v4455 = vpop.f32.mrf.mxu0
    %4456 = vdwg.mxu0
    %4457 = vmatpush.bf16.msra.mxu0 %v3105
    %4458 = vmatpush.bf16.msra.mxu0 %v3093
    %4459 = vmatpush.bf16.msra.mxu0 %v3081
    %4460 = vmatpush.bf16.msra.mxu0 %v3069
    %4461 = vmatpush.bf16.msra.mxu0 %v3057
    %4462 = vmatpush.bf16.msra.mxu0 %v3045
    %4463 = vmatpush.bf16.msra.mxu0 %v3033
    %4464 = vmatpush.bf16.msra.mxu0 %v3021
    %4465 = vmatmul.bf16.gmra.mxu0 %v871
    %v4466 = vpop.f32.mrf.mxu0
    %v4467 = vadd.f32 %v4454, %v4466
    %v4468 = vpop.f32.mrf.mxu0
    %4469 = vdwg.mxu0
    %4470 = vmatpush.bf16.msra.mxu0 %v3201
    %4471 = vmatpush.bf16.msra.mxu0 %v3189
    %4472 = vmatpush.bf16.msra.mxu0 %v3177
    %4473 = vmatpush.bf16.msra.mxu0 %v3165
    %4474 = vmatpush.bf16.msra.mxu0 %v3153
    %4475 = vmatpush.bf16.msra.mxu0 %v3141
    %4476 = vmatpush.bf16.msra.mxu0 %v3129
    %4477 = vmatpush.bf16.msra.mxu0 %v3117
    %4478 = vmatmul.bf16.gmra.mxu0 %v872
    %v4479 = vpop.f32.mrf.mxu0
    %v4480 = vadd.f32 %v4467, %v4479
    %v4481 = vpop.f32.mrf.mxu0
    %4482 = vdwg.mxu0
    %4483 = vmatpush.bf16.msra.mxu0 %v2722
    %4484 = vmatpush.bf16.msra.mxu0 %v2710
    %4485 = vmatpush.bf16.msra.mxu0 %v2698
    %4486 = vmatpush.bf16.msra.mxu0 %v2686
    %4487 = vmatpush.bf16.msra.mxu0 %v2674
    %4488 = vmatpush.bf16.msra.mxu0 %v2662
    %4489 = vmatpush.bf16.msra.mxu0 %v2650
    %4490 = vmatpush.bf16.msra.mxu0 %v2638
    %4491 = vmatmul.bf16.gmra.mxu0 %v867
    %v4492 = vpop.f32.mrf.mxu0
    %v4493 = vadd.f32 %v886, %v4492
    %v4494 = vpop.f32.mrf.mxu0
    %4495 = vdwg.mxu0
    %4496 = vmatpush.bf16.msra.mxu0 %v2818
    %4497 = vmatpush.bf16.msra.mxu0 %v2806
    %4498 = vmatpush.bf16.msra.mxu0 %v2794
    %4499 = vmatpush.bf16.msra.mxu0 %v2782
    %4500 = vmatpush.bf16.msra.mxu0 %v2770
    %4501 = vmatpush.bf16.msra.mxu0 %v2758
    %4502 = vmatpush.bf16.msra.mxu0 %v2746
    %4503 = vmatpush.bf16.msra.mxu0 %v2734
    %4504 = vmatmul.bf16.gmra.mxu0 %v868
    %v4505 = vpop.f32.mrf.mxu0
    %v4506 = vadd.f32 %v4493, %v4505
    %v4507 = vpop.f32.mrf.mxu0
    %4508 = vdwg.mxu0
    %4509 = vmatpush.bf16.msra.mxu0 %v2914
    %4510 = vmatpush.bf16.msra.mxu0 %v2902
    %4511 = vmatpush.bf16.msra.mxu0 %v2890
    %4512 = vmatpush.bf16.msra.mxu0 %v2878
    %4513 = vmatpush.bf16.msra.mxu0 %v2866
    %4514 = vmatpush.bf16.msra.mxu0 %v2854
    %4515 = vmatpush.bf16.msra.mxu0 %v2842
    %4516 = vmatpush.bf16.msra.mxu0 %v2830
    %4517 = vmatmul.bf16.gmra.mxu0 %v869
    %v4518 = vpop.f32.mrf.mxu0
    %v4519 = vadd.f32 %v4506, %v4518
    %v4520 = vpop.f32.mrf.mxu0
    %4521 = vdwg.mxu0
    %4522 = vmatpush.bf16.msra.mxu0 %v3010
    %4523 = vmatpush.bf16.msra.mxu0 %v2998
    %4524 = vmatpush.bf16.msra.mxu0 %v2986
    %4525 = vmatpush.bf16.msra.mxu0 %v2974
    %4526 = vmatpush.bf16.msra.mxu0 %v2962
    %4527 = vmatpush.bf16.msra.mxu0 %v2950
    %4528 = vmatpush.bf16.msra.mxu0 %v2938
    %4529 = vmatpush.bf16.msra.mxu0 %v2926
    %4530 = vmatmul.bf16.gmra.mxu0 %v870
    %v4531 = vpop.f32.mrf.mxu0
    %v4532 = vadd.f32 %v4519, %v4531
    %v4533 = vpop.f32.mrf.mxu0
    %4534 = vdwg.mxu0
    %4535 = vmatpush.bf16.msra.mxu0 %v3106
    %4536 = vmatpush.bf16.msra.mxu0 %v3094
    %4537 = vmatpush.bf16.msra.mxu0 %v3082
    %4538 = vmatpush.bf16.msra.mxu0 %v3070
    %4539 = vmatpush.bf16.msra.mxu0 %v3058
    %4540 = vmatpush.bf16.msra.mxu0 %v3046
    %4541 = vmatpush.bf16.msra.mxu0 %v3034
    %4542 = vmatpush.bf16.msra.mxu0 %v3022
    %4543 = vmatmul.bf16.gmra.mxu0 %v871
    %v4544 = vpop.f32.mrf.mxu0
    %v4545 = vadd.f32 %v4532, %v4544
    %v4546 = vpop.f32.mrf.mxu0
    %4547 = vdwg.mxu0
    %4548 = vmatpush.bf16.msra.mxu0 %v3202
    %4549 = vmatpush.bf16.msra.mxu0 %v3190
    %4550 = vmatpush.bf16.msra.mxu0 %v3178
    %4551 = vmatpush.bf16.msra.mxu0 %v3166
    %4552 = vmatpush.bf16.msra.mxu0 %v3154
    %4553 = vmatpush.bf16.msra.mxu0 %v3142
    %4554 = vmatpush.bf16.msra.mxu0 %v3130
    %4555 = vmatpush.bf16.msra.mxu0 %v3118
    %4556 = vmatmul.bf16.gmra.mxu0 %v872
    %v4557 = vpop.f32.mrf.mxu0
    %v4558 = vadd.f32 %v4545, %v4557
    %v4559 = vpop.f32.mrf.mxu0
    %4560 = vdwg.mxu0
    %4561 = vmatpush.bf16.msra.mxu0 %v2723
    %4562 = vmatpush.bf16.msra.mxu0 %v2711
    %4563 = vmatpush.bf16.msra.mxu0 %v2699
    %4564 = vmatpush.bf16.msra.mxu0 %v2687
    %4565 = vmatpush.bf16.msra.mxu0 %v2675
    %4566 = vmatpush.bf16.msra.mxu0 %v2663
    %4567 = vmatpush.bf16.msra.mxu0 %v2651
    %4568 = vmatpush.bf16.msra.mxu0 %v2639
    %4569 = vmatmul.bf16.gmra.mxu0 %v867
    %v4570 = vpop.f32.mrf.mxu0
    %v4571 = vadd.f32 %v887, %v4570
    %v4572 = vpop.f32.mrf.mxu0
    %4573 = vdwg.mxu0
    %4574 = vmatpush.bf16.msra.mxu0 %v2819
    %4575 = vmatpush.bf16.msra.mxu0 %v2807
    %4576 = vmatpush.bf16.msra.mxu0 %v2795
    %4577 = vmatpush.bf16.msra.mxu0 %v2783
    %4578 = vmatpush.bf16.msra.mxu0 %v2771
    %4579 = vmatpush.bf16.msra.mxu0 %v2759
    %4580 = vmatpush.bf16.msra.mxu0 %v2747
    %4581 = vmatpush.bf16.msra.mxu0 %v2735
    %4582 = vmatmul.bf16.gmra.mxu0 %v868
    %v4583 = vpop.f32.mrf.mxu0
    %v4584 = vadd.f32 %v4571, %v4583
    %v4585 = vpop.f32.mrf.mxu0
    %4586 = vdwg.mxu0
    %4587 = vmatpush.bf16.msra.mxu0 %v2915
    %4588 = vmatpush.bf16.msra.mxu0 %v2903
    %4589 = vmatpush.bf16.msra.mxu0 %v2891
    %4590 = vmatpush.bf16.msra.mxu0 %v2879
    %4591 = vmatpush.bf16.msra.mxu0 %v2867
    %4592 = vmatpush.bf16.msra.mxu0 %v2855
    %4593 = vmatpush.bf16.msra.mxu0 %v2843
    %4594 = vmatpush.bf16.msra.mxu0 %v2831
    %4595 = vmatmul.bf16.gmra.mxu0 %v869
    %v4596 = vpop.f32.mrf.mxu0
    %v4597 = vadd.f32 %v4584, %v4596
    %v4598 = vpop.f32.mrf.mxu0
    %4599 = vdwg.mxu0
    %4600 = vmatpush.bf16.msra.mxu0 %v3011
    %4601 = vmatpush.bf16.msra.mxu0 %v2999
    %4602 = vmatpush.bf16.msra.mxu0 %v2987
    %4603 = vmatpush.bf16.msra.mxu0 %v2975
    %4604 = vmatpush.bf16.msra.mxu0 %v2963
    %4605 = vmatpush.bf16.msra.mxu0 %v2951
    %4606 = vmatpush.bf16.msra.mxu0 %v2939
    %4607 = vmatpush.bf16.msra.mxu0 %v2927
    %4608 = vmatmul.bf16.gmra.mxu0 %v870
    %v4609 = vpop.f32.mrf.mxu0
    %v4610 = vadd.f32 %v4597, %v4609
    %v4611 = vpop.f32.mrf.mxu0
    %4612 = vdwg.mxu0
    %4613 = vmatpush.bf16.msra.mxu0 %v3107
    %4614 = vmatpush.bf16.msra.mxu0 %v3095
    %4615 = vmatpush.bf16.msra.mxu0 %v3083
    %4616 = vmatpush.bf16.msra.mxu0 %v3071
    %4617 = vmatpush.bf16.msra.mxu0 %v3059
    %4618 = vmatpush.bf16.msra.mxu0 %v3047
    %4619 = vmatpush.bf16.msra.mxu0 %v3035
    %4620 = vmatpush.bf16.msra.mxu0 %v3023
    %4621 = vmatmul.bf16.gmra.mxu0 %v871
    %v4622 = vpop.f32.mrf.mxu0
    %v4623 = vadd.f32 %v4610, %v4622
    %v4624 = vpop.f32.mrf.mxu0
    %4625 = vdwg.mxu0
    %4626 = vmatpush.bf16.msra.mxu0 %v3203
    %4627 = vmatpush.bf16.msra.mxu0 %v3191
    %4628 = vmatpush.bf16.msra.mxu0 %v3179
    %4629 = vmatpush.bf16.msra.mxu0 %v3167
    %4630 = vmatpush.bf16.msra.mxu0 %v3155
    %4631 = vmatpush.bf16.msra.mxu0 %v3143
    %4632 = vmatpush.bf16.msra.mxu0 %v3131
    %4633 = vmatpush.bf16.msra.mxu0 %v3119
    %4634 = vmatmul.bf16.gmra.mxu0 %v872
    %v4635 = vpop.f32.mrf.mxu0
    %v4636 = vadd.f32 %v4623, %v4635
    %v4637 = vpop.f32.mrf.mxu0
    %4638 = vdwg.mxu0
    %4639 = vmatpush.bf16.msra.mxu0 %v2724
    %4640 = vmatpush.bf16.msra.mxu0 %v2712
    %4641 = vmatpush.bf16.msra.mxu0 %v2700
    %4642 = vmatpush.bf16.msra.mxu0 %v2688
    %4643 = vmatpush.bf16.msra.mxu0 %v2676
    %4644 = vmatpush.bf16.msra.mxu0 %v2664
    %4645 = vmatpush.bf16.msra.mxu0 %v2652
    %4646 = vmatpush.bf16.msra.mxu0 %v2640
    %4647 = vmatmul.bf16.gmra.mxu0 %v867
    %v4648 = vpop.f32.mrf.mxu0
    %v4649 = vadd.f32 %v888, %v4648
    %v4650 = vpop.f32.mrf.mxu0
    %4651 = vdwg.mxu0
    %4652 = vmatpush.bf16.msra.mxu0 %v2820
    %4653 = vmatpush.bf16.msra.mxu0 %v2808
    %4654 = vmatpush.bf16.msra.mxu0 %v2796
    %4655 = vmatpush.bf16.msra.mxu0 %v2784
    %4656 = vmatpush.bf16.msra.mxu0 %v2772
    %4657 = vmatpush.bf16.msra.mxu0 %v2760
    %4658 = vmatpush.bf16.msra.mxu0 %v2748
    %4659 = vmatpush.bf16.msra.mxu0 %v2736
    %4660 = vmatmul.bf16.gmra.mxu0 %v868
    %v4661 = vpop.f32.mrf.mxu0
    %v4662 = vadd.f32 %v4649, %v4661
    %v4663 = vpop.f32.mrf.mxu0
    %4664 = vdwg.mxu0
    %4665 = vmatpush.bf16.msra.mxu0 %v2916
    %4666 = vmatpush.bf16.msra.mxu0 %v2904
    %4667 = vmatpush.bf16.msra.mxu0 %v2892
    %4668 = vmatpush.bf16.msra.mxu0 %v2880
    %4669 = vmatpush.bf16.msra.mxu0 %v2868
    %4670 = vmatpush.bf16.msra.mxu0 %v2856
    %4671 = vmatpush.bf16.msra.mxu0 %v2844
    %4672 = vmatpush.bf16.msra.mxu0 %v2832
    %4673 = vmatmul.bf16.gmra.mxu0 %v869
    %v4674 = vpop.f32.mrf.mxu0
    %v4675 = vadd.f32 %v4662, %v4674
    %v4676 = vpop.f32.mrf.mxu0
    %4677 = vdwg.mxu0
    %4678 = vmatpush.bf16.msra.mxu0 %v3012
    %4679 = vmatpush.bf16.msra.mxu0 %v3000
    %4680 = vmatpush.bf16.msra.mxu0 %v2988
    %4681 = vmatpush.bf16.msra.mxu0 %v2976
    %4682 = vmatpush.bf16.msra.mxu0 %v2964
    %4683 = vmatpush.bf16.msra.mxu0 %v2952
    %4684 = vmatpush.bf16.msra.mxu0 %v2940
    %4685 = vmatpush.bf16.msra.mxu0 %v2928
    %4686 = vmatmul.bf16.gmra.mxu0 %v870
    %v4687 = vpop.f32.mrf.mxu0
    %v4688 = vadd.f32 %v4675, %v4687
    %v4689 = vpop.f32.mrf.mxu0
    %4690 = vdwg.mxu0
    %4691 = vmatpush.bf16.msra.mxu0 %v3108
    %4692 = vmatpush.bf16.msra.mxu0 %v3096
    %4693 = vmatpush.bf16.msra.mxu0 %v3084
    %4694 = vmatpush.bf16.msra.mxu0 %v3072
    %4695 = vmatpush.bf16.msra.mxu0 %v3060
    %4696 = vmatpush.bf16.msra.mxu0 %v3048
    %4697 = vmatpush.bf16.msra.mxu0 %v3036
    %4698 = vmatpush.bf16.msra.mxu0 %v3024
    %4699 = vmatmul.bf16.gmra.mxu0 %v871
    %v4700 = vpop.f32.mrf.mxu0
    %v4701 = vadd.f32 %v4688, %v4700
    %v4702 = vpop.f32.mrf.mxu0
    %4703 = vdwg.mxu0
    %4704 = vmatpush.bf16.msra.mxu0 %v3204
    %4705 = vmatpush.bf16.msra.mxu0 %v3192
    %4706 = vmatpush.bf16.msra.mxu0 %v3180
    %4707 = vmatpush.bf16.msra.mxu0 %v3168
    %4708 = vmatpush.bf16.msra.mxu0 %v3156
    %4709 = vmatpush.bf16.msra.mxu0 %v3144
    %4710 = vmatpush.bf16.msra.mxu0 %v3132
    %4711 = vmatpush.bf16.msra.mxu0 %v3120
    %4712 = vmatmul.bf16.gmra.mxu0 %v872
    %v4713 = vpop.f32.mrf.mxu0
    %v4714 = vadd.f32 %v4701, %v4713
    %v4715 = vpop.f32.mrf.mxu0
    %4716 = vdwg.mxu0
    %v4717 = vld [vmem:[#allocation8] sm:$0xff]
    %v4718 = vld [vmem:[#allocation8 + $0x8] sm:$0xff]
    %v4719 = vld [vmem:[#allocation8 + $0x10] sm:$0xff]
    %v4720 = vld [vmem:[#allocation8 + $0x18] sm:$0xff]
    %v4721 = vld [vmem:[#allocation8 + $0x20] sm:$0xff]
    %v4722 = vld [vmem:[#allocation8 + $0x28] sm:$0xff]
    %v4723 = vld [vmem:[#allocation8 + $0x30] sm:$0xff]
    %v4724 = vld [vmem:[#allocation8 + $0x38] sm:$0xff]
    %v4725 = vld [vmem:[#allocation8 + $0x40] sm:$0xff]
    %v4726 = vld [vmem:[#allocation8 + $0x48] sm:$0xff]
    %v4727 = vld [vmem:[#allocation8 + $0x50] sm:$0xff]
    %v4728 = vld [vmem:[#allocation8 + $0x58] sm:$0xff]
    %v4729 = vld [vmem:[#allocation8 + $0x60] sm:$0xff]
    %v4730 = vld [vmem:[#allocation8 + $0x68] sm:$0xff]
    %v4731 = vld [vmem:[#allocation8 + $0x70] sm:$0xff]
    %v4732 = vld [vmem:[#allocation8 + $0x78] sm:$0xff]
    %v4733 = vld [vmem:[#allocation8 + $0x80] sm:$0xff]
    %v4734 = vld [vmem:[#allocation8 + $0x88] sm:$0xff]
    %v4735 = vld [vmem:[#allocation8 + $0x90] sm:$0xff]
    %v4736 = vld [vmem:[#allocation8 + $0x98] sm:$0xff]
    %v4737 = vld [vmem:[#allocation8 + $0xa0] sm:$0xff]
    %v4738 = vld [vmem:[#allocation8 + $0xa8] sm:$0xff]
    %v4739 = vld [vmem:[#allocation8 + $0xb0] sm:$0xff]
    %v4740 = vld [vmem:[#allocation8 + $0xb8] sm:$0xff]
    %v4741 = vld [vmem:[#allocation8 + $0xc0] sm:$0xff]
    %v4742 = vld [vmem:[#allocation8 + $0xc8] sm:$0xff]
    %v4743 = vld [vmem:[#allocation8 + $0xd0] sm:$0xff]
    %v4744 = vld [vmem:[#allocation8 + $0xd8] sm:$0xff]
    %v4745 = vld [vmem:[#allocation8 + $0xe0] sm:$0xff]
    %v4746 = vld [vmem:[#allocation8 + $0xe8] sm:$0xff]
    %v4747 = vld [vmem:[#allocation8 + $0xf0] sm:$0xff]
    %v4748 = vld [vmem:[#allocation8 + $0xf8] sm:$0xff]
    %v4749 = vld [vmem:[#allocation8 + $0x100] sm:$0xff]
    %v4750 = vld [vmem:[#allocation8 + $0x108] sm:$0xff]
    %v4751 = vld [vmem:[#allocation8 + $0x110] sm:$0xff]
    %v4752 = vld [vmem:[#allocation8 + $0x118] sm:$0xff]
    %v4753 = vld [vmem:[#allocation8 + $0x120] sm:$0xff]
    %v4754 = vld [vmem:[#allocation8 + $0x128] sm:$0xff]
    %v4755 = vld [vmem:[#allocation8 + $0x130] sm:$0xff]
    %v4756 = vld [vmem:[#allocation8 + $0x138] sm:$0xff]
    %v4757 = vld [vmem:[#allocation8 + $0x140] sm:$0xff]
    %v4758 = vld [vmem:[#allocation8 + $0x148] sm:$0xff]
    %v4759 = vld [vmem:[#allocation8 + $0x150] sm:$0xff]
    %v4760 = vld [vmem:[#allocation8 + $0x158] sm:$0xff]
    %v4761 = vld [vmem:[#allocation8 + $0x160] sm:$0xff]
    %v4762 = vld [vmem:[#allocation8 + $0x168] sm:$0xff]
    %v4763 = vld [vmem:[#allocation8 + $0x170] sm:$0xff]
    %v4764 = vld [vmem:[#allocation8 + $0x178] sm:$0xff]
    %v4765 = vld [vmem:[#allocation8 + $0x180] sm:$0xff]
    %v4766 = vld [vmem:[#allocation8 + $0x188] sm:$0xff]
    %v4767 = vld [vmem:[#allocation8 + $0x190] sm:$0xff]
    %v4768 = vld [vmem:[#allocation8 + $0x198] sm:$0xff]
    %v4769 = vld [vmem:[#allocation8 + $0x1a0] sm:$0xff]
    %v4770 = vld [vmem:[#allocation8 + $0x1a8] sm:$0xff]
    %v4771 = vld [vmem:[#allocation8 + $0x1b0] sm:$0xff]
    %v4772 = vld [vmem:[#allocation8 + $0x1b8] sm:$0xff]
    %v4773 = vld [vmem:[#allocation8 + $0x1c0] sm:$0xff]
    %v4774 = vld [vmem:[#allocation8 + $0x1c8] sm:$0xff]
    %v4775 = vld [vmem:[#allocation8 + $0x1d0] sm:$0xff]
    %v4776 = vld [vmem:[#allocation8 + $0x1d8] sm:$0xff]
    %v4777 = vld [vmem:[#allocation8 + $0x1e0] sm:$0xff]
    %v4778 = vld [vmem:[#allocation8 + $0x1e8] sm:$0xff]
    %v4779 = vld [vmem:[#allocation8 + $0x1f0] sm:$0xff]
    %v4780 = vld [vmem:[#allocation8 + $0x1f8] sm:$0xff]
    %v4781 = vld [vmem:[#allocation8 + $0x200] sm:$0xff]
    %v4782 = vld [vmem:[#allocation8 + $0x208] sm:$0xff]
    %v4783 = vld [vmem:[#allocation8 + $0x210] sm:$0xff]
    %v4784 = vld [vmem:[#allocation8 + $0x218] sm:$0xff]
    %v4785 = vld [vmem:[#allocation8 + $0x220] sm:$0xff]
    %v4786 = vld [vmem:[#allocation8 + $0x228] sm:$0xff]
    %v4787 = vld [vmem:[#allocation8 + $0x230] sm:$0xff]
    %v4788 = vld [vmem:[#allocation8 + $0x238] sm:$0xff]
    %v4789 = vld [vmem:[#allocation8 + $0x240] sm:$0xff]
    %v4790 = vld [vmem:[#allocation8 + $0x248] sm:$0xff]
    %v4791 = vld [vmem:[#allocation8 + $0x250] sm:$0xff]
    %v4792 = vld [vmem:[#allocation8 + $0x258] sm:$0xff]
    %v4793 = vld [vmem:[#allocation8 + $0x260] sm:$0xff]
    %v4794 = vld [vmem:[#allocation8 + $0x268] sm:$0xff]
    %v4795 = vld [vmem:[#allocation8 + $0x270] sm:$0xff]
    %v4796 = vld [vmem:[#allocation8 + $0x278] sm:$0xff]
    %v4797 = vld [vmem:[#allocation8 + $0x280] sm:$0xff]
    %v4798 = vld [vmem:[#allocation8 + $0x288] sm:$0xff]
    %v4799 = vld [vmem:[#allocation8 + $0x290] sm:$0xff]
    %v4800 = vld [vmem:[#allocation8 + $0x298] sm:$0xff]
    %v4801 = vld [vmem:[#allocation8 + $0x2a0] sm:$0xff]
    %v4802 = vld [vmem:[#allocation8 + $0x2a8] sm:$0xff]
    %v4803 = vld [vmem:[#allocation8 + $0x2b0] sm:$0xff]
    %v4804 = vld [vmem:[#allocation8 + $0x2b8] sm:$0xff]
    %v4805 = vld [vmem:[#allocation8 + $0x2c0] sm:$0xff]
    %v4806 = vld [vmem:[#allocation8 + $0x2c8] sm:$0xff]
    %v4807 = vld [vmem:[#allocation8 + $0x2d0] sm:$0xff]
    %v4808 = vld [vmem:[#allocation8 + $0x2d8] sm:$0xff]
    %v4809 = vld [vmem:[#allocation8 + $0x2e0] sm:$0xff]
    %v4810 = vld [vmem:[#allocation8 + $0x2e8] sm:$0xff]
    %v4811 = vld [vmem:[#allocation8 + $0x2f0] sm:$0xff]
    %v4812 = vld [vmem:[#allocation8 + $0x2f8] sm:$0xff]
    %v4813 = vld [vmem:[#allocation8 + $0x300] sm:$0xff]
    %v4814 = vld [vmem:[#allocation8 + $0x308] sm:$0xff]
    %v4815 = vld [vmem:[#allocation8 + $0x310] sm:$0xff]
    %v4816 = vld [vmem:[#allocation8 + $0x318] sm:$0xff]
    %v4817 = vld [vmem:[#allocation8 + $0x320] sm:$0xff]
    %v4818 = vld [vmem:[#allocation8 + $0x328] sm:$0xff]
    %v4819 = vld [vmem:[#allocation8 + $0x330] sm:$0xff]
    %v4820 = vld [vmem:[#allocation8 + $0x338] sm:$0xff]
    %v4821 = vld [vmem:[#allocation8 + $0x340] sm:$0xff]
    %v4822 = vld [vmem:[#allocation8 + $0x348] sm:$0xff]
    %v4823 = vld [vmem:[#allocation8 + $0x350] sm:$0xff]
    %v4824 = vld [vmem:[#allocation8 + $0x358] sm:$0xff]
    %v4825 = vld [vmem:[#allocation8 + $0x360] sm:$0xff]
    %v4826 = vld [vmem:[#allocation8 + $0x368] sm:$0xff]
    %v4827 = vld [vmem:[#allocation8 + $0x370] sm:$0xff]
    %v4828 = vld [vmem:[#allocation8 + $0x378] sm:$0xff]
    %v4829 = vld [vmem:[#allocation8 + $0x380] sm:$0xff]
    %v4830 = vld [vmem:[#allocation8 + $0x388] sm:$0xff]
    %v4831 = vld [vmem:[#allocation8 + $0x390] sm:$0xff]
    %v4832 = vld [vmem:[#allocation8 + $0x398] sm:$0xff]
    %v4833 = vld [vmem:[#allocation8 + $0x3a0] sm:$0xff]
    %v4834 = vld [vmem:[#allocation8 + $0x3a8] sm:$0xff]
    %v4835 = vld [vmem:[#allocation8 + $0x3b0] sm:$0xff]
    %v4836 = vld [vmem:[#allocation8 + $0x3b8] sm:$0xff]
    %v4837 = vld [vmem:[#allocation8 + $0x3c0] sm:$0xff]
    %v4838 = vld [vmem:[#allocation8 + $0x3c8] sm:$0xff]
    %v4839 = vld [vmem:[#allocation8 + $0x3d0] sm:$0xff]
    %v4840 = vld [vmem:[#allocation8 + $0x3d8] sm:$0xff]
    %v4841 = vld [vmem:[#allocation8 + $0x3e0] sm:$0xff]
    %v4842 = vld [vmem:[#allocation8 + $0x3e8] sm:$0xff]
    %v4843 = vld [vmem:[#allocation8 + $0x3f0] sm:$0xff]
    %v4844 = vld [vmem:[#allocation8 + $0x3f8] sm:$0xff]
    %v4845 = vld [vmem:[#allocation8 + $0x400] sm:$0xff]
    %v4846 = vld [vmem:[#allocation8 + $0x408] sm:$0xff]
    %v4847 = vld [vmem:[#allocation8 + $0x410] sm:$0xff]
    %v4848 = vld [vmem:[#allocation8 + $0x418] sm:$0xff]
    %v4849 = vld [vmem:[#allocation8 + $0x420] sm:$0xff]
    %v4850 = vld [vmem:[#allocation8 + $0x428] sm:$0xff]
    %v4851 = vld [vmem:[#allocation8 + $0x430] sm:$0xff]
    %v4852 = vld [vmem:[#allocation8 + $0x438] sm:$0xff]
    %v4853 = vld [vmem:[#allocation8 + $0x440] sm:$0xff]
    %v4854 = vld [vmem:[#allocation8 + $0x448] sm:$0xff]
    %v4855 = vld [vmem:[#allocation8 + $0x450] sm:$0xff]
    %v4856 = vld [vmem:[#allocation8 + $0x458] sm:$0xff]
    %v4857 = vld [vmem:[#allocation8 + $0x460] sm:$0xff]
    %v4858 = vld [vmem:[#allocation8 + $0x468] sm:$0xff]
    %v4859 = vld [vmem:[#allocation8 + $0x470] sm:$0xff]
    %v4860 = vld [vmem:[#allocation8 + $0x478] sm:$0xff]
    %v4861 = vld [vmem:[#allocation8 + $0x480] sm:$0xff]
    %v4862 = vld [vmem:[#allocation8 + $0x488] sm:$0xff]
    %v4863 = vld [vmem:[#allocation8 + $0x490] sm:$0xff]
    %v4864 = vld [vmem:[#allocation8 + $0x498] sm:$0xff]
    %v4865 = vld [vmem:[#allocation8 + $0x4a0] sm:$0xff]
    %v4866 = vld [vmem:[#allocation8 + $0x4a8] sm:$0xff]
    %v4867 = vld [vmem:[#allocation8 + $0x4b0] sm:$0xff]
    %v4868 = vld [vmem:[#allocation8 + $0x4b8] sm:$0xff]
    %v4869 = vld [vmem:[#allocation8 + $0x4c0] sm:$0xff]
    %v4870 = vld [vmem:[#allocation8 + $0x4c8] sm:$0xff]
    %v4871 = vld [vmem:[#allocation8 + $0x4d0] sm:$0xff]
    %v4872 = vld [vmem:[#allocation8 + $0x4d8] sm:$0xff]
    %v4873 = vld [vmem:[#allocation8 + $0x4e0] sm:$0xff]
    %v4874 = vld [vmem:[#allocation8 + $0x4e8] sm:$0xff]
    %v4875 = vld [vmem:[#allocation8 + $0x4f0] sm:$0xff]
    %v4876 = vld [vmem:[#allocation8 + $0x4f8] sm:$0xff]
    %v4877 = vld [vmem:[#allocation8 + $0x500] sm:$0xff]
    %v4878 = vld [vmem:[#allocation8 + $0x508] sm:$0xff]
    %v4879 = vld [vmem:[#allocation8 + $0x510] sm:$0xff]
    %v4880 = vld [vmem:[#allocation8 + $0x518] sm:$0xff]
    %v4881 = vld [vmem:[#allocation8 + $0x520] sm:$0xff]
    %v4882 = vld [vmem:[#allocation8 + $0x528] sm:$0xff]
    %v4883 = vld [vmem:[#allocation8 + $0x530] sm:$0xff]
    %v4884 = vld [vmem:[#allocation8 + $0x538] sm:$0xff]
    %v4885 = vld [vmem:[#allocation8 + $0x540] sm:$0xff]
    %v4886 = vld [vmem:[#allocation8 + $0x548] sm:$0xff]
    %v4887 = vld [vmem:[#allocation8 + $0x550] sm:$0xff]
    %v4888 = vld [vmem:[#allocation8 + $0x558] sm:$0xff]
    %v4889 = vld [vmem:[#allocation8 + $0x560] sm:$0xff]
    %v4890 = vld [vmem:[#allocation8 + $0x568] sm:$0xff]
    %v4891 = vld [vmem:[#allocation8 + $0x570] sm:$0xff]
    %v4892 = vld [vmem:[#allocation8 + $0x578] sm:$0xff]
    %v4893 = vld [vmem:[#allocation8 + $0x580] sm:$0xff]
    %v4894 = vld [vmem:[#allocation8 + $0x588] sm:$0xff]
    %v4895 = vld [vmem:[#allocation8 + $0x590] sm:$0xff]
    %v4896 = vld [vmem:[#allocation8 + $0x598] sm:$0xff]
    %v4897 = vld [vmem:[#allocation8 + $0x5a0] sm:$0xff]
    %v4898 = vld [vmem:[#allocation8 + $0x5a8] sm:$0xff]
    %v4899 = vld [vmem:[#allocation8 + $0x5b0] sm:$0xff]
    %v4900 = vld [vmem:[#allocation8 + $0x5b8] sm:$0xff]
    %v4901 = vld [vmem:[#allocation8 + $0x5c0] sm:$0xff]
    %v4902 = vld [vmem:[#allocation8 + $0x5c8] sm:$0xff]
    %v4903 = vld [vmem:[#allocation8 + $0x5d0] sm:$0xff]
    %v4904 = vld [vmem:[#allocation8 + $0x5d8] sm:$0xff]
    %v4905 = vld [vmem:[#allocation8 + $0x5e0] sm:$0xff]
    %v4906 = vld [vmem:[#allocation8 + $0x5e8] sm:$0xff]
    %v4907 = vld [vmem:[#allocation8 + $0x5f0] sm:$0xff]
    %v4908 = vld [vmem:[#allocation8 + $0x5f8] sm:$0xff]
    %v4909 = vld [vmem:[#allocation8 + $0x600] sm:$0xff]
    %v4910 = vld [vmem:[#allocation8 + $0x608] sm:$0xff]
    %v4911 = vld [vmem:[#allocation8 + $0x610] sm:$0xff]
    %v4912 = vld [vmem:[#allocation8 + $0x618] sm:$0xff]
    %v4913 = vld [vmem:[#allocation8 + $0x620] sm:$0xff]
    %v4914 = vld [vmem:[#allocation8 + $0x628] sm:$0xff]
    %v4915 = vld [vmem:[#allocation8 + $0x630] sm:$0xff]
    %v4916 = vld [vmem:[#allocation8 + $0x638] sm:$0xff]
    %v4917 = vld [vmem:[#allocation8 + $0x640] sm:$0xff]
    %v4918 = vld [vmem:[#allocation8 + $0x648] sm:$0xff]
    %v4919 = vld [vmem:[#allocation8 + $0x650] sm:$0xff]
    %v4920 = vld [vmem:[#allocation8 + $0x658] sm:$0xff]
    %v4921 = vld [vmem:[#allocation8 + $0x660] sm:$0xff]
    %v4922 = vld [vmem:[#allocation8 + $0x668] sm:$0xff]
    %v4923 = vld [vmem:[#allocation8 + $0x670] sm:$0xff]
    %v4924 = vld [vmem:[#allocation8 + $0x678] sm:$0xff]
    %v4925 = vld [vmem:[#allocation8 + $0x680] sm:$0xff]
    %v4926 = vld [vmem:[#allocation8 + $0x688] sm:$0xff]
    %v4927 = vld [vmem:[#allocation8 + $0x690] sm:$0xff]
    %v4928 = vld [vmem:[#allocation8 + $0x698] sm:$0xff]
    %v4929 = vld [vmem:[#allocation8 + $0x6a0] sm:$0xff]
    %v4930 = vld [vmem:[#allocation8 + $0x6a8] sm:$0xff]
    %v4931 = vld [vmem:[#allocation8 + $0x6b0] sm:$0xff]
    %v4932 = vld [vmem:[#allocation8 + $0x6b8] sm:$0xff]
    %v4933 = vld [vmem:[#allocation8 + $0x6c0] sm:$0xff]
    %v4934 = vld [vmem:[#allocation8 + $0x6c8] sm:$0xff]
    %v4935 = vld [vmem:[#allocation8 + $0x6d0] sm:$0xff]
    %v4936 = vld [vmem:[#allocation8 + $0x6d8] sm:$0xff]
    %v4937 = vld [vmem:[#allocation8 + $0x6e0] sm:$0xff]
    %v4938 = vld [vmem:[#allocation8 + $0x6e8] sm:$0xff]
    %v4939 = vld [vmem:[#allocation8 + $0x6f0] sm:$0xff]
    %v4940 = vld [vmem:[#allocation8 + $0x6f8] sm:$0xff]
    %v4941 = vld [vmem:[#allocation8 + $0x700] sm:$0xff]
    %v4942 = vld [vmem:[#allocation8 + $0x708] sm:$0xff]
    %v4943 = vld [vmem:[#allocation8 + $0x710] sm:$0xff]
    %v4944 = vld [vmem:[#allocation8 + $0x718] sm:$0xff]
    %v4945 = vld [vmem:[#allocation8 + $0x720] sm:$0xff]
    %v4946 = vld [vmem:[#allocation8 + $0x728] sm:$0xff]
    %v4947 = vld [vmem:[#allocation8 + $0x730] sm:$0xff]
    %v4948 = vld [vmem:[#allocation8 + $0x738] sm:$0xff]
    %v4949 = vld [vmem:[#allocation8 + $0x740] sm:$0xff]
    %v4950 = vld [vmem:[#allocation8 + $0x748] sm:$0xff]
    %v4951 = vld [vmem:[#allocation8 + $0x750] sm:$0xff]
    %v4952 = vld [vmem:[#allocation8 + $0x758] sm:$0xff]
    %v4953 = vld [vmem:[#allocation8 + $0x760] sm:$0xff]
    %v4954 = vld [vmem:[#allocation8 + $0x768] sm:$0xff]
    %v4955 = vld [vmem:[#allocation8 + $0x770] sm:$0xff]
    %v4956 = vld [vmem:[#allocation8 + $0x778] sm:$0xff]
    %v4957 = vld [vmem:[#allocation8 + $0x780] sm:$0xff]
    %v4958 = vld [vmem:[#allocation8 + $0x788] sm:$0xff]
    %v4959 = vld [vmem:[#allocation8 + $0x790] sm:$0xff]
    %v4960 = vld [vmem:[#allocation8 + $0x798] sm:$0xff]
    %v4961 = vld [vmem:[#allocation8 + $0x7a0] sm:$0xff]
    %v4962 = vld [vmem:[#allocation8 + $0x7a8] sm:$0xff]
    %v4963 = vld [vmem:[#allocation8 + $0x7b0] sm:$0xff]
    %v4964 = vld [vmem:[#allocation8 + $0x7b8] sm:$0xff]
    %v4965 = vld [vmem:[#allocation8 + $0x7c0] sm:$0xff]
    %v4966 = vld [vmem:[#allocation8 + $0x7c8] sm:$0xff]
    %v4967 = vld [vmem:[#allocation8 + $0x7d0] sm:$0xff]
    %v4968 = vld [vmem:[#allocation8 + $0x7d8] sm:$0xff]
    %v4969 = vld [vmem:[#allocation8 + $0x7e0] sm:$0xff]
    %v4970 = vld [vmem:[#allocation8 + $0x7e8] sm:$0xff]
    %v4971 = vld [vmem:[#allocation8 + $0x7f0] sm:$0xff]
    %v4972 = vld [vmem:[#allocation8 + $0x7f8] sm:$0xff]
    %v4973 = vld [vmem:[#allocation8 + $0x800] sm:$0xff]
    %v4974 = vld [vmem:[#allocation8 + $0x808] sm:$0xff]
    %v4975 = vld [vmem:[#allocation8 + $0x810] sm:$0xff]
    %v4976 = vld [vmem:[#allocation8 + $0x818] sm:$0xff]
    %v4977 = vld [vmem:[#allocation8 + $0x820] sm:$0xff]
    %v4978 = vld [vmem:[#allocation8 + $0x828] sm:$0xff]
    %v4979 = vld [vmem:[#allocation8 + $0x830] sm:$0xff]
    %v4980 = vld [vmem:[#allocation8 + $0x838] sm:$0xff]
    %v4981 = vld [vmem:[#allocation8 + $0x840] sm:$0xff]
    %v4982 = vld [vmem:[#allocation8 + $0x848] sm:$0xff]
    %v4983 = vld [vmem:[#allocation8 + $0x850] sm:$0xff]
    %v4984 = vld [vmem:[#allocation8 + $0x858] sm:$0xff]
    %v4985 = vld [vmem:[#allocation8 + $0x860] sm:$0xff]
    %v4986 = vld [vmem:[#allocation8 + $0x868] sm:$0xff]
    %v4987 = vld [vmem:[#allocation8 + $0x870] sm:$0xff]
    %v4988 = vld [vmem:[#allocation8 + $0x878] sm:$0xff]
    %v4989 = vld [vmem:[#allocation8 + $0x880] sm:$0xff]
    %v4990 = vld [vmem:[#allocation8 + $0x888] sm:$0xff]
    %v4991 = vld [vmem:[#allocation8 + $0x890] sm:$0xff]
    %v4992 = vld [vmem:[#allocation8 + $0x898] sm:$0xff]
    %v4993 = vld [vmem:[#allocation8 + $0x8a0] sm:$0xff]
    %v4994 = vld [vmem:[#allocation8 + $0x8a8] sm:$0xff]
    %v4995 = vld [vmem:[#allocation8 + $0x8b0] sm:$0xff]
    %v4996 = vld [vmem:[#allocation8 + $0x8b8] sm:$0xff]
    %v4997 = vld [vmem:[#allocation8 + $0x8c0] sm:$0xff]
    %v4998 = vld [vmem:[#allocation8 + $0x8c8] sm:$0xff]
    %v4999 = vld [vmem:[#allocation8 + $0x8d0] sm:$0xff]
    %v5000 = vld [vmem:[#allocation8 + $0x8d8] sm:$0xff]
    %v5001 = vld [vmem:[#allocation8 + $0x8e0] sm:$0xff]
    %v5002 = vld [vmem:[#allocation8 + $0x8e8] sm:$0xff]
    %v5003 = vld [vmem:[#allocation8 + $0x8f0] sm:$0xff]
    %v5004 = vld [vmem:[#allocation8 + $0x8f8] sm:$0xff]
    %v5005 = vld [vmem:[#allocation8 + $0x900] sm:$0xff]
    %v5006 = vld [vmem:[#allocation8 + $0x908] sm:$0xff]
    %v5007 = vld [vmem:[#allocation8 + $0x910] sm:$0xff]
    %v5008 = vld [vmem:[#allocation8 + $0x918] sm:$0xff]
    %v5009 = vld [vmem:[#allocation8 + $0x920] sm:$0xff]
    %v5010 = vld [vmem:[#allocation8 + $0x928] sm:$0xff]
    %v5011 = vld [vmem:[#allocation8 + $0x930] sm:$0xff]
    %v5012 = vld [vmem:[#allocation8 + $0x938] sm:$0xff]
    %v5013 = vld [vmem:[#allocation8 + $0x940] sm:$0xff]
    %v5014 = vld [vmem:[#allocation8 + $0x948] sm:$0xff]
    %v5015 = vld [vmem:[#allocation8 + $0x950] sm:$0xff]
    %v5016 = vld [vmem:[#allocation8 + $0x958] sm:$0xff]
    %v5017 = vld [vmem:[#allocation8 + $0x960] sm:$0xff]
    %v5018 = vld [vmem:[#allocation8 + $0x968] sm:$0xff]
    %v5019 = vld [vmem:[#allocation8 + $0x970] sm:$0xff]
    %v5020 = vld [vmem:[#allocation8 + $0x978] sm:$0xff]
    %v5021 = vld [vmem:[#allocation8 + $0x980] sm:$0xff]
    %v5022 = vld [vmem:[#allocation8 + $0x988] sm:$0xff]
    %v5023 = vld [vmem:[#allocation8 + $0x990] sm:$0xff]
    %v5024 = vld [vmem:[#allocation8 + $0x998] sm:$0xff]
    %v5025 = vld [vmem:[#allocation8 + $0x9a0] sm:$0xff]
    %v5026 = vld [vmem:[#allocation8 + $0x9a8] sm:$0xff]
    %v5027 = vld [vmem:[#allocation8 + $0x9b0] sm:$0xff]
    %v5028 = vld [vmem:[#allocation8 + $0x9b8] sm:$0xff]
    %v5029 = vld [vmem:[#allocation8 + $0x9c0] sm:$0xff]
    %v5030 = vld [vmem:[#allocation8 + $0x9c8] sm:$0xff]
    %v5031 = vld [vmem:[#allocation8 + $0x9d0] sm:$0xff]
    %v5032 = vld [vmem:[#allocation8 + $0x9d8] sm:$0xff]
    %v5033 = vld [vmem:[#allocation8 + $0x9e0] sm:$0xff]
    %v5034 = vld [vmem:[#allocation8 + $0x9e8] sm:$0xff]
    %v5035 = vld [vmem:[#allocation8 + $0x9f0] sm:$0xff]
    %v5036 = vld [vmem:[#allocation8 + $0x9f8] sm:$0xff]
    %v5037 = vld [vmem:[#allocation8 + $0xa00] sm:$0xff]
    %v5038 = vld [vmem:[#allocation8 + $0xa08] sm:$0xff]
    %v5039 = vld [vmem:[#allocation8 + $0xa10] sm:$0xff]
    %v5040 = vld [vmem:[#allocation8 + $0xa18] sm:$0xff]
    %v5041 = vld [vmem:[#allocation8 + $0xa20] sm:$0xff]
    %v5042 = vld [vmem:[#allocation8 + $0xa28] sm:$0xff]
    %v5043 = vld [vmem:[#allocation8 + $0xa30] sm:$0xff]
    %v5044 = vld [vmem:[#allocation8 + $0xa38] sm:$0xff]
    %v5045 = vld [vmem:[#allocation8 + $0xa40] sm:$0xff]
    %v5046 = vld [vmem:[#allocation8 + $0xa48] sm:$0xff]
    %v5047 = vld [vmem:[#allocation8 + $0xa50] sm:$0xff]
    %v5048 = vld [vmem:[#allocation8 + $0xa58] sm:$0xff]
    %v5049 = vld [vmem:[#allocation8 + $0xa60] sm:$0xff]
    %v5050 = vld [vmem:[#allocation8 + $0xa68] sm:$0xff]
    %v5051 = vld [vmem:[#allocation8 + $0xa70] sm:$0xff]
    %v5052 = vld [vmem:[#allocation8 + $0xa78] sm:$0xff]
    %v5053 = vld [vmem:[#allocation8 + $0xa80] sm:$0xff]
    %v5054 = vld [vmem:[#allocation8 + $0xa88] sm:$0xff]
    %v5055 = vld [vmem:[#allocation8 + $0xa90] sm:$0xff]
    %v5056 = vld [vmem:[#allocation8 + $0xa98] sm:$0xff]
    %v5057 = vld [vmem:[#allocation8 + $0xaa0] sm:$0xff]
    %v5058 = vld [vmem:[#allocation8 + $0xaa8] sm:$0xff]
    %v5059 = vld [vmem:[#allocation8 + $0xab0] sm:$0xff]
    %v5060 = vld [vmem:[#allocation8 + $0xab8] sm:$0xff]
    %v5061 = vld [vmem:[#allocation8 + $0xac0] sm:$0xff]
    %v5062 = vld [vmem:[#allocation8 + $0xac8] sm:$0xff]
    %v5063 = vld [vmem:[#allocation8 + $0xad0] sm:$0xff]
    %v5064 = vld [vmem:[#allocation8 + $0xad8] sm:$0xff]
    %v5065 = vld [vmem:[#allocation8 + $0xae0] sm:$0xff]
    %v5066 = vld [vmem:[#allocation8 + $0xae8] sm:$0xff]
    %v5067 = vld [vmem:[#allocation8 + $0xaf0] sm:$0xff]
    %v5068 = vld [vmem:[#allocation8 + $0xaf8] sm:$0xff]
    %v5069 = vld [vmem:[#allocation8 + $0xb00] sm:$0xff]
    %v5070 = vld [vmem:[#allocation8 + $0xb08] sm:$0xff]
    %v5071 = vld [vmem:[#allocation8 + $0xb10] sm:$0xff]
    %v5072 = vld [vmem:[#allocation8 + $0xb18] sm:$0xff]
    %v5073 = vld [vmem:[#allocation8 + $0xb20] sm:$0xff]
    %v5074 = vld [vmem:[#allocation8 + $0xb28] sm:$0xff]
    %v5075 = vld [vmem:[#allocation8 + $0xb30] sm:$0xff]
    %v5076 = vld [vmem:[#allocation8 + $0xb38] sm:$0xff]
    %v5077 = vld [vmem:[#allocation8 + $0xb40] sm:$0xff]
    %v5078 = vld [vmem:[#allocation8 + $0xb48] sm:$0xff]
    %v5079 = vld [vmem:[#allocation8 + $0xb50] sm:$0xff]
    %v5080 = vld [vmem:[#allocation8 + $0xb58] sm:$0xff]
    %v5081 = vld [vmem:[#allocation8 + $0xb60] sm:$0xff]
    %v5082 = vld [vmem:[#allocation8 + $0xb68] sm:$0xff]
    %v5083 = vld [vmem:[#allocation8 + $0xb70] sm:$0xff]
    %v5084 = vld [vmem:[#allocation8 + $0xb78] sm:$0xff]
    %v5085 = vld [vmem:[#allocation8 + $0xb80] sm:$0xff]
    %v5086 = vld [vmem:[#allocation8 + $0xb88] sm:$0xff]
    %v5087 = vld [vmem:[#allocation8 + $0xb90] sm:$0xff]
    %v5088 = vld [vmem:[#allocation8 + $0xb98] sm:$0xff]
    %v5089 = vld [vmem:[#allocation8 + $0xba0] sm:$0xff]
    %v5090 = vld [vmem:[#allocation8 + $0xba8] sm:$0xff]
    %v5091 = vld [vmem:[#allocation8 + $0xbb0] sm:$0xff]
    %v5092 = vld [vmem:[#allocation8 + $0xbb8] sm:$0xff]
    %v5093 = vld [vmem:[#allocation8 + $0xbc0] sm:$0xff]
    %v5094 = vld [vmem:[#allocation8 + $0xbc8] sm:$0xff]
    %v5095 = vld [vmem:[#allocation8 + $0xbd0] sm:$0xff]
    %v5096 = vld [vmem:[#allocation8 + $0xbd8] sm:$0xff]
    %v5097 = vld [vmem:[#allocation8 + $0xbe0] sm:$0xff]
    %v5098 = vld [vmem:[#allocation8 + $0xbe8] sm:$0xff]
    %v5099 = vld [vmem:[#allocation8 + $0xbf0] sm:$0xff]
    %v5100 = vld [vmem:[#allocation8 + $0xbf8] sm:$0xff]
    %v5101 = vpack.c.bf16 %v3856, %v3856
    %v5102 = vpack.c.bf16 %v3934, %v3934
    %v5103 = vpack.c.bf16 %v4012, %v4012
    %v5104 = vpack.c.bf16 %v4090, %v4090
    %v5105 = vpack.c.bf16 %v4168, %v4168
    %v5106 = vpack.c.bf16 %v4246, %v4246
    %v5107 = vpack.c.bf16 %v4324, %v4324
    %v5108 = vpack.c.bf16 %v4402, %v4402
    %v5109 = vpack.c.bf16 %v4480, %v4480
    %v5110 = vpack.c.bf16 %v4558, %v4558
    %v5111 = vpack.c.bf16 %v4636, %v4636
    %v5112 = vpack.c.bf16 %v4714, %v4714
    %v5113 = vld [vmem:[#allocation10] sm:$0xf]
    %v5115 = vperm.slane %v5113, 0
    %v5116 = vperm.slane %v5113, 1
    %v5117 = vperm.slane %v5113, 2
    %v5118 = vperm.slane %v5113, 3
    %v5507 = vunpack.c.l.b16 %v4717
    %v5508 = vunpack.c.h.b16 %v4717
    %v5509 = vunpack.c.l.b16 %v4718
    %v5510 = vunpack.c.h.b16 %v4718
    %v5511 = vunpack.c.l.b16 %v4719
    %v5512 = vunpack.c.h.b16 %v4719
    %v5513 = vunpack.c.l.b16 %v4720
    %v5514 = vunpack.c.h.b16 %v4720
    %v5515 = vunpack.c.l.b16 %v4721
    %v5516 = vunpack.c.h.b16 %v4721
    %v5517 = vunpack.c.l.b16 %v4722
    %v5518 = vunpack.c.h.b16 %v4722
    %v5519 = vunpack.c.l.b16 %v4723
    %v5520 = vunpack.c.h.b16 %v4723
    %v5521 = vunpack.c.l.b16 %v4724
    %v5522 = vunpack.c.h.b16 %v4724
    %v5523 = vunpack.c.l.b16 %v4725
    %v5524 = vunpack.c.h.b16 %v4725
    %v5525 = vunpack.c.l.b16 %v4726
    %v5526 = vunpack.c.h.b16 %v4726
    %v5527 = vunpack.c.l.b16 %v4727
    %v5528 = vunpack.c.h.b16 %v4727
    %v5529 = vunpack.c.l.b16 %v4728
    %v5530 = vunpack.c.h.b16 %v4728
    %v5531 = vunpack.c.l.b16 %v4729
    %v5532 = vunpack.c.h.b16 %v4729
    %v5533 = vunpack.c.l.b16 %v4730
    %v5534 = vunpack.c.h.b16 %v4730
    %v5535 = vunpack.c.l.b16 %v4731
    %v5536 = vunpack.c.h.b16 %v4731
    %v5537 = vunpack.c.l.b16 %v4732
    %v5538 = vunpack.c.h.b16 %v4732
    %v5539 = vunpack.c.l.b16 %v4733
    %v5540 = vunpack.c.h.b16 %v4733
    %v5541 = vunpack.c.l.b16 %v4734
    %v5542 = vunpack.c.h.b16 %v4734
    %v5543 = vunpack.c.l.b16 %v4735
    %v5544 = vunpack.c.h.b16 %v4735
    %v5545 = vunpack.c.l.b16 %v4736
    %v5546 = vunpack.c.h.b16 %v4736
    %v5547 = vunpack.c.l.b16 %v4737
    %v5548 = vunpack.c.h.b16 %v4737
    %v5549 = vunpack.c.l.b16 %v4738
    %v5550 = vunpack.c.h.b16 %v4738
    %v5551 = vunpack.c.l.b16 %v4739
    %v5552 = vunpack.c.h.b16 %v4739
    %v5553 = vunpack.c.l.b16 %v4740
    %v5554 = vunpack.c.h.b16 %v4740
    %v5555 = vunpack.c.l.b16 %v4741
    %v5556 = vunpack.c.h.b16 %v4741
    %v5557 = vunpack.c.l.b16 %v4742
    %v5558 = vunpack.c.h.b16 %v4742
    %v5559 = vunpack.c.l.b16 %v4743
    %v5560 = vunpack.c.h.b16 %v4743
    %v5561 = vunpack.c.l.b16 %v4744
    %v5562 = vunpack.c.h.b16 %v4744
    %v5563 = vunpack.c.l.b16 %v4745
    %v5564 = vunpack.c.h.b16 %v4745
    %v5565 = vunpack.c.l.b16 %v4746
    %v5566 = vunpack.c.h.b16 %v4746
    %v5567 = vunpack.c.l.b16 %v4747
    %v5568 = vunpack.c.h.b16 %v4747
    %v5569 = vunpack.c.l.b16 %v4748
    %v5570 = vunpack.c.h.b16 %v4748
    %v5571 = vunpack.c.l.b16 %v4749
    %v5572 = vunpack.c.h.b16 %v4749
    %v5573 = vunpack.c.l.b16 %v4750
    %v5574 = vunpack.c.h.b16 %v4750
    %v5575 = vunpack.c.l.b16 %v4751
    %v5576 = vunpack.c.h.b16 %v4751
    %v5577 = vunpack.c.l.b16 %v4752
    %v5578 = vunpack.c.h.b16 %v4752
    %v5579 = vunpack.c.l.b16 %v4753
    %v5580 = vunpack.c.h.b16 %v4753
    %v5581 = vunpack.c.l.b16 %v4754
    %v5582 = vunpack.c.h.b16 %v4754
    %v5583 = vunpack.c.l.b16 %v4755
    %v5584 = vunpack.c.h.b16 %v4755
    %v5585 = vunpack.c.l.b16 %v4756
    %v5586 = vunpack.c.h.b16 %v4756
    %v5587 = vunpack.c.l.b16 %v4757
    %v5588 = vunpack.c.h.b16 %v4757
    %v5589 = vunpack.c.l.b16 %v4758
    %v5590 = vunpack.c.h.b16 %v4758
    %v5591 = vunpack.c.l.b16 %v4759
    %v5592 = vunpack.c.h.b16 %v4759
    %v5593 = vunpack.c.l.b16 %v4760
    %v5594 = vunpack.c.h.b16 %v4760
    %v5595 = vunpack.c.l.b16 %v4761
    %v5596 = vunpack.c.h.b16 %v4761
    %v5597 = vunpack.c.l.b16 %v4762
    %v5598 = vunpack.c.h.b16 %v4762
    %v5599 = vunpack.c.l.b16 %v4763
    %v5600 = vunpack.c.h.b16 %v4763
    %v5601 = vunpack.c.l.b16 %v4764
    %v5602 = vunpack.c.h.b16 %v4764
    %v5603 = vunpack.c.l.b16 %v4765
    %v5604 = vunpack.c.h.b16 %v4765
    %v5605 = vunpack.c.l.b16 %v4766
    %v5606 = vunpack.c.h.b16 %v4766
    %v5607 = vunpack.c.l.b16 %v4767
    %v5608 = vunpack.c.h.b16 %v4767
    %v5609 = vunpack.c.l.b16 %v4768
    %v5610 = vunpack.c.h.b16 %v4768
    %v5611 = vunpack.c.l.b16 %v4769
    %v5612 = vunpack.c.h.b16 %v4769
    %v5613 = vunpack.c.l.b16 %v4770
    %v5614 = vunpack.c.h.b16 %v4770
    %v5615 = vunpack.c.l.b16 %v4771
    %v5616 = vunpack.c.h.b16 %v4771
    %v5617 = vunpack.c.l.b16 %v4772
    %v5618 = vunpack.c.h.b16 %v4772
    %v5619 = vunpack.c.l.b16 %v4773
    %v5620 = vunpack.c.h.b16 %v4773
    %v5621 = vunpack.c.l.b16 %v4774
    %v5622 = vunpack.c.h.b16 %v4774
    %v5623 = vunpack.c.l.b16 %v4775
    %v5624 = vunpack.c.h.b16 %v4775
    %v5625 = vunpack.c.l.b16 %v4776
    %v5626 = vunpack.c.h.b16 %v4776
    %v5627 = vunpack.c.l.b16 %v4777
    %v5628 = vunpack.c.h.b16 %v4777
    %v5629 = vunpack.c.l.b16 %v4778
    %v5630 = vunpack.c.h.b16 %v4778
    %v5631 = vunpack.c.l.b16 %v4779
    %v5632 = vunpack.c.h.b16 %v4779
    %v5633 = vunpack.c.l.b16 %v4780
    %v5634 = vunpack.c.h.b16 %v4780
    %v5635 = vunpack.c.l.b16 %v4781
    %v5636 = vunpack.c.h.b16 %v4781
    %v5637 = vunpack.c.l.b16 %v4782
    %v5638 = vunpack.c.h.b16 %v4782
    %v5639 = vunpack.c.l.b16 %v4783
    %v5640 = vunpack.c.h.b16 %v4783
    %v5641 = vunpack.c.l.b16 %v4784
    %v5642 = vunpack.c.h.b16 %v4784
    %v5643 = vunpack.c.l.b16 %v4785
    %v5644 = vunpack.c.h.b16 %v4785
    %v5645 = vunpack.c.l.b16 %v4786
    %v5646 = vunpack.c.h.b16 %v4786
    %v5647 = vunpack.c.l.b16 %v4787
    %v5648 = vunpack.c.h.b16 %v4787
    %v5649 = vunpack.c.l.b16 %v4788
    %v5650 = vunpack.c.h.b16 %v4788
    %v5651 = vunpack.c.l.b16 %v4789
    %v5652 = vunpack.c.h.b16 %v4789
    %v5653 = vunpack.c.l.b16 %v4790
    %v5654 = vunpack.c.h.b16 %v4790
    %v5655 = vunpack.c.l.b16 %v4791
    %v5656 = vunpack.c.h.b16 %v4791
    %v5657 = vunpack.c.l.b16 %v4792
    %v5658 = vunpack.c.h.b16 %v4792
    %v5659 = vunpack.c.l.b16 %v4793
    %v5660 = vunpack.c.h.b16 %v4793
    %v5661 = vunpack.c.l.b16 %v4794
    %v5662 = vunpack.c.h.b16 %v4794
    %v5663 = vunpack.c.l.b16 %v4795
    %v5664 = vunpack.c.h.b16 %v4795
    %v5665 = vunpack.c.l.b16 %v4796
    %v5666 = vunpack.c.h.b16 %v4796
    %v5667 = vunpack.c.l.b16 %v4797
    %v5668 = vunpack.c.h.b16 %v4797
    %v5669 = vunpack.c.l.b16 %v4798
    %v5670 = vunpack.c.h.b16 %v4798
    %v5671 = vunpack.c.l.b16 %v4799
    %v5672 = vunpack.c.h.b16 %v4799
    %v5673 = vunpack.c.l.b16 %v4800
    %v5674 = vunpack.c.h.b16 %v4800
    %v5675 = vunpack.c.l.b16 %v4801
    %v5676 = vunpack.c.h.b16 %v4801
    %v5677 = vunpack.c.l.b16 %v4802
    %v5678 = vunpack.c.h.b16 %v4802
    %v5679 = vunpack.c.l.b16 %v4803
    %v5680 = vunpack.c.h.b16 %v4803
    %v5681 = vunpack.c.l.b16 %v4804
    %v5682 = vunpack.c.h.b16 %v4804
    %v5683 = vunpack.c.l.b16 %v4805
    %v5684 = vunpack.c.h.b16 %v4805
    %v5685 = vunpack.c.l.b16 %v4806
    %v5686 = vunpack.c.h.b16 %v4806
    %v5687 = vunpack.c.l.b16 %v4807
    %v5688 = vunpack.c.h.b16 %v4807
    %v5689 = vunpack.c.l.b16 %v4808
    %v5690 = vunpack.c.h.b16 %v4808
    %v5691 = vunpack.c.l.b16 %v4809
    %v5692 = vunpack.c.h.b16 %v4809
    %v5693 = vunpack.c.l.b16 %v4810
    %v5694 = vunpack.c.h.b16 %v4810
    %v5695 = vunpack.c.l.b16 %v4811
    %v5696 = vunpack.c.h.b16 %v4811
    %v5697 = vunpack.c.l.b16 %v4812
    %v5698 = vunpack.c.h.b16 %v4812
    %v5699 = vunpack.c.l.b16 %v4813
    %v5700 = vunpack.c.h.b16 %v4813
    %v5701 = vunpack.c.l.b16 %v4814
    %v5702 = vunpack.c.h.b16 %v4814
    %v5703 = vunpack.c.l.b16 %v4815
    %v5704 = vunpack.c.h.b16 %v4815
    %v5705 = vunpack.c.l.b16 %v4816
    %v5706 = vunpack.c.h.b16 %v4816
    %v5707 = vunpack.c.l.b16 %v4817
    %v5708 = vunpack.c.h.b16 %v4817
    %v5709 = vunpack.c.l.b16 %v4818
    %v5710 = vunpack.c.h.b16 %v4818
    %v5711 = vunpack.c.l.b16 %v4819
    %v5712 = vunpack.c.h.b16 %v4819
    %v5713 = vunpack.c.l.b16 %v4820
    %v5714 = vunpack.c.h.b16 %v4820
    %v5715 = vunpack.c.l.b16 %v4821
    %v5716 = vunpack.c.h.b16 %v4821
    %v5717 = vunpack.c.l.b16 %v4822
    %v5718 = vunpack.c.h.b16 %v4822
    %v5719 = vunpack.c.l.b16 %v4823
    %v5720 = vunpack.c.h.b16 %v4823
    %v5721 = vunpack.c.l.b16 %v4824
    %v5722 = vunpack.c.h.b16 %v4824
    %v5723 = vunpack.c.l.b16 %v4825
    %v5724 = vunpack.c.h.b16 %v4825
    %v5725 = vunpack.c.l.b16 %v4826
    %v5726 = vunpack.c.h.b16 %v4826
    %v5727 = vunpack.c.l.b16 %v4827
    %v5728 = vunpack.c.h.b16 %v4827
    %v5729 = vunpack.c.l.b16 %v4828
    %v5730 = vunpack.c.h.b16 %v4828
    %v5731 = vunpack.c.l.b16 %v4829
    %v5732 = vunpack.c.h.b16 %v4829
    %v5733 = vunpack.c.l.b16 %v4830
    %v5734 = vunpack.c.h.b16 %v4830
    %v5735 = vunpack.c.l.b16 %v4831
    %v5736 = vunpack.c.h.b16 %v4831
    %v5737 = vunpack.c.l.b16 %v4832
    %v5738 = vunpack.c.h.b16 %v4832
    %v5739 = vunpack.c.l.b16 %v4833
    %v5740 = vunpack.c.h.b16 %v4833
    %v5741 = vunpack.c.l.b16 %v4834
    %v5742 = vunpack.c.h.b16 %v4834
    %v5743 = vunpack.c.l.b16 %v4835
    %v5744 = vunpack.c.h.b16 %v4835
    %v5745 = vunpack.c.l.b16 %v4836
    %v5746 = vunpack.c.h.b16 %v4836
    %v5747 = vunpack.c.l.b16 %v4837
    %v5748 = vunpack.c.h.b16 %v4837
    %v5749 = vunpack.c.l.b16 %v4838
    %v5750 = vunpack.c.h.b16 %v4838
    %v5751 = vunpack.c.l.b16 %v4839
    %v5752 = vunpack.c.h.b16 %v4839
    %v5753 = vunpack.c.l.b16 %v4840
    %v5754 = vunpack.c.h.b16 %v4840
    %v5755 = vunpack.c.l.b16 %v4841
    %v5756 = vunpack.c.h.b16 %v4841
    %v5757 = vunpack.c.l.b16 %v4842
    %v5758 = vunpack.c.h.b16 %v4842
    %v5759 = vunpack.c.l.b16 %v4843
    %v5760 = vunpack.c.h.b16 %v4843
    %v5761 = vunpack.c.l.b16 %v4844
    %v5762 = vunpack.c.h.b16 %v4844
    %v5763 = vunpack.c.l.b16 %v4845
    %v5764 = vunpack.c.h.b16 %v4845
    %v5765 = vunpack.c.l.b16 %v4846
    %v5766 = vunpack.c.h.b16 %v4846
    %v5767 = vunpack.c.l.b16 %v4847
    %v5768 = vunpack.c.h.b16 %v4847
    %v5769 = vunpack.c.l.b16 %v4848
    %v5770 = vunpack.c.h.b16 %v4848
    %v5771 = vunpack.c.l.b16 %v4849
    %v5772 = vunpack.c.h.b16 %v4849
    %v5773 = vunpack.c.l.b16 %v4850
    %v5774 = vunpack.c.h.b16 %v4850
    %v5775 = vunpack.c.l.b16 %v4851
    %v5776 = vunpack.c.h.b16 %v4851
    %v5777 = vunpack.c.l.b16 %v4852
    %v5778 = vunpack.c.h.b16 %v4852
    %v5779 = vunpack.c.l.b16 %v4853
    %v5780 = vunpack.c.h.b16 %v4853
    %v5781 = vunpack.c.l.b16 %v4854
    %v5782 = vunpack.c.h.b16 %v4854
    %v5783 = vunpack.c.l.b16 %v4855
    %v5784 = vunpack.c.h.b16 %v4855
    %v5785 = vunpack.c.l.b16 %v4856
    %v5786 = vunpack.c.h.b16 %v4856
    %v5787 = vunpack.c.l.b16 %v4857
    %v5788 = vunpack.c.h.b16 %v4857
    %v5789 = vunpack.c.l.b16 %v4858
    %v5790 = vunpack.c.h.b16 %v4858
    %v5791 = vunpack.c.l.b16 %v4859
    %v5792 = vunpack.c.h.b16 %v4859
    %v5793 = vunpack.c.l.b16 %v4860
    %v5794 = vunpack.c.h.b16 %v4860
    %v5795 = vunpack.c.l.b16 %v4861
    %v5796 = vunpack.c.h.b16 %v4861
    %v5797 = vunpack.c.l.b16 %v4862
    %v5798 = vunpack.c.h.b16 %v4862
    %v5799 = vunpack.c.l.b16 %v4863
    %v5800 = vunpack.c.h.b16 %v4863
    %v5801 = vunpack.c.l.b16 %v4864
    %v5802 = vunpack.c.h.b16 %v4864
    %v5803 = vunpack.c.l.b16 %v4865
    %v5804 = vunpack.c.h.b16 %v4865
    %v5805 = vunpack.c.l.b16 %v4866
    %v5806 = vunpack.c.h.b16 %v4866
    %v5807 = vunpack.c.l.b16 %v4867
    %v5808 = vunpack.c.h.b16 %v4867
    %v5809 = vunpack.c.l.b16 %v4868
    %v5810 = vunpack.c.h.b16 %v4868
    %v5811 = vunpack.c.l.b16 %v4869
    %v5812 = vunpack.c.h.b16 %v4869
    %v5813 = vunpack.c.l.b16 %v4870
    %v5814 = vunpack.c.h.b16 %v4870
    %v5815 = vunpack.c.l.b16 %v4871
    %v5816 = vunpack.c.h.b16 %v4871
    %v5817 = vunpack.c.l.b16 %v4872
    %v5818 = vunpack.c.h.b16 %v4872
    %v5819 = vunpack.c.l.b16 %v4873
    %v5820 = vunpack.c.h.b16 %v4873
    %v5821 = vunpack.c.l.b16 %v4874
    %v5822 = vunpack.c.h.b16 %v4874
    %v5823 = vunpack.c.l.b16 %v4875
    %v5824 = vunpack.c.h.b16 %v4875
    %v5825 = vunpack.c.l.b16 %v4876
    %v5826 = vunpack.c.h.b16 %v4876
    %v5827 = vunpack.c.l.b16 %v4877
    %v5828 = vunpack.c.h.b16 %v4877
    %v5829 = vunpack.c.l.b16 %v4878
    %v5830 = vunpack.c.h.b16 %v4878
    %v5831 = vunpack.c.l.b16 %v4879
    %v5832 = vunpack.c.h.b16 %v4879
    %v5833 = vunpack.c.l.b16 %v4880
    %v5834 = vunpack.c.h.b16 %v4880
    %v5835 = vunpack.c.l.b16 %v4881
    %v5836 = vunpack.c.h.b16 %v4881
    %v5837 = vunpack.c.l.b16 %v4882
    %v5838 = vunpack.c.h.b16 %v4882
    %v5839 = vunpack.c.l.b16 %v4883
    %v5840 = vunpack.c.h.b16 %v4883
    %v5841 = vunpack.c.l.b16 %v4884
    %v5842 = vunpack.c.h.b16 %v4884
    %v5843 = vunpack.c.l.b16 %v4885
    %v5844 = vunpack.c.h.b16 %v4885
    %v5845 = vunpack.c.l.b16 %v4886
    %v5846 = vunpack.c.h.b16 %v4886
    %v5847 = vunpack.c.l.b16 %v4887
    %v5848 = vunpack.c.h.b16 %v4887
    %v5849 = vunpack.c.l.b16 %v4888
    %v5850 = vunpack.c.h.b16 %v4888
    %v5851 = vunpack.c.l.b16 %v4889
    %v5852 = vunpack.c.h.b16 %v4889
    %v5853 = vunpack.c.l.b16 %v4890
    %v5854 = vunpack.c.h.b16 %v4890
    %v5855 = vunpack.c.l.b16 %v4891
    %v5856 = vunpack.c.h.b16 %v4891
    %v5857 = vunpack.c.l.b16 %v4892
    %v5858 = vunpack.c.h.b16 %v4892
    %v5859 = vunpack.c.l.b16 %v4893
    %v5860 = vunpack.c.h.b16 %v4893
    %v5861 = vunpack.c.l.b16 %v4894
    %v5862 = vunpack.c.h.b16 %v4894
    %v5863 = vunpack.c.l.b16 %v4895
    %v5864 = vunpack.c.h.b16 %v4895
    %v5865 = vunpack.c.l.b16 %v4896
    %v5866 = vunpack.c.h.b16 %v4896
    %v5867 = vunpack.c.l.b16 %v4897
    %v5868 = vunpack.c.h.b16 %v4897
    %v5869 = vunpack.c.l.b16 %v4898
    %v5870 = vunpack.c.h.b16 %v4898
    %v5871 = vunpack.c.l.b16 %v4899
    %v5872 = vunpack.c.h.b16 %v4899
    %v5873 = vunpack.c.l.b16 %v4900
    %v5874 = vunpack.c.h.b16 %v4900
    %v5875 = vunpack.c.l.b16 %v4901
    %v5876 = vunpack.c.h.b16 %v4901
    %v5877 = vunpack.c.l.b16 %v4902
    %v5878 = vunpack.c.h.b16 %v4902
    %v5879 = vunpack.c.l.b16 %v4903
    %v5880 = vunpack.c.h.b16 %v4903
    %v5881 = vunpack.c.l.b16 %v4904
    %v5882 = vunpack.c.h.b16 %v4904
    %v5883 = vunpack.c.l.b16 %v4905
    %v5884 = vunpack.c.h.b16 %v4905
    %v5885 = vunpack.c.l.b16 %v4906
    %v5886 = vunpack.c.h.b16 %v4906
    %v5887 = vunpack.c.l.b16 %v4907
    %v5888 = vunpack.c.h.b16 %v4907
    %v5889 = vunpack.c.l.b16 %v4908
    %v5890 = vunpack.c.h.b16 %v4908
    %v5891 = vunpack.c.l.b16 %v4909
    %v5892 = vunpack.c.h.b16 %v4909
    %v5893 = vunpack.c.l.b16 %v4910
    %v5894 = vunpack.c.h.b16 %v4910
    %v5895 = vunpack.c.l.b16 %v4911
    %v5896 = vunpack.c.h.b16 %v4911
    %v5897 = vunpack.c.l.b16 %v4912
    %v5898 = vunpack.c.h.b16 %v4912
    %v5899 = vunpack.c.l.b16 %v4913
    %v5900 = vunpack.c.h.b16 %v4913
    %v5901 = vunpack.c.l.b16 %v4914
    %v5902 = vunpack.c.h.b16 %v4914
    %v5903 = vunpack.c.l.b16 %v4915
    %v5904 = vunpack.c.h.b16 %v4915
    %v5905 = vunpack.c.l.b16 %v4916
    %v5906 = vunpack.c.h.b16 %v4916
    %v5907 = vunpack.c.l.b16 %v4917
    %v5908 = vunpack.c.h.b16 %v4917
    %v5909 = vunpack.c.l.b16 %v4918
    %v5910 = vunpack.c.h.b16 %v4918
    %v5911 = vunpack.c.l.b16 %v4919
    %v5912 = vunpack.c.h.b16 %v4919
    %v5913 = vunpack.c.l.b16 %v4920
    %v5914 = vunpack.c.h.b16 %v4920
    %v5915 = vunpack.c.l.b16 %v4921
    %v5916 = vunpack.c.h.b16 %v4921
    %v5917 = vunpack.c.l.b16 %v4922
    %v5918 = vunpack.c.h.b16 %v4922
    %v5919 = vunpack.c.l.b16 %v4923
    %v5920 = vunpack.c.h.b16 %v4923
    %v5921 = vunpack.c.l.b16 %v4924
    %v5922 = vunpack.c.h.b16 %v4924
    %v5923 = vunpack.c.l.b16 %v4925
    %v5924 = vunpack.c.h.b16 %v4925
    %v5925 = vunpack.c.l.b16 %v4926
    %v5926 = vunpack.c.h.b16 %v4926
    %v5927 = vunpack.c.l.b16 %v4927
    %v5928 = vunpack.c.h.b16 %v4927
    %v5929 = vunpack.c.l.b16 %v4928
    %v5930 = vunpack.c.h.b16 %v4928
    %v5931 = vunpack.c.l.b16 %v4929
    %v5932 = vunpack.c.h.b16 %v4929
    %v5933 = vunpack.c.l.b16 %v4930
    %v5934 = vunpack.c.h.b16 %v4930
    %v5935 = vunpack.c.l.b16 %v4931
    %v5936 = vunpack.c.h.b16 %v4931
    %v5937 = vunpack.c.l.b16 %v4932
    %v5938 = vunpack.c.h.b16 %v4932
    %v5939 = vunpack.c.l.b16 %v4933
    %v5940 = vunpack.c.h.b16 %v4933
    %v5941 = vunpack.c.l.b16 %v4934
    %v5942 = vunpack.c.h.b16 %v4934
    %v5943 = vunpack.c.l.b16 %v4935
    %v5944 = vunpack.c.h.b16 %v4935
    %v5945 = vunpack.c.l.b16 %v4936
    %v5946 = vunpack.c.h.b16 %v4936
    %v5947 = vunpack.c.l.b16 %v4937
    %v5948 = vunpack.c.h.b16 %v4937
    %v5949 = vunpack.c.l.b16 %v4938
    %v5950 = vunpack.c.h.b16 %v4938
    %v5951 = vunpack.c.l.b16 %v4939
    %v5952 = vunpack.c.h.b16 %v4939
    %v5953 = vunpack.c.l.b16 %v4940
    %v5954 = vunpack.c.h.b16 %v4940
    %v5955 = vunpack.c.l.b16 %v4941
    %v5956 = vunpack.c.h.b16 %v4941
    %v5957 = vunpack.c.l.b16 %v4942
    %v5958 = vunpack.c.h.b16 %v4942
    %v5959 = vunpack.c.l.b16 %v4943
    %v5960 = vunpack.c.h.b16 %v4943
    %v5961 = vunpack.c.l.b16 %v4944
    %v5962 = vunpack.c.h.b16 %v4944
    %v5963 = vunpack.c.l.b16 %v4945
    %v5964 = vunpack.c.h.b16 %v4945
    %v5965 = vunpack.c.l.b16 %v4946
    %v5966 = vunpack.c.h.b16 %v4946
    %v5967 = vunpack.c.l.b16 %v4947
    %v5968 = vunpack.c.h.b16 %v4947
    %v5969 = vunpack.c.l.b16 %v4948
    %v5970 = vunpack.c.h.b16 %v4948
    %v5971 = vunpack.c.l.b16 %v4949
    %v5972 = vunpack.c.h.b16 %v4949
    %v5973 = vunpack.c.l.b16 %v4950
    %v5974 = vunpack.c.h.b16 %v4950
    %v5975 = vunpack.c.l.b16 %v4951
    %v5976 = vunpack.c.h.b16 %v4951
    %v5977 = vunpack.c.l.b16 %v4952
    %v5978 = vunpack.c.h.b16 %v4952
    %v5979 = vunpack.c.l.b16 %v4953
    %v5980 = vunpack.c.h.b16 %v4953
    %v5981 = vunpack.c.l.b16 %v4954
    %v5982 = vunpack.c.h.b16 %v4954
    %v5983 = vunpack.c.l.b16 %v4955
    %v5984 = vunpack.c.h.b16 %v4955
    %v5985 = vunpack.c.l.b16 %v4956
    %v5986 = vunpack.c.h.b16 %v4956
    %v5987 = vunpack.c.l.b16 %v4957
    %v5988 = vunpack.c.h.b16 %v4957
    %v5989 = vunpack.c.l.b16 %v4958
    %v5990 = vunpack.c.h.b16 %v4958
    %v5991 = vunpack.c.l.b16 %v4959
    %v5992 = vunpack.c.h.b16 %v4959
    %v5993 = vunpack.c.l.b16 %v4960
    %v5994 = vunpack.c.h.b16 %v4960
    %v5995 = vunpack.c.l.b16 %v4961
    %v5996 = vunpack.c.h.b16 %v4961
    %v5997 = vunpack.c.l.b16 %v4962
    %v5998 = vunpack.c.h.b16 %v4962
    %v5999 = vunpack.c.l.b16 %v4963
    %v6000 = vunpack.c.h.b16 %v4963
    %v6001 = vunpack.c.l.b16 %v4964
    %v6002 = vunpack.c.h.b16 %v4964
    %v6003 = vunpack.c.l.b16 %v4965
    %v6004 = vunpack.c.h.b16 %v4965
    %v6005 = vunpack.c.l.b16 %v4966
    %v6006 = vunpack.c.h.b16 %v4966
    %v6007 = vunpack.c.l.b16 %v4967
    %v6008 = vunpack.c.h.b16 %v4967
    %v6009 = vunpack.c.l.b16 %v4968
    %v6010 = vunpack.c.h.b16 %v4968
    %v6011 = vunpack.c.l.b16 %v4969
    %v6012 = vunpack.c.h.b16 %v4969
    %v6013 = vunpack.c.l.b16 %v4970
    %v6014 = vunpack.c.h.b16 %v4970
    %v6015 = vunpack.c.l.b16 %v4971
    %v6016 = vunpack.c.h.b16 %v4971
    %v6017 = vunpack.c.l.b16 %v4972
    %v6018 = vunpack.c.h.b16 %v4972
    %v6019 = vunpack.c.l.b16 %v4973
    %v6020 = vunpack.c.h.b16 %v4973
    %v6021 = vunpack.c.l.b16 %v4974
    %v6022 = vunpack.c.h.b16 %v4974
    %v6023 = vunpack.c.l.b16 %v4975
    %v6024 = vunpack.c.h.b16 %v4975
    %v6025 = vunpack.c.l.b16 %v4976
    %v6026 = vunpack.c.h.b16 %v4976
    %v6027 = vunpack.c.l.b16 %v4977
    %v6028 = vunpack.c.h.b16 %v4977
    %v6029 = vunpack.c.l.b16 %v4978
    %v6030 = vunpack.c.h.b16 %v4978
    %v6031 = vunpack.c.l.b16 %v4979
    %v6032 = vunpack.c.h.b16 %v4979
    %v6033 = vunpack.c.l.b16 %v4980
    %v6034 = vunpack.c.h.b16 %v4980
    %v6035 = vunpack.c.l.b16 %v4981
    %v6036 = vunpack.c.h.b16 %v4981
    %v6037 = vunpack.c.l.b16 %v4982
    %v6038 = vunpack.c.h.b16 %v4982
    %v6039 = vunpack.c.l.b16 %v4983
    %v6040 = vunpack.c.h.b16 %v4983
    %v6041 = vunpack.c.l.b16 %v4984
    %v6042 = vunpack.c.h.b16 %v4984
    %v6043 = vunpack.c.l.b16 %v4985
    %v6044 = vunpack.c.h.b16 %v4985
    %v6045 = vunpack.c.l.b16 %v4986
    %v6046 = vunpack.c.h.b16 %v4986
    %v6047 = vunpack.c.l.b16 %v4987
    %v6048 = vunpack.c.h.b16 %v4987
    %v6049 = vunpack.c.l.b16 %v4988
    %v6050 = vunpack.c.h.b16 %v4988
    %v6051 = vunpack.c.l.b16 %v4989
    %v6052 = vunpack.c.h.b16 %v4989
    %v6053 = vunpack.c.l.b16 %v4990
    %v6054 = vunpack.c.h.b16 %v4990
    %v6055 = vunpack.c.l.b16 %v4991
    %v6056 = vunpack.c.h.b16 %v4991
    %v6057 = vunpack.c.l.b16 %v4992
    %v6058 = vunpack.c.h.b16 %v4992
    %v6059 = vunpack.c.l.b16 %v4993
    %v6060 = vunpack.c.h.b16 %v4993
    %v6061 = vunpack.c.l.b16 %v4994
    %v6062 = vunpack.c.h.b16 %v4994
    %v6063 = vunpack.c.l.b16 %v4995
    %v6064 = vunpack.c.h.b16 %v4995
    %v6065 = vunpack.c.l.b16 %v4996
    %v6066 = vunpack.c.h.b16 %v4996
    %v6067 = vunpack.c.l.b16 %v4997
    %v6068 = vunpack.c.h.b16 %v4997
    %v6069 = vunpack.c.l.b16 %v4998
    %v6070 = vunpack.c.h.b16 %v4998
    %v6071 = vunpack.c.l.b16 %v4999
    %v6072 = vunpack.c.h.b16 %v4999
    %v6073 = vunpack.c.l.b16 %v5000
    %v6074 = vunpack.c.h.b16 %v5000
    %v6075 = vunpack.c.l.b16 %v5001
    %v6076 = vunpack.c.h.b16 %v5001
    %v6077 = vunpack.c.l.b16 %v5002
    %v6078 = vunpack.c.h.b16 %v5002
    %v6079 = vunpack.c.l.b16 %v5003
    %v6080 = vunpack.c.h.b16 %v5003
    %v6081 = vunpack.c.l.b16 %v5004
    %v6082 = vunpack.c.h.b16 %v5004
    %v6083 = vunpack.c.l.b16 %v5005
    %v6084 = vunpack.c.h.b16 %v5005
    %v6085 = vunpack.c.l.b16 %v5006
    %v6086 = vunpack.c.h.b16 %v5006
    %v6087 = vunpack.c.l.b16 %v5007
    %v6088 = vunpack.c.h.b16 %v5007
    %v6089 = vunpack.c.l.b16 %v5008
    %v6090 = vunpack.c.h.b16 %v5008
    %v6091 = vunpack.c.l.b16 %v5009
    %v6092 = vunpack.c.h.b16 %v5009
    %v6093 = vunpack.c.l.b16 %v5010
    %v6094 = vunpack.c.h.b16 %v5010
    %v6095 = vunpack.c.l.b16 %v5011
    %v6096 = vunpack.c.h.b16 %v5011
    %v6097 = vunpack.c.l.b16 %v5012
    %v6098 = vunpack.c.h.b16 %v5012
    %v6099 = vunpack.c.l.b16 %v5013
    %v6100 = vunpack.c.h.b16 %v5013
    %v6101 = vunpack.c.l.b16 %v5014
    %v6102 = vunpack.c.h.b16 %v5014
    %v6103 = vunpack.c.l.b16 %v5015
    %v6104 = vunpack.c.h.b16 %v5015
    %v6105 = vunpack.c.l.b16 %v5016
    %v6106 = vunpack.c.h.b16 %v5016
    %v6107 = vunpack.c.l.b16 %v5017
    %v6108 = vunpack.c.h.b16 %v5017
    %v6109 = vunpack.c.l.b16 %v5018
    %v6110 = vunpack.c.h.b16 %v5018
    %v6111 = vunpack.c.l.b16 %v5019
    %v6112 = vunpack.c.h.b16 %v5019
    %v6113 = vunpack.c.l.b16 %v5020
    %v6114 = vunpack.c.h.b16 %v5020
    %v6115 = vunpack.c.l.b16 %v5021
    %v6116 = vunpack.c.h.b16 %v5021
    %v6117 = vunpack.c.l.b16 %v5022
    %v6118 = vunpack.c.h.b16 %v5022
    %v6119 = vunpack.c.l.b16 %v5023
    %v6120 = vunpack.c.h.b16 %v5023
    %v6121 = vunpack.c.l.b16 %v5024
    %v6122 = vunpack.c.h.b16 %v5024
    %v6123 = vunpack.c.l.b16 %v5025
    %v6124 = vunpack.c.h.b16 %v5025
    %v6125 = vunpack.c.l.b16 %v5026
    %v6126 = vunpack.c.h.b16 %v5026
    %v6127 = vunpack.c.l.b16 %v5027
    %v6128 = vunpack.c.h.b16 %v5027
    %v6129 = vunpack.c.l.b16 %v5028
    %v6130 = vunpack.c.h.b16 %v5028
    %v6131 = vunpack.c.l.b16 %v5029
    %v6132 = vunpack.c.h.b16 %v5029
    %v6133 = vunpack.c.l.b16 %v5030
    %v6134 = vunpack.c.h.b16 %v5030
    %v6135 = vunpack.c.l.b16 %v5031
    %v6136 = vunpack.c.h.b16 %v5031
    %v6137 = vunpack.c.l.b16 %v5032
    %v6138 = vunpack.c.h.b16 %v5032
    %v6139 = vunpack.c.l.b16 %v5033
    %v6140 = vunpack.c.h.b16 %v5033
    %v6141 = vunpack.c.l.b16 %v5034
    %v6142 = vunpack.c.h.b16 %v5034
    %v6143 = vunpack.c.l.b16 %v5035
    %v6144 = vunpack.c.h.b16 %v5035
    %v6145 = vunpack.c.l.b16 %v5036
    %v6146 = vunpack.c.h.b16 %v5036
    %v6147 = vunpack.c.l.b16 %v5037
    %v6148 = vunpack.c.h.b16 %v5037
    %v6149 = vunpack.c.l.b16 %v5038
    %v6150 = vunpack.c.h.b16 %v5038
    %v6151 = vunpack.c.l.b16 %v5039
    %v6152 = vunpack.c.h.b16 %v5039
    %v6153 = vunpack.c.l.b16 %v5040
    %v6154 = vunpack.c.h.b16 %v5040
    %v6155 = vunpack.c.l.b16 %v5041
    %v6156 = vunpack.c.h.b16 %v5041
    %v6157 = vunpack.c.l.b16 %v5042
    %v6158 = vunpack.c.h.b16 %v5042
    %v6159 = vunpack.c.l.b16 %v5043
    %v6160 = vunpack.c.h.b16 %v5043
    %v6161 = vunpack.c.l.b16 %v5044
    %v6162 = vunpack.c.h.b16 %v5044
    %v6163 = vunpack.c.l.b16 %v5045
    %v6164 = vunpack.c.h.b16 %v5045
    %v6165 = vunpack.c.l.b16 %v5046
    %v6166 = vunpack.c.h.b16 %v5046
    %v6167 = vunpack.c.l.b16 %v5047
    %v6168 = vunpack.c.h.b16 %v5047
    %v6169 = vunpack.c.l.b16 %v5048
    %v6170 = vunpack.c.h.b16 %v5048
    %v6171 = vunpack.c.l.b16 %v5049
    %v6172 = vunpack.c.h.b16 %v5049
    %v6173 = vunpack.c.l.b16 %v5050
    %v6174 = vunpack.c.h.b16 %v5050
    %v6175 = vunpack.c.l.b16 %v5051
    %v6176 = vunpack.c.h.b16 %v5051
    %v6177 = vunpack.c.l.b16 %v5052
    %v6178 = vunpack.c.h.b16 %v5052
    %v6179 = vunpack.c.l.b16 %v5053
    %v6180 = vunpack.c.h.b16 %v5053
    %v6181 = vunpack.c.l.b16 %v5054
    %v6182 = vunpack.c.h.b16 %v5054
    %v6183 = vunpack.c.l.b16 %v5055
    %v6184 = vunpack.c.h.b16 %v5055
    %v6185 = vunpack.c.l.b16 %v5056
    %v6186 = vunpack.c.h.b16 %v5056
    %v6187 = vunpack.c.l.b16 %v5057
    %v6188 = vunpack.c.h.b16 %v5057
    %v6189 = vunpack.c.l.b16 %v5058
    %v6190 = vunpack.c.h.b16 %v5058
    %v6191 = vunpack.c.l.b16 %v5059
    %v6192 = vunpack.c.h.b16 %v5059
    %v6193 = vunpack.c.l.b16 %v5060
    %v6194 = vunpack.c.h.b16 %v5060
    %v6195 = vunpack.c.l.b16 %v5061
    %v6196 = vunpack.c.h.b16 %v5061
    %v6197 = vunpack.c.l.b16 %v5062
    %v6198 = vunpack.c.h.b16 %v5062
    %v6199 = vunpack.c.l.b16 %v5063
    %v6200 = vunpack.c.h.b16 %v5063
    %v6201 = vunpack.c.l.b16 %v5064
    %v6202 = vunpack.c.h.b16 %v5064
    %v6203 = vunpack.c.l.b16 %v5065
    %v6204 = vunpack.c.h.b16 %v5065
    %v6205 = vunpack.c.l.b16 %v5066
    %v6206 = vunpack.c.h.b16 %v5066
    %v6207 = vunpack.c.l.b16 %v5067
    %v6208 = vunpack.c.h.b16 %v5067
    %v6209 = vunpack.c.l.b16 %v5068
    %v6210 = vunpack.c.h.b16 %v5068
    %v6211 = vunpack.c.l.b16 %v5069
    %v6212 = vunpack.c.h.b16 %v5069
    %v6213 = vunpack.c.l.b16 %v5070
    %v6214 = vunpack.c.h.b16 %v5070
    %v6215 = vunpack.c.l.b16 %v5071
    %v6216 = vunpack.c.h.b16 %v5071
    %v6217 = vunpack.c.l.b16 %v5072
    %v6218 = vunpack.c.h.b16 %v5072
    %v6219 = vunpack.c.l.b16 %v5073
    %v6220 = vunpack.c.h.b16 %v5073
    %v6221 = vunpack.c.l.b16 %v5074
    %v6222 = vunpack.c.h.b16 %v5074
    %v6223 = vunpack.c.l.b16 %v5075
    %v6224 = vunpack.c.h.b16 %v5075
    %v6225 = vunpack.c.l.b16 %v5076
    %v6226 = vunpack.c.h.b16 %v5076
    %v6227 = vunpack.c.l.b16 %v5077
    %v6228 = vunpack.c.h.b16 %v5077
    %v6229 = vunpack.c.l.b16 %v5078
    %v6230 = vunpack.c.h.b16 %v5078
    %v6231 = vunpack.c.l.b16 %v5079
    %v6232 = vunpack.c.h.b16 %v5079
    %v6233 = vunpack.c.l.b16 %v5080
    %v6234 = vunpack.c.h.b16 %v5080
    %v6235 = vunpack.c.l.b16 %v5081
    %v6236 = vunpack.c.h.b16 %v5081
    %v6237 = vunpack.c.l.b16 %v5082
    %v6238 = vunpack.c.h.b16 %v5082
    %v6239 = vunpack.c.l.b16 %v5083
    %v6240 = vunpack.c.h.b16 %v5083
    %v6241 = vunpack.c.l.b16 %v5084
    %v6242 = vunpack.c.h.b16 %v5084
    %v6243 = vunpack.c.l.b16 %v5085
    %v6244 = vunpack.c.h.b16 %v5085
    %v6245 = vunpack.c.l.b16 %v5086
    %v6246 = vunpack.c.h.b16 %v5086
    %v6247 = vunpack.c.l.b16 %v5087
    %v6248 = vunpack.c.h.b16 %v5087
    %v6249 = vunpack.c.l.b16 %v5088
    %v6250 = vunpack.c.h.b16 %v5088
    %v6251 = vunpack.c.l.b16 %v5089
    %v6252 = vunpack.c.h.b16 %v5089
    %v6253 = vunpack.c.l.b16 %v5090
    %v6254 = vunpack.c.h.b16 %v5090
    %v6255 = vunpack.c.l.b16 %v5091
    %v6256 = vunpack.c.h.b16 %v5091
    %v6257 = vunpack.c.l.b16 %v5092
    %v6258 = vunpack.c.h.b16 %v5092
    %v6259 = vunpack.c.l.b16 %v5093
    %v6260 = vunpack.c.h.b16 %v5093
    %v6261 = vunpack.c.l.b16 %v5094
    %v6262 = vunpack.c.h.b16 %v5094
    %v6263 = vunpack.c.l.b16 %v5095
    %v6264 = vunpack.c.h.b16 %v5095
    %v6265 = vunpack.c.l.b16 %v5096
    %v6266 = vunpack.c.h.b16 %v5096
    %v6267 = vunpack.c.l.b16 %v5097
    %v6268 = vunpack.c.h.b16 %v5097
    %v6269 = vunpack.c.l.b16 %v5098
    %v6270 = vunpack.c.h.b16 %v5098
    %v6271 = vunpack.c.l.b16 %v5099
    %v6272 = vunpack.c.h.b16 %v5099
    %v6273 = vunpack.c.l.b16 %v5100
    %v6274 = vunpack.c.h.b16 %v5100
    %v6275 = vpack.c.b16 %v5511, %v5507
    %v6276 = vpack.c.b16 %v5512, %v5508
    %v6277 = vpack.c.b16 %v5513, %v5509
    %v6278 = vpack.c.b16 %v5514, %v5510
    %v6279 = vpack.c.b16 %v5519, %v5515
    %v6280 = vpack.c.b16 %v5520, %v5516
    %v6281 = vpack.c.b16 %v5521, %v5517
    %v6282 = vpack.c.b16 %v5522, %v5518
    %v6283 = vpack.c.b16 %v5527, %v5523
    %v6284 = vpack.c.b16 %v5528, %v5524
    %v6285 = vpack.c.b16 %v5529, %v5525
    %v6286 = vpack.c.b16 %v5530, %v5526
    %v6287 = vpack.c.b16 %v5535, %v5531
    %v6288 = vpack.c.b16 %v5536, %v5532
    %v6289 = vpack.c.b16 %v5537, %v5533
    %v6290 = vpack.c.b16 %v5538, %v5534
    %v6291 = vpack.c.b16 %v5543, %v5539
    %v6292 = vpack.c.b16 %v5544, %v5540
    %v6293 = vpack.c.b16 %v5545, %v5541
    %v6294 = vpack.c.b16 %v5546, %v5542
    %v6295 = vpack.c.b16 %v5551, %v5547
    %v6296 = vpack.c.b16 %v5552, %v5548
    %v6297 = vpack.c.b16 %v5553, %v5549
    %v6298 = vpack.c.b16 %v5554, %v5550
    %v6299 = vpack.c.b16 %v5559, %v5555
    %v6300 = vpack.c.b16 %v5560, %v5556
    %v6301 = vpack.c.b16 %v5561, %v5557
    %v6302 = vpack.c.b16 %v5562, %v5558
    %v6303 = vpack.c.b16 %v5567, %v5563
    %v6304 = vpack.c.b16 %v5568, %v5564
    %v6305 = vpack.c.b16 %v5569, %v5565
    %v6306 = vpack.c.b16 %v5570, %v5566
    %v6307 = vpack.c.b16 %v5575, %v5571
    %v6308 = vpack.c.b16 %v5576, %v5572
    %v6309 = vpack.c.b16 %v5577, %v5573
    %v6310 = vpack.c.b16 %v5578, %v5574
    %v6311 = vpack.c.b16 %v5583, %v5579
    %v6312 = vpack.c.b16 %v5584, %v5580
    %v6313 = vpack.c.b16 %v5585, %v5581
    %v6314 = vpack.c.b16 %v5586, %v5582
    %v6315 = vpack.c.b16 %v5591, %v5587
    %v6316 = vpack.c.b16 %v5592, %v5588
    %v6317 = vpack.c.b16 %v5593, %v5589
    %v6318 = vpack.c.b16 %v5594, %v5590
    %v6319 = vpack.c.b16 %v5599, %v5595
    %v6320 = vpack.c.b16 %v5600, %v5596
    %v6321 = vpack.c.b16 %v5601, %v5597
    %v6322 = vpack.c.b16 %v5602, %v5598
    %v6323 = vpack.c.b16 %v5607, %v5603
    %v6324 = vpack.c.b16 %v5608, %v5604
    %v6325 = vpack.c.b16 %v5609, %v5605
    %v6326 = vpack.c.b16 %v5610, %v5606
    %v6327 = vpack.c.b16 %v5615, %v5611
    %v6328 = vpack.c.b16 %v5616, %v5612
    %v6329 = vpack.c.b16 %v5617, %v5613
    %v6330 = vpack.c.b16 %v5618, %v5614
    %v6331 = vpack.c.b16 %v5623, %v5619
    %v6332 = vpack.c.b16 %v5624, %v5620
    %v6333 = vpack.c.b16 %v5625, %v5621
    %v6334 = vpack.c.b16 %v5626, %v5622
    %v6335 = vpack.c.b16 %v5631, %v5627
    %v6336 = vpack.c.b16 %v5632, %v5628
    %v6337 = vpack.c.b16 %v5633, %v5629
    %v6338 = vpack.c.b16 %v5634, %v5630
    %v6339 = vpack.c.b16 %v5639, %v5635
    %v6340 = vpack.c.b16 %v5640, %v5636
    %v6341 = vpack.c.b16 %v5641, %v5637
    %v6342 = vpack.c.b16 %v5642, %v5638
    %v6343 = vpack.c.b16 %v5647, %v5643
    %v6344 = vpack.c.b16 %v5648, %v5644
    %v6345 = vpack.c.b16 %v5649, %v5645
    %v6346 = vpack.c.b16 %v5650, %v5646
    %v6347 = vpack.c.b16 %v5655, %v5651
    %v6348 = vpack.c.b16 %v5656, %v5652
    %v6349 = vpack.c.b16 %v5657, %v5653
    %v6350 = vpack.c.b16 %v5658, %v5654
    %v6351 = vpack.c.b16 %v5663, %v5659
    %v6352 = vpack.c.b16 %v5664, %v5660
    %v6353 = vpack.c.b16 %v5665, %v5661
    %v6354 = vpack.c.b16 %v5666, %v5662
    %v6355 = vpack.c.b16 %v5671, %v5667
    %v6356 = vpack.c.b16 %v5672, %v5668
    %v6357 = vpack.c.b16 %v5673, %v5669
    %v6358 = vpack.c.b16 %v5674, %v5670
    %v6359 = vpack.c.b16 %v5679, %v5675
    %v6360 = vpack.c.b16 %v5680, %v5676
    %v6361 = vpack.c.b16 %v5681, %v5677
    %v6362 = vpack.c.b16 %v5682, %v5678
    %v6363 = vpack.c.b16 %v5687, %v5683
    %v6364 = vpack.c.b16 %v5688, %v5684
    %v6365 = vpack.c.b16 %v5689, %v5685
    %v6366 = vpack.c.b16 %v5690, %v5686
    %v6367 = vpack.c.b16 %v5695, %v5691
    %v6368 = vpack.c.b16 %v5696, %v5692
    %v6369 = vpack.c.b16 %v5697, %v5693
    %v6370 = vpack.c.b16 %v5698, %v5694
    %v6371 = vpack.c.b16 %v5703, %v5699
    %v6372 = vpack.c.b16 %v5704, %v5700
    %v6373 = vpack.c.b16 %v5705, %v5701
    %v6374 = vpack.c.b16 %v5706, %v5702
    %v6375 = vpack.c.b16 %v5711, %v5707
    %v6376 = vpack.c.b16 %v5712, %v5708
    %v6377 = vpack.c.b16 %v5713, %v5709
    %v6378 = vpack.c.b16 %v5714, %v5710
    %v6379 = vpack.c.b16 %v5719, %v5715
    %v6380 = vpack.c.b16 %v5720, %v5716
    %v6381 = vpack.c.b16 %v5721, %v5717
    %v6382 = vpack.c.b16 %v5722, %v5718
    %v6383 = vpack.c.b16 %v5727, %v5723
    %v6384 = vpack.c.b16 %v5728, %v5724
    %v6385 = vpack.c.b16 %v5729, %v5725
    %v6386 = vpack.c.b16 %v5730, %v5726
    %v6387 = vpack.c.b16 %v5735, %v5731
    %v6388 = vpack.c.b16 %v5736, %v5732
    %v6389 = vpack.c.b16 %v5737, %v5733
    %v6390 = vpack.c.b16 %v5738, %v5734
    %v6391 = vpack.c.b16 %v5743, %v5739
    %v6392 = vpack.c.b16 %v5744, %v5740
    %v6393 = vpack.c.b16 %v5745, %v5741
    %v6394 = vpack.c.b16 %v5746, %v5742
    %v6395 = vpack.c.b16 %v5751, %v5747
    %v6396 = vpack.c.b16 %v5752, %v5748
    %v6397 = vpack.c.b16 %v5753, %v5749
    %v6398 = vpack.c.b16 %v5754, %v5750
    %v6399 = vpack.c.b16 %v5759, %v5755
    %v6400 = vpack.c.b16 %v5760, %v5756
    %v6401 = vpack.c.b16 %v5761, %v5757
    %v6402 = vpack.c.b16 %v5762, %v5758
    %v6403 = vpack.c.b16 %v5767, %v5763
    %v6404 = vpack.c.b16 %v5768, %v5764
    %v6405 = vpack.c.b16 %v5769, %v5765
    %v6406 = vpack.c.b16 %v5770, %v5766
    %v6407 = vpack.c.b16 %v5775, %v5771
    %v6408 = vpack.c.b16 %v5776, %v5772
    %v6409 = vpack.c.b16 %v5777, %v5773
    %v6410 = vpack.c.b16 %v5778, %v5774
    %v6411 = vpack.c.b16 %v5783, %v5779
    %v6412 = vpack.c.b16 %v5784, %v5780
    %v6413 = vpack.c.b16 %v5785, %v5781
    %v6414 = vpack.c.b16 %v5786, %v5782
    %v6415 = vpack.c.b16 %v5791, %v5787
    %v6416 = vpack.c.b16 %v5792, %v5788
    %v6417 = vpack.c.b16 %v5793, %v5789
    %v6418 = vpack.c.b16 %v5794, %v5790
    %v6419 = vpack.c.b16 %v5799, %v5795
    %v6420 = vpack.c.b16 %v5800, %v5796
    %v6421 = vpack.c.b16 %v5801, %v5797
    %v6422 = vpack.c.b16 %v5802, %v5798
    %v6423 = vpack.c.b16 %v5807, %v5803
    %v6424 = vpack.c.b16 %v5808, %v5804
    %v6425 = vpack.c.b16 %v5809, %v5805
    %v6426 = vpack.c.b16 %v5810, %v5806
    %v6427 = vpack.c.b16 %v5815, %v5811
    %v6428 = vpack.c.b16 %v5816, %v5812
    %v6429 = vpack.c.b16 %v5817, %v5813
    %v6430 = vpack.c.b16 %v5818, %v5814
    %v6431 = vpack.c.b16 %v5823, %v5819
    %v6432 = vpack.c.b16 %v5824, %v5820
    %v6433 = vpack.c.b16 %v5825, %v5821
    %v6434 = vpack.c.b16 %v5826, %v5822
    %v6435 = vpack.c.b16 %v5831, %v5827
    %v6436 = vpack.c.b16 %v5832, %v5828
    %v6437 = vpack.c.b16 %v5833, %v5829
    %v6438 = vpack.c.b16 %v5834, %v5830
    %v6439 = vpack.c.b16 %v5839, %v5835
    %v6440 = vpack.c.b16 %v5840, %v5836
    %v6441 = vpack.c.b16 %v5841, %v5837
    %v6442 = vpack.c.b16 %v5842, %v5838
    %v6443 = vpack.c.b16 %v5847, %v5843
    %v6444 = vpack.c.b16 %v5848, %v5844
    %v6445 = vpack.c.b16 %v5849, %v5845
    %v6446 = vpack.c.b16 %v5850, %v5846
    %v6447 = vpack.c.b16 %v5855, %v5851
    %v6448 = vpack.c.b16 %v5856, %v5852
    %v6449 = vpack.c.b16 %v5857, %v5853
    %v6450 = vpack.c.b16 %v5858, %v5854
    %v6451 = vpack.c.b16 %v5863, %v5859
    %v6452 = vpack.c.b16 %v5864, %v5860
    %v6453 = vpack.c.b16 %v5865, %v5861
    %v6454 = vpack.c.b16 %v5866, %v5862
    %v6455 = vpack.c.b16 %v5871, %v5867
    %v6456 = vpack.c.b16 %v5872, %v5868
    %v6457 = vpack.c.b16 %v5873, %v5869
    %v6458 = vpack.c.b16 %v5874, %v5870
    %v6459 = vpack.c.b16 %v5879, %v5875
    %v6460 = vpack.c.b16 %v5880, %v5876
    %v6461 = vpack.c.b16 %v5881, %v5877
    %v6462 = vpack.c.b16 %v5882, %v5878
    %v6463 = vpack.c.b16 %v5887, %v5883
    %v6464 = vpack.c.b16 %v5888, %v5884
    %v6465 = vpack.c.b16 %v5889, %v5885
    %v6466 = vpack.c.b16 %v5890, %v5886
    %v6467 = vpack.c.b16 %v5895, %v5891
    %v6468 = vpack.c.b16 %v5896, %v5892
    %v6469 = vpack.c.b16 %v5897, %v5893
    %v6470 = vpack.c.b16 %v5898, %v5894
    %v6471 = vpack.c.b16 %v5903, %v5899
    %v6472 = vpack.c.b16 %v5904, %v5900
    %v6473 = vpack.c.b16 %v5905, %v5901
    %v6474 = vpack.c.b16 %v5906, %v5902
    %v6475 = vpack.c.b16 %v5911, %v5907
    %v6476 = vpack.c.b16 %v5912, %v5908
    %v6477 = vpack.c.b16 %v5913, %v5909
    %v6478 = vpack.c.b16 %v5914, %v5910
    %v6479 = vpack.c.b16 %v5919, %v5915
    %v6480 = vpack.c.b16 %v5920, %v5916
    %v6481 = vpack.c.b16 %v5921, %v5917
    %v6482 = vpack.c.b16 %v5922, %v5918
    %v6483 = vpack.c.b16 %v5927, %v5923
    %v6484 = vpack.c.b16 %v5928, %v5924
    %v6485 = vpack.c.b16 %v5929, %v5925
    %v6486 = vpack.c.b16 %v5930, %v5926
    %v6487 = vpack.c.b16 %v5935, %v5931
    %v6488 = vpack.c.b16 %v5936, %v5932
    %v6489 = vpack.c.b16 %v5937, %v5933
    %v6490 = vpack.c.b16 %v5938, %v5934
    %v6491 = vpack.c.b16 %v5943, %v5939
    %v6492 = vpack.c.b16 %v5944, %v5940
    %v6493 = vpack.c.b16 %v5945, %v5941
    %v6494 = vpack.c.b16 %v5946, %v5942
    %v6495 = vpack.c.b16 %v5951, %v5947
    %v6496 = vpack.c.b16 %v5952, %v5948
    %v6497 = vpack.c.b16 %v5953, %v5949
    %v6498 = vpack.c.b16 %v5954, %v5950
    %v6499 = vpack.c.b16 %v5959, %v5955
    %v6500 = vpack.c.b16 %v5960, %v5956
    %v6501 = vpack.c.b16 %v5961, %v5957
    %v6502 = vpack.c.b16 %v5962, %v5958
    %v6503 = vpack.c.b16 %v5967, %v5963
    %v6504 = vpack.c.b16 %v5968, %v5964
    %v6505 = vpack.c.b16 %v5969, %v5965
    %v6506 = vpack.c.b16 %v5970, %v5966
    %v6507 = vpack.c.b16 %v5975, %v5971
    %v6508 = vpack.c.b16 %v5976, %v5972
    %v6509 = vpack.c.b16 %v5977, %v5973
    %v6510 = vpack.c.b16 %v5978, %v5974
    %v6511 = vpack.c.b16 %v5983, %v5979
    %v6512 = vpack.c.b16 %v5984, %v5980
    %v6513 = vpack.c.b16 %v5985, %v5981
    %v6514 = vpack.c.b16 %v5986, %v5982
    %v6515 = vpack.c.b16 %v5991, %v5987
    %v6516 = vpack.c.b16 %v5992, %v5988
    %v6517 = vpack.c.b16 %v5993, %v5989
    %v6518 = vpack.c.b16 %v5994, %v5990
    %v6519 = vpack.c.b16 %v5999, %v5995
    %v6520 = vpack.c.b16 %v6000, %v5996
    %v6521 = vpack.c.b16 %v6001, %v5997
    %v6522 = vpack.c.b16 %v6002, %v5998
    %v6523 = vpack.c.b16 %v6007, %v6003
    %v6524 = vpack.c.b16 %v6008, %v6004
    %v6525 = vpack.c.b16 %v6009, %v6005
    %v6526 = vpack.c.b16 %v6010, %v6006
    %v6527 = vpack.c.b16 %v6015, %v6011
    %v6528 = vpack.c.b16 %v6016, %v6012
    %v6529 = vpack.c.b16 %v6017, %v6013
    %v6530 = vpack.c.b16 %v6018, %v6014
    %v6531 = vpack.c.b16 %v6023, %v6019
    %v6532 = vpack.c.b16 %v6024, %v6020
    %v6533 = vpack.c.b16 %v6025, %v6021
    %v6534 = vpack.c.b16 %v6026, %v6022
    %v6535 = vpack.c.b16 %v6031, %v6027
    %v6536 = vpack.c.b16 %v6032, %v6028
    %v6537 = vpack.c.b16 %v6033, %v6029
    %v6538 = vpack.c.b16 %v6034, %v6030
    %v6539 = vpack.c.b16 %v6039, %v6035
    %v6540 = vpack.c.b16 %v6040, %v6036
    %v6541 = vpack.c.b16 %v6041, %v6037
    %v6542 = vpack.c.b16 %v6042, %v6038
    %v6543 = vpack.c.b16 %v6047, %v6043
    %v6544 = vpack.c.b16 %v6048, %v6044
    %v6545 = vpack.c.b16 %v6049, %v6045
    %v6546 = vpack.c.b16 %v6050, %v6046
    %v6547 = vpack.c.b16 %v6055, %v6051
    %v6548 = vpack.c.b16 %v6056, %v6052
    %v6549 = vpack.c.b16 %v6057, %v6053
    %v6550 = vpack.c.b16 %v6058, %v6054
    %v6551 = vpack.c.b16 %v6063, %v6059
    %v6552 = vpack.c.b16 %v6064, %v6060
    %v6553 = vpack.c.b16 %v6065, %v6061
    %v6554 = vpack.c.b16 %v6066, %v6062
    %v6555 = vpack.c.b16 %v6071, %v6067
    %v6556 = vpack.c.b16 %v6072, %v6068
    %v6557 = vpack.c.b16 %v6073, %v6069
    %v6558 = vpack.c.b16 %v6074, %v6070
    %v6559 = vpack.c.b16 %v6079, %v6075
    %v6560 = vpack.c.b16 %v6080, %v6076
    %v6561 = vpack.c.b16 %v6081, %v6077
    %v6562 = vpack.c.b16 %v6082, %v6078
    %v6563 = vpack.c.b16 %v6087, %v6083
    %v6564 = vpack.c.b16 %v6088, %v6084
    %v6565 = vpack.c.b16 %v6089, %v6085
    %v6566 = vpack.c.b16 %v6090, %v6086
    %v6567 = vpack.c.b16 %v6095, %v6091
    %v6568 = vpack.c.b16 %v6096, %v6092
    %v6569 = vpack.c.b16 %v6097, %v6093
    %v6570 = vpack.c.b16 %v6098, %v6094
    %v6571 = vpack.c.b16 %v6103, %v6099
    %v6572 = vpack.c.b16 %v6104, %v6100
    %v6573 = vpack.c.b16 %v6105, %v6101
    %v6574 = vpack.c.b16 %v6106, %v6102
    %v6575 = vpack.c.b16 %v6111, %v6107
    %v6576 = vpack.c.b16 %v6112, %v6108
    %v6577 = vpack.c.b16 %v6113, %v6109
    %v6578 = vpack.c.b16 %v6114, %v6110
    %v6579 = vpack.c.b16 %v6119, %v6115
    %v6580 = vpack.c.b16 %v6120, %v6116
    %v6581 = vpack.c.b16 %v6121, %v6117
    %v6582 = vpack.c.b16 %v6122, %v6118
    %v6583 = vpack.c.b16 %v6127, %v6123
    %v6584 = vpack.c.b16 %v6128, %v6124
    %v6585 = vpack.c.b16 %v6129, %v6125
    %v6586 = vpack.c.b16 %v6130, %v6126
    %v6587 = vpack.c.b16 %v6135, %v6131
    %v6588 = vpack.c.b16 %v6136, %v6132
    %v6589 = vpack.c.b16 %v6137, %v6133
    %v6590 = vpack.c.b16 %v6138, %v6134
    %v6591 = vpack.c.b16 %v6143, %v6139
    %v6592 = vpack.c.b16 %v6144, %v6140
    %v6593 = vpack.c.b16 %v6145, %v6141
    %v6594 = vpack.c.b16 %v6146, %v6142
    %v6595 = vpack.c.b16 %v6151, %v6147
    %v6596 = vpack.c.b16 %v6152, %v6148
    %v6597 = vpack.c.b16 %v6153, %v6149
    %v6598 = vpack.c.b16 %v6154, %v6150
    %v6599 = vpack.c.b16 %v6159, %v6155
    %v6600 = vpack.c.b16 %v6160, %v6156
    %v6601 = vpack.c.b16 %v6161, %v6157
    %v6602 = vpack.c.b16 %v6162, %v6158
    %v6603 = vpack.c.b16 %v6167, %v6163
    %v6604 = vpack.c.b16 %v6168, %v6164
    %v6605 = vpack.c.b16 %v6169, %v6165
    %v6606 = vpack.c.b16 %v6170, %v6166
    %v6607 = vpack.c.b16 %v6175, %v6171
    %v6608 = vpack.c.b16 %v6176, %v6172
    %v6609 = vpack.c.b16 %v6177, %v6173
    %v6610 = vpack.c.b16 %v6178, %v6174
    %v6611 = vpack.c.b16 %v6183, %v6179
    %v6612 = vpack.c.b16 %v6184, %v6180
    %v6613 = vpack.c.b16 %v6185, %v6181
    %v6614 = vpack.c.b16 %v6186, %v6182
    %v6615 = vpack.c.b16 %v6191, %v6187
    %v6616 = vpack.c.b16 %v6192, %v6188
    %v6617 = vpack.c.b16 %v6193, %v6189
    %v6618 = vpack.c.b16 %v6194, %v6190
    %v6619 = vpack.c.b16 %v6199, %v6195
    %v6620 = vpack.c.b16 %v6200, %v6196
    %v6621 = vpack.c.b16 %v6201, %v6197
    %v6622 = vpack.c.b16 %v6202, %v6198
    %v6623 = vpack.c.b16 %v6207, %v6203
    %v6624 = vpack.c.b16 %v6208, %v6204
    %v6625 = vpack.c.b16 %v6209, %v6205
    %v6626 = vpack.c.b16 %v6210, %v6206
    %v6627 = vpack.c.b16 %v6215, %v6211
    %v6628 = vpack.c.b16 %v6216, %v6212
    %v6629 = vpack.c.b16 %v6217, %v6213
    %v6630 = vpack.c.b16 %v6218, %v6214
    %v6631 = vpack.c.b16 %v6223, %v6219
    %v6632 = vpack.c.b16 %v6224, %v6220
    %v6633 = vpack.c.b16 %v6225, %v6221
    %v6634 = vpack.c.b16 %v6226, %v6222
    %v6635 = vpack.c.b16 %v6231, %v6227
    %v6636 = vpack.c.b16 %v6232, %v6228
    %v6637 = vpack.c.b16 %v6233, %v6229
    %v6638 = vpack.c.b16 %v6234, %v6230
    %v6639 = vpack.c.b16 %v6239, %v6235
    %v6640 = vpack.c.b16 %v6240, %v6236
    %v6641 = vpack.c.b16 %v6241, %v6237
    %v6642 = vpack.c.b16 %v6242, %v6238
    %v6643 = vpack.c.b16 %v6247, %v6243
    %v6644 = vpack.c.b16 %v6248, %v6244
    %v6645 = vpack.c.b16 %v6249, %v6245
    %v6646 = vpack.c.b16 %v6250, %v6246
    %v6647 = vpack.c.b16 %v6255, %v6251
    %v6648 = vpack.c.b16 %v6256, %v6252
    %v6649 = vpack.c.b16 %v6257, %v6253
    %v6650 = vpack.c.b16 %v6258, %v6254
    %v6651 = vpack.c.b16 %v6263, %v6259
    %v6652 = vpack.c.b16 %v6264, %v6260
    %v6653 = vpack.c.b16 %v6265, %v6261
    %v6654 = vpack.c.b16 %v6266, %v6262
    %v6655 = vpack.c.b16 %v6271, %v6267
    %v6656 = vpack.c.b16 %v6272, %v6268
    %v6657 = vpack.c.b16 %v6273, %v6269
    %v6658 = vpack.c.b16 %v6274, %v6270
    %7043 = vmatpush.bf16.msra.mxu0 %v6303
    %7044 = vmatpush.bf16.msra.mxu0 %v6299
    %7045 = vmatpush.bf16.msra.mxu0 %v6295
    %7046 = vmatpush.bf16.msra.mxu0 %v6291
    %7047 = vmatpush.bf16.msra.mxu0 %v6287
    %7048 = vmatpush.bf16.msra.mxu0 %v6283
    %7049 = vmatpush.bf16.msra.mxu0 %v6279
    %7050 = vmatpush.bf16.msra.mxu0 %v6275
    %7051 = vmatmul.bf16.gmra.mxu0 %v5101
    %v7052 = vpop.f32.mrf.mxu0
    %v7053 = vadd.f32 %v5115, %v7052
    %v7054 = vpop.f32.mrf.mxu0
    %7055 = vdwg.mxu0
    %7056 = vmatpush.bf16.msra.mxu0 %v6335
    %7057 = vmatpush.bf16.msra.mxu0 %v6331
    %7058 = vmatpush.bf16.msra.mxu0 %v6327
    %7059 = vmatpush.bf16.msra.mxu0 %v6323
    %7060 = vmatpush.bf16.msra.mxu0 %v6319
    %7061 = vmatpush.bf16.msra.mxu0 %v6315
    %7062 = vmatpush.bf16.msra.mxu0 %v6311
    %7063 = vmatpush.bf16.msra.mxu0 %v6307
    %7064 = vmatmul.bf16.gmra.mxu0 %v5102
    %v7065 = vpop.f32.mrf.mxu0
    %v7066 = vadd.f32 %v7053, %v7065
    %v7067 = vpop.f32.mrf.mxu0
    %7068 = vdwg.mxu0
    %7069 = vmatpush.bf16.msra.mxu0 %v6367
    %7070 = vmatpush.bf16.msra.mxu0 %v6363
    %7071 = vmatpush.bf16.msra.mxu0 %v6359
    %7072 = vmatpush.bf16.msra.mxu0 %v6355
    %7073 = vmatpush.bf16.msra.mxu0 %v6351
    %7074 = vmatpush.bf16.msra.mxu0 %v6347
    %7075 = vmatpush.bf16.msra.mxu0 %v6343
    %7076 = vmatpush.bf16.msra.mxu0 %v6339
    %7077 = vmatmul.bf16.gmra.mxu0 %v5103
    %v7078 = vpop.f32.mrf.mxu0
    %v7079 = vadd.f32 %v7066, %v7078
    %v7080 = vpop.f32.mrf.mxu0
    %7081 = vdwg.mxu0
    %7082 = vmatpush.bf16.msra.mxu0 %v6399
    %7083 = vmatpush.bf16.msra.mxu0 %v6395
    %7084 = vmatpush.bf16.msra.mxu0 %v6391
    %7085 = vmatpush.bf16.msra.mxu0 %v6387
    %7086 = vmatpush.bf16.msra.mxu0 %v6383
    %7087 = vmatpush.bf16.msra.mxu0 %v6379
    %7088 = vmatpush.bf16.msra.mxu0 %v6375
    %7089 = vmatpush.bf16.msra.mxu0 %v6371
    %7090 = vmatmul.bf16.gmra.mxu0 %v5104
    %v7091 = vpop.f32.mrf.mxu0
    %v7092 = vadd.f32 %v7079, %v7091
    %v7093 = vpop.f32.mrf.mxu0
    %7094 = vdwg.mxu0
    %7095 = vmatpush.bf16.msra.mxu0 %v6431
    %7096 = vmatpush.bf16.msra.mxu0 %v6427
    %7097 = vmatpush.bf16.msra.mxu0 %v6423
    %7098 = vmatpush.bf16.msra.mxu0 %v6419
    %7099 = vmatpush.bf16.msra.mxu0 %v6415
    %7100 = vmatpush.bf16.msra.mxu0 %v6411
    %7101 = vmatpush.bf16.msra.mxu0 %v6407
    %7102 = vmatpush.bf16.msra.mxu0 %v6403
    %7103 = vmatmul.bf16.gmra.mxu0 %v5105
    %v7104 = vpop.f32.mrf.mxu0
    %v7105 = vadd.f32 %v7092, %v7104
    %v7106 = vpop.f32.mrf.mxu0
    %7107 = vdwg.mxu0
    %7108 = vmatpush.bf16.msra.mxu0 %v6463
    %7109 = vmatpush.bf16.msra.mxu0 %v6459
    %7110 = vmatpush.bf16.msra.mxu0 %v6455
    %7111 = vmatpush.bf16.msra.mxu0 %v6451
    %7112 = vmatpush.bf16.msra.mxu0 %v6447
    %7113 = vmatpush.bf16.msra.mxu0 %v6443
    %7114 = vmatpush.bf16.msra.mxu0 %v6439
    %7115 = vmatpush.bf16.msra.mxu0 %v6435
    %7116 = vmatmul.bf16.gmra.mxu0 %v5106
    %v7117 = vpop.f32.mrf.mxu0
    %v7118 = vadd.f32 %v7105, %v7117
    %v7119 = vpop.f32.mrf.mxu0
    %7120 = vdwg.mxu0
    %7121 = vmatpush.bf16.msra.mxu0 %v6495
    %7122 = vmatpush.bf16.msra.mxu0 %v6491
    %7123 = vmatpush.bf16.msra.mxu0 %v6487
    %7124 = vmatpush.bf16.msra.mxu0 %v6483
    %7125 = vmatpush.bf16.msra.mxu0 %v6479
    %7126 = vmatpush.bf16.msra.mxu0 %v6475
    %7127 = vmatpush.bf16.msra.mxu0 %v6471
    %7128 = vmatpush.bf16.msra.mxu0 %v6467
    %7129 = vmatmul.bf16.gmra.mxu0 %v5107
    %v7130 = vpop.f32.mrf.mxu0
    %v7131 = vadd.f32 %v7118, %v7130
    %v7132 = vpop.f32.mrf.mxu0
    %7133 = vdwg.mxu0
    %7134 = vmatpush.bf16.msra.mxu0 %v6527
    %7135 = vmatpush.bf16.msra.mxu0 %v6523
    %7136 = vmatpush.bf16.msra.mxu0 %v6519
    %7137 = vmatpush.bf16.msra.mxu0 %v6515
    %7138 = vmatpush.bf16.msra.mxu0 %v6511
    %7139 = vmatpush.bf16.msra.mxu0 %v6507
    %7140 = vmatpush.bf16.msra.mxu0 %v6503
    %7141 = vmatpush.bf16.msra.mxu0 %v6499
    %7142 = vmatmul.bf16.gmra.mxu0 %v5108
    %v7143 = vpop.f32.mrf.mxu0
    %v7144 = vadd.f32 %v7131, %v7143
    %v7145 = vpop.f32.mrf.mxu0
    %7146 = vdwg.mxu0
    %7147 = vmatpush.bf16.msra.mxu0 %v6559
    %7148 = vmatpush.bf16.msra.mxu0 %v6555
    %7149 = vmatpush.bf16.msra.mxu0 %v6551
    %7150 = vmatpush.bf16.msra.mxu0 %v6547
    %7151 = vmatpush.bf16.msra.mxu0 %v6543
    %7152 = vmatpush.bf16.msra.mxu0 %v6539
    %7153 = vmatpush.bf16.msra.mxu0 %v6535
    %7154 = vmatpush.bf16.msra.mxu0 %v6531
    %7155 = vmatmul.bf16.gmra.mxu0 %v5109
    %v7156 = vpop.f32.mrf.mxu0
    %v7157 = vadd.f32 %v7144, %v7156
    %v7158 = vpop.f32.mrf.mxu0
    %7159 = vdwg.mxu0
    %7160 = vmatpush.bf16.msra.mxu0 %v6591
    %7161 = vmatpush.bf16.msra.mxu0 %v6587
    %7162 = vmatpush.bf16.msra.mxu0 %v6583
    %7163 = vmatpush.bf16.msra.mxu0 %v6579
    %7164 = vmatpush.bf16.msra.mxu0 %v6575
    %7165 = vmatpush.bf16.msra.mxu0 %v6571
    %7166 = vmatpush.bf16.msra.mxu0 %v6567
    %7167 = vmatpush.bf16.msra.mxu0 %v6563
    %7168 = vmatmul.bf16.gmra.mxu0 %v5110
    %v7169 = vpop.f32.mrf.mxu0
    %v7170 = vadd.f32 %v7157, %v7169
    %v7171 = vpop.f32.mrf.mxu0
    %7172 = vdwg.mxu0
    %7173 = vmatpush.bf16.msra.mxu0 %v6623
    %7174 = vmatpush.bf16.msra.mxu0 %v6619
    %7175 = vmatpush.bf16.msra.mxu0 %v6615
    %7176 = vmatpush.bf16.msra.mxu0 %v6611
    %7177 = vmatpush.bf16.msra.mxu0 %v6607
    %7178 = vmatpush.bf16.msra.mxu0 %v6603
    %7179 = vmatpush.bf16.msra.mxu0 %v6599
    %7180 = vmatpush.bf16.msra.mxu0 %v6595
    %7181 = vmatmul.bf16.gmra.mxu0 %v5111
    %v7182 = vpop.f32.mrf.mxu0
    %v7183 = vadd.f32 %v7170, %v7182
    %v7184 = vpop.f32.mrf.mxu0
    %7185 = vdwg.mxu0
    %7186 = vmatpush.bf16.msra.mxu0 %v6655
    %7187 = vmatpush.bf16.msra.mxu0 %v6651
    %7188 = vmatpush.bf16.msra.mxu0 %v6647
    %7189 = vmatpush.bf16.msra.mxu0 %v6643
    %7190 = vmatpush.bf16.msra.mxu0 %v6639
    %7191 = vmatpush.bf16.msra.mxu0 %v6635
    %7192 = vmatpush.bf16.msra.mxu0 %v6631
    %7193 = vmatpush.bf16.msra.mxu0 %v6627
    %7194 = vmatmul.bf16.gmra.mxu0 %v5112
    %v7195 = vpop.f32.mrf.mxu0
    %v7196 = vadd.f32 %v7183, %v7195
    %v7197 = vpop.f32.mrf.mxu0
    %7198 = vdwg.mxu0
    %7199 = vmatpush.bf16.msra.mxu0 %v6304
    %7200 = vmatpush.bf16.msra.mxu0 %v6300
    %7201 = vmatpush.bf16.msra.mxu0 %v6296
    %7202 = vmatpush.bf16.msra.mxu0 %v6292
    %7203 = vmatpush.bf16.msra.mxu0 %v6288
    %7204 = vmatpush.bf16.msra.mxu0 %v6284
    %7205 = vmatpush.bf16.msra.mxu0 %v6280
    %7206 = vmatpush.bf16.msra.mxu0 %v6276
    %7207 = vmatmul.bf16.gmra.mxu0 %v5101
    %v7208 = vpop.f32.mrf.mxu0
    %v7209 = vadd.f32 %v5116, %v7208
    %v7210 = vpop.f32.mrf.mxu0
    %7211 = vdwg.mxu0
    %7212 = vmatpush.bf16.msra.mxu0 %v6336
    %7213 = vmatpush.bf16.msra.mxu0 %v6332
    %7214 = vmatpush.bf16.msra.mxu0 %v6328
    %7215 = vmatpush.bf16.msra.mxu0 %v6324
    %7216 = vmatpush.bf16.msra.mxu0 %v6320
    %7217 = vmatpush.bf16.msra.mxu0 %v6316
    %7218 = vmatpush.bf16.msra.mxu0 %v6312
    %7219 = vmatpush.bf16.msra.mxu0 %v6308
    %7220 = vmatmul.bf16.gmra.mxu0 %v5102
    %v7221 = vpop.f32.mrf.mxu0
    %v7222 = vadd.f32 %v7209, %v7221
    %v7223 = vpop.f32.mrf.mxu0
    %7224 = vdwg.mxu0
    %7225 = vmatpush.bf16.msra.mxu0 %v6368
    %7226 = vmatpush.bf16.msra.mxu0 %v6364
    %7227 = vmatpush.bf16.msra.mxu0 %v6360
    %7228 = vmatpush.bf16.msra.mxu0 %v6356
    %7229 = vmatpush.bf16.msra.mxu0 %v6352
    %7230 = vmatpush.bf16.msra.mxu0 %v6348
    %7231 = vmatpush.bf16.msra.mxu0 %v6344
    %7232 = vmatpush.bf16.msra.mxu0 %v6340
    %7233 = vmatmul.bf16.gmra.mxu0 %v5103
    %v7234 = vpop.f32.mrf.mxu0
    %v7235 = vadd.f32 %v7222, %v7234
    %v7236 = vpop.f32.mrf.mxu0
    %7237 = vdwg.mxu0
    %7238 = vmatpush.bf16.msra.mxu0 %v6400
    %7239 = vmatpush.bf16.msra.mxu0 %v6396
    %7240 = vmatpush.bf16.msra.mxu0 %v6392
    %7241 = vmatpush.bf16.msra.mxu0 %v6388
    %7242 = vmatpush.bf16.msra.mxu0 %v6384
    %7243 = vmatpush.bf16.msra.mxu0 %v6380
    %7244 = vmatpush.bf16.msra.mxu0 %v6376
    %7245 = vmatpush.bf16.msra.mxu0 %v6372
    %7246 = vmatmul.bf16.gmra.mxu0 %v5104
    %v7247 = vpop.f32.mrf.mxu0
    %v7248 = vadd.f32 %v7235, %v7247
    %v7249 = vpop.f32.mrf.mxu0
    %7250 = vdwg.mxu0
    %7251 = vmatpush.bf16.msra.mxu0 %v6432
    %7252 = vmatpush.bf16.msra.mxu0 %v6428
    %7253 = vmatpush.bf16.msra.mxu0 %v6424
    %7254 = vmatpush.bf16.msra.mxu0 %v6420
    %7255 = vmatpush.bf16.msra.mxu0 %v6416
    %7256 = vmatpush.bf16.msra.mxu0 %v6412
    %7257 = vmatpush.bf16.msra.mxu0 %v6408
    %7258 = vmatpush.bf16.msra.mxu0 %v6404
    %7259 = vmatmul.bf16.gmra.mxu0 %v5105
    %v7260 = vpop.f32.mrf.mxu0
    %v7261 = vadd.f32 %v7248, %v7260
    %v7262 = vpop.f32.mrf.mxu0
    %7263 = vdwg.mxu0
    %7264 = vmatpush.bf16.msra.mxu0 %v6464
    %7265 = vmatpush.bf16.msra.mxu0 %v6460
    %7266 = vmatpush.bf16.msra.mxu0 %v6456
    %7267 = vmatpush.bf16.msra.mxu0 %v6452
    %7268 = vmatpush.bf16.msra.mxu0 %v6448
    %7269 = vmatpush.bf16.msra.mxu0 %v6444
    %7270 = vmatpush.bf16.msra.mxu0 %v6440
    %7271 = vmatpush.bf16.msra.mxu0 %v6436
    %7272 = vmatmul.bf16.gmra.mxu0 %v5106
    %v7273 = vpop.f32.mrf.mxu0
    %v7274 = vadd.f32 %v7261, %v7273
    %v7275 = vpop.f32.mrf.mxu0
    %7276 = vdwg.mxu0
    %7277 = vmatpush.bf16.msra.mxu0 %v6496
    %7278 = vmatpush.bf16.msra.mxu0 %v6492
    %7279 = vmatpush.bf16.msra.mxu0 %v6488
    %7280 = vmatpush.bf16.msra.mxu0 %v6484
    %7281 = vmatpush.bf16.msra.mxu0 %v6480
    %7282 = vmatpush.bf16.msra.mxu0 %v6476
    %7283 = vmatpush.bf16.msra.mxu0 %v6472
    %7284 = vmatpush.bf16.msra.mxu0 %v6468
    %7285 = vmatmul.bf16.gmra.mxu0 %v5107
    %v7286 = vpop.f32.mrf.mxu0
    %v7287 = vadd.f32 %v7274, %v7286
    %v7288 = vpop.f32.mrf.mxu0
    %7289 = vdwg.mxu0
    %7290 = vmatpush.bf16.msra.mxu0 %v6528
    %7291 = vmatpush.bf16.msra.mxu0 %v6524
    %7292 = vmatpush.bf16.msra.mxu0 %v6520
    %7293 = vmatpush.bf16.msra.mxu0 %v6516
    %7294 = vmatpush.bf16.msra.mxu0 %v6512
    %7295 = vmatpush.bf16.msra.mxu0 %v6508
    %7296 = vmatpush.bf16.msra.mxu0 %v6504
    %7297 = vmatpush.bf16.msra.mxu0 %v6500
    %7298 = vmatmul.bf16.gmra.mxu0 %v5108
    %v7299 = vpop.f32.mrf.mxu0
    %v7300 = vadd.f32 %v7287, %v7299
    %v7301 = vpop.f32.mrf.mxu0
    %7302 = vdwg.mxu0
    %7303 = vmatpush.bf16.msra.mxu0 %v6560
    %7304 = vmatpush.bf16.msra.mxu0 %v6556
    %7305 = vmatpush.bf16.msra.mxu0 %v6552
    %7306 = vmatpush.bf16.msra.mxu0 %v6548
    %7307 = vmatpush.bf16.msra.mxu0 %v6544
    %7308 = vmatpush.bf16.msra.mxu0 %v6540
    %7309 = vmatpush.bf16.msra.mxu0 %v6536
    %7310 = vmatpush.bf16.msra.mxu0 %v6532
    %7311 = vmatmul.bf16.gmra.mxu0 %v5109
    %v7312 = vpop.f32.mrf.mxu0
    %v7313 = vadd.f32 %v7300, %v7312
    %v7314 = vpop.f32.mrf.mxu0
    %7315 = vdwg.mxu0
    %7316 = vmatpush.bf16.msra.mxu0 %v6592
    %7317 = vmatpush.bf16.msra.mxu0 %v6588
    %7318 = vmatpush.bf16.msra.mxu0 %v6584
    %7319 = vmatpush.bf16.msra.mxu0 %v6580
    %7320 = vmatpush.bf16.msra.mxu0 %v6576
    %7321 = vmatpush.bf16.msra.mxu0 %v6572
    %7322 = vmatpush.bf16.msra.mxu0 %v6568
    %7323 = vmatpush.bf16.msra.mxu0 %v6564
    %7324 = vmatmul.bf16.gmra.mxu0 %v5110
    %v7325 = vpop.f32.mrf.mxu0
    %v7326 = vadd.f32 %v7313, %v7325
    %v7327 = vpop.f32.mrf.mxu0
    %7328 = vdwg.mxu0
    %7329 = vmatpush.bf16.msra.mxu0 %v6624
    %7330 = vmatpush.bf16.msra.mxu0 %v6620
    %7331 = vmatpush.bf16.msra.mxu0 %v6616
    %7332 = vmatpush.bf16.msra.mxu0 %v6612
    %7333 = vmatpush.bf16.msra.mxu0 %v6608
    %7334 = vmatpush.bf16.msra.mxu0 %v6604
    %7335 = vmatpush.bf16.msra.mxu0 %v6600
    %7336 = vmatpush.bf16.msra.mxu0 %v6596
    %7337 = vmatmul.bf16.gmra.mxu0 %v5111
    %v7338 = vpop.f32.mrf.mxu0
    %v7339 = vadd.f32 %v7326, %v7338
    %v7340 = vpop.f32.mrf.mxu0
    %7341 = vdwg.mxu0
    %7342 = vmatpush.bf16.msra.mxu0 %v6656
    %7343 = vmatpush.bf16.msra.mxu0 %v6652
    %7344 = vmatpush.bf16.msra.mxu0 %v6648
    %7345 = vmatpush.bf16.msra.mxu0 %v6644
    %7346 = vmatpush.bf16.msra.mxu0 %v6640
    %7347 = vmatpush.bf16.msra.mxu0 %v6636
    %7348 = vmatpush.bf16.msra.mxu0 %v6632
    %7349 = vmatpush.bf16.msra.mxu0 %v6628
    %7350 = vmatmul.bf16.gmra.mxu0 %v5112
    %v7351 = vpop.f32.mrf.mxu0
    %v7352 = vadd.f32 %v7339, %v7351
    %v7353 = vpop.f32.mrf.mxu0
    %7354 = vdwg.mxu0
    %7355 = vmatpush.bf16.msra.mxu0 %v6305
    %7356 = vmatpush.bf16.msra.mxu0 %v6301
    %7357 = vmatpush.bf16.msra.mxu0 %v6297
    %7358 = vmatpush.bf16.msra.mxu0 %v6293
    %7359 = vmatpush.bf16.msra.mxu0 %v6289
    %7360 = vmatpush.bf16.msra.mxu0 %v6285
    %7361 = vmatpush.bf16.msra.mxu0 %v6281
    %7362 = vmatpush.bf16.msra.mxu0 %v6277
    %7363 = vmatmul.bf16.gmra.mxu0 %v5101
    %v7364 = vpop.f32.mrf.mxu0
    %v7365 = vadd.f32 %v5117, %v7364
    %v7366 = vpop.f32.mrf.mxu0
    %7367 = vdwg.mxu0
    %7368 = vmatpush.bf16.msra.mxu0 %v6337
    %7369 = vmatpush.bf16.msra.mxu0 %v6333
    %7370 = vmatpush.bf16.msra.mxu0 %v6329
    %7371 = vmatpush.bf16.msra.mxu0 %v6325
    %7372 = vmatpush.bf16.msra.mxu0 %v6321
    %7373 = vmatpush.bf16.msra.mxu0 %v6317
    %7374 = vmatpush.bf16.msra.mxu0 %v6313
    %7375 = vmatpush.bf16.msra.mxu0 %v6309
    %7376 = vmatmul.bf16.gmra.mxu0 %v5102
    %v7377 = vpop.f32.mrf.mxu0
    %v7378 = vadd.f32 %v7365, %v7377
    %v7379 = vpop.f32.mrf.mxu0
    %7380 = vdwg.mxu0
    %7381 = vmatpush.bf16.msra.mxu0 %v6369
    %7382 = vmatpush.bf16.msra.mxu0 %v6365
    %7383 = vmatpush.bf16.msra.mxu0 %v6361
    %7384 = vmatpush.bf16.msra.mxu0 %v6357
    %7385 = vmatpush.bf16.msra.mxu0 %v6353
    %7386 = vmatpush.bf16.msra.mxu0 %v6349
    %7387 = vmatpush.bf16.msra.mxu0 %v6345
    %7388 = vmatpush.bf16.msra.mxu0 %v6341
    %7389 = vmatmul.bf16.gmra.mxu0 %v5103
    %v7390 = vpop.f32.mrf.mxu0
    %v7391 = vadd.f32 %v7378, %v7390
    %v7392 = vpop.f32.mrf.mxu0
    %7393 = vdwg.mxu0
    %7394 = vmatpush.bf16.msra.mxu0 %v6401
    %7395 = vmatpush.bf16.msra.mxu0 %v6397
    %7396 = vmatpush.bf16.msra.mxu0 %v6393
    %7397 = vmatpush.bf16.msra.mxu0 %v6389
    %7398 = vmatpush.bf16.msra.mxu0 %v6385
    %7399 = vmatpush.bf16.msra.mxu0 %v6381
    %7400 = vmatpush.bf16.msra.mxu0 %v6377
    %7401 = vmatpush.bf16.msra.mxu0 %v6373
    %7402 = vmatmul.bf16.gmra.mxu0 %v5104
    %v7403 = vpop.f32.mrf.mxu0
    %v7404 = vadd.f32 %v7391, %v7403
    %v7405 = vpop.f32.mrf.mxu0
    %7406 = vdwg.mxu0
    %7407 = vmatpush.bf16.msra.mxu0 %v6433
    %7408 = vmatpush.bf16.msra.mxu0 %v6429
    %7409 = vmatpush.bf16.msra.mxu0 %v6425
    %7410 = vmatpush.bf16.msra.mxu0 %v6421
    %7411 = vmatpush.bf16.msra.mxu0 %v6417
    %7412 = vmatpush.bf16.msra.mxu0 %v6413
    %7413 = vmatpush.bf16.msra.mxu0 %v6409
    %7414 = vmatpush.bf16.msra.mxu0 %v6405
    %7415 = vmatmul.bf16.gmra.mxu0 %v5105
    %v7416 = vpop.f32.mrf.mxu0
    %v7417 = vadd.f32 %v7404, %v7416
    %v7418 = vpop.f32.mrf.mxu0
    %7419 = vdwg.mxu0
    %7420 = vmatpush.bf16.msra.mxu0 %v6465
    %7421 = vmatpush.bf16.msra.mxu0 %v6461
    %7422 = vmatpush.bf16.msra.mxu0 %v6457
    %7423 = vmatpush.bf16.msra.mxu0 %v6453
    %7424 = vmatpush.bf16.msra.mxu0 %v6449
    %7425 = vmatpush.bf16.msra.mxu0 %v6445
    %7426 = vmatpush.bf16.msra.mxu0 %v6441
    %7427 = vmatpush.bf16.msra.mxu0 %v6437
    %7428 = vmatmul.bf16.gmra.mxu0 %v5106
    %v7429 = vpop.f32.mrf.mxu0
    %v7430 = vadd.f32 %v7417, %v7429
    %v7431 = vpop.f32.mrf.mxu0
    %7432 = vdwg.mxu0
    %7433 = vmatpush.bf16.msra.mxu0 %v6497
    %7434 = vmatpush.bf16.msra.mxu0 %v6493
    %7435 = vmatpush.bf16.msra.mxu0 %v6489
    %7436 = vmatpush.bf16.msra.mxu0 %v6485
    %7437 = vmatpush.bf16.msra.mxu0 %v6481
    %7438 = vmatpush.bf16.msra.mxu0 %v6477
    %7439 = vmatpush.bf16.msra.mxu0 %v6473
    %7440 = vmatpush.bf16.msra.mxu0 %v6469
    %7441 = vmatmul.bf16.gmra.mxu0 %v5107
    %v7442 = vpop.f32.mrf.mxu0
    %v7443 = vadd.f32 %v7430, %v7442
    %v7444 = vpop.f32.mrf.mxu0
    %7445 = vdwg.mxu0
    %7446 = vmatpush.bf16.msra.mxu0 %v6529
    %7447 = vmatpush.bf16.msra.mxu0 %v6525
    %7448 = vmatpush.bf16.msra.mxu0 %v6521
    %7449 = vmatpush.bf16.msra.mxu0 %v6517
    %7450 = vmatpush.bf16.msra.mxu0 %v6513
    %7451 = vmatpush.bf16.msra.mxu0 %v6509
    %7452 = vmatpush.bf16.msra.mxu0 %v6505
    %7453 = vmatpush.bf16.msra.mxu0 %v6501
    %7454 = vmatmul.bf16.gmra.mxu0 %v5108
    %v7455 = vpop.f32.mrf.mxu0
    %v7456 = vadd.f32 %v7443, %v7455
    %v7457 = vpop.f32.mrf.mxu0
    %7458 = vdwg.mxu0
    %7459 = vmatpush.bf16.msra.mxu0 %v6561
    %7460 = vmatpush.bf16.msra.mxu0 %v6557
    %7461 = vmatpush.bf16.msra.mxu0 %v6553
    %7462 = vmatpush.bf16.msra.mxu0 %v6549
    %7463 = vmatpush.bf16.msra.mxu0 %v6545
    %7464 = vmatpush.bf16.msra.mxu0 %v6541
    %7465 = vmatpush.bf16.msra.mxu0 %v6537
    %7466 = vmatpush.bf16.msra.mxu0 %v6533
    %7467 = vmatmul.bf16.gmra.mxu0 %v5109
    %v7468 = vpop.f32.mrf.mxu0
    %v7469 = vadd.f32 %v7456, %v7468
    %v7470 = vpop.f32.mrf.mxu0
    %7471 = vdwg.mxu0
    %7472 = vmatpush.bf16.msra.mxu0 %v6593
    %7473 = vmatpush.bf16.msra.mxu0 %v6589
    %7474 = vmatpush.bf16.msra.mxu0 %v6585
    %7475 = vmatpush.bf16.msra.mxu0 %v6581
    %7476 = vmatpush.bf16.msra.mxu0 %v6577
    %7477 = vmatpush.bf16.msra.mxu0 %v6573
    %7478 = vmatpush.bf16.msra.mxu0 %v6569
    %7479 = vmatpush.bf16.msra.mxu0 %v6565
    %7480 = vmatmul.bf16.gmra.mxu0 %v5110
    %v7481 = vpop.f32.mrf.mxu0
    %v7482 = vadd.f32 %v7469, %v7481
    %v7483 = vpop.f32.mrf.mxu0
    %7484 = vdwg.mxu0
    %7485 = vmatpush.bf16.msra.mxu0 %v6625
    %7486 = vmatpush.bf16.msra.mxu0 %v6621
    %7487 = vmatpush.bf16.msra.mxu0 %v6617
    %7488 = vmatpush.bf16.msra.mxu0 %v6613
    %7489 = vmatpush.bf16.msra.mxu0 %v6609
    %7490 = vmatpush.bf16.msra.mxu0 %v6605
    %7491 = vmatpush.bf16.msra.mxu0 %v6601
    %7492 = vmatpush.bf16.msra.mxu0 %v6597
    %7493 = vmatmul.bf16.gmra.mxu0 %v5111
    %v7494 = vpop.f32.mrf.mxu0
    %v7495 = vadd.f32 %v7482, %v7494
    %v7496 = vpop.f32.mrf.mxu0
    %7497 = vdwg.mxu0
    %7498 = vmatpush.bf16.msra.mxu0 %v6657
    %7499 = vmatpush.bf16.msra.mxu0 %v6653
    %7500 = vmatpush.bf16.msra.mxu0 %v6649
    %7501 = vmatpush.bf16.msra.mxu0 %v6645
    %7502 = vmatpush.bf16.msra.mxu0 %v6641
    %7503 = vmatpush.bf16.msra.mxu0 %v6637
    %7504 = vmatpush.bf16.msra.mxu0 %v6633
    %7505 = vmatpush.bf16.msra.mxu0 %v6629
    %7506 = vmatmul.bf16.gmra.mxu0 %v5112
    %v7507 = vpop.f32.mrf.mxu0
    %v7508 = vadd.f32 %v7495, %v7507
    %v7509 = vpop.f32.mrf.mxu0
    %7510 = vdwg.mxu0
    %7511 = vmatpush.bf16.msra.mxu0 %v6306
    %7512 = vmatpush.bf16.msra.mxu0 %v6302
    %7513 = vmatpush.bf16.msra.mxu0 %v6298
    %7514 = vmatpush.bf16.msra.mxu0 %v6294
    %7515 = vmatpush.bf16.msra.mxu0 %v6290
    %7516 = vmatpush.bf16.msra.mxu0 %v6286
    %7517 = vmatpush.bf16.msra.mxu0 %v6282
    %7518 = vmatpush.bf16.msra.mxu0 %v6278
    %7519 = vmatmul.bf16.gmra.mxu0 %v5101
    %v7520 = vpop.f32.mrf.mxu0
    %v7521 = vadd.f32 %v5118, %v7520
    %v7522 = vpop.f32.mrf.mxu0
    %7523 = vdwg.mxu0
    %7524 = vmatpush.bf16.msra.mxu0 %v6338
    %7525 = vmatpush.bf16.msra.mxu0 %v6334
    %7526 = vmatpush.bf16.msra.mxu0 %v6330
    %7527 = vmatpush.bf16.msra.mxu0 %v6326
    %7528 = vmatpush.bf16.msra.mxu0 %v6322
    %7529 = vmatpush.bf16.msra.mxu0 %v6318
    %7530 = vmatpush.bf16.msra.mxu0 %v6314
    %7531 = vmatpush.bf16.msra.mxu0 %v6310
    %7532 = vmatmul.bf16.gmra.mxu0 %v5102
    %v7533 = vpop.f32.mrf.mxu0
    %v7534 = vadd.f32 %v7521, %v7533
    %v7535 = vpop.f32.mrf.mxu0
    %7536 = vdwg.mxu0
    %7537 = vmatpush.bf16.msra.mxu0 %v6370
    %7538 = vmatpush.bf16.msra.mxu0 %v6366
    %7539 = vmatpush.bf16.msra.mxu0 %v6362
    %7540 = vmatpush.bf16.msra.mxu0 %v6358
    %7541 = vmatpush.bf16.msra.mxu0 %v6354
    %7542 = vmatpush.bf16.msra.mxu0 %v6350
    %7543 = vmatpush.bf16.msra.mxu0 %v6346
    %7544 = vmatpush.bf16.msra.mxu0 %v6342
    %7545 = vmatmul.bf16.gmra.mxu0 %v5103
    %v7546 = vpop.f32.mrf.mxu0
    %v7547 = vadd.f32 %v7534, %v7546
    %v7548 = vpop.f32.mrf.mxu0
    %7549 = vdwg.mxu0
    %7550 = vmatpush.bf16.msra.mxu0 %v6402
    %7551 = vmatpush.bf16.msra.mxu0 %v6398
    %7552 = vmatpush.bf16.msra.mxu0 %v6394
    %7553 = vmatpush.bf16.msra.mxu0 %v6390
    %7554 = vmatpush.bf16.msra.mxu0 %v6386
    %7555 = vmatpush.bf16.msra.mxu0 %v6382
    %7556 = vmatpush.bf16.msra.mxu0 %v6378
    %7557 = vmatpush.bf16.msra.mxu0 %v6374
    %7558 = vmatmul.bf16.gmra.mxu0 %v5104
    %v7559 = vpop.f32.mrf.mxu0
    %v7560 = vadd.f32 %v7547, %v7559
    %v7561 = vpop.f32.mrf.mxu0
    %7562 = vdwg.mxu0
    %7563 = vmatpush.bf16.msra.mxu0 %v6434
    %7564 = vmatpush.bf16.msra.mxu0 %v6430
    %7565 = vmatpush.bf16.msra.mxu0 %v6426
    %7566 = vmatpush.bf16.msra.mxu0 %v6422
    %7567 = vmatpush.bf16.msra.mxu0 %v6418
    %7568 = vmatpush.bf16.msra.mxu0 %v6414
    %7569 = vmatpush.bf16.msra.mxu0 %v6410
    %7570 = vmatpush.bf16.msra.mxu0 %v6406
    %7571 = vmatmul.bf16.gmra.mxu0 %v5105
    %v7572 = vpop.f32.mrf.mxu0
    %v7573 = vadd.f32 %v7560, %v7572
    %v7574 = vpop.f32.mrf.mxu0
    %7575 = vdwg.mxu0
    %7576 = vmatpush.bf16.msra.mxu0 %v6466
    %7577 = vmatpush.bf16.msra.mxu0 %v6462
    %7578 = vmatpush.bf16.msra.mxu0 %v6458
    %7579 = vmatpush.bf16.msra.mxu0 %v6454
    %7580 = vmatpush.bf16.msra.mxu0 %v6450
    %7581 = vmatpush.bf16.msra.mxu0 %v6446
    %7582 = vmatpush.bf16.msra.mxu0 %v6442
    %7583 = vmatpush.bf16.msra.mxu0 %v6438
    %7584 = vmatmul.bf16.gmra.mxu0 %v5106
    %v7585 = vpop.f32.mrf.mxu0
    %v7586 = vadd.f32 %v7573, %v7585
    %v7587 = vpop.f32.mrf.mxu0
    %7588 = vdwg.mxu0
    %7589 = vmatpush.bf16.msra.mxu0 %v6498
    %7590 = vmatpush.bf16.msra.mxu0 %v6494
    %7591 = vmatpush.bf16.msra.mxu0 %v6490
    %7592 = vmatpush.bf16.msra.mxu0 %v6486
    %7593 = vmatpush.bf16.msra.mxu0 %v6482
    %7594 = vmatpush.bf16.msra.mxu0 %v6478
    %7595 = vmatpush.bf16.msra.mxu0 %v6474
    %7596 = vmatpush.bf16.msra.mxu0 %v6470
    %7597 = vmatmul.bf16.gmra.mxu0 %v5107
    %v7598 = vpop.f32.mrf.mxu0
    %v7599 = vadd.f32 %v7586, %v7598
    %v7600 = vpop.f32.mrf.mxu0
    %7601 = vdwg.mxu0
    %7602 = vmatpush.bf16.msra.mxu0 %v6530
    %7603 = vmatpush.bf16.msra.mxu0 %v6526
    %7604 = vmatpush.bf16.msra.mxu0 %v6522
    %7605 = vmatpush.bf16.msra.mxu0 %v6518
    %7606 = vmatpush.bf16.msra.mxu0 %v6514
    %7607 = vmatpush.bf16.msra.mxu0 %v6510
    %7608 = vmatpush.bf16.msra.mxu0 %v6506
    %7609 = vmatpush.bf16.msra.mxu0 %v6502
    %7610 = vmatmul.bf16.gmra.mxu0 %v5108
    %v7611 = vpop.f32.mrf.mxu0
    %v7612 = vadd.f32 %v7599, %v7611
    %v7613 = vpop.f32.mrf.mxu0
    %7614 = vdwg.mxu0
    %7615 = vmatpush.bf16.msra.mxu0 %v6562
    %7616 = vmatpush.bf16.msra.mxu0 %v6558
    %7617 = vmatpush.bf16.msra.mxu0 %v6554
    %7618 = vmatpush.bf16.msra.mxu0 %v6550
    %7619 = vmatpush.bf16.msra.mxu0 %v6546
    %7620 = vmatpush.bf16.msra.mxu0 %v6542
    %7621 = vmatpush.bf16.msra.mxu0 %v6538
    %7622 = vmatpush.bf16.msra.mxu0 %v6534
    %7623 = vmatmul.bf16.gmra.mxu0 %v5109
    %v7624 = vpop.f32.mrf.mxu0
    %v7625 = vadd.f32 %v7612, %v7624
    %v7626 = vpop.f32.mrf.mxu0
    %7627 = vdwg.mxu0
    %7628 = vmatpush.bf16.msra.mxu0 %v6594
    %7629 = vmatpush.bf16.msra.mxu0 %v6590
    %7630 = vmatpush.bf16.msra.mxu0 %v6586
    %7631 = vmatpush.bf16.msra.mxu0 %v6582
    %7632 = vmatpush.bf16.msra.mxu0 %v6578
    %7633 = vmatpush.bf16.msra.mxu0 %v6574
    %7634 = vmatpush.bf16.msra.mxu0 %v6570
    %7635 = vmatpush.bf16.msra.mxu0 %v6566
    %7636 = vmatmul.bf16.gmra.mxu0 %v5110
    %v7637 = vpop.f32.mrf.mxu0
    %v7638 = vadd.f32 %v7625, %v7637
    %v7639 = vpop.f32.mrf.mxu0
    %7640 = vdwg.mxu0
    %7641 = vmatpush.bf16.msra.mxu0 %v6626
    %7642 = vmatpush.bf16.msra.mxu0 %v6622
    %7643 = vmatpush.bf16.msra.mxu0 %v6618
    %7644 = vmatpush.bf16.msra.mxu0 %v6614
    %7645 = vmatpush.bf16.msra.mxu0 %v6610
    %7646 = vmatpush.bf16.msra.mxu0 %v6606
    %7647 = vmatpush.bf16.msra.mxu0 %v6602
    %7648 = vmatpush.bf16.msra.mxu0 %v6598
    %7649 = vmatmul.bf16.gmra.mxu0 %v5111
    %v7650 = vpop.f32.mrf.mxu0
    %v7651 = vadd.f32 %v7638, %v7650
    %v7652 = vpop.f32.mrf.mxu0
    %7653 = vdwg.mxu0
    %7654 = vmatpush.bf16.msra.mxu0 %v6658
    %7655 = vmatpush.bf16.msra.mxu0 %v6654
    %7656 = vmatpush.bf16.msra.mxu0 %v6650
    %7657 = vmatpush.bf16.msra.mxu0 %v6646
    %7658 = vmatpush.bf16.msra.mxu0 %v6642
    %7659 = vmatpush.bf16.msra.mxu0 %v6638
    %7660 = vmatpush.bf16.msra.mxu0 %v6634
    %7661 = vmatpush.bf16.msra.mxu0 %v6630
    %7662 = vmatmul.bf16.gmra.mxu0 %v5112
    %v7663 = vpop.f32.mrf.mxu0
    %v7664 = vadd.f32 %v7651, %v7663
    %v7665 = vpop.f32.mrf.mxu0
    %7666 = vdwg.mxu0
    %v7667 = vld [vmem:[#allocation11] sm:$0xff]
    %v7668 = vld [vmem:[#allocation11 + $0x8] sm:$0xff]
    %v7669 = vld [vmem:[#allocation11 + $0x10] sm:$0xff]
    %v7670 = vld [vmem:[#allocation11 + $0x18] sm:$0xff]
    %v7671 = vld [vmem:[#allocation11 + $0x20] sm:$0xff]
    %v7672 = vld [vmem:[#allocation11 + $0x28] sm:$0xff]
    %v7673 = vld [vmem:[#allocation11 + $0x30] sm:$0xff]
    %v7674 = vld [vmem:[#allocation11 + $0x38] sm:$0xff]
    %v7675 = vld [vmem:[#allocation11 + $0x40] sm:$0xff]
    %v7676 = vld [vmem:[#allocation11 + $0x48] sm:$0xff]
    %v7677 = vld [vmem:[#allocation11 + $0x50] sm:$0xff]
    %v7678 = vld [vmem:[#allocation11 + $0x58] sm:$0xff]
    %v7679 = vld [vmem:[#allocation11 + $0x60] sm:$0xff]
    %v7680 = vld [vmem:[#allocation11 + $0x68] sm:$0xff]
    %v7681 = vld [vmem:[#allocation11 + $0x70] sm:$0xff]
    %v7682 = vld [vmem:[#allocation11 + $0x78] sm:$0xff]
    %v7683 = vld [vmem:[#allocation11 + $0x80] sm:$0xff]
    %v7684 = vld [vmem:[#allocation11 + $0x88] sm:$0xff]
    %v7685 = vld [vmem:[#allocation11 + $0x90] sm:$0xff]
    %v7686 = vld [vmem:[#allocation11 + $0x98] sm:$0xff]
    %v7687 = vld [vmem:[#allocation11 + $0xa0] sm:$0xff]
    %v7688 = vld [vmem:[#allocation11 + $0xa8] sm:$0xff]
    %v7689 = vld [vmem:[#allocation11 + $0xb0] sm:$0xff]
    %v7690 = vld [vmem:[#allocation11 + $0xb8] sm:$0xff]
    %v7691 = vld [vmem:[#allocation11 + $0xc0] sm:$0xff]
    %v7692 = vld [vmem:[#allocation11 + $0xc8] sm:$0xff]
    %v7693 = vld [vmem:[#allocation11 + $0xd0] sm:$0xff]
    %v7694 = vld [vmem:[#allocation11 + $0xd8] sm:$0xff]
    %v7695 = vld [vmem:[#allocation11 + $0xe0] sm:$0xff]
    %v7696 = vld [vmem:[#allocation11 + $0xe8] sm:$0xff]
    %v7697 = vld [vmem:[#allocation11 + $0xf0] sm:$0xff]
    %v7698 = vld [vmem:[#allocation11 + $0xf8] sm:$0xff]
    %v7699 = vld [vmem:[#allocation11 + $0x100] sm:$0xff]
    %v7700 = vld [vmem:[#allocation11 + $0x108] sm:$0xff]
    %v7701 = vld [vmem:[#allocation11 + $0x110] sm:$0xff]
    %v7702 = vld [vmem:[#allocation11 + $0x118] sm:$0xff]
    %v7703 = vld [vmem:[#allocation11 + $0x120] sm:$0xff]
    %v7704 = vld [vmem:[#allocation11 + $0x128] sm:$0xff]
    %v7705 = vld [vmem:[#allocation11 + $0x130] sm:$0xff]
    %v7706 = vld [vmem:[#allocation11 + $0x138] sm:$0xff]
    %v7707 = vld [vmem:[#allocation11 + $0x140] sm:$0xff]
    %v7708 = vld [vmem:[#allocation11 + $0x148] sm:$0xff]
    %v7709 = vld [vmem:[#allocation11 + $0x150] sm:$0xff]
    %v7710 = vld [vmem:[#allocation11 + $0x158] sm:$0xff]
    %v7711 = vld [vmem:[#allocation11 + $0x160] sm:$0xff]
    %v7712 = vld [vmem:[#allocation11 + $0x168] sm:$0xff]
    %v7713 = vld [vmem:[#allocation11 + $0x170] sm:$0xff]
    %v7714 = vld [vmem:[#allocation11 + $0x178] sm:$0xff]
    %v7715 = vld [vmem:[#allocation11 + $0x180] sm:$0xff]
    %v7716 = vld [vmem:[#allocation11 + $0x188] sm:$0xff]
    %v7717 = vld [vmem:[#allocation11 + $0x190] sm:$0xff]
    %v7718 = vld [vmem:[#allocation11 + $0x198] sm:$0xff]
    %v7719 = vld [vmem:[#allocation11 + $0x1a0] sm:$0xff]
    %v7720 = vld [vmem:[#allocation11 + $0x1a8] sm:$0xff]
    %v7721 = vld [vmem:[#allocation11 + $0x1b0] sm:$0xff]
    %v7722 = vld [vmem:[#allocation11 + $0x1b8] sm:$0xff]
    %v7723 = vld [vmem:[#allocation11 + $0x1c0] sm:$0xff]
    %v7724 = vld [vmem:[#allocation11 + $0x1c8] sm:$0xff]
    %v7725 = vld [vmem:[#allocation11 + $0x1d0] sm:$0xff]
    %v7726 = vld [vmem:[#allocation11 + $0x1d8] sm:$0xff]
    %v7727 = vld [vmem:[#allocation11 + $0x1e0] sm:$0xff]
    %v7728 = vld [vmem:[#allocation11 + $0x1e8] sm:$0xff]
    %v7729 = vld [vmem:[#allocation11 + $0x1f0] sm:$0xff]
    %v7730 = vld [vmem:[#allocation11 + $0x1f8] sm:$0xff]
    %v7731 = vpack.c.bf16 %v7196, %v7196
    %v7732 = vpack.c.bf16 %v7352, %v7352
    %v7733 = vpack.c.bf16 %v7508, %v7508
    %v7734 = vpack.c.bf16 %v7664, %v7664
    %v7735 = vld [vmem:[#allocation13] sm:$0x3]
    %v7737 = vperm.slane %v7735, 0
    %v7738 = vperm.slane %v7735, 1
    %v7805 = vunpack.c.l.b16 %v7667
    %v7806 = vunpack.c.h.b16 %v7667
    %v7807 = vunpack.c.l.b16 %v7668
    %v7808 = vunpack.c.h.b16 %v7668
    %v7809 = vunpack.c.l.b16 %v7669
    %v7810 = vunpack.c.h.b16 %v7669
    %v7811 = vunpack.c.l.b16 %v7670
    %v7812 = vunpack.c.h.b16 %v7670
    %v7813 = vunpack.c.l.b16 %v7671
    %v7814 = vunpack.c.h.b16 %v7671
    %v7815 = vunpack.c.l.b16 %v7672
    %v7816 = vunpack.c.h.b16 %v7672
    %v7817 = vunpack.c.l.b16 %v7673
    %v7818 = vunpack.c.h.b16 %v7673
    %v7819 = vunpack.c.l.b16 %v7674
    %v7820 = vunpack.c.h.b16 %v7674
    %v7821 = vunpack.c.l.b16 %v7675
    %v7822 = vunpack.c.h.b16 %v7675
    %v7823 = vunpack.c.l.b16 %v7676
    %v7824 = vunpack.c.h.b16 %v7676
    %v7825 = vunpack.c.l.b16 %v7677
    %v7826 = vunpack.c.h.b16 %v7677
    %v7827 = vunpack.c.l.b16 %v7678
    %v7828 = vunpack.c.h.b16 %v7678
    %v7829 = vunpack.c.l.b16 %v7679
    %v7830 = vunpack.c.h.b16 %v7679
    %v7831 = vunpack.c.l.b16 %v7680
    %v7832 = vunpack.c.h.b16 %v7680
    %v7833 = vunpack.c.l.b16 %v7681
    %v7834 = vunpack.c.h.b16 %v7681
    %v7835 = vunpack.c.l.b16 %v7682
    %v7836 = vunpack.c.h.b16 %v7682
    %v7837 = vunpack.c.l.b16 %v7683
    %v7838 = vunpack.c.h.b16 %v7683
    %v7839 = vunpack.c.l.b16 %v7684
    %v7840 = vunpack.c.h.b16 %v7684
    %v7841 = vunpack.c.l.b16 %v7685
    %v7842 = vunpack.c.h.b16 %v7685
    %v7843 = vunpack.c.l.b16 %v7686
    %v7844 = vunpack.c.h.b16 %v7686
    %v7845 = vunpack.c.l.b16 %v7687
    %v7846 = vunpack.c.h.b16 %v7687
    %v7847 = vunpack.c.l.b16 %v7688
    %v7848 = vunpack.c.h.b16 %v7688
    %v7849 = vunpack.c.l.b16 %v7689
    %v7850 = vunpack.c.h.b16 %v7689
    %v7851 = vunpack.c.l.b16 %v7690
    %v7852 = vunpack.c.h.b16 %v7690
    %v7853 = vunpack.c.l.b16 %v7691
    %v7854 = vunpack.c.h.b16 %v7691
    %v7855 = vunpack.c.l.b16 %v7692
    %v7856 = vunpack.c.h.b16 %v7692
    %v7857 = vunpack.c.l.b16 %v7693
    %v7858 = vunpack.c.h.b16 %v7693
    %v7859 = vunpack.c.l.b16 %v7694
    %v7860 = vunpack.c.h.b16 %v7694
    %v7861 = vunpack.c.l.b16 %v7695
    %v7862 = vunpack.c.h.b16 %v7695
    %v7863 = vunpack.c.l.b16 %v7696
    %v7864 = vunpack.c.h.b16 %v7696
    %v7865 = vunpack.c.l.b16 %v7697
    %v7866 = vunpack.c.h.b16 %v7697
    %v7867 = vunpack.c.l.b16 %v7698
    %v7868 = vunpack.c.h.b16 %v7698
    %v7869 = vunpack.c.l.b16 %v7699
    %v7870 = vunpack.c.h.b16 %v7699
    %v7871 = vunpack.c.l.b16 %v7700
    %v7872 = vunpack.c.h.b16 %v7700
    %v7873 = vunpack.c.l.b16 %v7701
    %v7874 = vunpack.c.h.b16 %v7701
    %v7875 = vunpack.c.l.b16 %v7702
    %v7876 = vunpack.c.h.b16 %v7702
    %v7877 = vunpack.c.l.b16 %v7703
    %v7878 = vunpack.c.h.b16 %v7703
    %v7879 = vunpack.c.l.b16 %v7704
    %v7880 = vunpack.c.h.b16 %v7704
    %v7881 = vunpack.c.l.b16 %v7705
    %v7882 = vunpack.c.h.b16 %v7705
    %v7883 = vunpack.c.l.b16 %v7706
    %v7884 = vunpack.c.h.b16 %v7706
    %v7885 = vunpack.c.l.b16 %v7707
    %v7886 = vunpack.c.h.b16 %v7707
    %v7887 = vunpack.c.l.b16 %v7708
    %v7888 = vunpack.c.h.b16 %v7708
    %v7889 = vunpack.c.l.b16 %v7709
    %v7890 = vunpack.c.h.b16 %v7709
    %v7891 = vunpack.c.l.b16 %v7710
    %v7892 = vunpack.c.h.b16 %v7710
    %v7893 = vunpack.c.l.b16 %v7711
    %v7894 = vunpack.c.h.b16 %v7711
    %v7895 = vunpack.c.l.b16 %v7712
    %v7896 = vunpack.c.h.b16 %v7712
    %v7897 = vunpack.c.l.b16 %v7713
    %v7898 = vunpack.c.h.b16 %v7713
    %v7899 = vunpack.c.l.b16 %v7714
    %v7900 = vunpack.c.h.b16 %v7714
    %v7901 = vunpack.c.l.b16 %v7715
    %v7902 = vunpack.c.h.b16 %v7715
    %v7903 = vunpack.c.l.b16 %v7716
    %v7904 = vunpack.c.h.b16 %v7716
    %v7905 = vunpack.c.l.b16 %v7717
    %v7906 = vunpack.c.h.b16 %v7717
    %v7907 = vunpack.c.l.b16 %v7718
    %v7908 = vunpack.c.h.b16 %v7718
    %v7909 = vunpack.c.l.b16 %v7719
    %v7910 = vunpack.c.h.b16 %v7719
    %v7911 = vunpack.c.l.b16 %v7720
    %v7912 = vunpack.c.h.b16 %v7720
    %v7913 = vunpack.c.l.b16 %v7721
    %v7914 = vunpack.c.h.b16 %v7721
    %v7915 = vunpack.c.l.b16 %v7722
    %v7916 = vunpack.c.h.b16 %v7722
    %v7917 = vunpack.c.l.b16 %v7723
    %v7918 = vunpack.c.h.b16 %v7723
    %v7919 = vunpack.c.l.b16 %v7724
    %v7920 = vunpack.c.h.b16 %v7724
    %v7921 = vunpack.c.l.b16 %v7725
    %v7922 = vunpack.c.h.b16 %v7725
    %v7923 = vunpack.c.l.b16 %v7726
    %v7924 = vunpack.c.h.b16 %v7726
    %v7925 = vunpack.c.l.b16 %v7727
    %v7926 = vunpack.c.h.b16 %v7727
    %v7927 = vunpack.c.l.b16 %v7728
    %v7928 = vunpack.c.h.b16 %v7728
    %v7929 = vunpack.c.l.b16 %v7729
    %v7930 = vunpack.c.h.b16 %v7729
    %v7931 = vunpack.c.l.b16 %v7730
    %v7932 = vunpack.c.h.b16 %v7730
    %v7933 = vpack.c.b16 %v7807, %v7805
    %v7934 = vpack.c.b16 %v7808, %v7806
    %v7935 = vpack.c.b16 %v7811, %v7809
    %v7936 = vpack.c.b16 %v7812, %v7810
    %v7937 = vpack.c.b16 %v7815, %v7813
    %v7938 = vpack.c.b16 %v7816, %v7814
    %v7939 = vpack.c.b16 %v7819, %v7817
    %v7940 = vpack.c.b16 %v7820, %v7818
    %v7941 = vpack.c.b16 %v7823, %v7821
    %v7942 = vpack.c.b16 %v7824, %v7822
    %v7943 = vpack.c.b16 %v7827, %v7825
    %v7944 = vpack.c.b16 %v7828, %v7826
    %v7945 = vpack.c.b16 %v7831, %v7829
    %v7946 = vpack.c.b16 %v7832, %v7830
    %v7947 = vpack.c.b16 %v7835, %v7833
    %v7948 = vpack.c.b16 %v7836, %v7834
    %v7949 = vpack.c.b16 %v7839, %v7837
    %v7950 = vpack.c.b16 %v7840, %v7838
    %v7951 = vpack.c.b16 %v7843, %v7841
    %v7952 = vpack.c.b16 %v7844, %v7842
    %v7953 = vpack.c.b16 %v7847, %v7845
    %v7954 = vpack.c.b16 %v7848, %v7846
    %v7955 = vpack.c.b16 %v7851, %v7849
    %v7956 = vpack.c.b16 %v7852, %v7850
    %v7957 = vpack.c.b16 %v7855, %v7853
    %v7958 = vpack.c.b16 %v7856, %v7854
    %v7959 = vpack.c.b16 %v7859, %v7857
    %v7960 = vpack.c.b16 %v7860, %v7858
    %v7961 = vpack.c.b16 %v7863, %v7861
    %v7962 = vpack.c.b16 %v7864, %v7862
    %v7963 = vpack.c.b16 %v7867, %v7865
    %v7964 = vpack.c.b16 %v7868, %v7866
    %v7965 = vpack.c.b16 %v7871, %v7869
    %v7966 = vpack.c.b16 %v7872, %v7870
    %v7967 = vpack.c.b16 %v7875, %v7873
    %v7968 = vpack.c.b16 %v7876, %v7874
    %v7969 = vpack.c.b16 %v7879, %v7877
    %v7970 = vpack.c.b16 %v7880, %v7878
    %v7971 = vpack.c.b16 %v7883, %v7881
    %v7972 = vpack.c.b16 %v7884, %v7882
    %v7973 = vpack.c.b16 %v7887, %v7885
    %v7974 = vpack.c.b16 %v7888, %v7886
    %v7975 = vpack.c.b16 %v7891, %v7889
    %v7976 = vpack.c.b16 %v7892, %v7890
    %v7977 = vpack.c.b16 %v7895, %v7893
    %v7978 = vpack.c.b16 %v7896, %v7894
    %v7979 = vpack.c.b16 %v7899, %v7897
    %v7980 = vpack.c.b16 %v7900, %v7898
    %v7981 = vpack.c.b16 %v7903, %v7901
    %v7982 = vpack.c.b16 %v7904, %v7902
    %v7983 = vpack.c.b16 %v7907, %v7905
    %v7984 = vpack.c.b16 %v7908, %v7906
    %v7985 = vpack.c.b16 %v7911, %v7909
    %v7986 = vpack.c.b16 %v7912, %v7910
    %v7987 = vpack.c.b16 %v7915, %v7913
    %v7988 = vpack.c.b16 %v7916, %v7914
    %v7989 = vpack.c.b16 %v7919, %v7917
    %v7990 = vpack.c.b16 %v7920, %v7918
    %v7991 = vpack.c.b16 %v7923, %v7921
    %v7992 = vpack.c.b16 %v7924, %v7922
    %v7993 = vpack.c.b16 %v7927, %v7925
    %v7994 = vpack.c.b16 %v7928, %v7926
    %v7995 = vpack.c.b16 %v7931, %v7929
    %v7996 = vpack.c.b16 %v7932, %v7930
    %8061 = vmatpush.bf16.msra.mxu0 %v7947
    %8062 = vmatpush.bf16.msra.mxu0 %v7945
    %8063 = vmatpush.bf16.msra.mxu0 %v7943
    %8064 = vmatpush.bf16.msra.mxu0 %v7941
    %8065 = vmatpush.bf16.msra.mxu0 %v7939
    %8066 = vmatpush.bf16.msra.mxu0 %v7937
    %8067 = vmatpush.bf16.msra.mxu0 %v7935
    %8068 = vmatpush.bf16.msra.mxu0 %v7933
    %8069 = vmatmul.bf16.gmra.mxu0 %v7731
    %v8070 = vpop.f32.mrf.mxu0
    %v8071 = vadd.f32 %v7737, %v8070
    %v8072 = vpop.f32.mrf.mxu0
    %8073 = vdwg.mxu0
    %8074 = vmatpush.bf16.msra.mxu0 %v7963
    %8075 = vmatpush.bf16.msra.mxu0 %v7961
    %8076 = vmatpush.bf16.msra.mxu0 %v7959
    %8077 = vmatpush.bf16.msra.mxu0 %v7957
    %8078 = vmatpush.bf16.msra.mxu0 %v7955
    %8079 = vmatpush.bf16.msra.mxu0 %v7953
    %8080 = vmatpush.bf16.msra.mxu0 %v7951
    %8081 = vmatpush.bf16.msra.mxu0 %v7949
    %8082 = vmatmul.bf16.gmra.mxu0 %v7732
    %v8083 = vpop.f32.mrf.mxu0
    %v8084 = vadd.f32 %v8071, %v8083
    %v8085 = vpop.f32.mrf.mxu0
    %8086 = vdwg.mxu0
    %8087 = vmatpush.bf16.msra.mxu0 %v7979
    %8088 = vmatpush.bf16.msra.mxu0 %v7977
    %8089 = vmatpush.bf16.msra.mxu0 %v7975
    %8090 = vmatpush.bf16.msra.mxu0 %v7973
    %8091 = vmatpush.bf16.msra.mxu0 %v7971
    %8092 = vmatpush.bf16.msra.mxu0 %v7969
    %8093 = vmatpush.bf16.msra.mxu0 %v7967
    %8094 = vmatpush.bf16.msra.mxu0 %v7965
    %8095 = vmatmul.bf16.gmra.mxu0 %v7733
    %v8096 = vpop.f32.mrf.mxu0
    %v8097 = vadd.f32 %v8084, %v8096
    %v8098 = vpop.f32.mrf.mxu0
    %8099 = vdwg.mxu0
    %8100 = vmatpush.bf16.msra.mxu0 %v7995
    %8101 = vmatpush.bf16.msra.mxu0 %v7993
    %8102 = vmatpush.bf16.msra.mxu0 %v7991
    %8103 = vmatpush.bf16.msra.mxu0 %v7989
    %8104 = vmatpush.bf16.msra.mxu0 %v7987
    %8105 = vmatpush.bf16.msra.mxu0 %v7985
    %8106 = vmatpush.bf16.msra.mxu0 %v7983
    %8107 = vmatpush.bf16.msra.mxu0 %v7981
    %8108 = vmatmul.bf16.gmra.mxu0 %v7734
    %v8109 = vpop.f32.mrf.mxu0
    %v8110 = vadd.f32 %v8097, %v8109
    %v8111 = vpop.f32.mrf.mxu0
    %8112 = vdwg.mxu0
    %8113 = vmatpush.bf16.msra.mxu0 %v7948
    %8114 = vmatpush.bf16.msra.mxu0 %v7946
    %8115 = vmatpush.bf16.msra.mxu0 %v7944
    %8116 = vmatpush.bf16.msra.mxu0 %v7942
    %8117 = vmatpush.bf16.msra.mxu0 %v7940
    %8118 = vmatpush.bf16.msra.mxu0 %v7938
    %8119 = vmatpush.bf16.msra.mxu0 %v7936
    %8120 = vmatpush.bf16.msra.mxu0 %v7934
    %8121 = vmatmul.bf16.gmra.mxu0 %v7731
    %v8122 = vpop.f32.mrf.mxu0
    %v8123 = vadd.f32 %v7738, %v8122
    %v8124 = vpop.f32.mrf.mxu0
    %8125 = vdwg.mxu0
    %8126 = vmatpush.bf16.msra.mxu0 %v7964
    %8127 = vmatpush.bf16.msra.mxu0 %v7962
    %8128 = vmatpush.bf16.msra.mxu0 %v7960
    %8129 = vmatpush.bf16.msra.mxu0 %v7958
    %8130 = vmatpush.bf16.msra.mxu0 %v7956
    %8131 = vmatpush.bf16.msra.mxu0 %v7954
    %8132 = vmatpush.bf16.msra.mxu0 %v7952
    %8133 = vmatpush.bf16.msra.mxu0 %v7950
    %8134 = vmatmul.bf16.gmra.mxu0 %v7732
    %v8135 = vpop.f32.mrf.mxu0
    %v8136 = vadd.f32 %v8123, %v8135
    %v8137 = vpop.f32.mrf.mxu0
    %8138 = vdwg.mxu0
    %8139 = vmatpush.bf16.msra.mxu0 %v7980
    %8140 = vmatpush.bf16.msra.mxu0 %v7978
    %8141 = vmatpush.bf16.msra.mxu0 %v7976
    %8142 = vmatpush.bf16.msra.mxu0 %v7974
    %8143 = vmatpush.bf16.msra.mxu0 %v7972
    %8144 = vmatpush.bf16.msra.mxu0 %v7970
    %8145 = vmatpush.bf16.msra.mxu0 %v7968
    %8146 = vmatpush.bf16.msra.mxu0 %v7966
    %8147 = vmatmul.bf16.gmra.mxu0 %v7733
    %v8148 = vpop.f32.mrf.mxu0
    %v8149 = vadd.f32 %v8136, %v8148
    %v8150 = vpop.f32.mrf.mxu0
    %8151 = vdwg.mxu0
    %8152 = vmatpush.bf16.msra.mxu0 %v7996
    %8153 = vmatpush.bf16.msra.mxu0 %v7994
    %8154 = vmatpush.bf16.msra.mxu0 %v7992
    %8155 = vmatpush.bf16.msra.mxu0 %v7990
    %8156 = vmatpush.bf16.msra.mxu0 %v7988
    %8157 = vmatpush.bf16.msra.mxu0 %v7986
    %8158 = vmatpush.bf16.msra.mxu0 %v7984
    %8159 = vmatpush.bf16.msra.mxu0 %v7982
    %8160 = vmatmul.bf16.gmra.mxu0 %v7734
    %v8161 = vpop.f32.mrf.mxu0
    %v8162 = vadd.f32 %v8149, %v8161
    %v8163 = vpop.f32.mrf.mxu0
    %8164 = vdwg.mxu0
    %8165 = vst [vmem:[#allocation28] sm:$0xff] %v8110
    %8166 = vst [vmem:[#allocation28 + $0x8] sm:$0xff] %v8162
    %v8167 = vld [vmem:[#allocation23] sm:$0xf]
    %v8168 = vld [vmem:[#allocation25] sm:$0xf]
    %v8169 = vld [vmem:[#allocation14] sm:$0xf]
    %v8170 = vld [vmem:[#allocation14 + $0x4] sm:$0xf]
    %v8171 = vld [vmem:[#allocation14 + $0x8] sm:$0xf]
    %v8172 = vld [vmem:[#allocation14 + $0xc] sm:$0xf]
    %v8173 = vld [vmem:[#allocation14 + $0x10] sm:$0xf]
    %v8174 = vld [vmem:[#allocation14 + $0x14] sm:$0xf]
    %v8175 = vld [vmem:[#allocation14 + $0x18] sm:$0xf]
    %v8176 = vld [vmem:[#allocation14 + $0x1c] sm:$0xf]
    %v8177 = vld [vmem:[#allocation14 + $0x20] sm:$0xf]
    %v8178 = vld [vmem:[#allocation14 + $0x24] sm:$0xf]
    %v8179 = vld [vmem:[#allocation14 + $0x28] sm:$0xf]
    %v8180 = vld [vmem:[#allocation14 + $0x2c] sm:$0xf]
    %v8181 = vld [vmem:[#allocation14 + $0x30] sm:$0xf]
    %v8182 = vld [vmem:[#allocation14 + $0x34] sm:$0xf]
    %v8183 = vld [vmem:[#allocation14 + $0x38] sm:$0xf]
    %v8184 = vld [vmem:[#allocation14 + $0x3c] sm:$0xf]
    %v8185 = vld [vmem:[#allocation14 + $0x40] sm:$0xf]
    %v8186 = vld [vmem:[#allocation14 + $0x44] sm:$0xf]
    %v8187 = vld [vmem:[#allocation14 + $0x48] sm:$0xf]
    %v8188 = vld [vmem:[#allocation14 + $0x4c] sm:$0xf]
    %v8189 = vld [vmem:[#allocation14 + $0x50] sm:$0xf]
    %v8190 = vld [vmem:[#allocation14 + $0x54] sm:$0xf]
    %v8191 = vld [vmem:[#allocation14 + $0x58] sm:$0xf]
    %v8192 = vld [vmem:[#allocation14 + $0x5c] sm:$0xf]
    %v8193 = vld [vmem:[#allocation14 + $0x60] sm:$0xf]
    %v8194 = vld [vmem:[#allocation14 + $0x64] sm:$0xf]
    %v8195 = vld [vmem:[#allocation14 + $0x68] sm:$0xf]
    %v8196 = vld [vmem:[#allocation14 + $0x6c] sm:$0xf]
    %v8197 = vld [vmem:[#allocation14 + $0x70] sm:$0xf]
    %v8198 = vld [vmem:[#allocation14 + $0x74] sm:$0xf]
    %v8199 = vld [vmem:[#allocation14 + $0x78] sm:$0xf]
    %v8200 = vld [vmem:[#allocation14 + $0x7c] sm:$0xf]
    %v8201 = vld [vmem:[#allocation14 + $0x80] sm:$0xf]
    %v8202 = vld [vmem:[#allocation14 + $0x84] sm:$0xf]
    %v8203 = vld [vmem:[#allocation14 + $0x88] sm:$0xf]
    %v8204 = vld [vmem:[#allocation14 + $0x8c] sm:$0xf]
    %v8205 = vld [vmem:[#allocation14 + $0x90] sm:$0xf]
    %v8206 = vld [vmem:[#allocation14 + $0x94] sm:$0xf]
    %v8207 = vld [vmem:[#allocation14 + $0x98] sm:$0xf]
    %v8208 = vld [vmem:[#allocation14 + $0x9c] sm:$0xf]
    %v8209 = vld [vmem:[#allocation14 + $0xa0] sm:$0xf]
    %v8210 = vld [vmem:[#allocation14 + $0xa4] sm:$0xf]
    %v8211 = vld [vmem:[#allocation14 + $0xa8] sm:$0xf]
    %v8212 = vld [vmem:[#allocation14 + $0xac] sm:$0xf]
    %v8213 = vld [vmem:[#allocation14 + $0xb0] sm:$0xf]
    %v8214 = vld [vmem:[#allocation14 + $0xb4] sm:$0xf]
    %v8215 = vld [vmem:[#allocation14 + $0xb8] sm:$0xf]
    %v8216 = vld [vmem:[#allocation14 + $0xbc] sm:$0xf]
    %v8217 = vld [vmem:[#allocation14 + $0xc0] sm:$0xf]
    %v8218 = vld [vmem:[#allocation14 + $0xc4] sm:$0xf]
    %v8219 = vld [vmem:[#allocation14 + $0xc8] sm:$0xf]
    %v8220 = vld [vmem:[#allocation14 + $0xcc] sm:$0xf]
    %v8221 = vld [vmem:[#allocation14 + $0xd0] sm:$0xf]
    %v8222 = vld [vmem:[#allocation14 + $0xd4] sm:$0xf]
    %v8223 = vld [vmem:[#allocation14 + $0xd8] sm:$0xf]
    %v8224 = vld [vmem:[#allocation14 + $0xdc] sm:$0xf]
    %v8225 = vld [vmem:[#allocation14 + $0xe0] sm:$0xf]
    %v8226 = vld [vmem:[#allocation14 + $0xe4] sm:$0xf]
    %v8227 = vld [vmem:[#allocation14 + $0xe8] sm:$0xf]
    %v8228 = vld [vmem:[#allocation14 + $0xec] sm:$0xf]
    %v8229 = vld [vmem:[#allocation14 + $0xf0] sm:$0xf]
    %v8230 = vld [vmem:[#allocation14 + $0xf4] sm:$0xf]
    %v8231 = vld [vmem:[#allocation14 + $0xf8] sm:$0xf]
    %v8232 = vld [vmem:[#allocation14 + $0xfc] sm:$0xf]
    %v8297 = vunpack.c.l.b16 %v8169
    %v8298 = vunpack.c.l.b16 %v8170
    %v8299 = vunpack.c.l.b16 %v8171
    %v8300 = vunpack.c.l.b16 %v8172
    %v8301 = vunpack.c.l.b16 %v8173
    %v8302 = vunpack.c.l.b16 %v8174
    %v8303 = vunpack.c.l.b16 %v8175
    %v8304 = vunpack.c.l.b16 %v8176
    %v8305 = vunpack.c.l.b16 %v8177
    %v8306 = vunpack.c.l.b16 %v8178
    %v8307 = vunpack.c.l.b16 %v8179
    %v8308 = vunpack.c.l.b16 %v8180
    %v8309 = vunpack.c.l.b16 %v8181
    %v8310 = vunpack.c.l.b16 %v8182
    %v8311 = vunpack.c.l.b16 %v8183
    %v8312 = vunpack.c.l.b16 %v8184
    %v8313 = vunpack.c.l.b16 %v8185
    %v8314 = vunpack.c.l.b16 %v8186
    %v8315 = vunpack.c.l.b16 %v8187
    %v8316 = vunpack.c.l.b16 %v8188
    %v8317 = vunpack.c.l.b16 %v8189
    %v8318 = vunpack.c.l.b16 %v8190
    %v8319 = vunpack.c.l.b16 %v8191
    %v8320 = vunpack.c.l.b16 %v8192
    %v8321 = vunpack.c.l.b16 %v8193
    %v8322 = vunpack.c.l.b16 %v8194
    %v8323 = vunpack.c.l.b16 %v8195
    %v8324 = vunpack.c.l.b16 %v8196
    %v8325 = vunpack.c.l.b16 %v8197
    %v8326 = vunpack.c.l.b16 %v8198
    %v8327 = vunpack.c.l.b16 %v8199
    %v8328 = vunpack.c.l.b16 %v8200
    %v8329 = vunpack.c.l.b16 %v8201
    %v8330 = vunpack.c.l.b16 %v8202
    %v8331 = vunpack.c.l.b16 %v8203
    %v8332 = vunpack.c.l.b16 %v8204
    %v8333 = vunpack.c.l.b16 %v8205
    %v8334 = vunpack.c.l.b16 %v8206
    %v8335 = vunpack.c.l.b16 %v8207
    %v8336 = vunpack.c.l.b16 %v8208
    %v8337 = vunpack.c.l.b16 %v8209
    %v8338 = vunpack.c.l.b16 %v8210
    %v8339 = vunpack.c.l.b16 %v8211
    %v8340 = vunpack.c.l.b16 %v8212
    %v8341 = vunpack.c.l.b16 %v8213
    %v8342 = vunpack.c.l.b16 %v8214
    %v8343 = vunpack.c.l.b16 %v8215
    %v8344 = vunpack.c.l.b16 %v8216
    %v8345 = vunpack.c.l.b16 %v8217
    %v8346 = vunpack.c.l.b16 %v8218
    %v8347 = vunpack.c.l.b16 %v8219
    %v8348 = vunpack.c.l.b16 %v8220
    %v8349 = vunpack.c.l.b16 %v8221
    %v8350 = vunpack.c.l.b16 %v8222
    %v8351 = vunpack.c.l.b16 %v8223
    %v8352 = vunpack.c.l.b16 %v8224
    %v8353 = vunpack.c.l.b16 %v8225
    %v8354 = vunpack.c.l.b16 %v8226
    %v8355 = vunpack.c.l.b16 %v8227
    %v8356 = vunpack.c.l.b16 %v8228
    %v8357 = vunpack.c.l.b16 %v8229
    %v8358 = vunpack.c.l.b16 %v8230
    %v8359 = vunpack.c.l.b16 %v8231
    %v8360 = vunpack.c.l.b16 %v8232
    %v8361 = vpack.c.b16 %v8298, %v8297
    %v8362 = vpack.c.b16 %v8300, %v8299
    %v8363 = vpack.c.b16 %v8302, %v8301
    %v8364 = vpack.c.b16 %v8304, %v8303
    %v8365 = vpack.c.b16 %v8306, %v8305
    %v8366 = vpack.c.b16 %v8308, %v8307
    %v8367 = vpack.c.b16 %v8310, %v8309
    %v8368 = vpack.c.b16 %v8312, %v8311
    %v8369 = vpack.c.b16 %v8314, %v8313
    %v8370 = vpack.c.b16 %v8316, %v8315
    %v8371 = vpack.c.b16 %v8318, %v8317
    %v8372 = vpack.c.b16 %v8320, %v8319
    %v8373 = vpack.c.b16 %v8322, %v8321
    %v8374 = vpack.c.b16 %v8324, %v8323
    %v8375 = vpack.c.b16 %v8326, %v8325
    %v8376 = vpack.c.b16 %v8328, %v8327
    %v8377 = vpack.c.b16 %v8330, %v8329
    %v8378 = vpack.c.b16 %v8332, %v8331
    %v8379 = vpack.c.b16 %v8334, %v8333
    %v8380 = vpack.c.b16 %v8336, %v8335
    %v8381 = vpack.c.b16 %v8338, %v8337
    %v8382 = vpack.c.b16 %v8340, %v8339
    %v8383 = vpack.c.b16 %v8342, %v8341
    %v8384 = vpack.c.b16 %v8344, %v8343
    %v8385 = vpack.c.b16 %v8346, %v8345
    %v8386 = vpack.c.b16 %v8348, %v8347
    %v8387 = vpack.c.b16 %v8350, %v8349
    %v8388 = vpack.c.b16 %v8352, %v8351
    %v8389 = vpack.c.b16 %v8354, %v8353
    %v8390 = vpack.c.b16 %v8356, %v8355
    %v8391 = vpack.c.b16 %v8358, %v8357
    %v8392 = vpack.c.b16 %v8360, %v8359
    %8425 = vmatpush.bf16.msra.mxu0 %v8368
    %8426 = vmatpush.bf16.msra.mxu0 %v8367
    %8427 = vmatpush.bf16.msra.mxu0 %v8366
    %8428 = vmatpush.bf16.msra.mxu0 %v8365
    %8429 = vmatpush.bf16.msra.mxu0 %v8364
    %8430 = vmatpush.bf16.msra.mxu0 %v8363
    %8431 = vmatpush.bf16.msra.mxu0 %v8362
    %8432 = vmatpush.bf16.msra.mxu0 %v8361
    %8433 = vmatmul.bf16.gmra.mxu0 %v7731
    %v8434 = vpop.f32.mrf.mxu0
    %v8435 = vadd.f32 0.0, %v8434
    %v8436 = vpop.f32.mrf.mxu0
    %8437 = vdwg.mxu0
    %8438 = vmatpush.bf16.msra.mxu0 %v8376
    %8439 = vmatpush.bf16.msra.mxu0 %v8375
    %8440 = vmatpush.bf16.msra.mxu0 %v8374
    %8441 = vmatpush.bf16.msra.mxu0 %v8373
    %8442 = vmatpush.bf16.msra.mxu0 %v8372
    %8443 = vmatpush.bf16.msra.mxu0 %v8371
    %8444 = vmatpush.bf16.msra.mxu0 %v8370
    %8445 = vmatpush.bf16.msra.mxu0 %v8369
    %8446 = vmatmul.bf16.gmra.mxu0 %v7732
    %v8447 = vpop.f32.mrf.mxu0
    %v8448 = vadd.f32 %v8435, %v8447
    %v8449 = vpop.f32.mrf.mxu0
    %8450 = vdwg.mxu0
    %8451 = vmatpush.bf16.msra.mxu0 %v8384
    %8452 = vmatpush.bf16.msra.mxu0 %v8383
    %8453 = vmatpush.bf16.msra.mxu0 %v8382
    %8454 = vmatpush.bf16.msra.mxu0 %v8381
    %8455 = vmatpush.bf16.msra.mxu0 %v8380
    %8456 = vmatpush.bf16.msra.mxu0 %v8379
    %8457 = vmatpush.bf16.msra.mxu0 %v8378
    %8458 = vmatpush.bf16.msra.mxu0 %v8377
    %8459 = vmatmul.bf16.gmra.mxu0 %v7733
    %v8460 = vpop.f32.mrf.mxu0
    %v8461 = vadd.f32 %v8448, %v8460
    %v8462 = vpop.f32.mrf.mxu0
    %8463 = vdwg.mxu0
    %8464 = vmatpush.bf16.msra.mxu0 %v8392
    %8465 = vmatpush.bf16.msra.mxu0 %v8391
    %8466 = vmatpush.bf16.msra.mxu0 %v8390
    %8467 = vmatpush.bf16.msra.mxu0 %v8389
    %8468 = vmatpush.bf16.msra.mxu0 %v8388
    %8469 = vmatpush.bf16.msra.mxu0 %v8387
    %8470 = vmatpush.bf16.msra.mxu0 %v8386
    %8471 = vmatpush.bf16.msra.mxu0 %v8385
    %8472 = vmatmul.bf16.gmra.mxu0 %v7734
    %v8473 = vpop.f32.mrf.mxu0
    %v8474 = vadd.f32 %v8461, %v8473
    %v8475 = vpop.f32.mrf.mxu0
    %8476 = vdwg.mxu0
    %v8477 = vpack.c.bf16 %v8474, %v8474
    %vm8478 = vcmask 64512
    %v8480 = vsel %vm8478, %v8168, 0
    %vm8482 = vcmask 1043456
    %v8484 = vsel %vm8482, %v8477, 0
    %8486 = vmatpush.bf16.msra.mxu0 0
    %8487 = vmatpush.bf16.msra.mxu0 0
    %8488 = vmatpush.bf16.msra.mxu0 0
    %8489 = vmatpush.bf16.msra.mxu0 0
    %8490 = vmatpush.bf16.msra.mxu0 0
    %8491 = vmatpush.bf16.msra.mxu0 0
    %8492 = vmatpush.bf16.msra.mxu0 0
    %8493 = vmatpush.bf16.msra.mxu0 %v8484
    %8494 = vmatmul.bf16.gmra.mxu0 %v8480
    %v8495 = vpop.f32.mrf.mxu0
    %v8496 = vadd.f32 0.0, %v8495
    %v8497 = vpop.f32.mrf.mxu0
    %8498 = vdwg.mxu0
    %v8499 = vpack.c.bf16 %v8496, %v8496
    %v8500 = vld [vmem:[#allocation16] sm:$0x1]
    %v8502 = vperm.slane %v8500, 0
    %v8505 = vsel %vm8478, %v8167, 0
    %v8508 = vsel %vm8482, %v8499, 0
    %8510 = vmatpush.bf16.msra.mxu0 0
    %8511 = vmatpush.bf16.msra.mxu0 0
    %8512 = vmatpush.bf16.msra.mxu0 0
    %8513 = vmatpush.bf16.msra.mxu0 0
    %8514 = vmatpush.bf16.msra.mxu0 0
    %8515 = vmatpush.bf16.msra.mxu0 0
    %8516 = vmatpush.bf16.msra.mxu0 0
    %8517 = vmatpush.bf16.msra.mxu0 %v8508
    %8518 = vmatmul.bf16.gmra.mxu0 %v8505
    %v8519 = vpop.f32.mrf.mxu0
    %v8520 = vadd.f32 %v8502, %v8519
    %v8521 = vpop.f32.mrf.mxu0
    %8522 = vdwg.mxu0
    %v8523 = vmax.f32 %v8520, 0.0
    %v8524 = vld [vmem:[#allocation26] sm:$0xff]
    %v8525 = vmul.f32 %v8523, %v8524
    %v8526 = vld [vmem:[#allocation17] sm:$0xff]
    %v8527 = vld [vmem:[#allocation17 + $0x8] sm:$0xff]
    %v8528 = vld [vmem:[#allocation17 + $0x10] sm:$0xff]
    %v8529 = vld [vmem:[#allocation17 + $0x18] sm:$0xff]
    %v8530 = vld [vmem:[#allocation17 + $0x20] sm:$0xff]
    %v8531 = vld [vmem:[#allocation17 + $0x28] sm:$0xff]
    %v8532 = vld [vmem:[#allocation17 + $0x30] sm:$0xff]
    %v8533 = vld [vmem:[#allocation17 + $0x38] sm:$0xff]
    %v8534 = vld [vmem:[#allocation17 + $0x40] sm:$0xff]
    %v8535 = vld [vmem:[#allocation17 + $0x48] sm:$0xff]
    %v8536 = vld [vmem:[#allocation17 + $0x50] sm:$0xff]
    %v8537 = vld [vmem:[#allocation17 + $0x58] sm:$0xff]
    %v8538 = vld [vmem:[#allocation17 + $0x60] sm:$0xff]
    %v8539 = vld [vmem:[#allocation17 + $0x68] sm:$0xff]
    %v8540 = vld [vmem:[#allocation17 + $0x70] sm:$0xff]
    %v8541 = vld [vmem:[#allocation17 + $0x78] sm:$0xff]
    %v8542 = vpack.c.bf16 %v8525, %v8525
    %v8559 = vunpack.c.l.b16 %v8526
    %v8560 = vunpack.c.h.b16 %v8526
    %v8561 = vunpack.c.l.b16 %v8527
    %v8562 = vunpack.c.h.b16 %v8527
    %v8563 = vunpack.c.l.b16 %v8528
    %v8564 = vunpack.c.h.b16 %v8528
    %v8565 = vunpack.c.l.b16 %v8529
    %v8566 = vunpack.c.h.b16 %v8529
    %v8567 = vunpack.c.l.b16 %v8530
    %v8568 = vunpack.c.h.b16 %v8530
    %v8569 = vunpack.c.l.b16 %v8531
    %v8570 = vunpack.c.h.b16 %v8531
    %v8571 = vunpack.c.l.b16 %v8532
    %v8572 = vunpack.c.h.b16 %v8532
    %v8573 = vunpack.c.l.b16 %v8533
    %v8574 = vunpack.c.h.b16 %v8533
    %v8575 = vunpack.c.l.b16 %v8534
    %v8576 = vunpack.c.h.b16 %v8534
    %v8577 = vunpack.c.l.b16 %v8535
    %v8578 = vunpack.c.h.b16 %v8535
    %v8579 = vunpack.c.l.b16 %v8536
    %v8580 = vunpack.c.h.b16 %v8536
    %v8581 = vunpack.c.l.b16 %v8537
    %v8582 = vunpack.c.h.b16 %v8537
    %v8583 = vunpack.c.l.b16 %v8538
    %v8584 = vunpack.c.h.b16 %v8538
    %v8585 = vunpack.c.l.b16 %v8539
    %v8586 = vunpack.c.h.b16 %v8539
    %v8587 = vunpack.c.l.b16 %v8540
    %v8588 = vunpack.c.h.b16 %v8540
    %v8589 = vunpack.c.l.b16 %v8541
    %v8590 = vunpack.c.h.b16 %v8541
    %v8591 = vpack.c.b16 %v8561, %v8559
    %v8592 = vpack.c.b16 %v8562, %v8560
    %v8593 = vpack.c.b16 %v8565, %v8563
    %v8594 = vpack.c.b16 %v8566, %v8564
    %v8595 = vpack.c.b16 %v8569, %v8567
    %v8596 = vpack.c.b16 %v8570, %v8568
    %v8597 = vpack.c.b16 %v8573, %v8571
    %v8598 = vpack.c.b16 %v8574, %v8572
    %v8599 = vpack.c.b16 %v8577, %v8575
    %v8600 = vpack.c.b16 %v8578, %v8576
    %v8601 = vpack.c.b16 %v8581, %v8579
    %v8602 = vpack.c.b16 %v8582, %v8580
    %v8603 = vpack.c.b16 %v8585, %v8583
    %v8604 = vpack.c.b16 %v8586, %v8584
    %v8605 = vpack.c.b16 %v8589, %v8587
    %v8606 = vpack.c.b16 %v8590, %v8588
    %8623 = vmatpush.bf16.msra.mxu0 %v8605
    %8624 = vmatpush.bf16.msra.mxu0 %v8603
    %8625 = vmatpush.bf16.msra.mxu0 %v8601
    %8626 = vmatpush.bf16.msra.mxu0 %v8599
    %8627 = vmatpush.bf16.msra.mxu0 %v8597
    %8628 = vmatpush.bf16.msra.mxu0 %v8595
    %8629 = vmatpush.bf16.msra.mxu0 %v8593
    %8630 = vmatpush.bf16.msra.mxu0 %v8591
    %8631 = vmatmul.bf16.gmra.mxu0 %v8542
    %v8632 = vpop.f32.mrf.mxu0
    %v8633 = vadd.f32 0.0, %v8632
    %v8634 = vpop.f32.mrf.mxu0
    %8635 = vdwg.mxu0
    %8636 = vmatpush.bf16.msra.mxu0 %v8606
    %8637 = vmatpush.bf16.msra.mxu0 %v8604
    %8638 = vmatpush.bf16.msra.mxu0 %v8602
    %8639 = vmatpush.bf16.msra.mxu0 %v8600
    %8640 = vmatpush.bf16.msra.mxu0 %v8598
    %8641 = vmatpush.bf16.msra.mxu0 %v8596
    %8642 = vmatpush.bf16.msra.mxu0 %v8594
    %8643 = vmatpush.bf16.msra.mxu0 %v8592
    %8644 = vmatmul.bf16.gmra.mxu0 %v8542
    %v8645 = vpop.f32.mrf.mxu0
    %v8646 = vadd.f32 0.0, %v8645
    %v8647 = vpop.f32.mrf.mxu0
    %8648 = vdwg.mxu0
    %v8649 = vpack.c.bf16 %v8633, %v8633
    %v8650 = vpack.c.bf16 %v8646, %v8646
    %v8652 = vsel %vm8482, %v8649, 0
    %v8655 = vsel %vm8482, %v8650, 0
    %8657 = vmatpush.bf16.msra.mxu0 0
    %8658 = vmatpush.bf16.msra.mxu0 0
    %8659 = vmatpush.bf16.msra.mxu0 0
    %8660 = vmatpush.bf16.msra.mxu0 0
    %8661 = vmatpush.bf16.msra.mxu0 0
    %8662 = vmatpush.bf16.msra.mxu0 0
    %8663 = vmatpush.bf16.msra.mxu0 0
    %8664 = vmatpush.bf16.msra.mxu0 %v8652
    %8665 = vmatmul.bf16.gmra.mxu0 %v8480
    %v8666 = vpop.f32.mrf.mxu0
    %v8667 = vadd.f32 0.0, %v8666
    %v8668 = vpop.f32.mrf.mxu0
    %8669 = vdwg.mxu0
    %8670 = vmatpush.bf16.msra.mxu0 0
    %8671 = vmatpush.bf16.msra.mxu0 0
    %8672 = vmatpush.bf16.msra.mxu0 0
    %8673 = vmatpush.bf16.msra.mxu0 0
    %8674 = vmatpush.bf16.msra.mxu0 0
    %8675 = vmatpush.bf16.msra.mxu0 0
    %8676 = vmatpush.bf16.msra.mxu0 0
    %8677 = vmatpush.bf16.msra.mxu0 %v8655
    %8678 = vmatmul.bf16.gmra.mxu0 %v8480
    %v8679 = vpop.f32.mrf.mxu0
    %v8680 = vadd.f32 0.0, %v8679
    %v8681 = vpop.f32.mrf.mxu0
    %8682 = vdwg.mxu0
    %v8683 = vpack.c.bf16 %v8667, %v8667
    %v8684 = vpack.c.bf16 %v8680, %v8680
    %v8685 = vld [vmem:[#allocation19] sm:$0x3]
    %v8687 = vperm.slane %v8685, 0
    %v8688 = vperm.slane %v8685, 1
    %v8692 = vsel %vm8482, %v8683, 0
    %v8695 = vsel %vm8482, %v8684, 0
    %8697 = vmatpush.bf16.msra.mxu0 0
    %8698 = vmatpush.bf16.msra.mxu0 0
    %8699 = vmatpush.bf16.msra.mxu0 0
    %8700 = vmatpush.bf16.msra.mxu0 0
    %8701 = vmatpush.bf16.msra.mxu0 0
    %8702 = vmatpush.bf16.msra.mxu0 0
    %8703 = vmatpush.bf16.msra.mxu0 0
    %8704 = vmatpush.bf16.msra.mxu0 %v8692
    %8705 = vmatmul.bf16.gmra.mxu0 %v8505
    %v8706 = vpop.f32.mrf.mxu0
    %v8707 = vadd.f32 %v8687, %v8706
    %v8708 = vpop.f32.mrf.mxu0
    %8709 = vdwg.mxu0
    %8710 = vmatpush.bf16.msra.mxu0 0
    %8711 = vmatpush.bf16.msra.mxu0 0
    %8712 = vmatpush.bf16.msra.mxu0 0
    %8713 = vmatpush.bf16.msra.mxu0 0
    %8714 = vmatpush.bf16.msra.mxu0 0
    %8715 = vmatpush.bf16.msra.mxu0 0
    %8716 = vmatpush.bf16.msra.mxu0 0
    %8717 = vmatpush.bf16.msra.mxu0 %v8695
    %8718 = vmatmul.bf16.gmra.mxu0 %v8505
    %v8719 = vpop.f32.mrf.mxu0
    %v8720 = vadd.f32 %v8688, %v8719
    %v8721 = vpop.f32.mrf.mxu0
    %8722 = vdwg.mxu0
    %v8723 = vld [vmem:[#allocation20] sm:$0x3]
    %v8724 = vld [vmem:[#allocation22] sm:$0x3]
    %v8725 = vadd.f32 %v8707, %v8720
    %8726 = vadd.xlane.f32.xlu0 %v8725
    %v8727 = vpop.xlane.xlu0 %8726
    %v8728 = vrcp.pop 256.0
    %v8729 = vmul.f32 256.0, %v8728
    %v8730 = vsub.f32 1.0, %v8729
    %v8731 = vmul.f32 %v8728, %v8730
    %v8732 = vadd.f32 %v8728, %v8731
    %vm8733 = vweird.f32 %v8728
    %v8734 = vsel %vm8733, %v8728, %v8732
    %v8735 = vmul.f32 %v8727, %v8734
    %v8736 = vsub.f32 %v8707, %v8735
    %v8737 = vsub.f32 %v8720, %v8735
    %v8738 = vmul.f32 %v8736, %v8736
    %v8739 = vmul.f32 %v8737, %v8737
    %v8740 = vadd.f32 %v8738, %v8739
    %8741 = vadd.xlane.f32.xlu0 %v8740
    %v8742 = vpop.xlane.xlu0 %8741
    %v8743 = vmul.f32 %v8742, %v8734
    %v8744 = vadd.f32 %v8743, 1e-05
    %v8745 = vrsqrt.pop %v8744
    %v8746 = vmul.f32 %v8745, %v8744
    %v8747 = vmul.f32 %v8746, %v8745
    %v8748 = vmul.f32 0.5, %v8747
    %v8749 = vsub.f32 1.5, %v8748
    %v8750 = vmul.f32 %v8745, %v8749
    %vm8751 = vweird.f32 %v8744
    %vm8752 = vweird.f32 %v8745
    %vm8753 = vmor %vm8751, %vm8752
    %v8754 = vsel %vm8753, %v8745, %v8750
    %v8755 = vmul.f32 %v8736, %v8754
    %v8756 = vmul.f32 %v8737, %v8754
    %v8758 = vperm.slane %v8723, 0
    %v8759 = vperm.slane %v8723, 1
    %v8762 = vmul.f32 %v8755, %v8758
    %v8763 = vmul.f32 %v8756, %v8759
    %v8765 = vperm.slane %v8724, 0
    %v8766 = vperm.slane %v8724, 1
    %v8769 = vadd.f32 %v8762, %v8765
    %v8770 = vadd.f32 %v8763, %v8766
    %8771 = vst [vmem:[#allocation29] sm:$0xff] %v8769
    %8772 = vst [vmem:[#allocation29 + $0x8] sm:$0xff] %v8770
    // Predicated region
    $region130: #{tpu_custom_call.1} parent=1 // pred_check
      _
    $region131: #{tpu_custom_call.1} parent=1 // pred_check_branch
      %8774 = sbr.rel (0) target = $region133
    $region132: #{tpu_custom_call.1} parent=1 // pred_region
      %8776 = vsyncadd [#allocation4], 0
      %s8778 = sshll.u32 [#allocation28], 4
      %s8779 = int_to_ptr.vmem [resolvable:$true] %s8778
      %s8780 = sshll.u32 %s16, 4
      %s8781 = int_to_ptr.hbm [resolvable:$true] %s8780
      %8783 = dma.vmem_to_hbm [thread:$0]  %s8779, 256, %s8781, [#allocation4]
    $region133: #{tpu_custom_call.1} parent=1 // pred_fallthru
      _
    // Predicated region
    $region134: #{tpu_custom_call.1} parent=1 // pred_check
      _
    $region135: #{tpu_custom_call.1} parent=1 // pred_check_branch
      %8785 = sbr.rel (0) target = $region137
    $region136: #{tpu_custom_call.1} parent=1 // pred_region
      %8787 = vsyncadd [#allocation30], 0
      %s8789 = sshll.u32 [#allocation29], 4
      %s8790 = int_to_ptr.vmem [resolvable:$true] %s8789
      %s8791 = sshll.u32 %s17, 4
      %s8792 = int_to_ptr.hbm [resolvable:$true] %s8791
      %8794 = dma.vmem_to_hbm [thread:$0]  %s8790, 256, %s8792, [#allocation30]
    $region137: #{tpu_custom_call.1} parent=1 // pred_fallthru
      _
    // Predicated region
    $region138: #{tpu_custom_call.1} parent=1 // pred_check
      _
    $region139: #{tpu_custom_call.1} parent=1 // pred_check_branch
      %8796 = sbr.rel (0) target = $region141
    $region140: #{tpu_custom_call.1} parent=1 // pred_region
      %8798 = dma.done [#allocation4], 256
    $region141: #{tpu_custom_call.1} parent=1 // pred_fallthru
      _
    // Predicated region
    $region142: #{tpu_custom_call.1} parent=1 // pred_check
      _
    $region143: #{tpu_custom_call.1} parent=1 // pred_check_branch
      %8800 = sbr.rel (0) target = $region145
    $region144: #{tpu_custom_call.1} parent=1 // pred_region
      %8802 = dma.done [#allocation30], 256
    $region145: #{tpu_custom_call.1} parent=1 // pred_fallthru
      _
    %8803 = vsyncpa [#allocation3], 1
    %8804 = vsyncpa [#allocation6], 1
    %8805 = vsyncpa [#allocation9], 1
    %8806 = vsyncpa [#allocation12], 1
    %8807 = vsyncpa [#allocation15], 1
    %8808 = vsyncpa [#allocation18], 1
    %8809 = vsyncpa [#allocation21], 1
    %8810 = vsyncpa [#allocation24], 1
    %8811 = vsyncpa [#allocation27], 1
    %8812 = vsyncpa [#allocation4], 1
    %8813 = vsyncpa [#allocation30], 1

</llo_original>
